<compile_context>
chip_gen: v6e
topology: v6e:2x2x1
jax: 0.10.0
libtpu: 0.0.40
codegen_flags: <defaults>
</compile_context>

<pallas_src>
import jax
import jax.numpy as jnp
from jax import lax
from jax.experimental import pallas as pl
from jax.experimental.pallas import tpu as pltpu


def _rdb_kernel(x_ref, w1_ref, w2_ref, w3_ref, out_ref,
                xpad_ref, y1pad_ref, y2pad_ref):
    """NB batch elements per grid step.

    x_ref    : (NB, H, W, G0)       unpadded NHWC input block
    w1_ref   : (9*G0, G)            conv1 weights, rows ordered (dy, dx, cin)
    w2_ref   : (9*G,  G0)           conv2 weights
    w3_ref   : (9*G + 9*G0, G0)     agg weights: all y1 taps, then all y2 taps
    out_ref  : (NB, H, W, G0)
    xpad_ref : (NB, Hp, Wpad, G0)   VMEM scratch (zero-bordered, padded input)
    y1pad_ref: (NB, Hp, Wpad, G)    VMEM scratch (zero-bordered, padded y1)
    y2pad_ref: (NB, Hp, Wpad, G0)   VMEM scratch (zero-bordered, padded y2)
    """
    NB, H, W, G0 = x_ref.shape
    G = w1_ref.shape[1]
    M = NB * H * W

    def zero_borders(ref):
        # Only the 1-pixel border must be zero; the interior is fully
        # overwritten every step.  Done every step (not pl.when(id == 0)) so
        # the kernel stays correct when the "parallel" grid axis is sharded
        # across TensorCores (each core has its own scratch).
        _, hp, wp, c = ref.shape
        zrow = jnp.zeros((NB, 1, wp, c), jnp.float32)
        zcol = jnp.zeros((NB, hp, 1, c), jnp.float32)
        ref[:, 0:1, :, :] = zrow
        ref[:, H + 1:H + 2, :, :] = zrow
        ref[:, :, 0:1, :] = zcol
        ref[:, :, W + 1:W + 2, :] = zcol

    zero_borders(xpad_ref)
    zero_borders(y1pad_ref)
    zero_borders(y2pad_ref)

    def im2col(padded, center):
        # padded: (NB, Hp, Wpad, C) zero-bordered; center: (M, C) is the
        # dy=1,dx=1 patch (reuse the already-materialized unpadded tensor
        # instead of an unaligned interior slice).
        cin = padded.shape[-1]
        cols = []
        for dy in range(3):
            for dx in range(3):
                if dy == 1 and dx == 1:
                    cols.append(center)
                else:
                    cols.append(
                        padded[:, dy:dy + H, dx:dx + W, :].reshape(M, cin))
        return jnp.concatenate(cols, axis=-1)     # (M, 9*C)

    x = x_ref[...]                                 # (NB, H, W, G0)
    xc = x.reshape(M, G0)

    # --- y1 = relu(conv1(x)) : one matmul, K = 9*G0 ----------------------
    xpad_ref[:, 1:H + 1, 1:W + 1, :] = x
    p1 = im2col(xpad_ref[...], xc)                 # (M, 9*G0)
    y1 = jnp.maximum(
        jnp.dot(p1, w1_ref[...], preferred_element_type=jnp.float32), 0.0)

    # --- y2 = relu(conv2(y1)) : one matmul, K = 9*G -----------------------
    y1pad_ref[:, 1:H + 1, 1:W + 1, :] = y1.reshape(NB, H, W, G)
    p2 = im2col(y1pad_ref[...], y1)                # (M, 9*G)
    y2 = jnp.maximum(
        jnp.dot(p2, w2_ref[...], preferred_element_type=jnp.float32), 0.0)

    # --- out = relu(agg(concat(y1, y2))) + x : ONE matmul, K = 9*(G+G0) ---
    # The y1 half of the im2col matrix is exactly p2 (reused).
    y2pad_ref[:, 1:H + 1, 1:W + 1, :] = y2.reshape(NB, H, W, G0)
    p2b = im2col(y2pad_ref[...], y2)               # (M, 9*G0)
    p3 = jnp.concatenate([p2, p2b], axis=-1)       # (M, 9*(G+G0))
    agg = jnp.maximum(
        jnp.dot(p3, w3_ref[...], preferred_element_type=jnp.float32), 0.0)

    out_ref[...] = (agg.reshape(NB, H, W, G0) + x).astype(out_ref.dtype)


def _pick_nb(n):
    # Largest divisor of n among {8, 4, 2, 1}: batch elements fused per step.
    for cand in (8, 4, 2, 1):
        if n % cand == 0:
            return cand
    return 1


@jax.jit
def rdb_forward(x_nchw, w1, w2, w3):
    """x_nchw: (N, G0, H, W) float32.  Weights in PyTorch OIHW layout."""
    N, G0, H, W = x_nchw.shape
    G = w1.shape[0]
    NB = _pick_nb(N)
    Hp = H + 2
    Wpad = ((W + 2 + 7) // 8) * 8      # sublane-dim padded scratch width

    # NCHW -> NHWC (unpadded; padding is done inside the kernel).
    x = jnp.transpose(x_nchw, (0, 2, 3, 1))                      # (N,H,W,G0)

    # OIHW -> HWIO -> packed im2col weights, rows ordered (dy, dx, cin).
    w1_p = jnp.transpose(w1, (2, 3, 1, 0)).reshape(9 * G0, G)    # (9*G0, G)
    w2_p = jnp.transpose(w2, (2, 3, 1, 0)).reshape(9 * G, G0)    # (9*G,  G0)
    w3_h = jnp.transpose(w3, (2, 3, 1, 0))                       # (3,3,G+G0,G0)
    w3_p = jnp.concatenate(
        [w3_h[:, :, :G, :].reshape(9 * G, G0),                   # y1 taps
         w3_h[:, :, G:, :].reshape(9 * G0, G0)],                 # y2 taps
        axis=0)                                                  # (9*(G+G0), G0)

    out_nhwc = pl.pallas_call(
        _rdb_kernel,
        out_shape=jax.ShapeDtypeStruct((N, H, W, G0), x.dtype),
        grid_spec=pltpu.PrefetchScalarGridSpec(
            num_scalar_prefetch=0,
            grid=(N // NB,),
            in_specs=[
                pl.BlockSpec((NB, H, W, G0), lambda b: (b, 0, 0, 0)),
                pl.BlockSpec((9 * G0, G), lambda b: (0, 0)),
                pl.BlockSpec((9 * G, G0), lambda b: (0, 0)),
                pl.BlockSpec((9 * (G + G0), G0), lambda b: (0, 0)),
            ],
            out_specs=pl.BlockSpec((NB, H, W, G0), lambda b: (b, 0, 0, 0)),
            scratch_shapes=[
                pltpu.VMEM((NB, Hp, Wpad, G0), jnp.float32),
                pltpu.VMEM((NB, Hp, Wpad, G), jnp.float32),
                pltpu.VMEM((NB, Hp, Wpad, G0), jnp.float32),
            ],
        ),
        compiler_params=pltpu.CompilerParams(
            dimension_semantics=("parallel",)),
    )(x, w1_p, w2_p, w3_p)

    # NHWC -> NCHW to match the PyTorch module's output convention.
    return jnp.transpose(out_nhwc, (0, 3, 1, 2))


def rdb_reference(x_nchw, w1, w2, w3):
    """Pure-JAX reference (lax.conv) matching the PyTorch forward."""
    dn = lax.conv_dimension_numbers(x_nchw.shape, w1.shape,
                                    ("NCHW", "OIHW", "NCHW"))
    conv = lambda x, w: lax.conv_general_dilated(
        x, w, window_strides=(1, 1), padding="SAME", dimension_numbers=dn)
    relu = lambda v: jnp.maximum(v, 0.0)
    y1 = relu(conv(x_nchw, w1))
    y2 = relu(conv(y1, w2))
    inp = jnp.concatenate((y1, y2), axis=1)
    out = relu(conv(inp, w3))
    return out + x_nchw


if __name__ == "__main__":
    # Small, module-consistent shapes: N=2, G0=32, G=16, H=W=16.
    N, G0, G, H, W = 2, 32, 16, 16, 16

    key = jax.random.PRNGKey(0)
    kx, k1, k2, k3 = jax.random.split(key, 4)
    x = jax.random.normal(kx, (N, G0, H, W), dtype=jnp.float32)
    # Deterministic synthetic weights (PyTorch OIHW layout), bias=False.
    w1 = jax.random.normal(k1, (G, G0, 3, 3), dtype=jnp.float32) * 0.05
    w2 = jax.random.normal(k2, (G0, G, 3, 3), dtype=jnp.float32) * 0.05
    w3 = jax.random.normal(k3, (G0, G + G0, 3, 3), dtype=jnp.float32) * 0.05

    out = jax.block_until_ready(rdb_forward(x, w1, w2, w3))
    ref = jax.block_until_ready(rdb_reference(x, w1, w2, w3))

    assert out.shape == (N, G0, H, W), out.shape
    assert jnp.allclose(out, ref, atol=1e-4, rtol=1e-4), (
        float(jnp.max(jnp.abs(out - ref))))
    print("KERNEL_OK")
</pallas_src>

<mosaic_0001>
module attributes {stable_mosaic.version = 11 : i64} {
  func.func @_rdb_kernel(%arg0: i32, %arg1: memref<2x16x16x32xf32, #tpu.memory_space<vmem>>, %arg2: memref<288x16xf32, #tpu.memory_space<vmem>>, %arg3: memref<144x32xf32, #tpu.memory_space<vmem>>, %arg4: memref<432x32xf32, #tpu.memory_space<vmem>>, %arg5: memref<2x16x16x32xf32, #tpu.memory_space<vmem>>, %arg6: memref<2x18x24x32xf32, #tpu.memory_space<vmem>>, %arg7: memref<2x18x24x16xf32, #tpu.memory_space<vmem>>, %arg8: memref<2x18x24x32xf32, #tpu.memory_space<vmem>>) attributes {dimension_semantics = [#tpu.dimension_semantics<parallel>], iteration_bounds = array<i64: 1>, scalar_prefetch = 0 : i64, scratch_operands = 3 : i64, tpu.core_type = #tpu.core_type<tc>, window_params = [{transform_indices = @transform_0, window_bounds = array<i64: 2, 16, 16, 32>}, {pipeline_mode = #tpu.pipeline_mode<synchronous>, transform_indices = @transform_1, window_bounds = array<i64: 288, 16>}, {pipeline_mode = #tpu.pipeline_mode<synchronous>, transform_indices = @transform_2, window_bounds = array<i64: 144, 32>}, {pipeline_mode = #tpu.pipeline_mode<synchronous>, transform_indices = @transform_3, window_bounds = array<i64: 432, 32>}, {transform_indices = @transform_4, window_bounds = array<i64: 2, 16, 16, 32>}]} {
    %cst = arith.constant 0.000000e+00 : f32
    %0 = vector.broadcast %cst : f32 to vector<2x1x24x32xf32>
    %cst_0 = arith.constant 0.000000e+00 : f32
    %1 = vector.broadcast %cst_0 : f32 to vector<2x18x1x32xf32>
    %c0 = arith.constant 0 : index
    %c0_1 = arith.constant 0 : index
    %c0_2 = arith.constant 0 : index
    %c0_3 = arith.constant 0 : index
    %2 = vector.load %arg6[%c0, %c0_1, %c0_2, %c0_3] : memref<2x18x24x32xf32, #tpu.memory_space<vmem>>, vector<2x1x24x32xf32>
    tpu.vector_store %arg6[%c0, %c0_1, %c0_2, %c0_3], %0 {strides = array<i32>} : memref<2x18x24x32xf32, #tpu.memory_space<vmem>>, vector<2x1x24x32xf32>,
    %c0_4 = arith.constant 0 : index
    %c17 = arith.constant 17 : index
    %c0_5 = arith.constant 0 : index
    %c0_6 = arith.constant 0 : index
    %3 = vector.load %arg6[%c0_4, %c17, %c0_5, %c0_6] : memref<2x18x24x32xf32, #tpu.memory_space<vmem>>, vector<2x1x24x32xf32>
    tpu.vector_store %arg6[%c0_4, %c17, %c0_5, %c0_6], %0 {strides = array<i32>} : memref<2x18x24x32xf32, #tpu.memory_space<vmem>>, vector<2x1x24x32xf32>,
    %c0_7 = arith.constant 0 : index
    %c0_8 = arith.constant 0 : index
    %c0_9 = arith.constant 0 : index
    %c0_10 = arith.constant 0 : index
    %4 = vector.load %arg6[%c0_7, %c0_8, %c0_9, %c0_10] : memref<2x18x24x32xf32, #tpu.memory_space<vmem>>, vector<2x18x1x32xf32>
    tpu.vector_store %arg6[%c0_7, %c0_8, %c0_9, %c0_10], %1 {strides = array<i32>} : memref<2x18x24x32xf32, #tpu.memory_space<vmem>>, vector<2x18x1x32xf32>,
    %c0_11 = arith.constant 0 : index
    %c0_12 = arith.constant 0 : index
    %c17_13 = arith.constant 17 : index
    %c0_14 = arith.constant 0 : index
    %5 = vector.load %arg6[%c0_11, %c0_12, %c17_13, %c0_14] : memref<2x18x24x32xf32, #tpu.memory_space<vmem>>, vector<2x18x1x32xf32>
    tpu.vector_store %arg6[%c0_11, %c0_12, %c17_13, %c0_14], %1 {strides = array<i32>} : memref<2x18x24x32xf32, #tpu.memory_space<vmem>>, vector<2x18x1x32xf32>,
    %cst_15 = arith.constant 0.000000e+00 : f32
    %6 = vector.broadcast %cst_15 : f32 to vector<2x1x24x16xf32>
    %cst_16 = arith.constant 0.000000e+00 : f32
    %7 = vector.broadcast %cst_16 : f32 to vector<2x18x1x16xf32>
    %c0_17 = arith.constant 0 : index
    %c0_18 = arith.constant 0 : index
    %c0_19 = arith.constant 0 : index
    %c0_20 = arith.constant 0 : index
    %8 = vector.load %arg7[%c0_17, %c0_18, %c0_19, %c0_20] : memref<2x18x24x16xf32, #tpu.memory_space<vmem>>, vector<2x1x24x16xf32>
    tpu.vector_store %arg7[%c0_17, %c0_18, %c0_19, %c0_20], %6 {strides = array<i32>} : memref<2x18x24x16xf32, #tpu.memory_space<vmem>>, vector<2x1x24x16xf32>,
    %c0_21 = arith.constant 0 : index
    %c17_22 = arith.constant 17 : index
    %c0_23 = arith.constant 0 : index
    %c0_24 = arith.constant 0 : index
    %9 = vector.load %arg7[%c0_21, %c17_22, %c0_23, %c0_24] : memref<2x18x24x16xf32, #tpu.memory_space<vmem>>, vector<2x1x24x16xf32>
    tpu.vector_store %arg7[%c0_21, %c17_22, %c0_23, %c0_24], %6 {strides = array<i32>} : memref<2x18x24x16xf32, #tpu.memory_space<vmem>>, vector<2x1x24x16xf32>,
    %c0_25 = arith.constant 0 : index
    %c0_26 = arith.constant 0 : index
    %c0_27 = arith.constant 0 : index
    %c0_28 = arith.constant 0 : index
    %10 = vector.load %arg7[%c0_25, %c0_26, %c0_27, %c0_28] : memref<2x18x24x16xf32, #tpu.memory_space<vmem>>, vector<2x18x1x16xf32>
    tpu.vector_store %arg7[%c0_25, %c0_26, %c0_27, %c0_28], %7 {strides = array<i32>} : memref<2x18x24x16xf32, #tpu.memory_space<vmem>>, vector<2x18x1x16xf32>,
    %c0_29 = arith.constant 0 : index
    %c0_30 = arith.constant 0 : index
    %c17_31 = arith.constant 17 : index
    %c0_32 = arith.constant 0 : index
    %11 = vector.load %arg7[%c0_29, %c0_30, %c17_31, %c0_32] : memref<2x18x24x16xf32, #tpu.memory_space<vmem>>, vector<2x18x1x16xf32>
    tpu.vector_store %arg7[%c0_29, %c0_30, %c17_31, %c0_32], %7 {strides = array<i32>} : memref<2x18x24x16xf32, #tpu.memory_space<vmem>>, vector<2x18x1x16xf32>,
    %cst_33 = arith.constant 0.000000e+00 : f32
    %12 = vector.broadcast %cst_33 : f32 to vector<2x1x24x32xf32>
    %cst_34 = arith.constant 0.000000e+00 : f32
    %13 = vector.broadcast %cst_34 : f32 to vector<2x18x1x32xf32>
    %c0_35 = arith.constant 0 : index
    %c0_36 = arith.constant 0 : index
    %c0_37 = arith.constant 0 : index
    %c0_38 = arith.constant 0 : index
    %14 = vector.load %arg8[%c0_35, %c0_36, %c0_37, %c0_38] : memref<2x18x24x32xf32, #tpu.memory_space<vmem>>, vector<2x1x24x32xf32>
    tpu.vector_store %arg8[%c0_35, %c0_36, %c0_37, %c0_38], %12 {strides = array<i32>} : memref<2x18x24x32xf32, #tpu.memory_space<vmem>>, vector<2x1x24x32xf32>,
    %c0_39 = arith.constant 0 : index
    %c17_40 = arith.constant 17 : index
    %c0_41 = arith.constant 0 : index
    %c0_42 = arith.constant 0 : index
    %15 = vector.load %arg8[%c0_39, %c17_40, %c0_41, %c0_42] : memref<2x18x24x32xf32, #tpu.memory_space<vmem>>, vector<2x1x24x32xf32>
    tpu.vector_store %arg8[%c0_39, %c17_40, %c0_41, %c0_42], %12 {strides = array<i32>} : memref<2x18x24x32xf32, #tpu.memory_space<vmem>>, vector<2x1x24x32xf32>,
    %c0_43 = arith.constant 0 : index
    %c0_44 = arith.constant 0 : index
    %c0_45 = arith.constant 0 : index
    %c0_46 = arith.constant 0 : index
    %16 = vector.load %arg8[%c0_43, %c0_44, %c0_45, %c0_46] : memref<2x18x24x32xf32, #tpu.memory_space<vmem>>, vector<2x18x1x32xf32>
    tpu.vector_store %arg8[%c0_43, %c0_44, %c0_45, %c0_46], %13 {strides = array<i32>} : memref<2x18x24x32xf32, #tpu.memory_space<vmem>>, vector<2x18x1x32xf32>,
    %c0_47 = arith.constant 0 : index
    %c0_48 = arith.constant 0 : index
    %c17_49 = arith.constant 17 : index
    %c0_50 = arith.constant 0 : index
    %17 = vector.load %arg8[%c0_47, %c0_48, %c17_49, %c0_50] : memref<2x18x24x32xf32, #tpu.memory_space<vmem>>, vector<2x18x1x32xf32>
    tpu.vector_store %arg8[%c0_47, %c0_48, %c17_49, %c0_50], %13 {strides = array<i32>} : memref<2x18x24x32xf32, #tpu.memory_space<vmem>>, vector<2x18x1x32xf32>,
    %c0_51 = arith.constant 0 : index
    %c0_52 = arith.constant 0 : index
    %c0_53 = arith.constant 0 : index
    %c0_54 = arith.constant 0 : index
    %18 = vector.load %arg1[%c0_51, %c0_52, %c0_53, %c0_54] : memref<2x16x16x32xf32, #tpu.memory_space<vmem>>, vector<2x16x16x32xf32>
    %19 = vector.shape_cast %18 : vector<2x16x16x32xf32> to vector<512x32xf32>
    %c0_55 = arith.constant 0 : index
    %c1 = arith.constant 1 : index
    %c1_56 = arith.constant 1 : index
    %c0_57 = arith.constant 0 : index
    %20 = vector.load %arg6[%c0_55, %c1, %c1_56, %c0_57] : memref<2x18x24x32xf32, #tpu.memory_space<vmem>>, vector<2x16x16x32xf32>
    tpu.vector_store %arg6[%c0_55, %c1, %c1_56, %c0_57], %18 {strides = array<i32>} : memref<2x18x24x32xf32, #tpu.memory_space<vmem>>, vector<2x16x16x32xf32>,
    %c0_58 = arith.constant 0 : index
    %c0_59 = arith.constant 0 : index
    %c0_60 = arith.constant 0 : index
    %c0_61 = arith.constant 0 : index
    %21 = vector.load %arg6[%c0_58, %c0_59, %c0_60, %c0_61] : memref<2x18x24x32xf32, #tpu.memory_space<vmem>>, vector<2x18x24x32xf32>
    %22 = vector.extract_strided_slice %21 {offsets = [0, 0, 0, 0], sizes = [2, 16, 16, 32], strides = [1, 1, 1, 1]} : vector<2x18x24x32xf32> to vector<2x16x16x32xf32>
    %23 = vector.shape_cast %22 : vector<2x16x16x32xf32> to vector<512x32xf32>
    %24 = vector.extract_strided_slice %21 {offsets = [0, 0, 1, 0], sizes = [2, 16, 16, 32], strides = [1, 1, 1, 1]} : vector<2x18x24x32xf32> to vector<2x16x16x32xf32>
    %25 = vector.shape_cast %24 : vector<2x16x16x32xf32> to vector<512x32xf32>
    %26 = vector.extract_strided_slice %21 {offsets = [0, 0, 2, 0], sizes = [2, 16, 16, 32], strides = [1, 1, 1, 1]} : vector<2x18x24x32xf32> to vector<2x16x16x32xf32>
    %27 = vector.shape_cast %26 : vector<2x16x16x32xf32> to vector<512x32xf32>
    %28 = vector.extract_strided_slice %21 {offsets = [0, 1, 0, 0], sizes = [2, 16, 16, 32], strides = [1, 1, 1, 1]} : vector<2x18x24x32xf32> to vector<2x16x16x32xf32>
    %29 = vector.shape_cast %28 : vector<2x16x16x32xf32> to vector<512x32xf32>
    %30 = vector.extract_strided_slice %21 {offsets = [0, 1, 2, 0], sizes = [2, 16, 16, 32], strides = [1, 1, 1, 1]} : vector<2x18x24x32xf32> to vector<2x16x16x32xf32>
    %31 = vector.shape_cast %30 : vector<2x16x16x32xf32> to vector<512x32xf32>
    %32 = vector.extract_strided_slice %21 {offsets = [0, 2, 0, 0], sizes = [2, 16, 16, 32], strides = [1, 1, 1, 1]} : vector<2x18x24x32xf32> to vector<2x16x16x32xf32>
    %33 = vector.shape_cast %32 : vector<2x16x16x32xf32> to vector<512x32xf32>
    %34 = vector.extract_strided_slice %21 {offsets = [0, 2, 1, 0], sizes = [2, 16, 16, 32], strides = [1, 1, 1, 1]} : vector<2x18x24x32xf32> to vector<2x16x16x32xf32>
    %35 = vector.shape_cast %34 : vector<2x16x16x32xf32> to vector<512x32xf32>
    %36 = vector.extract_strided_slice %21 {offsets = [0, 2, 2, 0], sizes = [2, 16, 16, 32], strides = [1, 1, 1, 1]} : vector<2x18x24x32xf32> to vector<2x16x16x32xf32>
    %37 = vector.shape_cast %36 : vector<2x16x16x32xf32> to vector<512x32xf32>
    %38 = tpu.concatenate %23, %25, %27, %29, %19, %31, %33, %35, %37 in 1 : vector<512x32xf32>, vector<512x32xf32>, vector<512x32xf32>, vector<512x32xf32>, vector<512x32xf32>, vector<512x32xf32>, vector<512x32xf32>, vector<512x32xf32>, vector<512x32xf32> -> vector<512x288xf32>
    %c0_62 = arith.constant 0 : index
    %c0_63 = arith.constant 0 : index
    %39 = vector.load %arg2[%c0_62, %c0_63] : memref<288x16xf32, #tpu.memory_space<vmem>>, vector<288x16xf32>
    %cst_64 = arith.constant dense<0.000000e+00> : vector<512x16xf32>
    %40 = tpu.matmul %38, %39, %cst_64 {dimension_numbers = #tpu.dot_dimension_numbers<[1], [0], [0], [1], [0, 0, 1, 1], [], []>} : vector<512x288xf32>, vector<288x16xf32>, vector<512x16xf32> -> vector<512x16xf32>
    %cst_65 = arith.constant 0.000000e+00 : f32
    %41 = vector.broadcast %cst_65 : f32 to vector<512x16xf32>
    %42 = arith.maximumf %40, %41 : vector<512x16xf32>
    %43 = vector.shape_cast %42 : vector<512x16xf32> to vector<2x16x16x16xf32>
    %c0_66 = arith.constant 0 : index
    %c1_67 = arith.constant 1 : index
    %c1_68 = arith.constant 1 : index
    %c0_69 = arith.constant 0 : index
    %44 = vector.load %arg7[%c0_66, %c1_67, %c1_68, %c0_69] : memref<2x18x24x16xf32, #tpu.memory_space<vmem>>, vector<2x16x16x16xf32>
    tpu.vector_store %arg7[%c0_66, %c1_67, %c1_68, %c0_69], %43 {strides = array<i32>} : memref<2x18x24x16xf32, #tpu.memory_space<vmem>>, vector<2x16x16x16xf32>,
    %c0_70 = arith.constant 0 : index
    %c0_71 = arith.constant 0 : index
    %c0_72 = arith.constant 0 : index
    %c0_73 = arith.constant 0 : index
    %45 = vector.load %arg7[%c0_70, %c0_71, %c0_72, %c0_73] : memref<2x18x24x16xf32, #tpu.memory_space<vmem>>, vector<2x18x24x16xf32>
    %46 = vector.extract_strided_slice %45 {offsets = [0, 0, 0, 0], sizes = [2, 16, 16, 16], strides = [1, 1, 1, 1]} : vector<2x18x24x16xf32> to vector<2x16x16x16xf32>
    %47 = vector.shape_cast %46 : vector<2x16x16x16xf32> to vector<512x16xf32>
    %48 = vector.extract_strided_slice %45 {offsets = [0, 0, 1, 0], sizes = [2, 16, 16, 16], strides = [1, 1, 1, 1]} : vector<2x18x24x16xf32> to vector<2x16x16x16xf32>
    %49 = vector.shape_cast %48 : vector<2x16x16x16xf32> to vector<512x16xf32>
    %50 = vector.extract_strided_slice %45 {offsets = [0, 0, 2, 0], sizes = [2, 16, 16, 16], strides = [1, 1, 1, 1]} : vector<2x18x24x16xf32> to vector<2x16x16x16xf32>
    %51 = vector.shape_cast %50 : vector<2x16x16x16xf32> to vector<512x16xf32>
    %52 = vector.extract_strided_slice %45 {offsets = [0, 1, 0, 0], sizes = [2, 16, 16, 16], strides = [1, 1, 1, 1]} : vector<2x18x24x16xf32> to vector<2x16x16x16xf32>
    %53 = vector.shape_cast %52 : vector<2x16x16x16xf32> to vector<512x16xf32>
    %54 = vector.extract_strided_slice %45 {offsets = [0, 1, 2, 0], sizes = [2, 16, 16, 16], strides = [1, 1, 1, 1]} : vector<2x18x24x16xf32> to vector<2x16x16x16xf32>
    %55 = vector.shape_cast %54 : vector<2x16x16x16xf32> to vector<512x16xf32>
    %56 = vector.extract_strided_slice %45 {offsets = [0, 2, 0, 0], sizes = [2, 16, 16, 16], strides = [1, 1, 1, 1]} : vector<2x18x24x16xf32> to vector<2x16x16x16xf32>
    %57 = vector.shape_cast %56 : vector<2x16x16x16xf32> to vector<512x16xf32>
    %58 = vector.extract_strided_slice %45 {offsets = [0, 2, 1, 0], sizes = [2, 16, 16, 16], strides = [1, 1, 1, 1]} : vector<2x18x24x16xf32> to vector<2x16x16x16xf32>
    %59 = vector.shape_cast %58 : vector<2x16x16x16xf32> to vector<512x16xf32>
    %60 = vector.extract_strided_slice %45 {offsets = [0, 2, 2, 0], sizes = [2, 16, 16, 16], strides = [1, 1, 1, 1]} : vector<2x18x24x16xf32> to vector<2x16x16x16xf32>
    %61 = vector.shape_cast %60 : vector<2x16x16x16xf32> to vector<512x16xf32>
    %62 = tpu.concatenate %47, %49, %51, %53, %42, %55, %57, %59, %61 in 1 : vector<512x16xf32>, vector<512x16xf32>, vector<512x16xf32>, vector<512x16xf32>, vector<512x16xf32>, vector<512x16xf32>, vector<512x16xf32>, vector<512x16xf32>, vector<512x16xf32> -> vector<512x144xf32>
    %c0_74 = arith.constant 0 : index
    %c0_75 = arith.constant 0 : index
    %63 = vector.load %arg3[%c0_74, %c0_75] : memref<144x32xf32, #tpu.memory_space<vmem>>, vector<144x32xf32>
    %cst_76 = arith.constant dense<0.000000e+00> : vector<512x32xf32>
    %64 = tpu.matmul %62, %63, %cst_76 {dimension_numbers = #tpu.dot_dimension_numbers<[1], [0], [0], [1], [0, 0, 1, 1], [], []>} : vector<512x144xf32>, vector<144x32xf32>, vector<512x32xf32> -> vector<512x32xf32>
    %cst_77 = arith.constant 0.000000e+00 : f32
    %65 = vector.broadcast %cst_77 : f32 to vector<512x32xf32>
    %66 = arith.maximumf %64, %65 : vector<512x32xf32>
    %67 = vector.shape_cast %66 : vector<512x32xf32> to vector<2x16x16x32xf32>
    %c0_78 = arith.constant 0 : index
    %c1_79 = arith.constant 1 : index
    %c1_80 = arith.constant 1 : index
    %c0_81 = arith.constant 0 : index
    %68 = vector.load %arg8[%c0_78, %c1_79, %c1_80, %c0_81] : memref<2x18x24x32xf32, #tpu.memory_space<vmem>>, vector<2x16x16x32xf32>
    tpu.vector_store %arg8[%c0_78, %c1_79, %c1_80, %c0_81], %67 {strides = array<i32>} : memref<2x18x24x32xf32, #tpu.memory_space<vmem>>, vector<2x16x16x32xf32>,
    %c0_82 = arith.constant 0 : index
    %c0_83 = arith.constant 0 : index
    %c0_84 = arith.constant 0 : index
    %c0_85 = arith.constant 0 : index
    %69 = vector.load %arg8[%c0_82, %c0_83, %c0_84, %c0_85] : memref<2x18x24x32xf32, #tpu.memory_space<vmem>>, vector<2x18x24x32xf32>
    %70 = vector.extract_strided_slice %69 {offsets = [0, 0, 0, 0], sizes = [2, 16, 16, 32], strides = [1, 1, 1, 1]} : vector<2x18x24x32xf32> to vector<2x16x16x32xf32>
    %71 = vector.shape_cast %70 : vector<2x16x16x32xf32> to vector<512x32xf32>
    %72 = vector.extract_strided_slice %69 {offsets = [0, 0, 1, 0], sizes = [2, 16, 16, 32], strides = [1, 1, 1, 1]} : vector<2x18x24x32xf32> to vector<2x16x16x32xf32>
    %73 = vector.shape_cast %72 : vector<2x16x16x32xf32> to vector<512x32xf32>
    %74 = vector.extract_strided_slice %69 {offsets = [0, 0, 2, 0], sizes = [2, 16, 16, 32], strides = [1, 1, 1, 1]} : vector<2x18x24x32xf32> to vector<2x16x16x32xf32>
    %75 = vector.shape_cast %74 : vector<2x16x16x32xf32> to vector<512x32xf32>
    %76 = vector.extract_strided_slice %69 {offsets = [0, 1, 0, 0], sizes = [2, 16, 16, 32], strides = [1, 1, 1, 1]} : vector<2x18x24x32xf32> to vector<2x16x16x32xf32>
    %77 = vector.shape_cast %76 : vector<2x16x16x32xf32> to vector<512x32xf32>
    %78 = vector.extract_strided_slice %69 {offsets = [0, 1, 2, 0], sizes = [2, 16, 16, 32], strides = [1, 1, 1, 1]} : vector<2x18x24x32xf32> to vector<2x16x16x32xf32>
    %79 = vector.shape_cast %78 : vector<2x16x16x32xf32> to vector<512x32xf32>
    %80 = vector.extract_strided_slice %69 {offsets = [0, 2, 0, 0], sizes = [2, 16, 16, 32], strides = [1, 1, 1, 1]} : vector<2x18x24x32xf32> to vector<2x16x16x32xf32>
    %81 = vector.shape_cast %80 : vector<2x16x16x32xf32> to vector<512x32xf32>
    %82 = vector.extract_strided_slice %69 {offsets = [0, 2, 1, 0], sizes = [2, 16, 16, 32], strides = [1, 1, 1, 1]} : vector<2x18x24x32xf32> to vector<2x16x16x32xf32>
    %83 = vector.shape_cast %82 : vector<2x16x16x32xf32> to vector<512x32xf32>
    %84 = vector.extract_strided_slice %69 {offsets = [0, 2, 2, 0], sizes = [2, 16, 16, 32], strides = [1, 1, 1, 1]} : vector<2x18x24x32xf32> to vector<2x16x16x32xf32>
    %85 = vector.shape_cast %84 : vector<2x16x16x32xf32> to vector<512x32xf32>
    %86 = tpu.concatenate %71, %73, %75, %77, %66, %79, %81, %83, %85 in 1 : vector<512x32xf32>, vector<512x32xf32>, vector<512x32xf32>, vector<512x32xf32>, vector<512x32xf32>, vector<512x32xf32>, vector<512x32xf32>, vector<512x32xf32>, vector<512x32xf32> -> vector<512x288xf32>
    %87 = tpu.concatenate %62, %86 in 1 : vector<512x144xf32>, vector<512x288xf32> -> vector<512x432xf32>
    %c0_86 = arith.constant 0 : index
    %c0_87 = arith.constant 0 : index
    %88 = vector.load %arg4[%c0_86, %c0_87] : memref<432x32xf32, #tpu.memory_space<vmem>>, vector<432x32xf32>
    %cst_88 = arith.constant dense<0.000000e+00> : vector<512x32xf32>
    %89 = tpu.matmul %87, %88, %cst_88 {dimension_numbers = #tpu.dot_dimension_numbers<[1], [0], [0], [1], [0, 0, 1, 1], [], []>} : vector<512x432xf32>, vector<432x32xf32>, vector<512x32xf32> -> vector<512x32xf32>
    %cst_89 = arith.constant 0.000000e+00 : f32
    %90 = vector.broadcast %cst_89 : f32 to vector<512x32xf32>
    %91 = arith.maximumf %89, %90 : vector<512x32xf32>
    %92 = vector.shape_cast %91 : vector<512x32xf32> to vector<2x16x16x32xf32>
    %93 = arith.addf %92, %18 : vector<2x16x16x32xf32>
    %c0_90 = arith.constant 0 : index
    %c0_91 = arith.constant 0 : index
    %c0_92 = arith.constant 0 : index
    %c0_93 = arith.constant 0 : index
    %94 = vector.load %arg5[%c0_90, %c0_91, %c0_92, %c0_93] : memref<2x16x16x32xf32, #tpu.memory_space<vmem>>, vector<2x16x16x32xf32>
    tpu.vector_store %arg5[%c0_90, %c0_91, %c0_92, %c0_93], %93 {strides = array<i32>} : memref<2x16x16x32xf32, #tpu.memory_space<vmem>>, vector<2x16x16x32xf32>,
    return
  }
  func.func @transform_0(%arg0: i32) -> (i32, i32, i32, i32) {
    %c0_i32 = arith.constant 0 : i32
    %c0_i32_0 = arith.constant 0 : i32
    %c0_i32_1 = arith.constant 0 : i32
    %c0_i32_2 = arith.constant 0 : i32
    return %arg0, %c0_i32, %c0_i32_0, %c0_i32_1 : i32, i32, i32, i32
  }
  func.func @transform_1(%arg0: i32) -> (i32, i32) {
    %c0_i32 = arith.constant 0 : i32
    %c0_i32_0 = arith.constant 0 : i32
    %c0_i32_1 = arith.constant 0 : i32
    return %c0_i32, %c0_i32_0 : i32, i32
  }
  func.func @transform_2(%arg0: i32) -> (i32, i32) {
    %c0_i32 = arith.constant 0 : i32
    %c0_i32_0 = arith.constant 0 : i32
    %c0_i32_1 = arith.constant 0 : i32
    return %c0_i32, %c0_i32_0 : i32, i32
  }
  func.func @transform_3(%arg0: i32) -> (i32, i32) {
    %c0_i32 = arith.constant 0 : i32
    %c0_i32_0 = arith.constant 0 : i32
    %c0_i32_1 = arith.constant 0 : i32
    return %c0_i32, %c0_i32_0 : i32, i32
  }
  func.func @transform_4(%arg0: i32) -> (i32, i32, i32, i32) {
    %c0_i32 = arith.constant 0 : i32
    %c0_i32_0 = arith.constant 0 : i32
    %c0_i32_1 = arith.constant 0 : i32
    %c0_i32_2 = arith.constant 0 : i32
    return %arg0, %c0_i32, %c0_i32_0, %c0_i32_1 : i32, i32, i32, i32
  }
}

</mosaic_0001>

<llo_original>
// kernel: rdb_forward.1
$region0: #{rdb_forward.1}
  #allocation0 [shape = 'u32[]', space=smem, size = 0x4, offset = 0x4, fixed_abs, tag = 'smem constant byte address 0x4 - core index']
  #allocation1 [shape = 'u32[144,128]{1,0:T(1,128)}', space=vmem, size = 0x12000, scoped, tag = 'internal scratch']
  #allocation2 [shape = 'f32[2,18,24,32]{3,2,1,0:T(8,128)}', space=vmem, size = 0x6c000, scoped, tag = 'scratch operand']
  #allocation3 [shape = 'f32[2,18,24,16]{3,2,1,0:T(8,128)}', space=vmem, size = 0x6c000, scoped, tag = 'scratch operand']
  #allocation4 [shape = 'f32[2,18,24,32]{3,2,1,0:T(8,128)}', space=vmem, size = 0x6c000, scoped, tag = 'scratch operand']
  %s0 = inlined_call_operand.vmem [shape: f32[2,16,16,32], index: 0, kind: input, shape index: {}]
  %s1 = inlined_call_operand.vmem [shape: f32[288,16], index: 1, kind: input, shape index: {}]
  %s2 = inlined_call_operand.vmem [shape: f32[144,32], index: 2, kind: input, shape index: {}]
  %s3 = inlined_call_operand.vmem [shape: f32[432,32], index: 3, kind: input, shape index: {}]
  %s4 = inlined_call_operand.hbm [shape: f32[2,16,16,32], index: 4, kind: output, shape index: {}]
  %s5 = sld [smem:[#allocation0]]
  $region26: #{rdb_forward.1} parent=0
    _
  %s7 = ssub.s32 1, %s5
  %s8 = scalar_select 0, %s7, %s5
  $region1: #{rdb_forward.1} parent=0
    #allocation5 [shape = 'u8[262144]{0}', space=vmem, size = 0x40000, scoped, tag = 'output window, operand 0, single buffered']
    #allocation6 [shape = 's32[1]{0}', space=sflag, size = 0x4, scoped, tag = 'scoped memory for rdb_forward.1']
    %9 = vsyncpa [#allocation6], 0
    // Predicated region
    $region2: #{rdb_forward.1} parent=1 // pred_check
      _
    $region3: #{rdb_forward.1} parent=1 // pred_check_branch
      %11 = sbr.rel (0) target = $region5
    $region4: #{rdb_forward.1} parent=1 // pred_region
      _
    $region5: #{rdb_forward.1} parent=1 // pred_fallthru
      _
    // Predicated region
    $region6: #{rdb_forward.1} parent=1 // pred_check
      _
    $region7: #{rdb_forward.1} parent=1 // pred_check_branch
      %13 = sbr.rel (0) target = $region9
    $region8: #{rdb_forward.1} parent=1 // pred_region
      _
    $region9: #{rdb_forward.1} parent=1 // pred_fallthru
      _
    // Predicated region
    $region10: #{rdb_forward.1} parent=1 // pred_check
      _
    $region11: #{rdb_forward.1} parent=1 // pred_check_branch
      %15 = sbr.rel (0) target = $region13
    $region12: #{rdb_forward.1} parent=1 // pred_region
      _
    $region13: #{rdb_forward.1} parent=1 // pred_fallthru
      _
    // Predicated region
    $region14: #{rdb_forward.1} parent=1 // pred_check
      _
    $region15: #{rdb_forward.1} parent=1 // pred_check_branch
      %17 = sbr.rel (0) target = $region17
    $region16: #{rdb_forward.1} parent=1 // pred_region
      _
    $region17: #{rdb_forward.1} parent=1 // pred_fallthru
      _
    %vm18 = vcmask 261120
    %19 = vst.msk [vmem:[#allocation2] sm:$0xff] %vm18, 0.0
    %20 = vst.msk [vmem:[#allocation2 + $0x8] sm:$0xff] %vm18, 0.0
    %21 = vst.msk [vmem:[#allocation2 + $0x10] sm:$0xff] %vm18, 0.0
    %22 = vst.msk [vmem:[#allocation2 + $0x1b0] sm:$0xff] %vm18, 0.0
    %23 = vst.msk [vmem:[#allocation2 + $0x1b8] sm:$0xff] %vm18, 0.0
    %24 = vst.msk [vmem:[#allocation2 + $0x1c0] sm:$0xff] %vm18, 0.0
    %s25 = scalar_lea.vmem [#allocation2], 408
    %26 = vst.msk [vmem:[%s25] sm:$0xff] %vm18, 0.0
    %27 = vst.msk [vmem:[%s25 + $0x8] sm:$0xff] %vm18, 0.0
    %28 = vst.msk [vmem:[%s25 + $0x10] sm:$0xff] %vm18, 0.0
    %29 = vst.msk [vmem:[%s25 + $0x1b0] sm:$0xff] %vm18, 0.0
    %30 = vst.msk [vmem:[%s25 + $0x1b8] sm:$0xff] %vm18, 0.0
    %31 = vst.msk [vmem:[%s25 + $0x1c0] sm:$0xff] %vm18, 0.0
    %vm32 = vcmask 253952
    %33 = vst.msk [vmem:[#allocation2] sm:$0x1] %vm32, 0.0
    %34 = vst.msk [vmem:[#allocation2 + $0x18] sm:$0x1] %vm32, 0.0
    %35 = vst.msk [vmem:[#allocation2 + $0x30] sm:$0x1] %vm32, 0.0
    %36 = vst.msk [vmem:[#allocation2 + $0x48] sm:$0x1] %vm32, 0.0
    %37 = vst.msk [vmem:[#allocation2 + $0x60] sm:$0x1] %vm32, 0.0
    %38 = vst.msk [vmem:[#allocation2 + $0x78] sm:$0x1] %vm32, 0.0
    %39 = vst.msk [vmem:[#allocation2 + $0x90] sm:$0x1] %vm32, 0.0
    %40 = vst.msk [vmem:[#allocation2 + $0xa8] sm:$0x1] %vm32, 0.0
    %41 = vst.msk [vmem:[#allocation2 + $0xc0] sm:$0x1] %vm32, 0.0
    %42 = vst.msk [vmem:[#allocation2 + $0xd8] sm:$0x1] %vm32, 0.0
    %43 = vst.msk [vmem:[#allocation2 + $0xf0] sm:$0x1] %vm32, 0.0
    %44 = vst.msk [vmem:[#allocation2 + $0x108] sm:$0x1] %vm32, 0.0
    %45 = vst.msk [vmem:[#allocation2 + $0x120] sm:$0x1] %vm32, 0.0
    %46 = vst.msk [vmem:[#allocation2 + $0x138] sm:$0x1] %vm32, 0.0
    %47 = vst.msk [vmem:[#allocation2 + $0x150] sm:$0x1] %vm32, 0.0
    %48 = vst.msk [vmem:[#allocation2 + $0x168] sm:$0x1] %vm32, 0.0
    %49 = vst.msk [vmem:[#allocation2 + $0x180] sm:$0x1] %vm32, 0.0
    %50 = vst.msk [vmem:[#allocation2 + $0x198] sm:$0x1] %vm32, 0.0
    %51 = vst.msk [vmem:[#allocation2 + $0x1b0] sm:$0x1] %vm32, 0.0
    %52 = vst.msk [vmem:[#allocation2 + $0x1c8] sm:$0x1] %vm32, 0.0
    %53 = vst.msk [vmem:[#allocation2 + $0x1e0] sm:$0x1] %vm32, 0.0
    %54 = vst.msk [vmem:[#allocation2 + $0x1f8] sm:$0x1] %vm32, 0.0
    %55 = vst.msk [vmem:[#allocation2 + $0x210] sm:$0x1] %vm32, 0.0
    %56 = vst.msk [vmem:[#allocation2 + $0x228] sm:$0x1] %vm32, 0.0
    %57 = vst.msk [vmem:[#allocation2 + $0x240] sm:$0x1] %vm32, 0.0
    %58 = vst.msk [vmem:[#allocation2 + $0x258] sm:$0x1] %vm32, 0.0
    %59 = vst.msk [vmem:[#allocation2 + $0x270] sm:$0x1] %vm32, 0.0
    %60 = vst.msk [vmem:[#allocation2 + $0x288] sm:$0x1] %vm32, 0.0
    %61 = vst.msk [vmem:[#allocation2 + $0x2a0] sm:$0x1] %vm32, 0.0
    %62 = vst.msk [vmem:[#allocation2 + $0x2b8] sm:$0x1] %vm32, 0.0
    %63 = vst.msk [vmem:[#allocation2 + $0x2d0] sm:$0x1] %vm32, 0.0
    %64 = vst.msk [vmem:[#allocation2 + $0x2e8] sm:$0x1] %vm32, 0.0
    %65 = vst.msk [vmem:[#allocation2 + $0x300] sm:$0x1] %vm32, 0.0
    %66 = vst.msk [vmem:[#allocation2 + $0x318] sm:$0x1] %vm32, 0.0
    %67 = vst.msk [vmem:[#allocation2 + $0x330] sm:$0x1] %vm32, 0.0
    %68 = vst.msk [vmem:[#allocation2 + $0x348] sm:$0x1] %vm32, 0.0
    %69 = vst.msk [vmem:[#allocation2 + $0x11] sm:$0x1] %vm32, 0.0
    %70 = vst.msk [vmem:[#allocation2 + $0x29] sm:$0x1] %vm32, 0.0
    %71 = vst.msk [vmem:[#allocation2 + $0x41] sm:$0x1] %vm32, 0.0
    %72 = vst.msk [vmem:[#allocation2 + $0x59] sm:$0x1] %vm32, 0.0
    %73 = vst.msk [vmem:[#allocation2 + $0x71] sm:$0x1] %vm32, 0.0
    %74 = vst.msk [vmem:[#allocation2 + $0x89] sm:$0x1] %vm32, 0.0
    %75 = vst.msk [vmem:[#allocation2 + $0xa1] sm:$0x1] %vm32, 0.0
    %76 = vst.msk [vmem:[#allocation2 + $0xb9] sm:$0x1] %vm32, 0.0
    %77 = vst.msk [vmem:[#allocation2 + $0xd1] sm:$0x1] %vm32, 0.0
    %78 = vst.msk [vmem:[#allocation2 + $0xe9] sm:$0x1] %vm32, 0.0
    %79 = vst.msk [vmem:[#allocation2 + $0x101] sm:$0x1] %vm32, 0.0
    %80 = vst.msk [vmem:[#allocation2 + $0x119] sm:$0x1] %vm32, 0.0
    %81 = vst.msk [vmem:[#allocation2 + $0x131] sm:$0x1] %vm32, 0.0
    %82 = vst.msk [vmem:[#allocation2 + $0x149] sm:$0x1] %vm32, 0.0
    %83 = vst.msk [vmem:[#allocation2 + $0x161] sm:$0x1] %vm32, 0.0
    %84 = vst.msk [vmem:[#allocation2 + $0x179] sm:$0x1] %vm32, 0.0
    %85 = vst.msk [vmem:[#allocation2 + $0x191] sm:$0x1] %vm32, 0.0
    %86 = vst.msk [vmem:[#allocation2 + $0x1a9] sm:$0x1] %vm32, 0.0
    %87 = vst.msk [vmem:[#allocation2 + $0x1c1] sm:$0x1] %vm32, 0.0
    %88 = vst.msk [vmem:[#allocation2 + $0x1d9] sm:$0x1] %vm32, 0.0
    %89 = vst.msk [vmem:[#allocation2 + $0x1f1] sm:$0x1] %vm32, 0.0
    %90 = vst.msk [vmem:[#allocation2 + $0x209] sm:$0x1] %vm32, 0.0
    %91 = vst.msk [vmem:[#allocation2 + $0x221] sm:$0x1] %vm32, 0.0
    %92 = vst.msk [vmem:[#allocation2 + $0x239] sm:$0x1] %vm32, 0.0
    %93 = vst.msk [vmem:[#allocation2 + $0x251] sm:$0x1] %vm32, 0.0
    %94 = vst.msk [vmem:[#allocation2 + $0x269] sm:$0x1] %vm32, 0.0
    %95 = vst.msk [vmem:[#allocation2 + $0x281] sm:$0x1] %vm32, 0.0
    %96 = vst.msk [vmem:[#allocation2 + $0x299] sm:$0x1] %vm32, 0.0
    %97 = vst.msk [vmem:[#allocation2 + $0x2b1] sm:$0x1] %vm32, 0.0
    %98 = vst.msk [vmem:[#allocation2 + $0x2c9] sm:$0x1] %vm32, 0.0
    %99 = vst.msk [vmem:[#allocation2 + $0x2e1] sm:$0x1] %vm32, 0.0
    %100 = vst.msk [vmem:[#allocation2 + $0x2f9] sm:$0x1] %vm32, 0.0
    %101 = vst.msk [vmem:[#allocation2 + $0x311] sm:$0x1] %vm32, 0.0
    %102 = vst.msk [vmem:[#allocation2 + $0x329] sm:$0x1] %vm32, 0.0
    %103 = vst.msk [vmem:[#allocation2 + $0x341] sm:$0x1] %vm32, 0.0
    %104 = vst.msk [vmem:[#allocation2 + $0x359] sm:$0x1] %vm32, 0.0
    %vm105 = vcmask 130048
    %106 = vst.msk [vmem:[#allocation3] sm:$0xff] %vm105, 0.0
    %107 = vst.msk [vmem:[#allocation3 + $0x8] sm:$0xff] %vm105, 0.0
    %108 = vst.msk [vmem:[#allocation3 + $0x10] sm:$0xff] %vm105, 0.0
    %109 = vst.msk [vmem:[#allocation3 + $0x1b0] sm:$0xff] %vm105, 0.0
    %110 = vst.msk [vmem:[#allocation3 + $0x1b8] sm:$0xff] %vm105, 0.0
    %111 = vst.msk [vmem:[#allocation3 + $0x1c0] sm:$0xff] %vm105, 0.0
    %s112 = scalar_lea.vmem [#allocation3], 408
    %113 = vst.msk [vmem:[%s112] sm:$0xff] %vm105, 0.0
    %114 = vst.msk [vmem:[%s112 + $0x8] sm:$0xff] %vm105, 0.0
    %115 = vst.msk [vmem:[%s112 + $0x10] sm:$0xff] %vm105, 0.0
    %116 = vst.msk [vmem:[%s112 + $0x1b0] sm:$0xff] %vm105, 0.0
    %117 = vst.msk [vmem:[%s112 + $0x1b8] sm:$0xff] %vm105, 0.0
    %118 = vst.msk [vmem:[%s112 + $0x1c0] sm:$0xff] %vm105, 0.0
    %vm119 = vcmask 122880
    %120 = vst.msk [vmem:[#allocation3] sm:$0x1] %vm119, 0.0
    %121 = vst.msk [vmem:[#allocation3 + $0x18] sm:$0x1] %vm119, 0.0
    %122 = vst.msk [vmem:[#allocation3 + $0x30] sm:$0x1] %vm119, 0.0
    %123 = vst.msk [vmem:[#allocation3 + $0x48] sm:$0x1] %vm119, 0.0
    %124 = vst.msk [vmem:[#allocation3 + $0x60] sm:$0x1] %vm119, 0.0
    %125 = vst.msk [vmem:[#allocation3 + $0x78] sm:$0x1] %vm119, 0.0
    %126 = vst.msk [vmem:[#allocation3 + $0x90] sm:$0x1] %vm119, 0.0
    %127 = vst.msk [vmem:[#allocation3 + $0xa8] sm:$0x1] %vm119, 0.0
    %128 = vst.msk [vmem:[#allocation3 + $0xc0] sm:$0x1] %vm119, 0.0
    %129 = vst.msk [vmem:[#allocation3 + $0xd8] sm:$0x1] %vm119, 0.0
    %130 = vst.msk [vmem:[#allocation3 + $0xf0] sm:$0x1] %vm119, 0.0
    %131 = vst.msk [vmem:[#allocation3 + $0x108] sm:$0x1] %vm119, 0.0
    %132 = vst.msk [vmem:[#allocation3 + $0x120] sm:$0x1] %vm119, 0.0
    %133 = vst.msk [vmem:[#allocation3 + $0x138] sm:$0x1] %vm119, 0.0
    %134 = vst.msk [vmem:[#allocation3 + $0x150] sm:$0x1] %vm119, 0.0
    %135 = vst.msk [vmem:[#allocation3 + $0x168] sm:$0x1] %vm119, 0.0
    %136 = vst.msk [vmem:[#allocation3 + $0x180] sm:$0x1] %vm119, 0.0
    %137 = vst.msk [vmem:[#allocation3 + $0x198] sm:$0x1] %vm119, 0.0
    %138 = vst.msk [vmem:[#allocation3 + $0x1b0] sm:$0x1] %vm119, 0.0
    %139 = vst.msk [vmem:[#allocation3 + $0x1c8] sm:$0x1] %vm119, 0.0
    %140 = vst.msk [vmem:[#allocation3 + $0x1e0] sm:$0x1] %vm119, 0.0
    %141 = vst.msk [vmem:[#allocation3 + $0x1f8] sm:$0x1] %vm119, 0.0
    %142 = vst.msk [vmem:[#allocation3 + $0x210] sm:$0x1] %vm119, 0.0
    %143 = vst.msk [vmem:[#allocation3 + $0x228] sm:$0x1] %vm119, 0.0
    %144 = vst.msk [vmem:[#allocation3 + $0x240] sm:$0x1] %vm119, 0.0
    %145 = vst.msk [vmem:[#allocation3 + $0x258] sm:$0x1] %vm119, 0.0
    %146 = vst.msk [vmem:[#allocation3 + $0x270] sm:$0x1] %vm119, 0.0
    %147 = vst.msk [vmem:[#allocation3 + $0x288] sm:$0x1] %vm119, 0.0
    %148 = vst.msk [vmem:[#allocation3 + $0x2a0] sm:$0x1] %vm119, 0.0
    %149 = vst.msk [vmem:[#allocation3 + $0x2b8] sm:$0x1] %vm119, 0.0
    %150 = vst.msk [vmem:[#allocation3 + $0x2d0] sm:$0x1] %vm119, 0.0
    %151 = vst.msk [vmem:[#allocation3 + $0x2e8] sm:$0x1] %vm119, 0.0
    %152 = vst.msk [vmem:[#allocation3 + $0x300] sm:$0x1] %vm119, 0.0
    %153 = vst.msk [vmem:[#allocation3 + $0x318] sm:$0x1] %vm119, 0.0
    %154 = vst.msk [vmem:[#allocation3 + $0x330] sm:$0x1] %vm119, 0.0
    %155 = vst.msk [vmem:[#allocation3 + $0x348] sm:$0x1] %vm119, 0.0
    %156 = vst.msk [vmem:[#allocation3 + $0x11] sm:$0x1] %vm119, 0.0
    %157 = vst.msk [vmem:[#allocation3 + $0x29] sm:$0x1] %vm119, 0.0
    %158 = vst.msk [vmem:[#allocation3 + $0x41] sm:$0x1] %vm119, 0.0
    %159 = vst.msk [vmem:[#allocation3 + $0x59] sm:$0x1] %vm119, 0.0
    %160 = vst.msk [vmem:[#allocation3 + $0x71] sm:$0x1] %vm119, 0.0
    %161 = vst.msk [vmem:[#allocation3 + $0x89] sm:$0x1] %vm119, 0.0
    %162 = vst.msk [vmem:[#allocation3 + $0xa1] sm:$0x1] %vm119, 0.0
    %163 = vst.msk [vmem:[#allocation3 + $0xb9] sm:$0x1] %vm119, 0.0
    %164 = vst.msk [vmem:[#allocation3 + $0xd1] sm:$0x1] %vm119, 0.0
    %165 = vst.msk [vmem:[#allocation3 + $0xe9] sm:$0x1] %vm119, 0.0
    %166 = vst.msk [vmem:[#allocation3 + $0x101] sm:$0x1] %vm119, 0.0
    %167 = vst.msk [vmem:[#allocation3 + $0x119] sm:$0x1] %vm119, 0.0
    %168 = vst.msk [vmem:[#allocation3 + $0x131] sm:$0x1] %vm119, 0.0
    %169 = vst.msk [vmem:[#allocation3 + $0x149] sm:$0x1] %vm119, 0.0
    %170 = vst.msk [vmem:[#allocation3 + $0x161] sm:$0x1] %vm119, 0.0
    %171 = vst.msk [vmem:[#allocation3 + $0x179] sm:$0x1] %vm119, 0.0
    %172 = vst.msk [vmem:[#allocation3 + $0x191] sm:$0x1] %vm119, 0.0
    %173 = vst.msk [vmem:[#allocation3 + $0x1a9] sm:$0x1] %vm119, 0.0
    %174 = vst.msk [vmem:[#allocation3 + $0x1c1] sm:$0x1] %vm119, 0.0
    %175 = vst.msk [vmem:[#allocation3 + $0x1d9] sm:$0x1] %vm119, 0.0
    %176 = vst.msk [vmem:[#allocation3 + $0x1f1] sm:$0x1] %vm119, 0.0
    %177 = vst.msk [vmem:[#allocation3 + $0x209] sm:$0x1] %vm119, 0.0
    %178 = vst.msk [vmem:[#allocation3 + $0x221] sm:$0x1] %vm119, 0.0
    %179 = vst.msk [vmem:[#allocation3 + $0x239] sm:$0x1] %vm119, 0.0
    %180 = vst.msk [vmem:[#allocation3 + $0x251] sm:$0x1] %vm119, 0.0
    %181 = vst.msk [vmem:[#allocation3 + $0x269] sm:$0x1] %vm119, 0.0
    %182 = vst.msk [vmem:[#allocation3 + $0x281] sm:$0x1] %vm119, 0.0
    %183 = vst.msk [vmem:[#allocation3 + $0x299] sm:$0x1] %vm119, 0.0
    %184 = vst.msk [vmem:[#allocation3 + $0x2b1] sm:$0x1] %vm119, 0.0
    %185 = vst.msk [vmem:[#allocation3 + $0x2c9] sm:$0x1] %vm119, 0.0
    %186 = vst.msk [vmem:[#allocation3 + $0x2e1] sm:$0x1] %vm119, 0.0
    %187 = vst.msk [vmem:[#allocation3 + $0x2f9] sm:$0x1] %vm119, 0.0
    %188 = vst.msk [vmem:[#allocation3 + $0x311] sm:$0x1] %vm119, 0.0
    %189 = vst.msk [vmem:[#allocation3 + $0x329] sm:$0x1] %vm119, 0.0
    %190 = vst.msk [vmem:[#allocation3 + $0x341] sm:$0x1] %vm119, 0.0
    %191 = vst.msk [vmem:[#allocation3 + $0x359] sm:$0x1] %vm119, 0.0
    %192 = vst.msk [vmem:[#allocation4] sm:$0xff] %vm18, 0.0
    %193 = vst.msk [vmem:[#allocation4 + $0x8] sm:$0xff] %vm18, 0.0
    %194 = vst.msk [vmem:[#allocation4 + $0x10] sm:$0xff] %vm18, 0.0
    %195 = vst.msk [vmem:[#allocation4 + $0x1b0] sm:$0xff] %vm18, 0.0
    %196 = vst.msk [vmem:[#allocation4 + $0x1b8] sm:$0xff] %vm18, 0.0
    %197 = vst.msk [vmem:[#allocation4 + $0x1c0] sm:$0xff] %vm18, 0.0
    %s198 = scalar_lea.vmem [#allocation4], 408
    %199 = vst.msk [vmem:[%s198] sm:$0xff] %vm18, 0.0
    %200 = vst.msk [vmem:[%s198 + $0x8] sm:$0xff] %vm18, 0.0
    %201 = vst.msk [vmem:[%s198 + $0x10] sm:$0xff] %vm18, 0.0
    %202 = vst.msk [vmem:[%s198 + $0x1b0] sm:$0xff] %vm18, 0.0
    %203 = vst.msk [vmem:[%s198 + $0x1b8] sm:$0xff] %vm18, 0.0
    %204 = vst.msk [vmem:[%s198 + $0x1c0] sm:$0xff] %vm18, 0.0
    %205 = vst.msk [vmem:[#allocation4] sm:$0x1] %vm32, 0.0
    %206 = vst.msk [vmem:[#allocation4 + $0x18] sm:$0x1] %vm32, 0.0
    %207 = vst.msk [vmem:[#allocation4 + $0x30] sm:$0x1] %vm32, 0.0
    %208 = vst.msk [vmem:[#allocation4 + $0x48] sm:$0x1] %vm32, 0.0
    %209 = vst.msk [vmem:[#allocation4 + $0x60] sm:$0x1] %vm32, 0.0
    %210 = vst.msk [vmem:[#allocation4 + $0x78] sm:$0x1] %vm32, 0.0
    %211 = vst.msk [vmem:[#allocation4 + $0x90] sm:$0x1] %vm32, 0.0
    %212 = vst.msk [vmem:[#allocation4 + $0xa8] sm:$0x1] %vm32, 0.0
    %213 = vst.msk [vmem:[#allocation4 + $0xc0] sm:$0x1] %vm32, 0.0
    %214 = vst.msk [vmem:[#allocation4 + $0xd8] sm:$0x1] %vm32, 0.0
    %215 = vst.msk [vmem:[#allocation4 + $0xf0] sm:$0x1] %vm32, 0.0
    %216 = vst.msk [vmem:[#allocation4 + $0x108] sm:$0x1] %vm32, 0.0
    %217 = vst.msk [vmem:[#allocation4 + $0x120] sm:$0x1] %vm32, 0.0
    %218 = vst.msk [vmem:[#allocation4 + $0x138] sm:$0x1] %vm32, 0.0
    %219 = vst.msk [vmem:[#allocation4 + $0x150] sm:$0x1] %vm32, 0.0
    %220 = vst.msk [vmem:[#allocation4 + $0x168] sm:$0x1] %vm32, 0.0
    %221 = vst.msk [vmem:[#allocation4 + $0x180] sm:$0x1] %vm32, 0.0
    %222 = vst.msk [vmem:[#allocation4 + $0x198] sm:$0x1] %vm32, 0.0
    %223 = vst.msk [vmem:[#allocation4 + $0x1b0] sm:$0x1] %vm32, 0.0
    %224 = vst.msk [vmem:[#allocation4 + $0x1c8] sm:$0x1] %vm32, 0.0
    %225 = vst.msk [vmem:[#allocation4 + $0x1e0] sm:$0x1] %vm32, 0.0
    %226 = vst.msk [vmem:[#allocation4 + $0x1f8] sm:$0x1] %vm32, 0.0
    %227 = vst.msk [vmem:[#allocation4 + $0x210] sm:$0x1] %vm32, 0.0
    %228 = vst.msk [vmem:[#allocation4 + $0x228] sm:$0x1] %vm32, 0.0
    %229 = vst.msk [vmem:[#allocation4 + $0x240] sm:$0x1] %vm32, 0.0
    %230 = vst.msk [vmem:[#allocation4 + $0x258] sm:$0x1] %vm32, 0.0
    %231 = vst.msk [vmem:[#allocation4 + $0x270] sm:$0x1] %vm32, 0.0
    %232 = vst.msk [vmem:[#allocation4 + $0x288] sm:$0x1] %vm32, 0.0
    %233 = vst.msk [vmem:[#allocation4 + $0x2a0] sm:$0x1] %vm32, 0.0
    %234 = vst.msk [vmem:[#allocation4 + $0x2b8] sm:$0x1] %vm32, 0.0
    %235 = vst.msk [vmem:[#allocation4 + $0x2d0] sm:$0x1] %vm32, 0.0
    %236 = vst.msk [vmem:[#allocation4 + $0x2e8] sm:$0x1] %vm32, 0.0
    %237 = vst.msk [vmem:[#allocation4 + $0x300] sm:$0x1] %vm32, 0.0
    %238 = vst.msk [vmem:[#allocation4 + $0x318] sm:$0x1] %vm32, 0.0
    %239 = vst.msk [vmem:[#allocation4 + $0x330] sm:$0x1] %vm32, 0.0
    %240 = vst.msk [vmem:[#allocation4 + $0x348] sm:$0x1] %vm32, 0.0
    %241 = vst.msk [vmem:[#allocation4 + $0x11] sm:$0x1] %vm32, 0.0
    %242 = vst.msk [vmem:[#allocation4 + $0x29] sm:$0x1] %vm32, 0.0
    %243 = vst.msk [vmem:[#allocation4 + $0x41] sm:$0x1] %vm32, 0.0
    %244 = vst.msk [vmem:[#allocation4 + $0x59] sm:$0x1] %vm32, 0.0
    %245 = vst.msk [vmem:[#allocation4 + $0x71] sm:$0x1] %vm32, 0.0
    %246 = vst.msk [vmem:[#allocation4 + $0x89] sm:$0x1] %vm32, 0.0
    %247 = vst.msk [vmem:[#allocation4 + $0xa1] sm:$0x1] %vm32, 0.0
    %248 = vst.msk [vmem:[#allocation4 + $0xb9] sm:$0x1] %vm32, 0.0
    %249 = vst.msk [vmem:[#allocation4 + $0xd1] sm:$0x1] %vm32, 0.0
    %250 = vst.msk [vmem:[#allocation4 + $0xe9] sm:$0x1] %vm32, 0.0
    %251 = vst.msk [vmem:[#allocation4 + $0x101] sm:$0x1] %vm32, 0.0
    %252 = vst.msk [vmem:[#allocation4 + $0x119] sm:$0x1] %vm32, 0.0
    %253 = vst.msk [vmem:[#allocation4 + $0x131] sm:$0x1] %vm32, 0.0
    %254 = vst.msk [vmem:[#allocation4 + $0x149] sm:$0x1] %vm32, 0.0
    %255 = vst.msk [vmem:[#allocation4 + $0x161] sm:$0x1] %vm32, 0.0
    %256 = vst.msk [vmem:[#allocation4 + $0x179] sm:$0x1] %vm32, 0.0
    %257 = vst.msk [vmem:[#allocation4 + $0x191] sm:$0x1] %vm32, 0.0
    %258 = vst.msk [vmem:[#allocation4 + $0x1a9] sm:$0x1] %vm32, 0.0
    %259 = vst.msk [vmem:[#allocation4 + $0x1c1] sm:$0x1] %vm32, 0.0
    %260 = vst.msk [vmem:[#allocation4 + $0x1d9] sm:$0x1] %vm32, 0.0
    %261 = vst.msk [vmem:[#allocation4 + $0x1f1] sm:$0x1] %vm32, 0.0
    %262 = vst.msk [vmem:[#allocation4 + $0x209] sm:$0x1] %vm32, 0.0
    %263 = vst.msk [vmem:[#allocation4 + $0x221] sm:$0x1] %vm32, 0.0
    %264 = vst.msk [vmem:[#allocation4 + $0x239] sm:$0x1] %vm32, 0.0
    %265 = vst.msk [vmem:[#allocation4 + $0x251] sm:$0x1] %vm32, 0.0
    %266 = vst.msk [vmem:[#allocation4 + $0x269] sm:$0x1] %vm32, 0.0
    %267 = vst.msk [vmem:[#allocation4 + $0x281] sm:$0x1] %vm32, 0.0
    %268 = vst.msk [vmem:[#allocation4 + $0x299] sm:$0x1] %vm32, 0.0
    %269 = vst.msk [vmem:[#allocation4 + $0x2b1] sm:$0x1] %vm32, 0.0
    %270 = vst.msk [vmem:[#allocation4 + $0x2c9] sm:$0x1] %vm32, 0.0
    %271 = vst.msk [vmem:[#allocation4 + $0x2e1] sm:$0x1] %vm32, 0.0
    %272 = vst.msk [vmem:[#allocation4 + $0x2f9] sm:$0x1] %vm32, 0.0
    %273 = vst.msk [vmem:[#allocation4 + $0x311] sm:$0x1] %vm32, 0.0
    %274 = vst.msk [vmem:[#allocation4 + $0x329] sm:$0x1] %vm32, 0.0
    %275 = vst.msk [vmem:[#allocation4 + $0x341] sm:$0x1] %vm32, 0.0
    %276 = vst.msk [vmem:[#allocation4 + $0x359] sm:$0x1] %vm32, 0.0
    %v277 = vld [vmem:[%s0] sm:$0xff]
    %v278 = vld [vmem:[%s0 + $0x8] sm:$0xff]
    %v279 = vld [vmem:[%s0 + $0x10] sm:$0xff]
    %v280 = vld [vmem:[%s0 + $0x18] sm:$0xff]
    %v281 = vld [vmem:[%s0 + $0x20] sm:$0xff]
    %v282 = vld [vmem:[%s0 + $0x28] sm:$0xff]
    %v283 = vld [vmem:[%s0 + $0x30] sm:$0xff]
    %v284 = vld [vmem:[%s0 + $0x38] sm:$0xff]
    %v285 = vld [vmem:[%s0 + $0x40] sm:$0xff]
    %v286 = vld [vmem:[%s0 + $0x48] sm:$0xff]
    %v287 = vld [vmem:[%s0 + $0x50] sm:$0xff]
    %v288 = vld [vmem:[%s0 + $0x58] sm:$0xff]
    %v289 = vld [vmem:[%s0 + $0x60] sm:$0xff]
    %v290 = vld [vmem:[%s0 + $0x68] sm:$0xff]
    %v291 = vld [vmem:[%s0 + $0x70] sm:$0xff]
    %v292 = vld [vmem:[%s0 + $0x78] sm:$0xff]
    %v293 = vld [vmem:[%s0 + $0x80] sm:$0xff]
    %v294 = vld [vmem:[%s0 + $0x88] sm:$0xff]
    %v295 = vld [vmem:[%s0 + $0x90] sm:$0xff]
    %v296 = vld [vmem:[%s0 + $0x98] sm:$0xff]
    %v297 = vld [vmem:[%s0 + $0xa0] sm:$0xff]
    %v298 = vld [vmem:[%s0 + $0xa8] sm:$0xff]
    %v299 = vld [vmem:[%s0 + $0xb0] sm:$0xff]
    %v300 = vld [vmem:[%s0 + $0xb8] sm:$0xff]
    %v301 = vld [vmem:[%s0 + $0xc0] sm:$0xff]
    %v302 = vld [vmem:[%s0 + $0xc8] sm:$0xff]
    %v303 = vld [vmem:[%s0 + $0xd0] sm:$0xff]
    %v304 = vld [vmem:[%s0 + $0xd8] sm:$0xff]
    %v305 = vld [vmem:[%s0 + $0xe0] sm:$0xff]
    %v306 = vld [vmem:[%s0 + $0xe8] sm:$0xff]
    %v307 = vld [vmem:[%s0 + $0xf0] sm:$0xff]
    %v308 = vld [vmem:[%s0 + $0xf8] sm:$0xff]
    %v309 = vld [vmem:[%s0 + $0x100] sm:$0xff]
    %v310 = vld [vmem:[%s0 + $0x108] sm:$0xff]
    %v311 = vld [vmem:[%s0 + $0x110] sm:$0xff]
    %v312 = vld [vmem:[%s0 + $0x118] sm:$0xff]
    %v313 = vld [vmem:[%s0 + $0x120] sm:$0xff]
    %v314 = vld [vmem:[%s0 + $0x128] sm:$0xff]
    %v315 = vld [vmem:[%s0 + $0x130] sm:$0xff]
    %v316 = vld [vmem:[%s0 + $0x138] sm:$0xff]
    %v317 = vld [vmem:[%s0 + $0x140] sm:$0xff]
    %v318 = vld [vmem:[%s0 + $0x148] sm:$0xff]
    %v319 = vld [vmem:[%s0 + $0x150] sm:$0xff]
    %v320 = vld [vmem:[%s0 + $0x158] sm:$0xff]
    %v321 = vld [vmem:[%s0 + $0x160] sm:$0xff]
    %v322 = vld [vmem:[%s0 + $0x168] sm:$0xff]
    %v323 = vld [vmem:[%s0 + $0x170] sm:$0xff]
    %v324 = vld [vmem:[%s0 + $0x178] sm:$0xff]
    %v325 = vld [vmem:[%s0 + $0x180] sm:$0xff]
    %v326 = vld [vmem:[%s0 + $0x188] sm:$0xff]
    %v327 = vld [vmem:[%s0 + $0x190] sm:$0xff]
    %v328 = vld [vmem:[%s0 + $0x198] sm:$0xff]
    %v329 = vld [vmem:[%s0 + $0x1a0] sm:$0xff]
    %v330 = vld [vmem:[%s0 + $0x1a8] sm:$0xff]
    %v331 = vld [vmem:[%s0 + $0x1b0] sm:$0xff]
    %v332 = vld [vmem:[%s0 + $0x1b8] sm:$0xff]
    %v333 = vld [vmem:[%s0 + $0x1c0] sm:$0xff]
    %v334 = vld [vmem:[%s0 + $0x1c8] sm:$0xff]
    %v335 = vld [vmem:[%s0 + $0x1d0] sm:$0xff]
    %v336 = vld [vmem:[%s0 + $0x1d8] sm:$0xff]
    %v337 = vld [vmem:[%s0 + $0x1e0] sm:$0xff]
    %v338 = vld [vmem:[%s0 + $0x1e8] sm:$0xff]
    %v339 = vld [vmem:[%s0 + $0x1f0] sm:$0xff]
    %v340 = vld [vmem:[%s0 + $0x1f8] sm:$0xff]
    %s341 = scalar_lea.vmem [#allocation2], 24
    %342 = vst.msk [vmem:[%s341 + $0x1] sm:$0xff] %vm18, %v277
    %343 = vst.msk [vmem:[%s341 + $0x9] sm:$0xff] %vm18, %v278
    %344 = vst.msk [vmem:[%s341 + $0x19] sm:$0xff] %vm18, %v279
    %345 = vst.msk [vmem:[%s341 + $0x21] sm:$0xff] %vm18, %v280
    %346 = vst.msk [vmem:[%s341 + $0x31] sm:$0xff] %vm18, %v281
    %347 = vst.msk [vmem:[%s341 + $0x39] sm:$0xff] %vm18, %v282
    %348 = vst.msk [vmem:[%s341 + $0x49] sm:$0xff] %vm18, %v283
    %349 = vst.msk [vmem:[%s341 + $0x51] sm:$0xff] %vm18, %v284
    %350 = vst.msk [vmem:[%s341 + $0x61] sm:$0xff] %vm18, %v285
    %351 = vst.msk [vmem:[%s341 + $0x69] sm:$0xff] %vm18, %v286
    %352 = vst.msk [vmem:[%s341 + $0x79] sm:$0xff] %vm18, %v287
    %353 = vst.msk [vmem:[%s341 + $0x81] sm:$0xff] %vm18, %v288
    %354 = vst.msk [vmem:[%s341 + $0x91] sm:$0xff] %vm18, %v289
    %355 = vst.msk [vmem:[%s341 + $0x99] sm:$0xff] %vm18, %v290
    %356 = vst.msk [vmem:[%s341 + $0xa9] sm:$0xff] %vm18, %v291
    %357 = vst.msk [vmem:[%s341 + $0xb1] sm:$0xff] %vm18, %v292
    %358 = vst.msk [vmem:[%s341 + $0xc1] sm:$0xff] %vm18, %v293
    %359 = vst.msk [vmem:[%s341 + $0xc9] sm:$0xff] %vm18, %v294
    %360 = vst.msk [vmem:[%s341 + $0xd9] sm:$0xff] %vm18, %v295
    %361 = vst.msk [vmem:[%s341 + $0xe1] sm:$0xff] %vm18, %v296
    %362 = vst.msk [vmem:[%s341 + $0xf1] sm:$0xff] %vm18, %v297
    %363 = vst.msk [vmem:[%s341 + $0xf9] sm:$0xff] %vm18, %v298
    %364 = vst.msk [vmem:[%s341 + $0x109] sm:$0xff] %vm18, %v299
    %365 = vst.msk [vmem:[%s341 + $0x111] sm:$0xff] %vm18, %v300
    %366 = vst.msk [vmem:[%s341 + $0x121] sm:$0xff] %vm18, %v301
    %367 = vst.msk [vmem:[%s341 + $0x129] sm:$0xff] %vm18, %v302
    %368 = vst.msk [vmem:[%s341 + $0x139] sm:$0xff] %vm18, %v303
    %369 = vst.msk [vmem:[%s341 + $0x141] sm:$0xff] %vm18, %v304
    %370 = vst.msk [vmem:[%s341 + $0x151] sm:$0xff] %vm18, %v305
    %371 = vst.msk [vmem:[%s341 + $0x159] sm:$0xff] %vm18, %v306
    %372 = vst.msk [vmem:[%s341 + $0x169] sm:$0xff] %vm18, %v307
    %373 = vst.msk [vmem:[%s341 + $0x171] sm:$0xff] %vm18, %v308
    %374 = vst.msk [vmem:[%s341 + $0x1b1] sm:$0xff] %vm18, %v309
    %375 = vst.msk [vmem:[%s341 + $0x1b9] sm:$0xff] %vm18, %v310
    %376 = vst.msk [vmem:[%s341 + $0x1c9] sm:$0xff] %vm18, %v311
    %377 = vst.msk [vmem:[%s341 + $0x1d1] sm:$0xff] %vm18, %v312
    %378 = vst.msk [vmem:[%s341 + $0x1e1] sm:$0xff] %vm18, %v313
    %379 = vst.msk [vmem:[%s341 + $0x1e9] sm:$0xff] %vm18, %v314
    %380 = vst.msk [vmem:[%s341 + $0x1f9] sm:$0xff] %vm18, %v315
    %381 = vst.msk [vmem:[%s341 + $0x201] sm:$0xff] %vm18, %v316
    %382 = vst.msk [vmem:[%s341 + $0x211] sm:$0xff] %vm18, %v317
    %383 = vst.msk [vmem:[%s341 + $0x219] sm:$0xff] %vm18, %v318
    %384 = vst.msk [vmem:[%s341 + $0x229] sm:$0xff] %vm18, %v319
    %385 = vst.msk [vmem:[%s341 + $0x231] sm:$0xff] %vm18, %v320
    %386 = vst.msk [vmem:[%s341 + $0x241] sm:$0xff] %vm18, %v321
    %387 = vst.msk [vmem:[%s341 + $0x249] sm:$0xff] %vm18, %v322
    %388 = vst.msk [vmem:[%s341 + $0x259] sm:$0xff] %vm18, %v323
    %389 = vst.msk [vmem:[%s341 + $0x261] sm:$0xff] %vm18, %v324
    %390 = vst.msk [vmem:[%s341 + $0x271] sm:$0xff] %vm18, %v325
    %391 = vst.msk [vmem:[%s341 + $0x279] sm:$0xff] %vm18, %v326
    %392 = vst.msk [vmem:[%s341 + $0x289] sm:$0xff] %vm18, %v327
    %393 = vst.msk [vmem:[%s341 + $0x291] sm:$0xff] %vm18, %v328
    %394 = vst.msk [vmem:[%s341 + $0x2a1] sm:$0xff] %vm18, %v329
    %395 = vst.msk [vmem:[%s341 + $0x2a9] sm:$0xff] %vm18, %v330
    %396 = vst.msk [vmem:[%s341 + $0x2b9] sm:$0xff] %vm18, %v331
    %397 = vst.msk [vmem:[%s341 + $0x2c1] sm:$0xff] %vm18, %v332
    %398 = vst.msk [vmem:[%s341 + $0x2d1] sm:$0xff] %vm18, %v333
    %399 = vst.msk [vmem:[%s341 + $0x2d9] sm:$0xff] %vm18, %v334
    %400 = vst.msk [vmem:[%s341 + $0x2e9] sm:$0xff] %vm18, %v335
    %401 = vst.msk [vmem:[%s341 + $0x2f1] sm:$0xff] %vm18, %v336
    %402 = vst.msk [vmem:[%s341 + $0x301] sm:$0xff] %vm18, %v337
    %403 = vst.msk [vmem:[%s341 + $0x309] sm:$0xff] %vm18, %v338
    %404 = vst.msk [vmem:[%s341 + $0x319] sm:$0xff] %vm18, %v339
    %405 = vst.msk [vmem:[%s341 + $0x321] sm:$0xff] %vm18, %v340
    %v406 = vld [vmem:[#allocation2] sm:$0xff]
    %v407 = vld [vmem:[#allocation2 + $0x8] sm:$0xff]
    %v408 = vld [vmem:[#allocation2 + $0x10] sm:$0xff]
    %v409 = vld [vmem:[#allocation2 + $0x18] sm:$0xff]
    %v410 = vld [vmem:[#allocation2 + $0x20] sm:$0xff]
    %v411 = vld [vmem:[#allocation2 + $0x28] sm:$0xff]
    %v412 = vld [vmem:[#allocation2 + $0x30] sm:$0xff]
    %v413 = vld [vmem:[#allocation2 + $0x38] sm:$0xff]
    %v414 = vld [vmem:[#allocation2 + $0x40] sm:$0xff]
    %v415 = vld [vmem:[#allocation2 + $0x48] sm:$0xff]
    %v416 = vld [vmem:[#allocation2 + $0x50] sm:$0xff]
    %v417 = vld [vmem:[#allocation2 + $0x58] sm:$0xff]
    %v418 = vld [vmem:[#allocation2 + $0x60] sm:$0xff]
    %v419 = vld [vmem:[#allocation2 + $0x68] sm:$0xff]
    %v420 = vld [vmem:[#allocation2 + $0x70] sm:$0xff]
    %v421 = vld [vmem:[#allocation2 + $0x78] sm:$0xff]
    %v422 = vld [vmem:[#allocation2 + $0x80] sm:$0xff]
    %v423 = vld [vmem:[#allocation2 + $0x88] sm:$0xff]
    %v424 = vld [vmem:[#allocation2 + $0x90] sm:$0xff]
    %v425 = vld [vmem:[#allocation2 + $0x98] sm:$0xff]
    %v426 = vld [vmem:[#allocation2 + $0xa0] sm:$0xff]
    %v427 = vld [vmem:[#allocation2 + $0xa8] sm:$0xff]
    %v428 = vld [vmem:[#allocation2 + $0xb0] sm:$0xff]
    %v429 = vld [vmem:[#allocation2 + $0xb8] sm:$0xff]
    %v430 = vld [vmem:[#allocation2 + $0xc0] sm:$0xff]
    %v431 = vld [vmem:[#allocation2 + $0xc8] sm:$0xff]
    %v432 = vld [vmem:[#allocation2 + $0xd0] sm:$0xff]
    %v433 = vld [vmem:[#allocation2 + $0xd8] sm:$0xff]
    %v434 = vld [vmem:[#allocation2 + $0xe0] sm:$0xff]
    %v435 = vld [vmem:[#allocation2 + $0xe8] sm:$0xff]
    %v436 = vld [vmem:[#allocation2 + $0xf0] sm:$0xff]
    %v437 = vld [vmem:[#allocation2 + $0xf8] sm:$0xff]
    %v438 = vld [vmem:[#allocation2 + $0x100] sm:$0xff]
    %v439 = vld [vmem:[#allocation2 + $0x108] sm:$0xff]
    %v440 = vld [vmem:[#allocation2 + $0x110] sm:$0xff]
    %v441 = vld [vmem:[#allocation2 + $0x118] sm:$0xff]
    %v442 = vld [vmem:[#allocation2 + $0x120] sm:$0xff]
    %v443 = vld [vmem:[#allocation2 + $0x128] sm:$0xff]
    %v444 = vld [vmem:[#allocation2 + $0x130] sm:$0xff]
    %v445 = vld [vmem:[#allocation2 + $0x138] sm:$0xff]
    %v446 = vld [vmem:[#allocation2 + $0x140] sm:$0xff]
    %v447 = vld [vmem:[#allocation2 + $0x148] sm:$0xff]
    %v448 = vld [vmem:[#allocation2 + $0x150] sm:$0xff]
    %v449 = vld [vmem:[#allocation2 + $0x158] sm:$0xff]
    %v450 = vld [vmem:[#allocation2 + $0x160] sm:$0xff]
    %v451 = vld [vmem:[#allocation2 + $0x168] sm:$0xff]
    %v452 = vld [vmem:[#allocation2 + $0x170] sm:$0xff]
    %v453 = vld [vmem:[#allocation2 + $0x178] sm:$0xff]
    %v454 = vld [vmem:[#allocation2 + $0x180] sm:$0xff]
    %v455 = vld [vmem:[#allocation2 + $0x188] sm:$0xff]
    %v456 = vld [vmem:[#allocation2 + $0x190] sm:$0xff]
    %v457 = vld [vmem:[#allocation2 + $0x198] sm:$0xff]
    %v458 = vld [vmem:[#allocation2 + $0x1a0] sm:$0xff]
    %v459 = vld [vmem:[#allocation2 + $0x1a8] sm:$0xff]
    %v460 = vld [vmem:[#allocation2 + $0x1b0] sm:$0xff]
    %v461 = vld [vmem:[#allocation2 + $0x1b8] sm:$0xff]
    %v462 = vld [vmem:[#allocation2 + $0x1c0] sm:$0xff]
    %v463 = vld [vmem:[#allocation2 + $0x1c8] sm:$0xff]
    %v464 = vld [vmem:[#allocation2 + $0x1d0] sm:$0xff]
    %v465 = vld [vmem:[#allocation2 + $0x1d8] sm:$0xff]
    %v466 = vld [vmem:[#allocation2 + $0x1e0] sm:$0xff]
    %v467 = vld [vmem:[#allocation2 + $0x1e8] sm:$0xff]
    %v468 = vld [vmem:[#allocation2 + $0x1f0] sm:$0xff]
    %v469 = vld [vmem:[#allocation2 + $0x1f8] sm:$0xff]
    %v470 = vld [vmem:[#allocation2 + $0x200] sm:$0xff]
    %v471 = vld [vmem:[#allocation2 + $0x208] sm:$0xff]
    %v472 = vld [vmem:[#allocation2 + $0x210] sm:$0xff]
    %v473 = vld [vmem:[#allocation2 + $0x218] sm:$0xff]
    %v474 = vld [vmem:[#allocation2 + $0x220] sm:$0xff]
    %v475 = vld [vmem:[#allocation2 + $0x228] sm:$0xff]
    %v476 = vld [vmem:[#allocation2 + $0x230] sm:$0xff]
    %v477 = vld [vmem:[#allocation2 + $0x238] sm:$0xff]
    %v478 = vld [vmem:[#allocation2 + $0x240] sm:$0xff]
    %v479 = vld [vmem:[#allocation2 + $0x248] sm:$0xff]
    %v480 = vld [vmem:[#allocation2 + $0x250] sm:$0xff]
    %v481 = vld [vmem:[#allocation2 + $0x258] sm:$0xff]
    %v482 = vld [vmem:[#allocation2 + $0x260] sm:$0xff]
    %v483 = vld [vmem:[#allocation2 + $0x268] sm:$0xff]
    %v484 = vld [vmem:[#allocation2 + $0x270] sm:$0xff]
    %v485 = vld [vmem:[#allocation2 + $0x278] sm:$0xff]
    %v486 = vld [vmem:[#allocation2 + $0x280] sm:$0xff]
    %v487 = vld [vmem:[#allocation2 + $0x288] sm:$0xff]
    %v488 = vld [vmem:[#allocation2 + $0x290] sm:$0xff]
    %v489 = vld [vmem:[#allocation2 + $0x298] sm:$0xff]
    %v490 = vld [vmem:[#allocation2 + $0x2a0] sm:$0xff]
    %v491 = vld [vmem:[#allocation2 + $0x2a8] sm:$0xff]
    %v492 = vld [vmem:[#allocation2 + $0x2b0] sm:$0xff]
    %v493 = vld [vmem:[#allocation2 + $0x2b8] sm:$0xff]
    %v494 = vld [vmem:[#allocation2 + $0x2c0] sm:$0xff]
    %v495 = vld [vmem:[#allocation2 + $0x2c8] sm:$0xff]
    %v496 = vld [vmem:[#allocation2 + $0x2d0] sm:$0xff]
    %v497 = vld [vmem:[#allocation2 + $0x2d8] sm:$0xff]
    %v498 = vld [vmem:[#allocation2 + $0x2e0] sm:$0xff]
    %v499 = vld [vmem:[#allocation2 + $0x2e8] sm:$0xff]
    %v500 = vld [vmem:[#allocation2 + $0x2f0] sm:$0xff]
    %v501 = vld [vmem:[#allocation2 + $0x2f8] sm:$0xff]
    %v502 = vld [vmem:[#allocation2 + $0x300] sm:$0xff]
    %v503 = vld [vmem:[#allocation2 + $0x308] sm:$0xff]
    %v504 = vld [vmem:[#allocation2 + $0x310] sm:$0xff]
    %v505 = vld [vmem:[#allocation2 + $0x318] sm:$0xff]
    %v506 = vld [vmem:[#allocation2 + $0x320] sm:$0xff]
    %v507 = vld [vmem:[#allocation2 + $0x328] sm:$0xff]
    %v508 = vld [vmem:[#allocation2 + $0x330] sm:$0xff]
    %v509 = vld [vmem:[#allocation2 + $0x338] sm:$0xff]
    %v510 = vld [vmem:[#allocation2 + $0x340] sm:$0xff]
    %v511 = vld [vmem:[#allocation2 + $0x348] sm:$0xff]
    %v512 = vld [vmem:[#allocation2 + $0x350] sm:$0xff]
    %v513 = vld [vmem:[#allocation2 + $0x358] sm:$0xff]
    %vm610 = vcmask 1046528
    %v611 = vrot.slane %v406, 1
    %v612 = vrot.slane %v407, 1
    %v613 = vsel %vm610, %v611, %v612
    %v614 = vrot.slane %v408, 1
    %v615 = vsel %vm610, %v612, %v614
    %v616 = vrot.slane %v409, 1
    %v617 = vrot.slane %v410, 1
    %v618 = vsel %vm610, %v616, %v617
    %v619 = vrot.slane %v411, 1
    %v620 = vsel %vm610, %v617, %v619
    %v621 = vrot.slane %v412, 1
    %v622 = vrot.slane %v413, 1
    %v623 = vsel %vm610, %v621, %v622
    %v624 = vrot.slane %v414, 1
    %v625 = vsel %vm610, %v622, %v624
    %v626 = vrot.slane %v415, 1
    %v627 = vrot.slane %v416, 1
    %v628 = vsel %vm610, %v626, %v627
    %v629 = vrot.slane %v417, 1
    %v630 = vsel %vm610, %v627, %v629
    %v631 = vrot.slane %v418, 1
    %v632 = vrot.slane %v419, 1
    %v633 = vsel %vm610, %v631, %v632
    %v634 = vrot.slane %v420, 1
    %v635 = vsel %vm610, %v632, %v634
    %v636 = vrot.slane %v421, 1
    %v637 = vrot.slane %v422, 1
    %v638 = vsel %vm610, %v636, %v637
    %v639 = vrot.slane %v423, 1
    %v640 = vsel %vm610, %v637, %v639
    %v641 = vrot.slane %v424, 1
    %v642 = vrot.slane %v425, 1
    %v643 = vsel %vm610, %v641, %v642
    %v644 = vrot.slane %v426, 1
    %v645 = vsel %vm610, %v642, %v644
    %v646 = vrot.slane %v427, 1
    %v647 = vrot.slane %v428, 1
    %v648 = vsel %vm610, %v646, %v647
    %v649 = vrot.slane %v429, 1
    %v650 = vsel %vm610, %v647, %v649
    %v651 = vrot.slane %v430, 1
    %v652 = vrot.slane %v431, 1
    %v653 = vsel %vm610, %v651, %v652
    %v654 = vrot.slane %v432, 1
    %v655 = vsel %vm610, %v652, %v654
    %v656 = vrot.slane %v433, 1
    %v657 = vrot.slane %v434, 1
    %v658 = vsel %vm610, %v656, %v657
    %v659 = vrot.slane %v435, 1
    %v660 = vsel %vm610, %v657, %v659
    %v661 = vrot.slane %v436, 1
    %v662 = vrot.slane %v437, 1
    %v663 = vsel %vm610, %v661, %v662
    %v664 = vrot.slane %v438, 1
    %v665 = vsel %vm610, %v662, %v664
    %v666 = vrot.slane %v439, 1
    %v667 = vrot.slane %v440, 1
    %v668 = vsel %vm610, %v666, %v667
    %v669 = vrot.slane %v441, 1
    %v670 = vsel %vm610, %v667, %v669
    %v671 = vrot.slane %v442, 1
    %v672 = vrot.slane %v443, 1
    %v673 = vsel %vm610, %v671, %v672
    %v674 = vrot.slane %v444, 1
    %v675 = vsel %vm610, %v672, %v674
    %v676 = vrot.slane %v445, 1
    %v677 = vrot.slane %v446, 1
    %v678 = vsel %vm610, %v676, %v677
    %v679 = vrot.slane %v447, 1
    %v680 = vsel %vm610, %v677, %v679
    %v681 = vrot.slane %v448, 1
    %v682 = vrot.slane %v449, 1
    %v683 = vsel %vm610, %v681, %v682
    %v684 = vrot.slane %v450, 1
    %v685 = vsel %vm610, %v682, %v684
    %v686 = vrot.slane %v451, 1
    %v687 = vrot.slane %v452, 1
    %v688 = vsel %vm610, %v686, %v687
    %v689 = vrot.slane %v453, 1
    %v690 = vsel %vm610, %v687, %v689
    %v691 = vrot.slane %v460, 1
    %v692 = vrot.slane %v461, 1
    %v693 = vsel %vm610, %v691, %v692
    %v694 = vrot.slane %v462, 1
    %v695 = vsel %vm610, %v692, %v694
    %v696 = vrot.slane %v463, 1
    %v697 = vrot.slane %v464, 1
    %v698 = vsel %vm610, %v696, %v697
    %v699 = vrot.slane %v465, 1
    %v700 = vsel %vm610, %v697, %v699
    %v701 = vrot.slane %v466, 1
    %v702 = vrot.slane %v467, 1
    %v703 = vsel %vm610, %v701, %v702
    %v704 = vrot.slane %v468, 1
    %v705 = vsel %vm610, %v702, %v704
    %v706 = vrot.slane %v469, 1
    %v707 = vrot.slane %v470, 1
    %v708 = vsel %vm610, %v706, %v707
    %v709 = vrot.slane %v471, 1
    %v710 = vsel %vm610, %v707, %v709
    %v711 = vrot.slane %v472, 1
    %v712 = vrot.slane %v473, 1
    %v713 = vsel %vm610, %v711, %v712
    %v714 = vrot.slane %v474, 1
    %v715 = vsel %vm610, %v712, %v714
    %v716 = vrot.slane %v475, 1
    %v717 = vrot.slane %v476, 1
    %v718 = vsel %vm610, %v716, %v717
    %v719 = vrot.slane %v477, 1
    %v720 = vsel %vm610, %v717, %v719
    %v721 = vrot.slane %v478, 1
    %v722 = vrot.slane %v479, 1
    %v723 = vsel %vm610, %v721, %v722
    %v724 = vrot.slane %v480, 1
    %v725 = vsel %vm610, %v722, %v724
    %v726 = vrot.slane %v481, 1
    %v727 = vrot.slane %v482, 1
    %v728 = vsel %vm610, %v726, %v727
    %v729 = vrot.slane %v483, 1
    %v730 = vsel %vm610, %v727, %v729
    %v731 = vrot.slane %v484, 1
    %v732 = vrot.slane %v485, 1
    %v733 = vsel %vm610, %v731, %v732
    %v734 = vrot.slane %v486, 1
    %v735 = vsel %vm610, %v732, %v734
    %v736 = vrot.slane %v487, 1
    %v737 = vrot.slane %v488, 1
    %v738 = vsel %vm610, %v736, %v737
    %v739 = vrot.slane %v489, 1
    %v740 = vsel %vm610, %v737, %v739
    %v741 = vrot.slane %v490, 1
    %v742 = vrot.slane %v491, 1
    %v743 = vsel %vm610, %v741, %v742
    %v744 = vrot.slane %v492, 1
    %v745 = vsel %vm610, %v742, %v744
    %v746 = vrot.slane %v493, 1
    %v747 = vrot.slane %v494, 1
    %v748 = vsel %vm610, %v746, %v747
    %v749 = vrot.slane %v495, 1
    %v750 = vsel %vm610, %v747, %v749
    %v751 = vrot.slane %v496, 1
    %v752 = vrot.slane %v497, 1
    %v753 = vsel %vm610, %v751, %v752
    %v754 = vrot.slane %v498, 1
    %v755 = vsel %vm610, %v752, %v754
    %v756 = vrot.slane %v499, 1
    %v757 = vrot.slane %v500, 1
    %v758 = vsel %vm610, %v756, %v757
    %v759 = vrot.slane %v501, 1
    %v760 = vsel %vm610, %v757, %v759
    %v761 = vrot.slane %v502, 1
    %v762 = vrot.slane %v503, 1
    %v763 = vsel %vm610, %v761, %v762
    %v764 = vrot.slane %v504, 1
    %v765 = vsel %vm610, %v762, %v764
    %v766 = vrot.slane %v505, 1
    %v767 = vrot.slane %v506, 1
    %v768 = vsel %vm610, %v766, %v767
    %v769 = vrot.slane %v507, 1
    %v770 = vsel %vm610, %v767, %v769
    %vm771 = vcmask 1045504
    %v772 = vrot.slane %v406, 2
    %v773 = vrot.slane %v407, 2
    %v774 = vsel %vm771, %v772, %v773
    %v775 = vrot.slane %v408, 2
    %v776 = vsel %vm771, %v773, %v775
    %v777 = vrot.slane %v409, 2
    %v778 = vrot.slane %v410, 2
    %v779 = vsel %vm771, %v777, %v778
    %v780 = vrot.slane %v411, 2
    %v781 = vsel %vm771, %v778, %v780
    %v782 = vrot.slane %v412, 2
    %v783 = vrot.slane %v413, 2
    %v784 = vsel %vm771, %v782, %v783
    %v785 = vrot.slane %v414, 2
    %v786 = vsel %vm771, %v783, %v785
    %v787 = vrot.slane %v415, 2
    %v788 = vrot.slane %v416, 2
    %v789 = vsel %vm771, %v787, %v788
    %v790 = vrot.slane %v417, 2
    %v791 = vsel %vm771, %v788, %v790
    %v792 = vrot.slane %v418, 2
    %v793 = vrot.slane %v419, 2
    %v794 = vsel %vm771, %v792, %v793
    %v795 = vrot.slane %v420, 2
    %v796 = vsel %vm771, %v793, %v795
    %v797 = vrot.slane %v421, 2
    %v798 = vrot.slane %v422, 2
    %v799 = vsel %vm771, %v797, %v798
    %v800 = vrot.slane %v423, 2
    %v801 = vsel %vm771, %v798, %v800
    %v802 = vrot.slane %v424, 2
    %v803 = vrot.slane %v425, 2
    %v804 = vsel %vm771, %v802, %v803
    %v805 = vrot.slane %v426, 2
    %v806 = vsel %vm771, %v803, %v805
    %v807 = vrot.slane %v427, 2
    %v808 = vrot.slane %v428, 2
    %v809 = vsel %vm771, %v807, %v808
    %v810 = vrot.slane %v429, 2
    %v811 = vsel %vm771, %v808, %v810
    %v812 = vrot.slane %v430, 2
    %v813 = vrot.slane %v431, 2
    %v814 = vsel %vm771, %v812, %v813
    %v815 = vrot.slane %v432, 2
    %v816 = vsel %vm771, %v813, %v815
    %v817 = vrot.slane %v433, 2
    %v818 = vrot.slane %v434, 2
    %v819 = vsel %vm771, %v817, %v818
    %v820 = vrot.slane %v435, 2
    %v821 = vsel %vm771, %v818, %v820
    %v822 = vrot.slane %v436, 2
    %v823 = vrot.slane %v437, 2
    %v824 = vsel %vm771, %v822, %v823
    %v825 = vrot.slane %v438, 2
    %v826 = vsel %vm771, %v823, %v825
    %v827 = vrot.slane %v439, 2
    %v828 = vrot.slane %v440, 2
    %v829 = vsel %vm771, %v827, %v828
    %v830 = vrot.slane %v441, 2
    %v831 = vsel %vm771, %v828, %v830
    %v832 = vrot.slane %v442, 2
    %v833 = vrot.slane %v443, 2
    %v834 = vsel %vm771, %v832, %v833
    %v835 = vrot.slane %v444, 2
    %v836 = vsel %vm771, %v833, %v835
    %v837 = vrot.slane %v445, 2
    %v838 = vrot.slane %v446, 2
    %v839 = vsel %vm771, %v837, %v838
    %v840 = vrot.slane %v447, 2
    %v841 = vsel %vm771, %v838, %v840
    %v842 = vrot.slane %v448, 2
    %v843 = vrot.slane %v449, 2
    %v844 = vsel %vm771, %v842, %v843
    %v845 = vrot.slane %v450, 2
    %v846 = vsel %vm771, %v843, %v845
    %v847 = vrot.slane %v451, 2
    %v848 = vrot.slane %v452, 2
    %v849 = vsel %vm771, %v847, %v848
    %v850 = vrot.slane %v453, 2
    %v851 = vsel %vm771, %v848, %v850
    %v852 = vrot.slane %v460, 2
    %v853 = vrot.slane %v461, 2
    %v854 = vsel %vm771, %v852, %v853
    %v855 = vrot.slane %v462, 2
    %v856 = vsel %vm771, %v853, %v855
    %v857 = vrot.slane %v463, 2
    %v858 = vrot.slane %v464, 2
    %v859 = vsel %vm771, %v857, %v858
    %v860 = vrot.slane %v465, 2
    %v861 = vsel %vm771, %v858, %v860
    %v862 = vrot.slane %v466, 2
    %v863 = vrot.slane %v467, 2
    %v864 = vsel %vm771, %v862, %v863
    %v865 = vrot.slane %v468, 2
    %v866 = vsel %vm771, %v863, %v865
    %v867 = vrot.slane %v469, 2
    %v868 = vrot.slane %v470, 2
    %v869 = vsel %vm771, %v867, %v868
    %v870 = vrot.slane %v471, 2
    %v871 = vsel %vm771, %v868, %v870
    %v872 = vrot.slane %v472, 2
    %v873 = vrot.slane %v473, 2
    %v874 = vsel %vm771, %v872, %v873
    %v875 = vrot.slane %v474, 2
    %v876 = vsel %vm771, %v873, %v875
    %v877 = vrot.slane %v475, 2
    %v878 = vrot.slane %v476, 2
    %v879 = vsel %vm771, %v877, %v878
    %v880 = vrot.slane %v477, 2
    %v881 = vsel %vm771, %v878, %v880
    %v882 = vrot.slane %v478, 2
    %v883 = vrot.slane %v479, 2
    %v884 = vsel %vm771, %v882, %v883
    %v885 = vrot.slane %v480, 2
    %v886 = vsel %vm771, %v883, %v885
    %v887 = vrot.slane %v481, 2
    %v888 = vrot.slane %v482, 2
    %v889 = vsel %vm771, %v887, %v888
    %v890 = vrot.slane %v483, 2
    %v891 = vsel %vm771, %v888, %v890
    %v892 = vrot.slane %v484, 2
    %v893 = vrot.slane %v485, 2
    %v894 = vsel %vm771, %v892, %v893
    %v895 = vrot.slane %v486, 2
    %v896 = vsel %vm771, %v893, %v895
    %v897 = vrot.slane %v487, 2
    %v898 = vrot.slane %v488, 2
    %v899 = vsel %vm771, %v897, %v898
    %v900 = vrot.slane %v489, 2
    %v901 = vsel %vm771, %v898, %v900
    %v902 = vrot.slane %v490, 2
    %v903 = vrot.slane %v491, 2
    %v904 = vsel %vm771, %v902, %v903
    %v905 = vrot.slane %v492, 2
    %v906 = vsel %vm771, %v903, %v905
    %v907 = vrot.slane %v493, 2
    %v908 = vrot.slane %v494, 2
    %v909 = vsel %vm771, %v907, %v908
    %v910 = vrot.slane %v495, 2
    %v911 = vsel %vm771, %v908, %v910
    %v912 = vrot.slane %v496, 2
    %v913 = vrot.slane %v497, 2
    %v914 = vsel %vm771, %v912, %v913
    %v915 = vrot.slane %v498, 2
    %v916 = vsel %vm771, %v913, %v915
    %v917 = vrot.slane %v499, 2
    %v918 = vrot.slane %v500, 2
    %v919 = vsel %vm771, %v917, %v918
    %v920 = vrot.slane %v501, 2
    %v921 = vsel %vm771, %v918, %v920
    %v922 = vrot.slane %v502, 2
    %v923 = vrot.slane %v503, 2
    %v924 = vsel %vm771, %v922, %v923
    %v925 = vrot.slane %v504, 2
    %v926 = vsel %vm771, %v923, %v925
    %v927 = vrot.slane %v505, 2
    %v928 = vrot.slane %v506, 2
    %v929 = vsel %vm771, %v927, %v928
    %v930 = vrot.slane %v507, 2
    %v931 = vsel %vm771, %v928, %v930
    %v938 = vrot.slane %v454, 2
    %v939 = vrot.slane %v455, 2
    %v940 = vsel %vm771, %v938, %v939
    %v941 = vrot.slane %v456, 2
    %v942 = vsel %vm771, %v939, %v941
    %v943 = vrot.slane %v508, 2
    %v944 = vrot.slane %v509, 2
    %v945 = vsel %vm771, %v943, %v944
    %v946 = vrot.slane %v510, 2
    %v947 = vsel %vm771, %v944, %v946
    %v954 = vrot.slane %v454, 1
    %v955 = vrot.slane %v455, 1
    %v956 = vsel %vm610, %v954, %v955
    %v957 = vrot.slane %v456, 1
    %v958 = vsel %vm610, %v955, %v957
    %v959 = vrot.slane %v457, 1
    %v960 = vrot.slane %v458, 1
    %v961 = vsel %vm610, %v959, %v960
    %v962 = vrot.slane %v459, 1
    %v963 = vsel %vm610, %v960, %v962
    %v964 = vrot.slane %v508, 1
    %v965 = vrot.slane %v509, 1
    %v966 = vsel %vm610, %v964, %v965
    %v967 = vrot.slane %v510, 1
    %v968 = vsel %vm610, %v965, %v967
    %v969 = vrot.slane %v511, 1
    %v970 = vrot.slane %v512, 1
    %v971 = vsel %vm610, %v969, %v970
    %v972 = vrot.slane %v513, 1
    %v973 = vsel %vm610, %v970, %v972
    %v974 = vrot.slane %v457, 2
    %v975 = vrot.slane %v458, 2
    %v976 = vsel %vm771, %v974, %v975
    %v977 = vrot.slane %v459, 2
    %v978 = vsel %vm771, %v975, %v977
    %v979 = vrot.slane %v511, 2
    %v980 = vrot.slane %v512, 2
    %v981 = vsel %vm771, %v979, %v980
    %v982 = vrot.slane %v513, 2
    %v983 = vsel %vm771, %v980, %v982
    %984 = vrot.lane.b32.xlu0 %v613, 32
    %v985 = vpop.permute.xlu0 %984
    %986 = vrot.lane.b32.xlu0 %v615, 32
    %v987 = vpop.permute.xlu0 %986
    %988 = vrot.lane.b32.xlu0 %v618, 32
    %v989 = vpop.permute.xlu0 %988
    %990 = vrot.lane.b32.xlu0 %v620, 32
    %v991 = vpop.permute.xlu0 %990
    %992 = vrot.lane.b32.xlu0 %v623, 32
    %v993 = vpop.permute.xlu0 %992
    %994 = vrot.lane.b32.xlu0 %v625, 32
    %v995 = vpop.permute.xlu0 %994
    %996 = vrot.lane.b32.xlu0 %v628, 32
    %v997 = vpop.permute.xlu0 %996
    %998 = vrot.lane.b32.xlu0 %v630, 32
    %v999 = vpop.permute.xlu0 %998
    %1000 = vrot.lane.b32.xlu0 %v633, 32
    %v1001 = vpop.permute.xlu0 %1000
    %1002 = vrot.lane.b32.xlu0 %v635, 32
    %v1003 = vpop.permute.xlu0 %1002
    %1004 = vrot.lane.b32.xlu0 %v638, 32
    %v1005 = vpop.permute.xlu0 %1004
    %1006 = vrot.lane.b32.xlu0 %v640, 32
    %v1007 = vpop.permute.xlu0 %1006
    %1008 = vrot.lane.b32.xlu0 %v643, 32
    %v1009 = vpop.permute.xlu0 %1008
    %1010 = vrot.lane.b32.xlu0 %v645, 32
    %v1011 = vpop.permute.xlu0 %1010
    %1012 = vrot.lane.b32.xlu0 %v648, 32
    %v1013 = vpop.permute.xlu0 %1012
    %1014 = vrot.lane.b32.xlu0 %v650, 32
    %v1015 = vpop.permute.xlu0 %1014
    %1016 = vrot.lane.b32.xlu0 %v653, 32
    %v1017 = vpop.permute.xlu0 %1016
    %1018 = vrot.lane.b32.xlu0 %v655, 32
    %v1019 = vpop.permute.xlu0 %1018
    %1020 = vrot.lane.b32.xlu0 %v658, 32
    %v1021 = vpop.permute.xlu0 %1020
    %1022 = vrot.lane.b32.xlu0 %v660, 32
    %v1023 = vpop.permute.xlu0 %1022
    %1024 = vrot.lane.b32.xlu0 %v663, 32
    %v1025 = vpop.permute.xlu0 %1024
    %1026 = vrot.lane.b32.xlu0 %v665, 32
    %v1027 = vpop.permute.xlu0 %1026
    %1028 = vrot.lane.b32.xlu0 %v668, 32
    %v1029 = vpop.permute.xlu0 %1028
    %1030 = vrot.lane.b32.xlu0 %v670, 32
    %v1031 = vpop.permute.xlu0 %1030
    %1032 = vrot.lane.b32.xlu0 %v673, 32
    %v1033 = vpop.permute.xlu0 %1032
    %1034 = vrot.lane.b32.xlu0 %v675, 32
    %v1035 = vpop.permute.xlu0 %1034
    %1036 = vrot.lane.b32.xlu0 %v678, 32
    %v1037 = vpop.permute.xlu0 %1036
    %1038 = vrot.lane.b32.xlu0 %v680, 32
    %v1039 = vpop.permute.xlu0 %1038
    %1040 = vrot.lane.b32.xlu0 %v683, 32
    %v1041 = vpop.permute.xlu0 %1040
    %1042 = vrot.lane.b32.xlu0 %v685, 32
    %v1043 = vpop.permute.xlu0 %1042
    %1044 = vrot.lane.b32.xlu0 %v688, 32
    %v1045 = vpop.permute.xlu0 %1044
    %1046 = vrot.lane.b32.xlu0 %v690, 32
    %v1047 = vpop.permute.xlu0 %1046
    %1048 = vrot.lane.b32.xlu0 %v693, 32
    %v1049 = vpop.permute.xlu0 %1048
    %1050 = vrot.lane.b32.xlu0 %v695, 32
    %v1051 = vpop.permute.xlu0 %1050
    %1052 = vrot.lane.b32.xlu0 %v698, 32
    %v1053 = vpop.permute.xlu0 %1052
    %1054 = vrot.lane.b32.xlu0 %v700, 32
    %v1055 = vpop.permute.xlu0 %1054
    %1056 = vrot.lane.b32.xlu0 %v703, 32
    %v1057 = vpop.permute.xlu0 %1056
    %1058 = vrot.lane.b32.xlu0 %v705, 32
    %v1059 = vpop.permute.xlu0 %1058
    %1060 = vrot.lane.b32.xlu0 %v708, 32
    %v1061 = vpop.permute.xlu0 %1060
    %1062 = vrot.lane.b32.xlu0 %v710, 32
    %v1063 = vpop.permute.xlu0 %1062
    %1064 = vrot.lane.b32.xlu0 %v713, 32
    %v1065 = vpop.permute.xlu0 %1064
    %1066 = vrot.lane.b32.xlu0 %v715, 32
    %v1067 = vpop.permute.xlu0 %1066
    %1068 = vrot.lane.b32.xlu0 %v718, 32
    %v1069 = vpop.permute.xlu0 %1068
    %1070 = vrot.lane.b32.xlu0 %v720, 32
    %v1071 = vpop.permute.xlu0 %1070
    %1072 = vrot.lane.b32.xlu0 %v723, 32
    %v1073 = vpop.permute.xlu0 %1072
    %1074 = vrot.lane.b32.xlu0 %v725, 32
    %v1075 = vpop.permute.xlu0 %1074
    %1076 = vrot.lane.b32.xlu0 %v728, 32
    %v1077 = vpop.permute.xlu0 %1076
    %1078 = vrot.lane.b32.xlu0 %v730, 32
    %v1079 = vpop.permute.xlu0 %1078
    %1080 = vrot.lane.b32.xlu0 %v733, 32
    %v1081 = vpop.permute.xlu0 %1080
    %1082 = vrot.lane.b32.xlu0 %v735, 32
    %v1083 = vpop.permute.xlu0 %1082
    %1084 = vrot.lane.b32.xlu0 %v738, 32
    %v1085 = vpop.permute.xlu0 %1084
    %1086 = vrot.lane.b32.xlu0 %v740, 32
    %v1087 = vpop.permute.xlu0 %1086
    %1088 = vrot.lane.b32.xlu0 %v743, 32
    %v1089 = vpop.permute.xlu0 %1088
    %1090 = vrot.lane.b32.xlu0 %v745, 32
    %v1091 = vpop.permute.xlu0 %1090
    %1092 = vrot.lane.b32.xlu0 %v748, 32
    %v1093 = vpop.permute.xlu0 %1092
    %1094 = vrot.lane.b32.xlu0 %v750, 32
    %v1095 = vpop.permute.xlu0 %1094
    %1096 = vrot.lane.b32.xlu0 %v753, 32
    %v1097 = vpop.permute.xlu0 %1096
    %1098 = vrot.lane.b32.xlu0 %v755, 32
    %v1099 = vpop.permute.xlu0 %1098
    %1100 = vrot.lane.b32.xlu0 %v758, 32
    %v1101 = vpop.permute.xlu0 %1100
    %1102 = vrot.lane.b32.xlu0 %v760, 32
    %v1103 = vpop.permute.xlu0 %1102
    %1104 = vrot.lane.b32.xlu0 %v763, 32
    %v1105 = vpop.permute.xlu0 %1104
    %1106 = vrot.lane.b32.xlu0 %v765, 32
    %v1107 = vpop.permute.xlu0 %1106
    %1108 = vrot.lane.b32.xlu0 %v768, 32
    %v1109 = vpop.permute.xlu0 %1108
    %1110 = vrot.lane.b32.xlu0 %v770, 32
    %v1111 = vpop.permute.xlu0 %1110
    %1176 = vrot.lane.b32.xlu0 %v774, 64
    %v1177 = vpop.permute.xlu0 %1176
    %1178 = vrot.lane.b32.xlu0 %v776, 64
    %v1179 = vpop.permute.xlu0 %1178
    %1180 = vrot.lane.b32.xlu0 %v779, 64
    %v1181 = vpop.permute.xlu0 %1180
    %1182 = vrot.lane.b32.xlu0 %v781, 64
    %v1183 = vpop.permute.xlu0 %1182
    %1184 = vrot.lane.b32.xlu0 %v784, 64
    %v1185 = vpop.permute.xlu0 %1184
    %1186 = vrot.lane.b32.xlu0 %v786, 64
    %v1187 = vpop.permute.xlu0 %1186
    %1188 = vrot.lane.b32.xlu0 %v789, 64
    %v1189 = vpop.permute.xlu0 %1188
    %1190 = vrot.lane.b32.xlu0 %v791, 64
    %v1191 = vpop.permute.xlu0 %1190
    %1192 = vrot.lane.b32.xlu0 %v794, 64
    %v1193 = vpop.permute.xlu0 %1192
    %1194 = vrot.lane.b32.xlu0 %v796, 64
    %v1195 = vpop.permute.xlu0 %1194
    %1196 = vrot.lane.b32.xlu0 %v799, 64
    %v1197 = vpop.permute.xlu0 %1196
    %1198 = vrot.lane.b32.xlu0 %v801, 64
    %v1199 = vpop.permute.xlu0 %1198
    %1200 = vrot.lane.b32.xlu0 %v804, 64
    %v1201 = vpop.permute.xlu0 %1200
    %1202 = vrot.lane.b32.xlu0 %v806, 64
    %v1203 = vpop.permute.xlu0 %1202
    %1204 = vrot.lane.b32.xlu0 %v809, 64
    %v1205 = vpop.permute.xlu0 %1204
    %1206 = vrot.lane.b32.xlu0 %v811, 64
    %v1207 = vpop.permute.xlu0 %1206
    %1208 = vrot.lane.b32.xlu0 %v814, 64
    %v1209 = vpop.permute.xlu0 %1208
    %1210 = vrot.lane.b32.xlu0 %v816, 64
    %v1211 = vpop.permute.xlu0 %1210
    %1212 = vrot.lane.b32.xlu0 %v819, 64
    %v1213 = vpop.permute.xlu0 %1212
    %1214 = vrot.lane.b32.xlu0 %v821, 64
    %v1215 = vpop.permute.xlu0 %1214
    %1216 = vrot.lane.b32.xlu0 %v824, 64
    %v1217 = vpop.permute.xlu0 %1216
    %1218 = vrot.lane.b32.xlu0 %v826, 64
    %v1219 = vpop.permute.xlu0 %1218
    %1220 = vrot.lane.b32.xlu0 %v829, 64
    %v1221 = vpop.permute.xlu0 %1220
    %1222 = vrot.lane.b32.xlu0 %v831, 64
    %v1223 = vpop.permute.xlu0 %1222
    %1224 = vrot.lane.b32.xlu0 %v834, 64
    %v1225 = vpop.permute.xlu0 %1224
    %1226 = vrot.lane.b32.xlu0 %v836, 64
    %v1227 = vpop.permute.xlu0 %1226
    %1228 = vrot.lane.b32.xlu0 %v839, 64
    %v1229 = vpop.permute.xlu0 %1228
    %1230 = vrot.lane.b32.xlu0 %v841, 64
    %v1231 = vpop.permute.xlu0 %1230
    %1232 = vrot.lane.b32.xlu0 %v844, 64
    %v1233 = vpop.permute.xlu0 %1232
    %1234 = vrot.lane.b32.xlu0 %v846, 64
    %v1235 = vpop.permute.xlu0 %1234
    %1236 = vrot.lane.b32.xlu0 %v849, 64
    %v1237 = vpop.permute.xlu0 %1236
    %1238 = vrot.lane.b32.xlu0 %v851, 64
    %v1239 = vpop.permute.xlu0 %1238
    %1240 = vrot.lane.b32.xlu0 %v854, 64
    %v1241 = vpop.permute.xlu0 %1240
    %1242 = vrot.lane.b32.xlu0 %v856, 64
    %v1243 = vpop.permute.xlu0 %1242
    %1244 = vrot.lane.b32.xlu0 %v859, 64
    %v1245 = vpop.permute.xlu0 %1244
    %1246 = vrot.lane.b32.xlu0 %v861, 64
    %v1247 = vpop.permute.xlu0 %1246
    %1248 = vrot.lane.b32.xlu0 %v864, 64
    %v1249 = vpop.permute.xlu0 %1248
    %1250 = vrot.lane.b32.xlu0 %v866, 64
    %v1251 = vpop.permute.xlu0 %1250
    %1252 = vrot.lane.b32.xlu0 %v869, 64
    %v1253 = vpop.permute.xlu0 %1252
    %1254 = vrot.lane.b32.xlu0 %v871, 64
    %v1255 = vpop.permute.xlu0 %1254
    %1256 = vrot.lane.b32.xlu0 %v874, 64
    %v1257 = vpop.permute.xlu0 %1256
    %1258 = vrot.lane.b32.xlu0 %v876, 64
    %v1259 = vpop.permute.xlu0 %1258
    %1260 = vrot.lane.b32.xlu0 %v879, 64
    %v1261 = vpop.permute.xlu0 %1260
    %1262 = vrot.lane.b32.xlu0 %v881, 64
    %v1263 = vpop.permute.xlu0 %1262
    %1264 = vrot.lane.b32.xlu0 %v884, 64
    %v1265 = vpop.permute.xlu0 %1264
    %1266 = vrot.lane.b32.xlu0 %v886, 64
    %v1267 = vpop.permute.xlu0 %1266
    %1268 = vrot.lane.b32.xlu0 %v889, 64
    %v1269 = vpop.permute.xlu0 %1268
    %1270 = vrot.lane.b32.xlu0 %v891, 64
    %v1271 = vpop.permute.xlu0 %1270
    %1272 = vrot.lane.b32.xlu0 %v894, 64
    %v1273 = vpop.permute.xlu0 %1272
    %1274 = vrot.lane.b32.xlu0 %v896, 64
    %v1275 = vpop.permute.xlu0 %1274
    %1276 = vrot.lane.b32.xlu0 %v899, 64
    %v1277 = vpop.permute.xlu0 %1276
    %1278 = vrot.lane.b32.xlu0 %v901, 64
    %v1279 = vpop.permute.xlu0 %1278
    %1280 = vrot.lane.b32.xlu0 %v904, 64
    %v1281 = vpop.permute.xlu0 %1280
    %1282 = vrot.lane.b32.xlu0 %v906, 64
    %v1283 = vpop.permute.xlu0 %1282
    %1284 = vrot.lane.b32.xlu0 %v909, 64
    %v1285 = vpop.permute.xlu0 %1284
    %1286 = vrot.lane.b32.xlu0 %v911, 64
    %v1287 = vpop.permute.xlu0 %1286
    %1288 = vrot.lane.b32.xlu0 %v914, 64
    %v1289 = vpop.permute.xlu0 %1288
    %1290 = vrot.lane.b32.xlu0 %v916, 64
    %v1291 = vpop.permute.xlu0 %1290
    %1292 = vrot.lane.b32.xlu0 %v919, 64
    %v1293 = vpop.permute.xlu0 %1292
    %1294 = vrot.lane.b32.xlu0 %v921, 64
    %v1295 = vpop.permute.xlu0 %1294
    %1296 = vrot.lane.b32.xlu0 %v924, 64
    %v1297 = vpop.permute.xlu0 %1296
    %1298 = vrot.lane.b32.xlu0 %v926, 64
    %v1299 = vpop.permute.xlu0 %1298
    %1300 = vrot.lane.b32.xlu0 %v929, 64
    %v1301 = vpop.permute.xlu0 %1300
    %1302 = vrot.lane.b32.xlu0 %v931, 64
    %v1303 = vpop.permute.xlu0 %1302
    %1368 = vrot.lane.b32.xlu0 %v409, 96
    %v1369 = vpop.permute.xlu0 %1368
    %1370 = vrot.lane.b32.xlu0 %v410, 96
    %v1371 = vpop.permute.xlu0 %1370
    %1372 = vrot.lane.b32.xlu0 %v412, 96
    %v1373 = vpop.permute.xlu0 %1372
    %1374 = vrot.lane.b32.xlu0 %v413, 96
    %v1375 = vpop.permute.xlu0 %1374
    %1376 = vrot.lane.b32.xlu0 %v415, 96
    %v1377 = vpop.permute.xlu0 %1376
    %1378 = vrot.lane.b32.xlu0 %v416, 96
    %v1379 = vpop.permute.xlu0 %1378
    %1380 = vrot.lane.b32.xlu0 %v418, 96
    %v1381 = vpop.permute.xlu0 %1380
    %1382 = vrot.lane.b32.xlu0 %v419, 96
    %v1383 = vpop.permute.xlu0 %1382
    %1384 = vrot.lane.b32.xlu0 %v421, 96
    %v1385 = vpop.permute.xlu0 %1384
    %1386 = vrot.lane.b32.xlu0 %v422, 96
    %v1387 = vpop.permute.xlu0 %1386
    %1388 = vrot.lane.b32.xlu0 %v424, 96
    %v1389 = vpop.permute.xlu0 %1388
    %1390 = vrot.lane.b32.xlu0 %v425, 96
    %v1391 = vpop.permute.xlu0 %1390
    %1392 = vrot.lane.b32.xlu0 %v427, 96
    %v1393 = vpop.permute.xlu0 %1392
    %1394 = vrot.lane.b32.xlu0 %v428, 96
    %v1395 = vpop.permute.xlu0 %1394
    %1396 = vrot.lane.b32.xlu0 %v430, 96
    %v1397 = vpop.permute.xlu0 %1396
    %1398 = vrot.lane.b32.xlu0 %v431, 96
    %v1399 = vpop.permute.xlu0 %1398
    %1400 = vrot.lane.b32.xlu0 %v433, 96
    %v1401 = vpop.permute.xlu0 %1400
    %1402 = vrot.lane.b32.xlu0 %v434, 96
    %v1403 = vpop.permute.xlu0 %1402
    %1404 = vrot.lane.b32.xlu0 %v436, 96
    %v1405 = vpop.permute.xlu0 %1404
    %1406 = vrot.lane.b32.xlu0 %v437, 96
    %v1407 = vpop.permute.xlu0 %1406
    %1408 = vrot.lane.b32.xlu0 %v439, 96
    %v1409 = vpop.permute.xlu0 %1408
    %1410 = vrot.lane.b32.xlu0 %v440, 96
    %v1411 = vpop.permute.xlu0 %1410
    %1412 = vrot.lane.b32.xlu0 %v442, 96
    %v1413 = vpop.permute.xlu0 %1412
    %1414 = vrot.lane.b32.xlu0 %v443, 96
    %v1415 = vpop.permute.xlu0 %1414
    %1416 = vrot.lane.b32.xlu0 %v445, 96
    %v1417 = vpop.permute.xlu0 %1416
    %1418 = vrot.lane.b32.xlu0 %v446, 96
    %v1419 = vpop.permute.xlu0 %1418
    %1420 = vrot.lane.b32.xlu0 %v448, 96
    %v1421 = vpop.permute.xlu0 %1420
    %1422 = vrot.lane.b32.xlu0 %v449, 96
    %v1423 = vpop.permute.xlu0 %1422
    %1424 = vrot.lane.b32.xlu0 %v451, 96
    %v1425 = vpop.permute.xlu0 %1424
    %1426 = vrot.lane.b32.xlu0 %v452, 96
    %v1427 = vpop.permute.xlu0 %1426
    %1428 = vrot.lane.b32.xlu0 %v454, 96
    %v1429 = vpop.permute.xlu0 %1428
    %1430 = vrot.lane.b32.xlu0 %v455, 96
    %v1431 = vpop.permute.xlu0 %1430
    %1432 = vrot.lane.b32.xlu0 %v463, 96
    %v1433 = vpop.permute.xlu0 %1432
    %1434 = vrot.lane.b32.xlu0 %v464, 96
    %v1435 = vpop.permute.xlu0 %1434
    %1436 = vrot.lane.b32.xlu0 %v466, 96
    %v1437 = vpop.permute.xlu0 %1436
    %1438 = vrot.lane.b32.xlu0 %v467, 96
    %v1439 = vpop.permute.xlu0 %1438
    %1440 = vrot.lane.b32.xlu0 %v469, 96
    %v1441 = vpop.permute.xlu0 %1440
    %1442 = vrot.lane.b32.xlu0 %v470, 96
    %v1443 = vpop.permute.xlu0 %1442
    %1444 = vrot.lane.b32.xlu0 %v472, 96
    %v1445 = vpop.permute.xlu0 %1444
    %1446 = vrot.lane.b32.xlu0 %v473, 96
    %v1447 = vpop.permute.xlu0 %1446
    %1448 = vrot.lane.b32.xlu0 %v475, 96
    %v1449 = vpop.permute.xlu0 %1448
    %1450 = vrot.lane.b32.xlu0 %v476, 96
    %v1451 = vpop.permute.xlu0 %1450
    %1452 = vrot.lane.b32.xlu0 %v478, 96
    %v1453 = vpop.permute.xlu0 %1452
    %1454 = vrot.lane.b32.xlu0 %v479, 96
    %v1455 = vpop.permute.xlu0 %1454
    %1456 = vrot.lane.b32.xlu0 %v481, 96
    %v1457 = vpop.permute.xlu0 %1456
    %1458 = vrot.lane.b32.xlu0 %v482, 96
    %v1459 = vpop.permute.xlu0 %1458
    %1460 = vrot.lane.b32.xlu0 %v484, 96
    %v1461 = vpop.permute.xlu0 %1460
    %1462 = vrot.lane.b32.xlu0 %v485, 96
    %v1463 = vpop.permute.xlu0 %1462
    %1464 = vrot.lane.b32.xlu0 %v487, 96
    %v1465 = vpop.permute.xlu0 %1464
    %1466 = vrot.lane.b32.xlu0 %v488, 96
    %v1467 = vpop.permute.xlu0 %1466
    %1468 = vrot.lane.b32.xlu0 %v490, 96
    %v1469 = vpop.permute.xlu0 %1468
    %1470 = vrot.lane.b32.xlu0 %v491, 96
    %v1471 = vpop.permute.xlu0 %1470
    %1472 = vrot.lane.b32.xlu0 %v493, 96
    %v1473 = vpop.permute.xlu0 %1472
    %1474 = vrot.lane.b32.xlu0 %v494, 96
    %v1475 = vpop.permute.xlu0 %1474
    %1476 = vrot.lane.b32.xlu0 %v496, 96
    %v1477 = vpop.permute.xlu0 %1476
    %1478 = vrot.lane.b32.xlu0 %v497, 96
    %v1479 = vpop.permute.xlu0 %1478
    %1480 = vrot.lane.b32.xlu0 %v499, 96
    %v1481 = vpop.permute.xlu0 %1480
    %1482 = vrot.lane.b32.xlu0 %v500, 96
    %v1483 = vpop.permute.xlu0 %1482
    %1484 = vrot.lane.b32.xlu0 %v502, 96
    %v1485 = vpop.permute.xlu0 %1484
    %1486 = vrot.lane.b32.xlu0 %v503, 96
    %v1487 = vpop.permute.xlu0 %1486
    %1488 = vrot.lane.b32.xlu0 %v505, 96
    %v1489 = vpop.permute.xlu0 %1488
    %1490 = vrot.lane.b32.xlu0 %v506, 96
    %v1491 = vpop.permute.xlu0 %1490
    %1492 = vrot.lane.b32.xlu0 %v508, 96
    %v1493 = vpop.permute.xlu0 %1492
    %1494 = vrot.lane.b32.xlu0 %v509, 96
    %v1495 = vpop.permute.xlu0 %1494
    %1560 = vrot.lane.b32.xlu0 %v779, 32
    %v1561 = vpop.permute.xlu0 %1560
    %1562 = vrot.lane.b32.xlu0 %v781, 32
    %v1563 = vpop.permute.xlu0 %1562
    %1564 = vrot.lane.b32.xlu0 %v784, 32
    %v1565 = vpop.permute.xlu0 %1564
    %1566 = vrot.lane.b32.xlu0 %v786, 32
    %v1567 = vpop.permute.xlu0 %1566
    %1568 = vrot.lane.b32.xlu0 %v789, 32
    %v1569 = vpop.permute.xlu0 %1568
    %1570 = vrot.lane.b32.xlu0 %v791, 32
    %v1571 = vpop.permute.xlu0 %1570
    %1572 = vrot.lane.b32.xlu0 %v794, 32
    %v1573 = vpop.permute.xlu0 %1572
    %1574 = vrot.lane.b32.xlu0 %v796, 32
    %v1575 = vpop.permute.xlu0 %1574
    %1576 = vrot.lane.b32.xlu0 %v799, 32
    %v1577 = vpop.permute.xlu0 %1576
    %1578 = vrot.lane.b32.xlu0 %v801, 32
    %v1579 = vpop.permute.xlu0 %1578
    %1580 = vrot.lane.b32.xlu0 %v804, 32
    %v1581 = vpop.permute.xlu0 %1580
    %1582 = vrot.lane.b32.xlu0 %v806, 32
    %v1583 = vpop.permute.xlu0 %1582
    %1584 = vrot.lane.b32.xlu0 %v809, 32
    %v1585 = vpop.permute.xlu0 %1584
    %1586 = vrot.lane.b32.xlu0 %v811, 32
    %v1587 = vpop.permute.xlu0 %1586
    %1588 = vrot.lane.b32.xlu0 %v814, 32
    %v1589 = vpop.permute.xlu0 %1588
    %1590 = vrot.lane.b32.xlu0 %v816, 32
    %v1591 = vpop.permute.xlu0 %1590
    %1592 = vrot.lane.b32.xlu0 %v819, 32
    %v1593 = vpop.permute.xlu0 %1592
    %1594 = vrot.lane.b32.xlu0 %v821, 32
    %v1595 = vpop.permute.xlu0 %1594
    %1596 = vrot.lane.b32.xlu0 %v824, 32
    %v1597 = vpop.permute.xlu0 %1596
    %1598 = vrot.lane.b32.xlu0 %v826, 32
    %v1599 = vpop.permute.xlu0 %1598
    %1600 = vrot.lane.b32.xlu0 %v829, 32
    %v1601 = vpop.permute.xlu0 %1600
    %1602 = vrot.lane.b32.xlu0 %v831, 32
    %v1603 = vpop.permute.xlu0 %1602
    %1604 = vrot.lane.b32.xlu0 %v834, 32
    %v1605 = vpop.permute.xlu0 %1604
    %1606 = vrot.lane.b32.xlu0 %v836, 32
    %v1607 = vpop.permute.xlu0 %1606
    %1608 = vrot.lane.b32.xlu0 %v839, 32
    %v1609 = vpop.permute.xlu0 %1608
    %1610 = vrot.lane.b32.xlu0 %v841, 32
    %v1611 = vpop.permute.xlu0 %1610
    %1612 = vrot.lane.b32.xlu0 %v844, 32
    %v1613 = vpop.permute.xlu0 %1612
    %1614 = vrot.lane.b32.xlu0 %v846, 32
    %v1615 = vpop.permute.xlu0 %1614
    %1616 = vrot.lane.b32.xlu0 %v849, 32
    %v1617 = vpop.permute.xlu0 %1616
    %1618 = vrot.lane.b32.xlu0 %v851, 32
    %v1619 = vpop.permute.xlu0 %1618
    %1620 = vrot.lane.b32.xlu0 %v940, 32
    %v1621 = vpop.permute.xlu0 %1620
    %1622 = vrot.lane.b32.xlu0 %v942, 32
    %v1623 = vpop.permute.xlu0 %1622
    %1624 = vrot.lane.b32.xlu0 %v859, 32
    %v1625 = vpop.permute.xlu0 %1624
    %1626 = vrot.lane.b32.xlu0 %v861, 32
    %v1627 = vpop.permute.xlu0 %1626
    %1628 = vrot.lane.b32.xlu0 %v864, 32
    %v1629 = vpop.permute.xlu0 %1628
    %1630 = vrot.lane.b32.xlu0 %v866, 32
    %v1631 = vpop.permute.xlu0 %1630
    %1632 = vrot.lane.b32.xlu0 %v869, 32
    %v1633 = vpop.permute.xlu0 %1632
    %1634 = vrot.lane.b32.xlu0 %v871, 32
    %v1635 = vpop.permute.xlu0 %1634
    %1636 = vrot.lane.b32.xlu0 %v874, 32
    %v1637 = vpop.permute.xlu0 %1636
    %1638 = vrot.lane.b32.xlu0 %v876, 32
    %v1639 = vpop.permute.xlu0 %1638
    %1640 = vrot.lane.b32.xlu0 %v879, 32
    %v1641 = vpop.permute.xlu0 %1640
    %1642 = vrot.lane.b32.xlu0 %v881, 32
    %v1643 = vpop.permute.xlu0 %1642
    %1644 = vrot.lane.b32.xlu0 %v884, 32
    %v1645 = vpop.permute.xlu0 %1644
    %1646 = vrot.lane.b32.xlu0 %v886, 32
    %v1647 = vpop.permute.xlu0 %1646
    %1648 = vrot.lane.b32.xlu0 %v889, 32
    %v1649 = vpop.permute.xlu0 %1648
    %1650 = vrot.lane.b32.xlu0 %v891, 32
    %v1651 = vpop.permute.xlu0 %1650
    %1652 = vrot.lane.b32.xlu0 %v894, 32
    %v1653 = vpop.permute.xlu0 %1652
    %1654 = vrot.lane.b32.xlu0 %v896, 32
    %v1655 = vpop.permute.xlu0 %1654
    %1656 = vrot.lane.b32.xlu0 %v899, 32
    %v1657 = vpop.permute.xlu0 %1656
    %1658 = vrot.lane.b32.xlu0 %v901, 32
    %v1659 = vpop.permute.xlu0 %1658
    %1660 = vrot.lane.b32.xlu0 %v904, 32
    %v1661 = vpop.permute.xlu0 %1660
    %1662 = vrot.lane.b32.xlu0 %v906, 32
    %v1663 = vpop.permute.xlu0 %1662
    %1664 = vrot.lane.b32.xlu0 %v909, 32
    %v1665 = vpop.permute.xlu0 %1664
    %1666 = vrot.lane.b32.xlu0 %v911, 32
    %v1667 = vpop.permute.xlu0 %1666
    %1668 = vrot.lane.b32.xlu0 %v914, 32
    %v1669 = vpop.permute.xlu0 %1668
    %1670 = vrot.lane.b32.xlu0 %v916, 32
    %v1671 = vpop.permute.xlu0 %1670
    %1672 = vrot.lane.b32.xlu0 %v919, 32
    %v1673 = vpop.permute.xlu0 %1672
    %1674 = vrot.lane.b32.xlu0 %v921, 32
    %v1675 = vpop.permute.xlu0 %1674
    %1676 = vrot.lane.b32.xlu0 %v924, 32
    %v1677 = vpop.permute.xlu0 %1676
    %1678 = vrot.lane.b32.xlu0 %v926, 32
    %v1679 = vpop.permute.xlu0 %1678
    %1680 = vrot.lane.b32.xlu0 %v929, 32
    %v1681 = vpop.permute.xlu0 %1680
    %1682 = vrot.lane.b32.xlu0 %v931, 32
    %v1683 = vpop.permute.xlu0 %1682
    %1684 = vrot.lane.b32.xlu0 %v945, 32
    %v1685 = vpop.permute.xlu0 %1684
    %1686 = vrot.lane.b32.xlu0 %v947, 32
    %v1687 = vpop.permute.xlu0 %1686
    %1752 = vrot.lane.b32.xlu0 %v412, 64
    %v1753 = vpop.permute.xlu0 %1752
    %1754 = vrot.lane.b32.xlu0 %v413, 64
    %v1755 = vpop.permute.xlu0 %1754
    %1756 = vrot.lane.b32.xlu0 %v415, 64
    %v1757 = vpop.permute.xlu0 %1756
    %1758 = vrot.lane.b32.xlu0 %v416, 64
    %v1759 = vpop.permute.xlu0 %1758
    %1760 = vrot.lane.b32.xlu0 %v418, 64
    %v1761 = vpop.permute.xlu0 %1760
    %1762 = vrot.lane.b32.xlu0 %v419, 64
    %v1763 = vpop.permute.xlu0 %1762
    %1764 = vrot.lane.b32.xlu0 %v421, 64
    %v1765 = vpop.permute.xlu0 %1764
    %1766 = vrot.lane.b32.xlu0 %v422, 64
    %v1767 = vpop.permute.xlu0 %1766
    %1768 = vrot.lane.b32.xlu0 %v424, 64
    %v1769 = vpop.permute.xlu0 %1768
    %1770 = vrot.lane.b32.xlu0 %v425, 64
    %v1771 = vpop.permute.xlu0 %1770
    %1772 = vrot.lane.b32.xlu0 %v427, 64
    %v1773 = vpop.permute.xlu0 %1772
    %1774 = vrot.lane.b32.xlu0 %v428, 64
    %v1775 = vpop.permute.xlu0 %1774
    %1776 = vrot.lane.b32.xlu0 %v430, 64
    %v1777 = vpop.permute.xlu0 %1776
    %1778 = vrot.lane.b32.xlu0 %v431, 64
    %v1779 = vpop.permute.xlu0 %1778
    %1780 = vrot.lane.b32.xlu0 %v433, 64
    %v1781 = vpop.permute.xlu0 %1780
    %1782 = vrot.lane.b32.xlu0 %v434, 64
    %v1783 = vpop.permute.xlu0 %1782
    %1784 = vrot.lane.b32.xlu0 %v436, 64
    %v1785 = vpop.permute.xlu0 %1784
    %1786 = vrot.lane.b32.xlu0 %v437, 64
    %v1787 = vpop.permute.xlu0 %1786
    %1788 = vrot.lane.b32.xlu0 %v439, 64
    %v1789 = vpop.permute.xlu0 %1788
    %1790 = vrot.lane.b32.xlu0 %v440, 64
    %v1791 = vpop.permute.xlu0 %1790
    %1792 = vrot.lane.b32.xlu0 %v442, 64
    %v1793 = vpop.permute.xlu0 %1792
    %1794 = vrot.lane.b32.xlu0 %v443, 64
    %v1795 = vpop.permute.xlu0 %1794
    %1796 = vrot.lane.b32.xlu0 %v445, 64
    %v1797 = vpop.permute.xlu0 %1796
    %1798 = vrot.lane.b32.xlu0 %v446, 64
    %v1799 = vpop.permute.xlu0 %1798
    %1800 = vrot.lane.b32.xlu0 %v448, 64
    %v1801 = vpop.permute.xlu0 %1800
    %1802 = vrot.lane.b32.xlu0 %v449, 64
    %v1803 = vpop.permute.xlu0 %1802
    %1804 = vrot.lane.b32.xlu0 %v451, 64
    %v1805 = vpop.permute.xlu0 %1804
    %1806 = vrot.lane.b32.xlu0 %v452, 64
    %v1807 = vpop.permute.xlu0 %1806
    %1808 = vrot.lane.b32.xlu0 %v454, 64
    %v1809 = vpop.permute.xlu0 %1808
    %1810 = vrot.lane.b32.xlu0 %v455, 64
    %v1811 = vpop.permute.xlu0 %1810
    %1812 = vrot.lane.b32.xlu0 %v457, 64
    %v1813 = vpop.permute.xlu0 %1812
    %1814 = vrot.lane.b32.xlu0 %v458, 64
    %v1815 = vpop.permute.xlu0 %1814
    %1816 = vrot.lane.b32.xlu0 %v466, 64
    %v1817 = vpop.permute.xlu0 %1816
    %1818 = vrot.lane.b32.xlu0 %v467, 64
    %v1819 = vpop.permute.xlu0 %1818
    %1820 = vrot.lane.b32.xlu0 %v469, 64
    %v1821 = vpop.permute.xlu0 %1820
    %1822 = vrot.lane.b32.xlu0 %v470, 64
    %v1823 = vpop.permute.xlu0 %1822
    %1824 = vrot.lane.b32.xlu0 %v472, 64
    %v1825 = vpop.permute.xlu0 %1824
    %1826 = vrot.lane.b32.xlu0 %v473, 64
    %v1827 = vpop.permute.xlu0 %1826
    %1828 = vrot.lane.b32.xlu0 %v475, 64
    %v1829 = vpop.permute.xlu0 %1828
    %1830 = vrot.lane.b32.xlu0 %v476, 64
    %v1831 = vpop.permute.xlu0 %1830
    %1832 = vrot.lane.b32.xlu0 %v478, 64
    %v1833 = vpop.permute.xlu0 %1832
    %1834 = vrot.lane.b32.xlu0 %v479, 64
    %v1835 = vpop.permute.xlu0 %1834
    %1836 = vrot.lane.b32.xlu0 %v481, 64
    %v1837 = vpop.permute.xlu0 %1836
    %1838 = vrot.lane.b32.xlu0 %v482, 64
    %v1839 = vpop.permute.xlu0 %1838
    %1840 = vrot.lane.b32.xlu0 %v484, 64
    %v1841 = vpop.permute.xlu0 %1840
    %1842 = vrot.lane.b32.xlu0 %v485, 64
    %v1843 = vpop.permute.xlu0 %1842
    %1844 = vrot.lane.b32.xlu0 %v487, 64
    %v1845 = vpop.permute.xlu0 %1844
    %1846 = vrot.lane.b32.xlu0 %v488, 64
    %v1847 = vpop.permute.xlu0 %1846
    %1848 = vrot.lane.b32.xlu0 %v490, 64
    %v1849 = vpop.permute.xlu0 %1848
    %1850 = vrot.lane.b32.xlu0 %v491, 64
    %v1851 = vpop.permute.xlu0 %1850
    %1852 = vrot.lane.b32.xlu0 %v493, 64
    %v1853 = vpop.permute.xlu0 %1852
    %1854 = vrot.lane.b32.xlu0 %v494, 64
    %v1855 = vpop.permute.xlu0 %1854
    %1856 = vrot.lane.b32.xlu0 %v496, 64
    %v1857 = vpop.permute.xlu0 %1856
    %1858 = vrot.lane.b32.xlu0 %v497, 64
    %v1859 = vpop.permute.xlu0 %1858
    %1860 = vrot.lane.b32.xlu0 %v499, 64
    %v1861 = vpop.permute.xlu0 %1860
    %1862 = vrot.lane.b32.xlu0 %v500, 64
    %v1863 = vpop.permute.xlu0 %1862
    %1864 = vrot.lane.b32.xlu0 %v502, 64
    %v1865 = vpop.permute.xlu0 %1864
    %1866 = vrot.lane.b32.xlu0 %v503, 64
    %v1867 = vpop.permute.xlu0 %1866
    %1868 = vrot.lane.b32.xlu0 %v505, 64
    %v1869 = vpop.permute.xlu0 %1868
    %1870 = vrot.lane.b32.xlu0 %v506, 64
    %v1871 = vpop.permute.xlu0 %1870
    %1872 = vrot.lane.b32.xlu0 %v508, 64
    %v1873 = vpop.permute.xlu0 %1872
    %1874 = vrot.lane.b32.xlu0 %v509, 64
    %v1875 = vpop.permute.xlu0 %1874
    %1876 = vrot.lane.b32.xlu0 %v511, 64
    %v1877 = vpop.permute.xlu0 %1876
    %1878 = vrot.lane.b32.xlu0 %v512, 64
    %v1879 = vpop.permute.xlu0 %1878
    %1944 = vrot.lane.b32.xlu0 %v623, 96
    %v1945 = vpop.permute.xlu0 %1944
    %1946 = vrot.lane.b32.xlu0 %v625, 96
    %v1947 = vpop.permute.xlu0 %1946
    %1948 = vrot.lane.b32.xlu0 %v628, 96
    %v1949 = vpop.permute.xlu0 %1948
    %1950 = vrot.lane.b32.xlu0 %v630, 96
    %v1951 = vpop.permute.xlu0 %1950
    %1952 = vrot.lane.b32.xlu0 %v633, 96
    %v1953 = vpop.permute.xlu0 %1952
    %1954 = vrot.lane.b32.xlu0 %v635, 96
    %v1955 = vpop.permute.xlu0 %1954
    %1956 = vrot.lane.b32.xlu0 %v638, 96
    %v1957 = vpop.permute.xlu0 %1956
    %1958 = vrot.lane.b32.xlu0 %v640, 96
    %v1959 = vpop.permute.xlu0 %1958
    %1960 = vrot.lane.b32.xlu0 %v643, 96
    %v1961 = vpop.permute.xlu0 %1960
    %1962 = vrot.lane.b32.xlu0 %v645, 96
    %v1963 = vpop.permute.xlu0 %1962
    %1964 = vrot.lane.b32.xlu0 %v648, 96
    %v1965 = vpop.permute.xlu0 %1964
    %1966 = vrot.lane.b32.xlu0 %v650, 96
    %v1967 = vpop.permute.xlu0 %1966
    %1968 = vrot.lane.b32.xlu0 %v653, 96
    %v1969 = vpop.permute.xlu0 %1968
    %1970 = vrot.lane.b32.xlu0 %v655, 96
    %v1971 = vpop.permute.xlu0 %1970
    %1972 = vrot.lane.b32.xlu0 %v658, 96
    %v1973 = vpop.permute.xlu0 %1972
    %1974 = vrot.lane.b32.xlu0 %v660, 96
    %v1975 = vpop.permute.xlu0 %1974
    %1976 = vrot.lane.b32.xlu0 %v663, 96
    %v1977 = vpop.permute.xlu0 %1976
    %1978 = vrot.lane.b32.xlu0 %v665, 96
    %v1979 = vpop.permute.xlu0 %1978
    %1980 = vrot.lane.b32.xlu0 %v668, 96
    %v1981 = vpop.permute.xlu0 %1980
    %1982 = vrot.lane.b32.xlu0 %v670, 96
    %v1983 = vpop.permute.xlu0 %1982
    %1984 = vrot.lane.b32.xlu0 %v673, 96
    %v1985 = vpop.permute.xlu0 %1984
    %1986 = vrot.lane.b32.xlu0 %v675, 96
    %v1987 = vpop.permute.xlu0 %1986
    %1988 = vrot.lane.b32.xlu0 %v678, 96
    %v1989 = vpop.permute.xlu0 %1988
    %1990 = vrot.lane.b32.xlu0 %v680, 96
    %v1991 = vpop.permute.xlu0 %1990
    %1992 = vrot.lane.b32.xlu0 %v683, 96
    %v1993 = vpop.permute.xlu0 %1992
    %1994 = vrot.lane.b32.xlu0 %v685, 96
    %v1995 = vpop.permute.xlu0 %1994
    %1996 = vrot.lane.b32.xlu0 %v688, 96
    %v1997 = vpop.permute.xlu0 %1996
    %1998 = vrot.lane.b32.xlu0 %v690, 96
    %v1999 = vpop.permute.xlu0 %1998
    %2000 = vrot.lane.b32.xlu0 %v956, 96
    %v2001 = vpop.permute.xlu0 %2000
    %2002 = vrot.lane.b32.xlu0 %v958, 96
    %v2003 = vpop.permute.xlu0 %2002
    %2004 = vrot.lane.b32.xlu0 %v961, 96
    %v2005 = vpop.permute.xlu0 %2004
    %2006 = vrot.lane.b32.xlu0 %v963, 96
    %v2007 = vpop.permute.xlu0 %2006
    %2008 = vrot.lane.b32.xlu0 %v703, 96
    %v2009 = vpop.permute.xlu0 %2008
    %2010 = vrot.lane.b32.xlu0 %v705, 96
    %v2011 = vpop.permute.xlu0 %2010
    %2012 = vrot.lane.b32.xlu0 %v708, 96
    %v2013 = vpop.permute.xlu0 %2012
    %2014 = vrot.lane.b32.xlu0 %v710, 96
    %v2015 = vpop.permute.xlu0 %2014
    %2016 = vrot.lane.b32.xlu0 %v713, 96
    %v2017 = vpop.permute.xlu0 %2016
    %2018 = vrot.lane.b32.xlu0 %v715, 96
    %v2019 = vpop.permute.xlu0 %2018
    %2020 = vrot.lane.b32.xlu0 %v718, 96
    %v2021 = vpop.permute.xlu0 %2020
    %2022 = vrot.lane.b32.xlu0 %v720, 96
    %v2023 = vpop.permute.xlu0 %2022
    %2024 = vrot.lane.b32.xlu0 %v723, 96
    %v2025 = vpop.permute.xlu0 %2024
    %2026 = vrot.lane.b32.xlu0 %v725, 96
    %v2027 = vpop.permute.xlu0 %2026
    %2028 = vrot.lane.b32.xlu0 %v728, 96
    %v2029 = vpop.permute.xlu0 %2028
    %2030 = vrot.lane.b32.xlu0 %v730, 96
    %v2031 = vpop.permute.xlu0 %2030
    %2032 = vrot.lane.b32.xlu0 %v733, 96
    %v2033 = vpop.permute.xlu0 %2032
    %2034 = vrot.lane.b32.xlu0 %v735, 96
    %v2035 = vpop.permute.xlu0 %2034
    %2036 = vrot.lane.b32.xlu0 %v738, 96
    %v2037 = vpop.permute.xlu0 %2036
    %2038 = vrot.lane.b32.xlu0 %v740, 96
    %v2039 = vpop.permute.xlu0 %2038
    %2040 = vrot.lane.b32.xlu0 %v743, 96
    %v2041 = vpop.permute.xlu0 %2040
    %2042 = vrot.lane.b32.xlu0 %v745, 96
    %v2043 = vpop.permute.xlu0 %2042
    %2044 = vrot.lane.b32.xlu0 %v748, 96
    %v2045 = vpop.permute.xlu0 %2044
    %2046 = vrot.lane.b32.xlu0 %v750, 96
    %v2047 = vpop.permute.xlu0 %2046
    %2048 = vrot.lane.b32.xlu0 %v753, 96
    %v2049 = vpop.permute.xlu0 %2048
    %2050 = vrot.lane.b32.xlu0 %v755, 96
    %v2051 = vpop.permute.xlu0 %2050
    %2052 = vrot.lane.b32.xlu0 %v758, 96
    %v2053 = vpop.permute.xlu0 %2052
    %2054 = vrot.lane.b32.xlu0 %v760, 96
    %v2055 = vpop.permute.xlu0 %2054
    %2056 = vrot.lane.b32.xlu0 %v763, 96
    %v2057 = vpop.permute.xlu0 %2056
    %2058 = vrot.lane.b32.xlu0 %v765, 96
    %v2059 = vpop.permute.xlu0 %2058
    %2060 = vrot.lane.b32.xlu0 %v768, 96
    %v2061 = vpop.permute.xlu0 %2060
    %2062 = vrot.lane.b32.xlu0 %v770, 96
    %v2063 = vpop.permute.xlu0 %2062
    %2064 = vrot.lane.b32.xlu0 %v966, 96
    %v2065 = vpop.permute.xlu0 %2064
    %2066 = vrot.lane.b32.xlu0 %v968, 96
    %v2067 = vpop.permute.xlu0 %2066
    %2068 = vrot.lane.b32.xlu0 %v971, 96
    %v2069 = vpop.permute.xlu0 %2068
    %2070 = vrot.lane.b32.xlu0 %v973, 96
    %v2071 = vpop.permute.xlu0 %2070
    %v2136 = vsel %vm18, %v406, %v985
    %v2137 = vsel %vm18, %v407, %v987
    %v2138 = vsel %vm18, %v409, %v989
    %v2139 = vsel %vm18, %v410, %v991
    %v2140 = vsel %vm18, %v412, %v993
    %v2141 = vsel %vm18, %v413, %v995
    %v2142 = vsel %vm18, %v415, %v997
    %v2143 = vsel %vm18, %v416, %v999
    %v2144 = vsel %vm18, %v418, %v1001
    %v2145 = vsel %vm18, %v419, %v1003
    %v2146 = vsel %vm18, %v421, %v1005
    %v2147 = vsel %vm18, %v422, %v1007
    %v2148 = vsel %vm18, %v424, %v1009
    %v2149 = vsel %vm18, %v425, %v1011
    %v2150 = vsel %vm18, %v427, %v1013
    %v2151 = vsel %vm18, %v428, %v1015
    %v2152 = vsel %vm18, %v430, %v1017
    %v2153 = vsel %vm18, %v431, %v1019
    %v2154 = vsel %vm18, %v433, %v1021
    %v2155 = vsel %vm18, %v434, %v1023
    %v2156 = vsel %vm18, %v436, %v1025
    %v2157 = vsel %vm18, %v437, %v1027
    %v2158 = vsel %vm18, %v439, %v1029
    %v2159 = vsel %vm18, %v440, %v1031
    %v2160 = vsel %vm18, %v442, %v1033
    %v2161 = vsel %vm18, %v443, %v1035
    %v2162 = vsel %vm18, %v445, %v1037
    %v2163 = vsel %vm18, %v446, %v1039
    %v2164 = vsel %vm18, %v448, %v1041
    %v2165 = vsel %vm18, %v449, %v1043
    %v2166 = vsel %vm18, %v451, %v1045
    %v2167 = vsel %vm18, %v452, %v1047
    %v2168 = vsel %vm18, %v460, %v1049
    %v2169 = vsel %vm18, %v461, %v1051
    %v2170 = vsel %vm18, %v463, %v1053
    %v2171 = vsel %vm18, %v464, %v1055
    %v2172 = vsel %vm18, %v466, %v1057
    %v2173 = vsel %vm18, %v467, %v1059
    %v2174 = vsel %vm18, %v469, %v1061
    %v2175 = vsel %vm18, %v470, %v1063
    %v2176 = vsel %vm18, %v472, %v1065
    %v2177 = vsel %vm18, %v473, %v1067
    %v2178 = vsel %vm18, %v475, %v1069
    %v2179 = vsel %vm18, %v476, %v1071
    %v2180 = vsel %vm18, %v478, %v1073
    %v2181 = vsel %vm18, %v479, %v1075
    %v2182 = vsel %vm18, %v481, %v1077
    %v2183 = vsel %vm18, %v482, %v1079
    %v2184 = vsel %vm18, %v484, %v1081
    %v2185 = vsel %vm18, %v485, %v1083
    %v2186 = vsel %vm18, %v487, %v1085
    %v2187 = vsel %vm18, %v488, %v1087
    %v2188 = vsel %vm18, %v490, %v1089
    %v2189 = vsel %vm18, %v491, %v1091
    %v2190 = vsel %vm18, %v493, %v1093
    %v2191 = vsel %vm18, %v494, %v1095
    %v2192 = vsel %vm18, %v496, %v1097
    %v2193 = vsel %vm18, %v497, %v1099
    %v2194 = vsel %vm18, %v499, %v1101
    %v2195 = vsel %vm18, %v500, %v1103
    %v2196 = vsel %vm18, %v502, %v1105
    %v2197 = vsel %vm18, %v503, %v1107
    %v2198 = vsel %vm18, %v505, %v1109
    %v2199 = vsel %vm18, %v506, %v1111
    %vm2200 = vcmask 523264
    %v2201 = vsel %vm2200, %v2136, %v1177
    %v2202 = vsel %vm2200, %v2137, %v1179
    %v2203 = vsel %vm2200, %v2138, %v1181
    %v2204 = vsel %vm2200, %v2139, %v1183
    %v2205 = vsel %vm2200, %v2140, %v1185
    %v2206 = vsel %vm2200, %v2141, %v1187
    %v2207 = vsel %vm2200, %v2142, %v1189
    %v2208 = vsel %vm2200, %v2143, %v1191
    %v2209 = vsel %vm2200, %v2144, %v1193
    %v2210 = vsel %vm2200, %v2145, %v1195
    %v2211 = vsel %vm2200, %v2146, %v1197
    %v2212 = vsel %vm2200, %v2147, %v1199
    %v2213 = vsel %vm2200, %v2148, %v1201
    %v2214 = vsel %vm2200, %v2149, %v1203
    %v2215 = vsel %vm2200, %v2150, %v1205
    %v2216 = vsel %vm2200, %v2151, %v1207
    %v2217 = vsel %vm2200, %v2152, %v1209
    %v2218 = vsel %vm2200, %v2153, %v1211
    %v2219 = vsel %vm2200, %v2154, %v1213
    %v2220 = vsel %vm2200, %v2155, %v1215
    %v2221 = vsel %vm2200, %v2156, %v1217
    %v2222 = vsel %vm2200, %v2157, %v1219
    %v2223 = vsel %vm2200, %v2158, %v1221
    %v2224 = vsel %vm2200, %v2159, %v1223
    %v2225 = vsel %vm2200, %v2160, %v1225
    %v2226 = vsel %vm2200, %v2161, %v1227
    %v2227 = vsel %vm2200, %v2162, %v1229
    %v2228 = vsel %vm2200, %v2163, %v1231
    %v2229 = vsel %vm2200, %v2164, %v1233
    %v2230 = vsel %vm2200, %v2165, %v1235
    %v2231 = vsel %vm2200, %v2166, %v1237
    %v2232 = vsel %vm2200, %v2167, %v1239
    %v2233 = vsel %vm2200, %v2168, %v1241
    %v2234 = vsel %vm2200, %v2169, %v1243
    %v2235 = vsel %vm2200, %v2170, %v1245
    %v2236 = vsel %vm2200, %v2171, %v1247
    %v2237 = vsel %vm2200, %v2172, %v1249
    %v2238 = vsel %vm2200, %v2173, %v1251
    %v2239 = vsel %vm2200, %v2174, %v1253
    %v2240 = vsel %vm2200, %v2175, %v1255
    %v2241 = vsel %vm2200, %v2176, %v1257
    %v2242 = vsel %vm2200, %v2177, %v1259
    %v2243 = vsel %vm2200, %v2178, %v1261
    %v2244 = vsel %vm2200, %v2179, %v1263
    %v2245 = vsel %vm2200, %v2180, %v1265
    %v2246 = vsel %vm2200, %v2181, %v1267
    %v2247 = vsel %vm2200, %v2182, %v1269
    %v2248 = vsel %vm2200, %v2183, %v1271
    %v2249 = vsel %vm2200, %v2184, %v1273
    %v2250 = vsel %vm2200, %v2185, %v1275
    %v2251 = vsel %vm2200, %v2186, %v1277
    %v2252 = vsel %vm2200, %v2187, %v1279
    %v2253 = vsel %vm2200, %v2188, %v1281
    %v2254 = vsel %vm2200, %v2189, %v1283
    %v2255 = vsel %vm2200, %v2190, %v1285
    %v2256 = vsel %vm2200, %v2191, %v1287
    %v2257 = vsel %vm2200, %v2192, %v1289
    %v2258 = vsel %vm2200, %v2193, %v1291
    %v2259 = vsel %vm2200, %v2194, %v1293
    %v2260 = vsel %vm2200, %v2195, %v1295
    %v2261 = vsel %vm2200, %v2196, %v1297
    %v2262 = vsel %vm2200, %v2197, %v1299
    %v2263 = vsel %vm2200, %v2198, %v1301
    %v2264 = vsel %vm2200, %v2199, %v1303
    %vm2265 = vcmask 785408
    %v2266 = vsel %vm2265, %v2201, %v1369
    %v2267 = vsel %vm2265, %v2202, %v1371
    %v2268 = vsel %vm2265, %v2203, %v1373
    %v2269 = vsel %vm2265, %v2204, %v1375
    %v2270 = vsel %vm2265, %v2205, %v1377
    %v2271 = vsel %vm2265, %v2206, %v1379
    %v2272 = vsel %vm2265, %v2207, %v1381
    %v2273 = vsel %vm2265, %v2208, %v1383
    %v2274 = vsel %vm2265, %v2209, %v1385
    %v2275 = vsel %vm2265, %v2210, %v1387
    %v2276 = vsel %vm2265, %v2211, %v1389
    %v2277 = vsel %vm2265, %v2212, %v1391
    %v2278 = vsel %vm2265, %v2213, %v1393
    %v2279 = vsel %vm2265, %v2214, %v1395
    %v2280 = vsel %vm2265, %v2215, %v1397
    %v2281 = vsel %vm2265, %v2216, %v1399
    %v2282 = vsel %vm2265, %v2217, %v1401
    %v2283 = vsel %vm2265, %v2218, %v1403
    %v2284 = vsel %vm2265, %v2219, %v1405
    %v2285 = vsel %vm2265, %v2220, %v1407
    %v2286 = vsel %vm2265, %v2221, %v1409
    %v2287 = vsel %vm2265, %v2222, %v1411
    %v2288 = vsel %vm2265, %v2223, %v1413
    %v2289 = vsel %vm2265, %v2224, %v1415
    %v2290 = vsel %vm2265, %v2225, %v1417
    %v2291 = vsel %vm2265, %v2226, %v1419
    %v2292 = vsel %vm2265, %v2227, %v1421
    %v2293 = vsel %vm2265, %v2228, %v1423
    %v2294 = vsel %vm2265, %v2229, %v1425
    %v2295 = vsel %vm2265, %v2230, %v1427
    %v2296 = vsel %vm2265, %v2231, %v1429
    %v2297 = vsel %vm2265, %v2232, %v1431
    %v2298 = vsel %vm2265, %v2233, %v1433
    %v2299 = vsel %vm2265, %v2234, %v1435
    %v2300 = vsel %vm2265, %v2235, %v1437
    %v2301 = vsel %vm2265, %v2236, %v1439
    %v2302 = vsel %vm2265, %v2237, %v1441
    %v2303 = vsel %vm2265, %v2238, %v1443
    %v2304 = vsel %vm2265, %v2239, %v1445
    %v2305 = vsel %vm2265, %v2240, %v1447
    %v2306 = vsel %vm2265, %v2241, %v1449
    %v2307 = vsel %vm2265, %v2242, %v1451
    %v2308 = vsel %vm2265, %v2243, %v1453
    %v2309 = vsel %vm2265, %v2244, %v1455
    %v2310 = vsel %vm2265, %v2245, %v1457
    %v2311 = vsel %vm2265, %v2246, %v1459
    %v2312 = vsel %vm2265, %v2247, %v1461
    %v2313 = vsel %vm2265, %v2248, %v1463
    %v2314 = vsel %vm2265, %v2249, %v1465
    %v2315 = vsel %vm2265, %v2250, %v1467
    %v2316 = vsel %vm2265, %v2251, %v1469
    %v2317 = vsel %vm2265, %v2252, %v1471
    %v2318 = vsel %vm2265, %v2253, %v1473
    %v2319 = vsel %vm2265, %v2254, %v1475
    %v2320 = vsel %vm2265, %v2255, %v1477
    %v2321 = vsel %vm2265, %v2256, %v1479
    %v2322 = vsel %vm2265, %v2257, %v1481
    %v2323 = vsel %vm2265, %v2258, %v1483
    %v2324 = vsel %vm2265, %v2259, %v1485
    %v2325 = vsel %vm2265, %v2260, %v1487
    %v2326 = vsel %vm2265, %v2261, %v1489
    %v2327 = vsel %vm2265, %v2262, %v1491
    %v2328 = vsel %vm2265, %v2263, %v1493
    %v2329 = vsel %vm2265, %v2264, %v1495
    %v2330 = vsel %vm18, %v277, %v1561
    %v2331 = vsel %vm18, %v278, %v1563
    %v2332 = vsel %vm18, %v279, %v1565
    %v2333 = vsel %vm18, %v280, %v1567
    %v2334 = vsel %vm18, %v281, %v1569
    %v2335 = vsel %vm18, %v282, %v1571
    %v2336 = vsel %vm18, %v283, %v1573
    %v2337 = vsel %vm18, %v284, %v1575
    %v2338 = vsel %vm18, %v285, %v1577
    %v2339 = vsel %vm18, %v286, %v1579
    %v2340 = vsel %vm18, %v287, %v1581
    %v2341 = vsel %vm18, %v288, %v1583
    %v2342 = vsel %vm18, %v289, %v1585
    %v2343 = vsel %vm18, %v290, %v1587
    %v2344 = vsel %vm18, %v291, %v1589
    %v2345 = vsel %vm18, %v292, %v1591
    %v2346 = vsel %vm18, %v293, %v1593
    %v2347 = vsel %vm18, %v294, %v1595
    %v2348 = vsel %vm18, %v295, %v1597
    %v2349 = vsel %vm18, %v296, %v1599
    %v2350 = vsel %vm18, %v297, %v1601
    %v2351 = vsel %vm18, %v298, %v1603
    %v2352 = vsel %vm18, %v299, %v1605
    %v2353 = vsel %vm18, %v300, %v1607
    %v2354 = vsel %vm18, %v301, %v1609
    %v2355 = vsel %vm18, %v302, %v1611
    %v2356 = vsel %vm18, %v303, %v1613
    %v2357 = vsel %vm18, %v304, %v1615
    %v2358 = vsel %vm18, %v305, %v1617
    %v2359 = vsel %vm18, %v306, %v1619
    %v2360 = vsel %vm18, %v307, %v1621
    %v2361 = vsel %vm18, %v308, %v1623
    %v2362 = vsel %vm18, %v309, %v1625
    %v2363 = vsel %vm18, %v310, %v1627
    %v2364 = vsel %vm18, %v311, %v1629
    %v2365 = vsel %vm18, %v312, %v1631
    %v2366 = vsel %vm18, %v313, %v1633
    %v2367 = vsel %vm18, %v314, %v1635
    %v2368 = vsel %vm18, %v315, %v1637
    %v2369 = vsel %vm18, %v316, %v1639
    %v2370 = vsel %vm18, %v317, %v1641
    %v2371 = vsel %vm18, %v318, %v1643
    %v2372 = vsel %vm18, %v319, %v1645
    %v2373 = vsel %vm18, %v320, %v1647
    %v2374 = vsel %vm18, %v321, %v1649
    %v2375 = vsel %vm18, %v322, %v1651
    %v2376 = vsel %vm18, %v323, %v1653
    %v2377 = vsel %vm18, %v324, %v1655
    %v2378 = vsel %vm18, %v325, %v1657
    %v2379 = vsel %vm18, %v326, %v1659
    %v2380 = vsel %vm18, %v327, %v1661
    %v2381 = vsel %vm18, %v328, %v1663
    %v2382 = vsel %vm18, %v329, %v1665
    %v2383 = vsel %vm18, %v330, %v1667
    %v2384 = vsel %vm18, %v331, %v1669
    %v2385 = vsel %vm18, %v332, %v1671
    %v2386 = vsel %vm18, %v333, %v1673
    %v2387 = vsel %vm18, %v334, %v1675
    %v2388 = vsel %vm18, %v335, %v1677
    %v2389 = vsel %vm18, %v336, %v1679
    %v2390 = vsel %vm18, %v337, %v1681
    %v2391 = vsel %vm18, %v338, %v1683
    %v2392 = vsel %vm18, %v339, %v1685
    %v2393 = vsel %vm18, %v340, %v1687
    %v2394 = vsel %vm2200, %v2330, %v1753
    %v2395 = vsel %vm2200, %v2331, %v1755
    %v2396 = vsel %vm2200, %v2332, %v1757
    %v2397 = vsel %vm2200, %v2333, %v1759
    %v2398 = vsel %vm2200, %v2334, %v1761
    %v2399 = vsel %vm2200, %v2335, %v1763
    %v2400 = vsel %vm2200, %v2336, %v1765
    %v2401 = vsel %vm2200, %v2337, %v1767
    %v2402 = vsel %vm2200, %v2338, %v1769
    %v2403 = vsel %vm2200, %v2339, %v1771
    %v2404 = vsel %vm2200, %v2340, %v1773
    %v2405 = vsel %vm2200, %v2341, %v1775
    %v2406 = vsel %vm2200, %v2342, %v1777
    %v2407 = vsel %vm2200, %v2343, %v1779
    %v2408 = vsel %vm2200, %v2344, %v1781
    %v2409 = vsel %vm2200, %v2345, %v1783
    %v2410 = vsel %vm2200, %v2346, %v1785
    %v2411 = vsel %vm2200, %v2347, %v1787
    %v2412 = vsel %vm2200, %v2348, %v1789
    %v2413 = vsel %vm2200, %v2349, %v1791
    %v2414 = vsel %vm2200, %v2350, %v1793
    %v2415 = vsel %vm2200, %v2351, %v1795
    %v2416 = vsel %vm2200, %v2352, %v1797
    %v2417 = vsel %vm2200, %v2353, %v1799
    %v2418 = vsel %vm2200, %v2354, %v1801
    %v2419 = vsel %vm2200, %v2355, %v1803
    %v2420 = vsel %vm2200, %v2356, %v1805
    %v2421 = vsel %vm2200, %v2357, %v1807
    %v2422 = vsel %vm2200, %v2358, %v1809
    %v2423 = vsel %vm2200, %v2359, %v1811
    %v2424 = vsel %vm2200, %v2360, %v1813
    %v2425 = vsel %vm2200, %v2361, %v1815
    %v2426 = vsel %vm2200, %v2362, %v1817
    %v2427 = vsel %vm2200, %v2363, %v1819
    %v2428 = vsel %vm2200, %v2364, %v1821
    %v2429 = vsel %vm2200, %v2365, %v1823
    %v2430 = vsel %vm2200, %v2366, %v1825
    %v2431 = vsel %vm2200, %v2367, %v1827
    %v2432 = vsel %vm2200, %v2368, %v1829
    %v2433 = vsel %vm2200, %v2369, %v1831
    %v2434 = vsel %vm2200, %v2370, %v1833
    %v2435 = vsel %vm2200, %v2371, %v1835
    %v2436 = vsel %vm2200, %v2372, %v1837
    %v2437 = vsel %vm2200, %v2373, %v1839
    %v2438 = vsel %vm2200, %v2374, %v1841
    %v2439 = vsel %vm2200, %v2375, %v1843
    %v2440 = vsel %vm2200, %v2376, %v1845
    %v2441 = vsel %vm2200, %v2377, %v1847
    %v2442 = vsel %vm2200, %v2378, %v1849
    %v2443 = vsel %vm2200, %v2379, %v1851
    %v2444 = vsel %vm2200, %v2380, %v1853
    %v2445 = vsel %vm2200, %v2381, %v1855
    %v2446 = vsel %vm2200, %v2382, %v1857
    %v2447 = vsel %vm2200, %v2383, %v1859
    %v2448 = vsel %vm2200, %v2384, %v1861
    %v2449 = vsel %vm2200, %v2385, %v1863
    %v2450 = vsel %vm2200, %v2386, %v1865
    %v2451 = vsel %vm2200, %v2387, %v1867
    %v2452 = vsel %vm2200, %v2388, %v1869
    %v2453 = vsel %vm2200, %v2389, %v1871
    %v2454 = vsel %vm2200, %v2390, %v1873
    %v2455 = vsel %vm2200, %v2391, %v1875
    %v2456 = vsel %vm2200, %v2392, %v1877
    %v2457 = vsel %vm2200, %v2393, %v1879
    %v2458 = vsel %vm2265, %v2394, %v1945
    %v2459 = vsel %vm2265, %v2395, %v1947
    %v2460 = vsel %vm2265, %v2396, %v1949
    %v2461 = vsel %vm2265, %v2397, %v1951
    %v2462 = vsel %vm2265, %v2398, %v1953
    %v2463 = vsel %vm2265, %v2399, %v1955
    %v2464 = vsel %vm2265, %v2400, %v1957
    %v2465 = vsel %vm2265, %v2401, %v1959
    %v2466 = vsel %vm2265, %v2402, %v1961
    %v2467 = vsel %vm2265, %v2403, %v1963
    %v2468 = vsel %vm2265, %v2404, %v1965
    %v2469 = vsel %vm2265, %v2405, %v1967
    %v2470 = vsel %vm2265, %v2406, %v1969
    %v2471 = vsel %vm2265, %v2407, %v1971
    %v2472 = vsel %vm2265, %v2408, %v1973
    %v2473 = vsel %vm2265, %v2409, %v1975
    %v2474 = vsel %vm2265, %v2410, %v1977
    %v2475 = vsel %vm2265, %v2411, %v1979
    %v2476 = vsel %vm2265, %v2412, %v1981
    %v2477 = vsel %vm2265, %v2413, %v1983
    %v2478 = vsel %vm2265, %v2414, %v1985
    %v2479 = vsel %vm2265, %v2415, %v1987
    %v2480 = vsel %vm2265, %v2416, %v1989
    %v2481 = vsel %vm2265, %v2417, %v1991
    %v2482 = vsel %vm2265, %v2418, %v1993
    %v2483 = vsel %vm2265, %v2419, %v1995
    %v2484 = vsel %vm2265, %v2420, %v1997
    %v2485 = vsel %vm2265, %v2421, %v1999
    %v2486 = vsel %vm2265, %v2422, %v2001
    %v2487 = vsel %vm2265, %v2423, %v2003
    %v2488 = vsel %vm2265, %v2424, %v2005
    %v2489 = vsel %vm2265, %v2425, %v2007
    %v2490 = vsel %vm2265, %v2426, %v2009
    %v2491 = vsel %vm2265, %v2427, %v2011
    %v2492 = vsel %vm2265, %v2428, %v2013
    %v2493 = vsel %vm2265, %v2429, %v2015
    %v2494 = vsel %vm2265, %v2430, %v2017
    %v2495 = vsel %vm2265, %v2431, %v2019
    %v2496 = vsel %vm2265, %v2432, %v2021
    %v2497 = vsel %vm2265, %v2433, %v2023
    %v2498 = vsel %vm2265, %v2434, %v2025
    %v2499 = vsel %vm2265, %v2435, %v2027
    %v2500 = vsel %vm2265, %v2436, %v2029
    %v2501 = vsel %vm2265, %v2437, %v2031
    %v2502 = vsel %vm2265, %v2438, %v2033
    %v2503 = vsel %vm2265, %v2439, %v2035
    %v2504 = vsel %vm2265, %v2440, %v2037
    %v2505 = vsel %vm2265, %v2441, %v2039
    %v2506 = vsel %vm2265, %v2442, %v2041
    %v2507 = vsel %vm2265, %v2443, %v2043
    %v2508 = vsel %vm2265, %v2444, %v2045
    %v2509 = vsel %vm2265, %v2445, %v2047
    %v2510 = vsel %vm2265, %v2446, %v2049
    %v2511 = vsel %vm2265, %v2447, %v2051
    %v2512 = vsel %vm2265, %v2448, %v2053
    %v2513 = vsel %vm2265, %v2449, %v2055
    %v2514 = vsel %vm2265, %v2450, %v2057
    %v2515 = vsel %vm2265, %v2451, %v2059
    %v2516 = vsel %vm2265, %v2452, %v2061
    %v2517 = vsel %vm2265, %v2453, %v2063
    %v2518 = vsel %vm2265, %v2454, %v2065
    %v2519 = vsel %vm2265, %v2455, %v2067
    %v2520 = vsel %vm2265, %v2456, %v2069
    %v2521 = vsel %vm2265, %v2457, %v2071
    %v2522 = vld [vmem:[%s1] sm:$0xff]
    %v2523 = vld [vmem:[%s1 + $0x8] sm:$0xff]
    %v2524 = vld [vmem:[%s1 + $0x10] sm:$0xff]
    %v2525 = vld [vmem:[%s1 + $0x18] sm:$0xff]
    %v2526 = vld [vmem:[%s1 + $0x20] sm:$0xff]
    %v2527 = vld [vmem:[%s1 + $0x28] sm:$0xff]
    %v2528 = vld [vmem:[%s1 + $0x30] sm:$0xff]
    %v2529 = vld [vmem:[%s1 + $0x38] sm:$0xff]
    %v2530 = vld [vmem:[%s1 + $0x40] sm:$0xff]
    %v2531 = vld [vmem:[%s1 + $0x48] sm:$0xff]
    %v2532 = vld [vmem:[%s1 + $0x50] sm:$0xff]
    %v2533 = vld [vmem:[%s1 + $0x58] sm:$0xff]
    %v2534 = vld [vmem:[%s1 + $0x60] sm:$0xff]
    %v2535 = vld [vmem:[%s1 + $0x68] sm:$0xff]
    %v2536 = vld [vmem:[%s1 + $0x70] sm:$0xff]
    %v2537 = vld [vmem:[%s1 + $0x78] sm:$0xff]
    %v2538 = vld [vmem:[%s1 + $0x80] sm:$0xff]
    %v2539 = vld [vmem:[%s1 + $0x88] sm:$0xff]
    %v2540 = vld [vmem:[%s1 + $0x90] sm:$0xff]
    %v2541 = vld [vmem:[%s1 + $0x98] sm:$0xff]
    %v2542 = vld [vmem:[%s1 + $0xa0] sm:$0xff]
    %v2543 = vld [vmem:[%s1 + $0xa8] sm:$0xff]
    %v2544 = vld [vmem:[%s1 + $0xb0] sm:$0xff]
    %v2545 = vld [vmem:[%s1 + $0xb8] sm:$0xff]
    %v2546 = vld [vmem:[%s1 + $0xc0] sm:$0xff]
    %v2547 = vld [vmem:[%s1 + $0xc8] sm:$0xff]
    %v2548 = vld [vmem:[%s1 + $0xd0] sm:$0xff]
    %v2549 = vld [vmem:[%s1 + $0xd8] sm:$0xff]
    %v2550 = vld [vmem:[%s1 + $0xe0] sm:$0xff]
    %v2551 = vld [vmem:[%s1 + $0xe8] sm:$0xff]
    %v2552 = vld [vmem:[%s1 + $0xf0] sm:$0xff]
    %v2553 = vld [vmem:[%s1 + $0xf8] sm:$0xff]
    %v2554 = vld [vmem:[%s1 + $0x100] sm:$0xff]
    %v2555 = vld [vmem:[%s1 + $0x108] sm:$0xff]
    %v2556 = vld [vmem:[%s1 + $0x110] sm:$0xff]
    %v2557 = vld [vmem:[%s1 + $0x118] sm:$0xff]
    %v2558 = vsel %vm18, %v784, 0
    %v2560 = vsel %vm18, %v786, 0
    %v2562 = vsel %vm18, %v789, 0
    %v2564 = vsel %vm18, %v791, 0
    %v2566 = vsel %vm18, %v794, 0
    %v2568 = vsel %vm18, %v796, 0
    %v2570 = vsel %vm18, %v799, 0
    %v2572 = vsel %vm18, %v801, 0
    %v2574 = vsel %vm18, %v804, 0
    %v2576 = vsel %vm18, %v806, 0
    %v2578 = vsel %vm18, %v809, 0
    %v2580 = vsel %vm18, %v811, 0
    %v2582 = vsel %vm18, %v814, 0
    %v2584 = vsel %vm18, %v816, 0
    %v2586 = vsel %vm18, %v819, 0
    %v2588 = vsel %vm18, %v821, 0
    %v2590 = vsel %vm18, %v824, 0
    %v2592 = vsel %vm18, %v826, 0
    %v2594 = vsel %vm18, %v829, 0
    %v2596 = vsel %vm18, %v831, 0
    %v2598 = vsel %vm18, %v834, 0
    %v2600 = vsel %vm18, %v836, 0
    %v2602 = vsel %vm18, %v839, 0
    %v2604 = vsel %vm18, %v841, 0
    %v2606 = vsel %vm18, %v844, 0
    %v2608 = vsel %vm18, %v846, 0
    %v2610 = vsel %vm18, %v849, 0
    %v2612 = vsel %vm18, %v851, 0
    %v2614 = vsel %vm18, %v940, 0
    %v2616 = vsel %vm18, %v942, 0
    %v2618 = vsel %vm18, %v976, 0
    %v2620 = vsel %vm18, %v978, 0
    %v2622 = vsel %vm18, %v864, 0
    %v2624 = vsel %vm18, %v866, 0
    %v2626 = vsel %vm18, %v869, 0
    %v2628 = vsel %vm18, %v871, 0
    %v2630 = vsel %vm18, %v874, 0
    %v2632 = vsel %vm18, %v876, 0
    %v2634 = vsel %vm18, %v879, 0
    %v2636 = vsel %vm18, %v881, 0
    %v2638 = vsel %vm18, %v884, 0
    %v2640 = vsel %vm18, %v886, 0
    %v2642 = vsel %vm18, %v889, 0
    %v2644 = vsel %vm18, %v891, 0
    %v2646 = vsel %vm18, %v894, 0
    %v2648 = vsel %vm18, %v896, 0
    %v2650 = vsel %vm18, %v899, 0
    %v2652 = vsel %vm18, %v901, 0
    %v2654 = vsel %vm18, %v904, 0
    %v2656 = vsel %vm18, %v906, 0
    %v2658 = vsel %vm18, %v909, 0
    %v2660 = vsel %vm18, %v911, 0
    %v2662 = vsel %vm18, %v914, 0
    %v2664 = vsel %vm18, %v916, 0
    %v2666 = vsel %vm18, %v919, 0
    %v2668 = vsel %vm18, %v921, 0
    %v2670 = vsel %vm18, %v924, 0
    %v2672 = vsel %vm18, %v926, 0
    %v2674 = vsel %vm18, %v929, 0
    %v2676 = vsel %vm18, %v931, 0
    %v2678 = vsel %vm18, %v945, 0
    %v2680 = vsel %vm18, %v947, 0
    %v2682 = vsel %vm18, %v981, 0
    %v2684 = vsel %vm18, %v983, 0
    %2686 = vmatprep.subr.mxu0 0.0
    %2687 = vmatpush1.msra.mxu0 %v2537
    %2688 = vmatprep.subr.mxu0 0.0
    %2689 = vmatpush1.msra.mxu0 %v2536
    %2690 = vmatprep.subr.mxu0 0.0
    %2691 = vmatpush1.msra.mxu0 %v2535
    %2692 = vmatprep.subr.mxu0 0.0
    %2693 = vmatpush1.msra.mxu0 %v2534
    %2694 = vmatprep.subr.mxu0 0.0
    %2695 = vmatpush1.msra.mxu0 %v2533
    %2696 = vmatprep.subr.mxu0 0.0
    %2697 = vmatpush1.msra.mxu0 %v2532
    %2698 = vmatprep.subr.mxu0 0.0
    %2699 = vmatpush1.msra.mxu0 %v2531
    %2700 = vmatprep.subr.mxu0 0.0
    %2701 = vmatpush1.msra.mxu0 %v2530
    %2702 = vmatprep.subr.mxu0 0.0
    %2703 = vmatpush1.msra.mxu0 %v2529
    %2704 = vmatprep.subr.mxu0 0.0
    %2705 = vmatpush1.msra.mxu0 %v2528
    %2706 = vmatprep.subr.mxu0 0.0
    %2707 = vmatpush1.msra.mxu0 %v2527
    %2708 = vmatprep.subr.mxu0 0.0
    %2709 = vmatpush1.msra.mxu0 %v2526
    %2710 = vmatprep.subr.mxu0 0.0
    %2711 = vmatpush1.msra.mxu0 %v2525
    %2712 = vmatprep.subr.mxu0 0.0
    %2713 = vmatpush1.msra.mxu0 %v2524
    %2714 = vmatprep.subr.mxu0 0.0
    %2715 = vmatpush1.msra.mxu0 %v2523
    %2716 = vmatprep.subr.mxu0 0.0
    %2717 = vmatpush1.msra.mxu0 %v2522
    %2718 = vmatprep.subr.mxu0 0.0
    %2719 = vmatpush2.msra.mxu0 %v2553
    %2720 = vmatprep.subr.mxu0 0.0
    %2721 = vmatpush2.msra.mxu0 %v2552
    %2722 = vmatprep.subr.mxu0 0.0
    %2723 = vmatpush2.msra.mxu0 %v2551
    %2724 = vmatprep.subr.mxu0 0.0
    %2725 = vmatpush2.msra.mxu0 %v2550
    %2726 = vmatprep.subr.mxu0 0.0
    %2727 = vmatpush2.msra.mxu0 %v2549
    %2728 = vmatprep.subr.mxu0 0.0
    %2729 = vmatpush2.msra.mxu0 %v2548
    %2730 = vmatprep.subr.mxu0 0.0
    %2731 = vmatpush2.msra.mxu0 %v2547
    %2732 = vmatprep.subr.mxu0 0.0
    %2733 = vmatpush2.msra.mxu0 %v2546
    %2734 = vmatprep.subr.mxu0 0.0
    %2735 = vmatpush2.msra.mxu0 %v2545
    %2736 = vmatprep.subr.mxu0 0.0
    %2737 = vmatpush2.msra.mxu0 %v2544
    %2738 = vmatprep.subr.mxu0 0.0
    %2739 = vmatpush2.msra.mxu0 %v2543
    %2740 = vmatprep.subr.mxu0 0.0
    %2741 = vmatpush2.msra.mxu0 %v2542
    %2742 = vmatprep.subr.mxu0 0.0
    %2743 = vmatpush2.msra.mxu0 %v2541
    %2744 = vmatprep.subr.mxu0 0.0
    %2745 = vmatpush2.msra.mxu0 %v2540
    %2746 = vmatprep.subr.mxu0 0.0
    %2747 = vmatpush2.msra.mxu0 %v2539
    %2748 = vmatprep.subr.mxu0 0.0
    %2749 = vmatpush2.msra.mxu0 %v2538
    %2750 = vmatprep.mubr.f32.mxu0 %v2458
    %2751 = vmatmul.mubr.f32.gmra.mxu0 %v2266
    %v2752 = vpop.f32.mrf.mxu0
    %v2753 = vadd.f32 0.0, %v2752
    %v2754 = vpop.f32.mrf.mxu0
    %2755 = vmatprep.mubr.f32.mxu0 %v2459
    %2756 = vmatmul.mubr.f32.gmra.mxu0 %v2267
    %v2757 = vpop.f32.mrf.mxu0
    %v2758 = vadd.f32 0.0, %v2757
    %v2759 = vpop.f32.mrf.mxu0
    %2760 = vmatprep.mubr.f32.mxu0 %v2460
    %2761 = vmatmul.mubr.f32.gmra.mxu0 %v2268
    %v2762 = vpop.f32.mrf.mxu0
    %v2763 = vadd.f32 0.0, %v2762
    %v2764 = vpop.f32.mrf.mxu0
    %2765 = vmatprep.mubr.f32.mxu0 %v2461
    %2766 = vmatmul.mubr.f32.gmra.mxu0 %v2269
    %v2767 = vpop.f32.mrf.mxu0
    %v2768 = vadd.f32 0.0, %v2767
    %v2769 = vpop.f32.mrf.mxu0
    %2770 = vmatprep.mubr.f32.mxu0 %v2462
    %2771 = vmatmul.mubr.f32.gmra.mxu0 %v2270
    %v2772 = vpop.f32.mrf.mxu0
    %v2773 = vadd.f32 0.0, %v2772
    %v2774 = vpop.f32.mrf.mxu0
    %2775 = vmatprep.mubr.f32.mxu0 %v2463
    %2776 = vmatmul.mubr.f32.gmra.mxu0 %v2271
    %v2777 = vpop.f32.mrf.mxu0
    %v2778 = vadd.f32 0.0, %v2777
    %v2779 = vpop.f32.mrf.mxu0
    %2780 = vmatprep.mubr.f32.mxu0 %v2464
    %2781 = vmatmul.mubr.f32.gmra.mxu0 %v2272
    %v2782 = vpop.f32.mrf.mxu0
    %v2783 = vadd.f32 0.0, %v2782
    %v2784 = vpop.f32.mrf.mxu0
    %2785 = vmatprep.mubr.f32.mxu0 %v2465
    %2786 = vmatmul.mubr.f32.gmra.mxu0 %v2273
    %v2787 = vpop.f32.mrf.mxu0
    %v2788 = vadd.f32 0.0, %v2787
    %v2789 = vpop.f32.mrf.mxu0
    %2790 = vmatprep.mubr.f32.mxu0 %v2466
    %2791 = vmatmul.mubr.f32.gmra.mxu0 %v2274
    %v2792 = vpop.f32.mrf.mxu0
    %v2793 = vadd.f32 0.0, %v2792
    %v2794 = vpop.f32.mrf.mxu0
    %2795 = vmatprep.mubr.f32.mxu0 %v2467
    %2796 = vmatmul.mubr.f32.gmra.mxu0 %v2275
    %v2797 = vpop.f32.mrf.mxu0
    %v2798 = vadd.f32 0.0, %v2797
    %v2799 = vpop.f32.mrf.mxu0
    %2800 = vmatprep.mubr.f32.mxu0 %v2468
    %2801 = vmatmul.mubr.f32.gmra.mxu0 %v2276
    %v2802 = vpop.f32.mrf.mxu0
    %v2803 = vadd.f32 0.0, %v2802
    %v2804 = vpop.f32.mrf.mxu0
    %2805 = vmatprep.mubr.f32.mxu0 %v2469
    %2806 = vmatmul.mubr.f32.gmra.mxu0 %v2277
    %v2807 = vpop.f32.mrf.mxu0
    %v2808 = vadd.f32 0.0, %v2807
    %v2809 = vpop.f32.mrf.mxu0
    %2810 = vmatprep.mubr.f32.mxu0 %v2470
    %2811 = vmatmul.mubr.f32.gmra.mxu0 %v2278
    %v2812 = vpop.f32.mrf.mxu0
    %v2813 = vadd.f32 0.0, %v2812
    %v2814 = vpop.f32.mrf.mxu0
    %2815 = vmatprep.mubr.f32.mxu0 %v2471
    %2816 = vmatmul.mubr.f32.gmra.mxu0 %v2279
    %v2817 = vpop.f32.mrf.mxu0
    %v2818 = vadd.f32 0.0, %v2817
    %v2819 = vpop.f32.mrf.mxu0
    %2820 = vmatprep.mubr.f32.mxu0 %v2472
    %2821 = vmatmul.mubr.f32.gmra.mxu0 %v2280
    %v2822 = vpop.f32.mrf.mxu0
    %v2823 = vadd.f32 0.0, %v2822
    %v2824 = vpop.f32.mrf.mxu0
    %2825 = vmatprep.mubr.f32.mxu0 %v2473
    %2826 = vmatmul.mubr.f32.gmra.mxu0 %v2281
    %v2827 = vpop.f32.mrf.mxu0
    %v2828 = vadd.f32 0.0, %v2827
    %v2829 = vpop.f32.mrf.mxu0
    %2830 = vmatprep.mubr.f32.mxu0 %v2474
    %2831 = vmatmul.mubr.f32.gmra.mxu0 %v2282
    %v2832 = vpop.f32.mrf.mxu0
    %v2833 = vadd.f32 0.0, %v2832
    %v2834 = vpop.f32.mrf.mxu0
    %2835 = vmatprep.mubr.f32.mxu0 %v2475
    %2836 = vmatmul.mubr.f32.gmra.mxu0 %v2283
    %v2837 = vpop.f32.mrf.mxu0
    %v2838 = vadd.f32 0.0, %v2837
    %v2839 = vpop.f32.mrf.mxu0
    %2840 = vmatprep.mubr.f32.mxu0 %v2476
    %2841 = vmatmul.mubr.f32.gmra.mxu0 %v2284
    %v2842 = vpop.f32.mrf.mxu0
    %v2843 = vadd.f32 0.0, %v2842
    %v2844 = vpop.f32.mrf.mxu0
    %2845 = vmatprep.mubr.f32.mxu0 %v2477
    %2846 = vmatmul.mubr.f32.gmra.mxu0 %v2285
    %v2847 = vpop.f32.mrf.mxu0
    %v2848 = vadd.f32 0.0, %v2847
    %v2849 = vpop.f32.mrf.mxu0
    %2850 = vmatprep.mubr.f32.mxu0 %v2478
    %2851 = vmatmul.mubr.f32.gmra.mxu0 %v2286
    %v2852 = vpop.f32.mrf.mxu0
    %v2853 = vadd.f32 0.0, %v2852
    %v2854 = vpop.f32.mrf.mxu0
    %2855 = vmatprep.mubr.f32.mxu0 %v2479
    %2856 = vmatmul.mubr.f32.gmra.mxu0 %v2287
    %v2857 = vpop.f32.mrf.mxu0
    %v2858 = vadd.f32 0.0, %v2857
    %v2859 = vpop.f32.mrf.mxu0
    %2860 = vmatprep.mubr.f32.mxu0 %v2480
    %2861 = vmatmul.mubr.f32.gmra.mxu0 %v2288
    %v2862 = vpop.f32.mrf.mxu0
    %v2863 = vadd.f32 0.0, %v2862
    %v2864 = vpop.f32.mrf.mxu0
    %2865 = vmatprep.mubr.f32.mxu0 %v2481
    %2866 = vmatmul.mubr.f32.gmra.mxu0 %v2289
    %v2867 = vpop.f32.mrf.mxu0
    %v2868 = vadd.f32 0.0, %v2867
    %v2869 = vpop.f32.mrf.mxu0
    %2870 = vmatprep.mubr.f32.mxu0 %v2482
    %2871 = vmatmul.mubr.f32.gmra.mxu0 %v2290
    %v2872 = vpop.f32.mrf.mxu0
    %v2873 = vadd.f32 0.0, %v2872
    %v2874 = vpop.f32.mrf.mxu0
    %2875 = vmatprep.mubr.f32.mxu0 %v2483
    %2876 = vmatmul.mubr.f32.gmra.mxu0 %v2291
    %v2877 = vpop.f32.mrf.mxu0
    %v2878 = vadd.f32 0.0, %v2877
    %v2879 = vpop.f32.mrf.mxu0
    %2880 = vmatprep.mubr.f32.mxu0 %v2484
    %2881 = vmatmul.mubr.f32.gmra.mxu0 %v2292
    %v2882 = vpop.f32.mrf.mxu0
    %v2883 = vadd.f32 0.0, %v2882
    %v2884 = vpop.f32.mrf.mxu0
    %2885 = vmatprep.mubr.f32.mxu0 %v2485
    %2886 = vmatmul.mubr.f32.gmra.mxu0 %v2293
    %v2887 = vpop.f32.mrf.mxu0
    %v2888 = vadd.f32 0.0, %v2887
    %v2889 = vpop.f32.mrf.mxu0
    %2890 = vmatprep.mubr.f32.mxu0 %v2486
    %2891 = vmatmul.mubr.f32.gmra.mxu0 %v2294
    %v2892 = vpop.f32.mrf.mxu0
    %v2893 = vadd.f32 0.0, %v2892
    %v2894 = vpop.f32.mrf.mxu0
    %2895 = vmatprep.mubr.f32.mxu0 %v2487
    %2896 = vmatmul.mubr.f32.gmra.mxu0 %v2295
    %v2897 = vpop.f32.mrf.mxu0
    %v2898 = vadd.f32 0.0, %v2897
    %v2899 = vpop.f32.mrf.mxu0
    %2900 = vmatprep.mubr.f32.mxu0 %v2488
    %2901 = vmatmul.mubr.f32.gmra.mxu0 %v2296
    %v2902 = vpop.f32.mrf.mxu0
    %v2903 = vadd.f32 0.0, %v2902
    %v2904 = vpop.f32.mrf.mxu0
    %2905 = vmatprep.mubr.f32.mxu0 %v2489
    %2906 = vmatmul.mubr.f32.gmra.mxu0 %v2297
    %v2907 = vpop.f32.mrf.mxu0
    %v2908 = vadd.f32 0.0, %v2907
    %v2909 = vpop.f32.mrf.mxu0
    %2910 = vmatprep.mubr.f32.mxu0 %v2490
    %2911 = vmatmul.mubr.f32.gmra.mxu0 %v2298
    %v2912 = vpop.f32.mrf.mxu0
    %v2913 = vadd.f32 0.0, %v2912
    %v2914 = vpop.f32.mrf.mxu0
    %2915 = vmatprep.mubr.f32.mxu0 %v2491
    %2916 = vmatmul.mubr.f32.gmra.mxu0 %v2299
    %v2917 = vpop.f32.mrf.mxu0
    %v2918 = vadd.f32 0.0, %v2917
    %v2919 = vpop.f32.mrf.mxu0
    %2920 = vmatprep.mubr.f32.mxu0 %v2492
    %2921 = vmatmul.mubr.f32.gmra.mxu0 %v2300
    %v2922 = vpop.f32.mrf.mxu0
    %v2923 = vadd.f32 0.0, %v2922
    %v2924 = vpop.f32.mrf.mxu0
    %2925 = vmatprep.mubr.f32.mxu0 %v2493
    %2926 = vmatmul.mubr.f32.gmra.mxu0 %v2301
    %v2927 = vpop.f32.mrf.mxu0
    %v2928 = vadd.f32 0.0, %v2927
    %v2929 = vpop.f32.mrf.mxu0
    %2930 = vmatprep.mubr.f32.mxu0 %v2494
    %2931 = vmatmul.mubr.f32.gmra.mxu0 %v2302
    %v2932 = vpop.f32.mrf.mxu0
    %v2933 = vadd.f32 0.0, %v2932
    %v2934 = vpop.f32.mrf.mxu0
    %2935 = vmatprep.mubr.f32.mxu0 %v2495
    %2936 = vmatmul.mubr.f32.gmra.mxu0 %v2303
    %v2937 = vpop.f32.mrf.mxu0
    %v2938 = vadd.f32 0.0, %v2937
    %v2939 = vpop.f32.mrf.mxu0
    %2940 = vmatprep.mubr.f32.mxu0 %v2496
    %2941 = vmatmul.mubr.f32.gmra.mxu0 %v2304
    %v2942 = vpop.f32.mrf.mxu0
    %v2943 = vadd.f32 0.0, %v2942
    %v2944 = vpop.f32.mrf.mxu0
    %2945 = vmatprep.mubr.f32.mxu0 %v2497
    %2946 = vmatmul.mubr.f32.gmra.mxu0 %v2305
    %v2947 = vpop.f32.mrf.mxu0
    %v2948 = vadd.f32 0.0, %v2947
    %v2949 = vpop.f32.mrf.mxu0
    %2950 = vmatprep.mubr.f32.mxu0 %v2498
    %2951 = vmatmul.mubr.f32.gmra.mxu0 %v2306
    %v2952 = vpop.f32.mrf.mxu0
    %v2953 = vadd.f32 0.0, %v2952
    %v2954 = vpop.f32.mrf.mxu0
    %2955 = vmatprep.mubr.f32.mxu0 %v2499
    %2956 = vmatmul.mubr.f32.gmra.mxu0 %v2307
    %v2957 = vpop.f32.mrf.mxu0
    %v2958 = vadd.f32 0.0, %v2957
    %v2959 = vpop.f32.mrf.mxu0
    %2960 = vmatprep.mubr.f32.mxu0 %v2500
    %2961 = vmatmul.mubr.f32.gmra.mxu0 %v2308
    %v2962 = vpop.f32.mrf.mxu0
    %v2963 = vadd.f32 0.0, %v2962
    %v2964 = vpop.f32.mrf.mxu0
    %2965 = vmatprep.mubr.f32.mxu0 %v2501
    %2966 = vmatmul.mubr.f32.gmra.mxu0 %v2309
    %v2967 = vpop.f32.mrf.mxu0
    %v2968 = vadd.f32 0.0, %v2967
    %v2969 = vpop.f32.mrf.mxu0
    %2970 = vmatprep.mubr.f32.mxu0 %v2502
    %2971 = vmatmul.mubr.f32.gmra.mxu0 %v2310
    %v2972 = vpop.f32.mrf.mxu0
    %v2973 = vadd.f32 0.0, %v2972
    %v2974 = vpop.f32.mrf.mxu0
    %2975 = vmatprep.mubr.f32.mxu0 %v2503
    %2976 = vmatmul.mubr.f32.gmra.mxu0 %v2311
    %v2977 = vpop.f32.mrf.mxu0
    %v2978 = vadd.f32 0.0, %v2977
    %v2979 = vpop.f32.mrf.mxu0
    %2980 = vmatprep.mubr.f32.mxu0 %v2504
    %2981 = vmatmul.mubr.f32.gmra.mxu0 %v2312
    %v2982 = vpop.f32.mrf.mxu0
    %v2983 = vadd.f32 0.0, %v2982
    %v2984 = vpop.f32.mrf.mxu0
    %2985 = vmatprep.mubr.f32.mxu0 %v2505
    %2986 = vmatmul.mubr.f32.gmra.mxu0 %v2313
    %v2987 = vpop.f32.mrf.mxu0
    %v2988 = vadd.f32 0.0, %v2987
    %v2989 = vpop.f32.mrf.mxu0
    %2990 = vmatprep.mubr.f32.mxu0 %v2506
    %2991 = vmatmul.mubr.f32.gmra.mxu0 %v2314
    %v2992 = vpop.f32.mrf.mxu0
    %v2993 = vadd.f32 0.0, %v2992
    %v2994 = vpop.f32.mrf.mxu0
    %2995 = vmatprep.mubr.f32.mxu0 %v2507
    %2996 = vmatmul.mubr.f32.gmra.mxu0 %v2315
    %v2997 = vpop.f32.mrf.mxu0
    %v2998 = vadd.f32 0.0, %v2997
    %v2999 = vpop.f32.mrf.mxu0
    %3000 = vmatprep.mubr.f32.mxu0 %v2508
    %3001 = vmatmul.mubr.f32.gmra.mxu0 %v2316
    %v3002 = vpop.f32.mrf.mxu0
    %v3003 = vadd.f32 0.0, %v3002
    %v3004 = vpop.f32.mrf.mxu0
    %3005 = vmatprep.mubr.f32.mxu0 %v2509
    %3006 = vmatmul.mubr.f32.gmra.mxu0 %v2317
    %v3007 = vpop.f32.mrf.mxu0
    %v3008 = vadd.f32 0.0, %v3007
    %v3009 = vpop.f32.mrf.mxu0
    %3010 = vmatprep.mubr.f32.mxu0 %v2510
    %3011 = vmatmul.mubr.f32.gmra.mxu0 %v2318
    %v3012 = vpop.f32.mrf.mxu0
    %v3013 = vadd.f32 0.0, %v3012
    %v3014 = vpop.f32.mrf.mxu0
    %3015 = vmatprep.mubr.f32.mxu0 %v2511
    %3016 = vmatmul.mubr.f32.gmra.mxu0 %v2319
    %v3017 = vpop.f32.mrf.mxu0
    %v3018 = vadd.f32 0.0, %v3017
    %v3019 = vpop.f32.mrf.mxu0
    %3020 = vmatprep.mubr.f32.mxu0 %v2512
    %3021 = vmatmul.mubr.f32.gmra.mxu0 %v2320
    %v3022 = vpop.f32.mrf.mxu0
    %v3023 = vadd.f32 0.0, %v3022
    %v3024 = vpop.f32.mrf.mxu0
    %3025 = vmatprep.mubr.f32.mxu0 %v2513
    %3026 = vmatmul.mubr.f32.gmra.mxu0 %v2321
    %v3027 = vpop.f32.mrf.mxu0
    %v3028 = vadd.f32 0.0, %v3027
    %v3029 = vpop.f32.mrf.mxu0
    %3030 = vmatprep.mubr.f32.mxu0 %v2514
    %3031 = vmatmul.mubr.f32.gmra.mxu0 %v2322
    %v3032 = vpop.f32.mrf.mxu0
    %v3033 = vadd.f32 0.0, %v3032
    %v3034 = vpop.f32.mrf.mxu0
    %3035 = vmatprep.mubr.f32.mxu0 %v2515
    %3036 = vmatmul.mubr.f32.gmra.mxu0 %v2323
    %v3037 = vpop.f32.mrf.mxu0
    %v3038 = vadd.f32 0.0, %v3037
    %v3039 = vpop.f32.mrf.mxu0
    %3040 = vmatprep.mubr.f32.mxu0 %v2516
    %3041 = vmatmul.mubr.f32.gmra.mxu0 %v2324
    %v3042 = vpop.f32.mrf.mxu0
    %v3043 = vadd.f32 0.0, %v3042
    %v3044 = vpop.f32.mrf.mxu0
    %3045 = vmatprep.mubr.f32.mxu0 %v2517
    %3046 = vmatmul.mubr.f32.gmra.mxu0 %v2325
    %v3047 = vpop.f32.mrf.mxu0
    %v3048 = vadd.f32 0.0, %v3047
    %v3049 = vpop.f32.mrf.mxu0
    %3050 = vmatprep.mubr.f32.mxu0 %v2518
    %3051 = vmatmul.mubr.f32.gmra.mxu0 %v2326
    %v3052 = vpop.f32.mrf.mxu0
    %v3053 = vadd.f32 0.0, %v3052
    %v3054 = vpop.f32.mrf.mxu0
    %3055 = vmatprep.mubr.f32.mxu0 %v2519
    %3056 = vmatmul.mubr.f32.gmra.mxu0 %v2327
    %v3057 = vpop.f32.mrf.mxu0
    %v3058 = vadd.f32 0.0, %v3057
    %v3059 = vpop.f32.mrf.mxu0
    %3060 = vmatprep.mubr.f32.mxu0 %v2520
    %3061 = vmatmul.mubr.f32.gmra.mxu0 %v2328
    %v3062 = vpop.f32.mrf.mxu0
    %v3063 = vadd.f32 0.0, %v3062
    %v3064 = vpop.f32.mrf.mxu0
    %3065 = vmatprep.mubr.f32.mxu0 %v2521
    %3066 = vmatmul.mubr.f32.gmra.mxu0 %v2329
    %v3067 = vpop.f32.mrf.mxu0
    %v3068 = vadd.f32 0.0, %v3067
    %v3069 = vpop.f32.mrf.mxu0
    %3070 = vdwg.mxu0
    %3071 = vmatprep.subr.mxu0 0.0
    %3072 = vmatpush1.msra.mxu0 0.0
    %3073 = vmatprep.subr.mxu0 0.0
    %3074 = vmatpush1.msra.mxu0 0.0
    %3075 = vmatprep.subr.mxu0 0.0
    %3076 = vmatpush1.msra.mxu0 0.0
    %3077 = vmatprep.subr.mxu0 0.0
    %3078 = vmatpush1.msra.mxu0 0.0
    %3079 = vmatprep.subr.mxu0 0.0
    %3080 = vmatpush1.msra.mxu0 0.0
    %3081 = vmatprep.subr.mxu0 0.0
    %3082 = vmatpush1.msra.mxu0 0.0
    %3083 = vmatprep.subr.mxu0 0.0
    %3084 = vmatpush1.msra.mxu0 0.0
    %3085 = vmatprep.subr.mxu0 0.0
    %3086 = vmatpush1.msra.mxu0 0.0
    %3087 = vmatprep.subr.mxu0 0.0
    %3088 = vmatpush1.msra.mxu0 0.0
    %3089 = vmatprep.subr.mxu0 0.0
    %3090 = vmatpush1.msra.mxu0 0.0
    %3091 = vmatprep.subr.mxu0 0.0
    %3092 = vmatpush1.msra.mxu0 0.0
    %3093 = vmatprep.subr.mxu0 0.0
    %3094 = vmatpush1.msra.mxu0 0.0
    %3095 = vmatprep.subr.mxu0 0.0
    %3096 = vmatpush1.msra.mxu0 %v2557
    %3097 = vmatprep.subr.mxu0 0.0
    %3098 = vmatpush1.msra.mxu0 %v2556
    %3099 = vmatprep.subr.mxu0 0.0
    %3100 = vmatpush1.msra.mxu0 %v2555
    %3101 = vmatprep.subr.mxu0 0.0
    %3102 = vmatpush1.msra.mxu0 %v2554
    %3103 = vmatprep.subr.mxu0 0.0
    %3104 = vmatpush2.msra.mxu0 0.0
    %3105 = vmatprep.subr.mxu0 0.0
    %3106 = vmatpush2.msra.mxu0 0.0
    %3107 = vmatprep.subr.mxu0 0.0
    %3108 = vmatpush2.msra.mxu0 0.0
    %3109 = vmatprep.subr.mxu0 0.0
    %3110 = vmatpush2.msra.mxu0 0.0
    %3111 = vmatprep.subr.mxu0 0.0
    %3112 = vmatpush2.msra.mxu0 0.0
    %3113 = vmatprep.subr.mxu0 0.0
    %3114 = vmatpush2.msra.mxu0 0.0
    %3115 = vmatprep.subr.mxu0 0.0
    %3116 = vmatpush2.msra.mxu0 0.0
    %3117 = vmatprep.subr.mxu0 0.0
    %3118 = vmatpush2.msra.mxu0 0.0
    %3119 = vmatprep.subr.mxu0 0.0
    %3120 = vmatpush2.msra.mxu0 0.0
    %3121 = vmatprep.subr.mxu0 0.0
    %3122 = vmatpush2.msra.mxu0 0.0
    %3123 = vmatprep.subr.mxu0 0.0
    %3124 = vmatpush2.msra.mxu0 0.0
    %3125 = vmatprep.subr.mxu0 0.0
    %3126 = vmatpush2.msra.mxu0 0.0
    %3127 = vmatprep.subr.mxu0 0.0
    %3128 = vmatpush2.msra.mxu0 0.0
    %3129 = vmatprep.subr.mxu0 0.0
    %3130 = vmatpush2.msra.mxu0 0.0
    %3131 = vmatprep.subr.mxu0 0.0
    %3132 = vmatpush2.msra.mxu0 0.0
    %3133 = vmatprep.subr.mxu0 0.0
    %3134 = vmatpush2.msra.mxu0 0.0
    %3135 = vmatprep.mubr.f32.mxu0 0.0
    %3136 = vmatmul.mubr.f32.gmra.mxu0 %v2558
    %v3137 = vpop.f32.mrf.mxu0
    %v3138 = vadd.f32 %v2753, %v3137
    %v3139 = vpop.f32.mrf.mxu0
    %3140 = vmatprep.mubr.f32.mxu0 0.0
    %3141 = vmatmul.mubr.f32.gmra.mxu0 %v2560
    %v3142 = vpop.f32.mrf.mxu0
    %v3143 = vadd.f32 %v2758, %v3142
    %v3144 = vpop.f32.mrf.mxu0
    %3145 = vmatprep.mubr.f32.mxu0 0.0
    %3146 = vmatmul.mubr.f32.gmra.mxu0 %v2562
    %v3147 = vpop.f32.mrf.mxu0
    %v3148 = vadd.f32 %v2763, %v3147
    %v3149 = vpop.f32.mrf.mxu0
    %3150 = vmatprep.mubr.f32.mxu0 0.0
    %3151 = vmatmul.mubr.f32.gmra.mxu0 %v2564
    %v3152 = vpop.f32.mrf.mxu0
    %v3153 = vadd.f32 %v2768, %v3152
    %v3154 = vpop.f32.mrf.mxu0
    %3155 = vmatprep.mubr.f32.mxu0 0.0
    %3156 = vmatmul.mubr.f32.gmra.mxu0 %v2566
    %v3157 = vpop.f32.mrf.mxu0
    %v3158 = vadd.f32 %v2773, %v3157
    %v3159 = vpop.f32.mrf.mxu0
    %3160 = vmatprep.mubr.f32.mxu0 0.0
    %3161 = vmatmul.mubr.f32.gmra.mxu0 %v2568
    %v3162 = vpop.f32.mrf.mxu0
    %v3163 = vadd.f32 %v2778, %v3162
    %v3164 = vpop.f32.mrf.mxu0
    %3165 = vmatprep.mubr.f32.mxu0 0.0
    %3166 = vmatmul.mubr.f32.gmra.mxu0 %v2570
    %v3167 = vpop.f32.mrf.mxu0
    %v3168 = vadd.f32 %v2783, %v3167
    %v3169 = vpop.f32.mrf.mxu0
    %3170 = vmatprep.mubr.f32.mxu0 0.0
    %3171 = vmatmul.mubr.f32.gmra.mxu0 %v2572
    %v3172 = vpop.f32.mrf.mxu0
    %v3173 = vadd.f32 %v2788, %v3172
    %v3174 = vpop.f32.mrf.mxu0
    %3175 = vmatprep.mubr.f32.mxu0 0.0
    %3176 = vmatmul.mubr.f32.gmra.mxu0 %v2574
    %v3177 = vpop.f32.mrf.mxu0
    %v3178 = vadd.f32 %v2793, %v3177
    %v3179 = vpop.f32.mrf.mxu0
    %3180 = vmatprep.mubr.f32.mxu0 0.0
    %3181 = vmatmul.mubr.f32.gmra.mxu0 %v2576
    %v3182 = vpop.f32.mrf.mxu0
    %v3183 = vadd.f32 %v2798, %v3182
    %v3184 = vpop.f32.mrf.mxu0
    %3185 = vmatprep.mubr.f32.mxu0 0.0
    %3186 = vmatmul.mubr.f32.gmra.mxu0 %v2578
    %v3187 = vpop.f32.mrf.mxu0
    %v3188 = vadd.f32 %v2803, %v3187
    %v3189 = vpop.f32.mrf.mxu0
    %3190 = vmatprep.mubr.f32.mxu0 0.0
    %3191 = vmatmul.mubr.f32.gmra.mxu0 %v2580
    %v3192 = vpop.f32.mrf.mxu0
    %v3193 = vadd.f32 %v2808, %v3192
    %v3194 = vpop.f32.mrf.mxu0
    %3195 = vmatprep.mubr.f32.mxu0 0.0
    %3196 = vmatmul.mubr.f32.gmra.mxu0 %v2582
    %v3197 = vpop.f32.mrf.mxu0
    %v3198 = vadd.f32 %v2813, %v3197
    %v3199 = vpop.f32.mrf.mxu0
    %3200 = vmatprep.mubr.f32.mxu0 0.0
    %3201 = vmatmul.mubr.f32.gmra.mxu0 %v2584
    %v3202 = vpop.f32.mrf.mxu0
    %v3203 = vadd.f32 %v2818, %v3202
    %v3204 = vpop.f32.mrf.mxu0
    %3205 = vmatprep.mubr.f32.mxu0 0.0
    %3206 = vmatmul.mubr.f32.gmra.mxu0 %v2586
    %v3207 = vpop.f32.mrf.mxu0
    %v3208 = vadd.f32 %v2823, %v3207
    %v3209 = vpop.f32.mrf.mxu0
    %3210 = vmatprep.mubr.f32.mxu0 0.0
    %3211 = vmatmul.mubr.f32.gmra.mxu0 %v2588
    %v3212 = vpop.f32.mrf.mxu0
    %v3213 = vadd.f32 %v2828, %v3212
    %v3214 = vpop.f32.mrf.mxu0
    %3215 = vmatprep.mubr.f32.mxu0 0.0
    %3216 = vmatmul.mubr.f32.gmra.mxu0 %v2590
    %v3217 = vpop.f32.mrf.mxu0
    %v3218 = vadd.f32 %v2833, %v3217
    %v3219 = vpop.f32.mrf.mxu0
    %3220 = vmatprep.mubr.f32.mxu0 0.0
    %3221 = vmatmul.mubr.f32.gmra.mxu0 %v2592
    %v3222 = vpop.f32.mrf.mxu0
    %v3223 = vadd.f32 %v2838, %v3222
    %v3224 = vpop.f32.mrf.mxu0
    %3225 = vmatprep.mubr.f32.mxu0 0.0
    %3226 = vmatmul.mubr.f32.gmra.mxu0 %v2594
    %v3227 = vpop.f32.mrf.mxu0
    %v3228 = vadd.f32 %v2843, %v3227
    %v3229 = vpop.f32.mrf.mxu0
    %3230 = vmatprep.mubr.f32.mxu0 0.0
    %3231 = vmatmul.mubr.f32.gmra.mxu0 %v2596
    %v3232 = vpop.f32.mrf.mxu0
    %v3233 = vadd.f32 %v2848, %v3232
    %v3234 = vpop.f32.mrf.mxu0
    %3235 = vmatprep.mubr.f32.mxu0 0.0
    %3236 = vmatmul.mubr.f32.gmra.mxu0 %v2598
    %v3237 = vpop.f32.mrf.mxu0
    %v3238 = vadd.f32 %v2853, %v3237
    %v3239 = vpop.f32.mrf.mxu0
    %3240 = vmatprep.mubr.f32.mxu0 0.0
    %3241 = vmatmul.mubr.f32.gmra.mxu0 %v2600
    %v3242 = vpop.f32.mrf.mxu0
    %v3243 = vadd.f32 %v2858, %v3242
    %v3244 = vpop.f32.mrf.mxu0
    %3245 = vmatprep.mubr.f32.mxu0 0.0
    %3246 = vmatmul.mubr.f32.gmra.mxu0 %v2602
    %v3247 = vpop.f32.mrf.mxu0
    %v3248 = vadd.f32 %v2863, %v3247
    %v3249 = vpop.f32.mrf.mxu0
    %3250 = vmatprep.mubr.f32.mxu0 0.0
    %3251 = vmatmul.mubr.f32.gmra.mxu0 %v2604
    %v3252 = vpop.f32.mrf.mxu0
    %v3253 = vadd.f32 %v2868, %v3252
    %v3254 = vpop.f32.mrf.mxu0
    %3255 = vmatprep.mubr.f32.mxu0 0.0
    %3256 = vmatmul.mubr.f32.gmra.mxu0 %v2606
    %v3257 = vpop.f32.mrf.mxu0
    %v3258 = vadd.f32 %v2873, %v3257
    %v3259 = vpop.f32.mrf.mxu0
    %3260 = vmatprep.mubr.f32.mxu0 0.0
    %3261 = vmatmul.mubr.f32.gmra.mxu0 %v2608
    %v3262 = vpop.f32.mrf.mxu0
    %v3263 = vadd.f32 %v2878, %v3262
    %v3264 = vpop.f32.mrf.mxu0
    %3265 = vmatprep.mubr.f32.mxu0 0.0
    %3266 = vmatmul.mubr.f32.gmra.mxu0 %v2610
    %v3267 = vpop.f32.mrf.mxu0
    %v3268 = vadd.f32 %v2883, %v3267
    %v3269 = vpop.f32.mrf.mxu0
    %3270 = vmatprep.mubr.f32.mxu0 0.0
    %3271 = vmatmul.mubr.f32.gmra.mxu0 %v2612
    %v3272 = vpop.f32.mrf.mxu0
    %v3273 = vadd.f32 %v2888, %v3272
    %v3274 = vpop.f32.mrf.mxu0
    %3275 = vmatprep.mubr.f32.mxu0 0.0
    %3276 = vmatmul.mubr.f32.gmra.mxu0 %v2614
    %v3277 = vpop.f32.mrf.mxu0
    %v3278 = vadd.f32 %v2893, %v3277
    %v3279 = vpop.f32.mrf.mxu0
    %3280 = vmatprep.mubr.f32.mxu0 0.0
    %3281 = vmatmul.mubr.f32.gmra.mxu0 %v2616
    %v3282 = vpop.f32.mrf.mxu0
    %v3283 = vadd.f32 %v2898, %v3282
    %v3284 = vpop.f32.mrf.mxu0
    %3285 = vmatprep.mubr.f32.mxu0 0.0
    %3286 = vmatmul.mubr.f32.gmra.mxu0 %v2618
    %v3287 = vpop.f32.mrf.mxu0
    %v3288 = vadd.f32 %v2903, %v3287
    %v3289 = vpop.f32.mrf.mxu0
    %3290 = vmatprep.mubr.f32.mxu0 0.0
    %3291 = vmatmul.mubr.f32.gmra.mxu0 %v2620
    %v3292 = vpop.f32.mrf.mxu0
    %v3293 = vadd.f32 %v2908, %v3292
    %v3294 = vpop.f32.mrf.mxu0
    %3295 = vmatprep.mubr.f32.mxu0 0.0
    %3296 = vmatmul.mubr.f32.gmra.mxu0 %v2622
    %v3297 = vpop.f32.mrf.mxu0
    %v3298 = vadd.f32 %v2913, %v3297
    %v3299 = vpop.f32.mrf.mxu0
    %3300 = vmatprep.mubr.f32.mxu0 0.0
    %3301 = vmatmul.mubr.f32.gmra.mxu0 %v2624
    %v3302 = vpop.f32.mrf.mxu0
    %v3303 = vadd.f32 %v2918, %v3302
    %v3304 = vpop.f32.mrf.mxu0
    %3305 = vmatprep.mubr.f32.mxu0 0.0
    %3306 = vmatmul.mubr.f32.gmra.mxu0 %v2626
    %v3307 = vpop.f32.mrf.mxu0
    %v3308 = vadd.f32 %v2923, %v3307
    %v3309 = vpop.f32.mrf.mxu0
    %3310 = vmatprep.mubr.f32.mxu0 0.0
    %3311 = vmatmul.mubr.f32.gmra.mxu0 %v2628
    %v3312 = vpop.f32.mrf.mxu0
    %v3313 = vadd.f32 %v2928, %v3312
    %v3314 = vpop.f32.mrf.mxu0
    %3315 = vmatprep.mubr.f32.mxu0 0.0
    %3316 = vmatmul.mubr.f32.gmra.mxu0 %v2630
    %v3317 = vpop.f32.mrf.mxu0
    %v3318 = vadd.f32 %v2933, %v3317
    %v3319 = vpop.f32.mrf.mxu0
    %3320 = vmatprep.mubr.f32.mxu0 0.0
    %3321 = vmatmul.mubr.f32.gmra.mxu0 %v2632
    %v3322 = vpop.f32.mrf.mxu0
    %v3323 = vadd.f32 %v2938, %v3322
    %v3324 = vpop.f32.mrf.mxu0
    %3325 = vmatprep.mubr.f32.mxu0 0.0
    %3326 = vmatmul.mubr.f32.gmra.mxu0 %v2634
    %v3327 = vpop.f32.mrf.mxu0
    %v3328 = vadd.f32 %v2943, %v3327
    %v3329 = vpop.f32.mrf.mxu0
    %3330 = vmatprep.mubr.f32.mxu0 0.0
    %3331 = vmatmul.mubr.f32.gmra.mxu0 %v2636
    %v3332 = vpop.f32.mrf.mxu0
    %v3333 = vadd.f32 %v2948, %v3332
    %v3334 = vpop.f32.mrf.mxu0
    %3335 = vmatprep.mubr.f32.mxu0 0.0
    %3336 = vmatmul.mubr.f32.gmra.mxu0 %v2638
    %v3337 = vpop.f32.mrf.mxu0
    %v3338 = vadd.f32 %v2953, %v3337
    %v3339 = vpop.f32.mrf.mxu0
    %3340 = vmatprep.mubr.f32.mxu0 0.0
    %3341 = vmatmul.mubr.f32.gmra.mxu0 %v2640
    %v3342 = vpop.f32.mrf.mxu0
    %v3343 = vadd.f32 %v2958, %v3342
    %v3344 = vpop.f32.mrf.mxu0
    %3345 = vmatprep.mubr.f32.mxu0 0.0
    %3346 = vmatmul.mubr.f32.gmra.mxu0 %v2642
    %v3347 = vpop.f32.mrf.mxu0
    %v3348 = vadd.f32 %v2963, %v3347
    %v3349 = vpop.f32.mrf.mxu0
    %3350 = vmatprep.mubr.f32.mxu0 0.0
    %3351 = vmatmul.mubr.f32.gmra.mxu0 %v2644
    %v3352 = vpop.f32.mrf.mxu0
    %v3353 = vadd.f32 %v2968, %v3352
    %v3354 = vpop.f32.mrf.mxu0
    %3355 = vmatprep.mubr.f32.mxu0 0.0
    %3356 = vmatmul.mubr.f32.gmra.mxu0 %v2646
    %v3357 = vpop.f32.mrf.mxu0
    %v3358 = vadd.f32 %v2973, %v3357
    %v3359 = vpop.f32.mrf.mxu0
    %3360 = vmatprep.mubr.f32.mxu0 0.0
    %3361 = vmatmul.mubr.f32.gmra.mxu0 %v2648
    %v3362 = vpop.f32.mrf.mxu0
    %v3363 = vadd.f32 %v2978, %v3362
    %v3364 = vpop.f32.mrf.mxu0
    %3365 = vmatprep.mubr.f32.mxu0 0.0
    %3366 = vmatmul.mubr.f32.gmra.mxu0 %v2650
    %v3367 = vpop.f32.mrf.mxu0
    %v3368 = vadd.f32 %v2983, %v3367
    %v3369 = vpop.f32.mrf.mxu0
    %3370 = vmatprep.mubr.f32.mxu0 0.0
    %3371 = vmatmul.mubr.f32.gmra.mxu0 %v2652
    %v3372 = vpop.f32.mrf.mxu0
    %v3373 = vadd.f32 %v2988, %v3372
    %v3374 = vpop.f32.mrf.mxu0
    %3375 = vmatprep.mubr.f32.mxu0 0.0
    %3376 = vmatmul.mubr.f32.gmra.mxu0 %v2654
    %v3377 = vpop.f32.mrf.mxu0
    %v3378 = vadd.f32 %v2993, %v3377
    %v3379 = vpop.f32.mrf.mxu0
    %3380 = vmatprep.mubr.f32.mxu0 0.0
    %3381 = vmatmul.mubr.f32.gmra.mxu0 %v2656
    %v3382 = vpop.f32.mrf.mxu0
    %v3383 = vadd.f32 %v2998, %v3382
    %v3384 = vpop.f32.mrf.mxu0
    %3385 = vmatprep.mubr.f32.mxu0 0.0
    %3386 = vmatmul.mubr.f32.gmra.mxu0 %v2658
    %v3387 = vpop.f32.mrf.mxu0
    %v3388 = vadd.f32 %v3003, %v3387
    %v3389 = vpop.f32.mrf.mxu0
    %3390 = vmatprep.mubr.f32.mxu0 0.0
    %3391 = vmatmul.mubr.f32.gmra.mxu0 %v2660
    %v3392 = vpop.f32.mrf.mxu0
    %v3393 = vadd.f32 %v3008, %v3392
    %v3394 = vpop.f32.mrf.mxu0
    %3395 = vmatprep.mubr.f32.mxu0 0.0
    %3396 = vmatmul.mubr.f32.gmra.mxu0 %v2662
    %v3397 = vpop.f32.mrf.mxu0
    %v3398 = vadd.f32 %v3013, %v3397
    %v3399 = vpop.f32.mrf.mxu0
    %3400 = vmatprep.mubr.f32.mxu0 0.0
    %3401 = vmatmul.mubr.f32.gmra.mxu0 %v2664
    %v3402 = vpop.f32.mrf.mxu0
    %v3403 = vadd.f32 %v3018, %v3402
    %v3404 = vpop.f32.mrf.mxu0
    %3405 = vmatprep.mubr.f32.mxu0 0.0
    %3406 = vmatmul.mubr.f32.gmra.mxu0 %v2666
    %v3407 = vpop.f32.mrf.mxu0
    %v3408 = vadd.f32 %v3023, %v3407
    %v3409 = vpop.f32.mrf.mxu0
    %3410 = vmatprep.mubr.f32.mxu0 0.0
    %3411 = vmatmul.mubr.f32.gmra.mxu0 %v2668
    %v3412 = vpop.f32.mrf.mxu0
    %v3413 = vadd.f32 %v3028, %v3412
    %v3414 = vpop.f32.mrf.mxu0
    %3415 = vmatprep.mubr.f32.mxu0 0.0
    %3416 = vmatmul.mubr.f32.gmra.mxu0 %v2670
    %v3417 = vpop.f32.mrf.mxu0
    %v3418 = vadd.f32 %v3033, %v3417
    %v3419 = vpop.f32.mrf.mxu0
    %3420 = vmatprep.mubr.f32.mxu0 0.0
    %3421 = vmatmul.mubr.f32.gmra.mxu0 %v2672
    %v3422 = vpop.f32.mrf.mxu0
    %v3423 = vadd.f32 %v3038, %v3422
    %v3424 = vpop.f32.mrf.mxu0
    %3425 = vmatprep.mubr.f32.mxu0 0.0
    %3426 = vmatmul.mubr.f32.gmra.mxu0 %v2674
    %v3427 = vpop.f32.mrf.mxu0
    %v3428 = vadd.f32 %v3043, %v3427
    %v3429 = vpop.f32.mrf.mxu0
    %3430 = vmatprep.mubr.f32.mxu0 0.0
    %3431 = vmatmul.mubr.f32.gmra.mxu0 %v2676
    %v3432 = vpop.f32.mrf.mxu0
    %v3433 = vadd.f32 %v3048, %v3432
    %v3434 = vpop.f32.mrf.mxu0
    %3435 = vmatprep.mubr.f32.mxu0 0.0
    %3436 = vmatmul.mubr.f32.gmra.mxu0 %v2678
    %v3437 = vpop.f32.mrf.mxu0
    %v3438 = vadd.f32 %v3053, %v3437
    %v3439 = vpop.f32.mrf.mxu0
    %3440 = vmatprep.mubr.f32.mxu0 0.0
    %3441 = vmatmul.mubr.f32.gmra.mxu0 %v2680
    %v3442 = vpop.f32.mrf.mxu0
    %v3443 = vadd.f32 %v3058, %v3442
    %v3444 = vpop.f32.mrf.mxu0
    %3445 = vmatprep.mubr.f32.mxu0 0.0
    %3446 = vmatmul.mubr.f32.gmra.mxu0 %v2682
    %v3447 = vpop.f32.mrf.mxu0
    %v3448 = vadd.f32 %v3063, %v3447
    %v3449 = vpop.f32.mrf.mxu0
    %3450 = vmatprep.mubr.f32.mxu0 0.0
    %3451 = vmatmul.mubr.f32.gmra.mxu0 %v2684
    %v3452 = vpop.f32.mrf.mxu0
    %v3453 = vadd.f32 %v3068, %v3452
    %v3454 = vpop.f32.mrf.mxu0
    %3455 = vdwg.mxu0
    %v3456 = vmax.f32 %v3138, 0.0
    %v3457 = vmax.f32 %v3143, 0.0
    %v3458 = vmax.f32 %v3148, 0.0
    %v3459 = vmax.f32 %v3153, 0.0
    %v3460 = vmax.f32 %v3158, 0.0
    %v3461 = vmax.f32 %v3163, 0.0
    %v3462 = vmax.f32 %v3168, 0.0
    %v3463 = vmax.f32 %v3173, 0.0
    %v3464 = vmax.f32 %v3178, 0.0
    %v3465 = vmax.f32 %v3183, 0.0
    %v3466 = vmax.f32 %v3188, 0.0
    %v3467 = vmax.f32 %v3193, 0.0
    %v3468 = vmax.f32 %v3198, 0.0
    %v3469 = vmax.f32 %v3203, 0.0
    %v3470 = vmax.f32 %v3208, 0.0
    %v3471 = vmax.f32 %v3213, 0.0
    %v3472 = vmax.f32 %v3218, 0.0
    %v3473 = vmax.f32 %v3223, 0.0
    %v3474 = vmax.f32 %v3228, 0.0
    %v3475 = vmax.f32 %v3233, 0.0
    %v3476 = vmax.f32 %v3238, 0.0
    %v3477 = vmax.f32 %v3243, 0.0
    %v3478 = vmax.f32 %v3248, 0.0
    %v3479 = vmax.f32 %v3253, 0.0
    %v3480 = vmax.f32 %v3258, 0.0
    %v3481 = vmax.f32 %v3263, 0.0
    %v3482 = vmax.f32 %v3268, 0.0
    %v3483 = vmax.f32 %v3273, 0.0
    %v3484 = vmax.f32 %v3278, 0.0
    %v3485 = vmax.f32 %v3283, 0.0
    %v3486 = vmax.f32 %v3288, 0.0
    %v3487 = vmax.f32 %v3293, 0.0
    %v3488 = vmax.f32 %v3298, 0.0
    %v3489 = vmax.f32 %v3303, 0.0
    %v3490 = vmax.f32 %v3308, 0.0
    %v3491 = vmax.f32 %v3313, 0.0
    %v3492 = vmax.f32 %v3318, 0.0
    %v3493 = vmax.f32 %v3323, 0.0
    %v3494 = vmax.f32 %v3328, 0.0
    %v3495 = vmax.f32 %v3333, 0.0
    %v3496 = vmax.f32 %v3338, 0.0
    %v3497 = vmax.f32 %v3343, 0.0
    %v3498 = vmax.f32 %v3348, 0.0
    %v3499 = vmax.f32 %v3353, 0.0
    %v3500 = vmax.f32 %v3358, 0.0
    %v3501 = vmax.f32 %v3363, 0.0
    %v3502 = vmax.f32 %v3368, 0.0
    %v3503 = vmax.f32 %v3373, 0.0
    %v3504 = vmax.f32 %v3378, 0.0
    %v3505 = vmax.f32 %v3383, 0.0
    %v3506 = vmax.f32 %v3388, 0.0
    %v3507 = vmax.f32 %v3393, 0.0
    %v3508 = vmax.f32 %v3398, 0.0
    %v3509 = vmax.f32 %v3403, 0.0
    %v3510 = vmax.f32 %v3408, 0.0
    %v3511 = vmax.f32 %v3413, 0.0
    %v3512 = vmax.f32 %v3418, 0.0
    %v3513 = vmax.f32 %v3423, 0.0
    %v3514 = vmax.f32 %v3428, 0.0
    %v3515 = vmax.f32 %v3433, 0.0
    %v3516 = vmax.f32 %v3438, 0.0
    %v3517 = vmax.f32 %v3443, 0.0
    %v3518 = vmax.f32 %v3448, 0.0
    %v3519 = vmax.f32 %v3453, 0.0
    %s3520 = scalar_lea.vmem [#allocation3], 24
    %3521 = vst.msk [vmem:[%s3520 + $0x1] sm:$0xff] %vm105, %v3456
    %3522 = vst.msk [vmem:[%s3520 + $0x9] sm:$0xff] %vm105, %v3457
    %3523 = vst.msk [vmem:[%s3520 + $0x19] sm:$0xff] %vm105, %v3458
    %3524 = vst.msk [vmem:[%s3520 + $0x21] sm:$0xff] %vm105, %v3459
    %3525 = vst.msk [vmem:[%s3520 + $0x31] sm:$0xff] %vm105, %v3460
    %3526 = vst.msk [vmem:[%s3520 + $0x39] sm:$0xff] %vm105, %v3461
    %3527 = vst.msk [vmem:[%s3520 + $0x49] sm:$0xff] %vm105, %v3462
    %3528 = vst.msk [vmem:[%s3520 + $0x51] sm:$0xff] %vm105, %v3463
    %3529 = vst.msk [vmem:[%s3520 + $0x61] sm:$0xff] %vm105, %v3464
    %3530 = vst.msk [vmem:[%s3520 + $0x69] sm:$0xff] %vm105, %v3465
    %3531 = vst.msk [vmem:[%s3520 + $0x79] sm:$0xff] %vm105, %v3466
    %3532 = vst.msk [vmem:[%s3520 + $0x81] sm:$0xff] %vm105, %v3467
    %3533 = vst.msk [vmem:[%s3520 + $0x91] sm:$0xff] %vm105, %v3468
    %3534 = vst.msk [vmem:[%s3520 + $0x99] sm:$0xff] %vm105, %v3469
    %3535 = vst.msk [vmem:[%s3520 + $0xa9] sm:$0xff] %vm105, %v3470
    %3536 = vst.msk [vmem:[%s3520 + $0xb1] sm:$0xff] %vm105, %v3471
    %3537 = vst.msk [vmem:[%s3520 + $0xc1] sm:$0xff] %vm105, %v3472
    %3538 = vst.msk [vmem:[%s3520 + $0xc9] sm:$0xff] %vm105, %v3473
    %3539 = vst.msk [vmem:[%s3520 + $0xd9] sm:$0xff] %vm105, %v3474
    %3540 = vst.msk [vmem:[%s3520 + $0xe1] sm:$0xff] %vm105, %v3475
    %3541 = vst.msk [vmem:[%s3520 + $0xf1] sm:$0xff] %vm105, %v3476
    %3542 = vst.msk [vmem:[%s3520 + $0xf9] sm:$0xff] %vm105, %v3477
    %3543 = vst.msk [vmem:[%s3520 + $0x109] sm:$0xff] %vm105, %v3478
    %3544 = vst.msk [vmem:[%s3520 + $0x111] sm:$0xff] %vm105, %v3479
    %3545 = vst.msk [vmem:[%s3520 + $0x121] sm:$0xff] %vm105, %v3480
    %3546 = vst.msk [vmem:[%s3520 + $0x129] sm:$0xff] %vm105, %v3481
    %3547 = vst.msk [vmem:[%s3520 + $0x139] sm:$0xff] %vm105, %v3482
    %3548 = vst.msk [vmem:[%s3520 + $0x141] sm:$0xff] %vm105, %v3483
    %3549 = vst.msk [vmem:[%s3520 + $0x151] sm:$0xff] %vm105, %v3484
    %3550 = vst.msk [vmem:[%s3520 + $0x159] sm:$0xff] %vm105, %v3485
    %3551 = vst.msk [vmem:[%s3520 + $0x169] sm:$0xff] %vm105, %v3486
    %3552 = vst.msk [vmem:[%s3520 + $0x171] sm:$0xff] %vm105, %v3487
    %3553 = vst.msk [vmem:[%s3520 + $0x1b1] sm:$0xff] %vm105, %v3488
    %3554 = vst.msk [vmem:[%s3520 + $0x1b9] sm:$0xff] %vm105, %v3489
    %3555 = vst.msk [vmem:[%s3520 + $0x1c9] sm:$0xff] %vm105, %v3490
    %3556 = vst.msk [vmem:[%s3520 + $0x1d1] sm:$0xff] %vm105, %v3491
    %3557 = vst.msk [vmem:[%s3520 + $0x1e1] sm:$0xff] %vm105, %v3492
    %3558 = vst.msk [vmem:[%s3520 + $0x1e9] sm:$0xff] %vm105, %v3493
    %3559 = vst.msk [vmem:[%s3520 + $0x1f9] sm:$0xff] %vm105, %v3494
    %3560 = vst.msk [vmem:[%s3520 + $0x201] sm:$0xff] %vm105, %v3495
    %3561 = vst.msk [vmem:[%s3520 + $0x211] sm:$0xff] %vm105, %v3496
    %3562 = vst.msk [vmem:[%s3520 + $0x219] sm:$0xff] %vm105, %v3497
    %3563 = vst.msk [vmem:[%s3520 + $0x229] sm:$0xff] %vm105, %v3498
    %3564 = vst.msk [vmem:[%s3520 + $0x231] sm:$0xff] %vm105, %v3499
    %3565 = vst.msk [vmem:[%s3520 + $0x241] sm:$0xff] %vm105, %v3500
    %3566 = vst.msk [vmem:[%s3520 + $0x249] sm:$0xff] %vm105, %v3501
    %3567 = vst.msk [vmem:[%s3520 + $0x259] sm:$0xff] %vm105, %v3502
    %3568 = vst.msk [vmem:[%s3520 + $0x261] sm:$0xff] %vm105, %v3503
    %3569 = vst.msk [vmem:[%s3520 + $0x271] sm:$0xff] %vm105, %v3504
    %3570 = vst.msk [vmem:[%s3520 + $0x279] sm:$0xff] %vm105, %v3505
    %3571 = vst.msk [vmem:[%s3520 + $0x289] sm:$0xff] %vm105, %v3506
    %3572 = vst.msk [vmem:[%s3520 + $0x291] sm:$0xff] %vm105, %v3507
    %3573 = vst.msk [vmem:[%s3520 + $0x2a1] sm:$0xff] %vm105, %v3508
    %3574 = vst.msk [vmem:[%s3520 + $0x2a9] sm:$0xff] %vm105, %v3509
    %3575 = vst.msk [vmem:[%s3520 + $0x2b9] sm:$0xff] %vm105, %v3510
    %3576 = vst.msk [vmem:[%s3520 + $0x2c1] sm:$0xff] %vm105, %v3511
    %3577 = vst.msk [vmem:[%s3520 + $0x2d1] sm:$0xff] %vm105, %v3512
    %3578 = vst.msk [vmem:[%s3520 + $0x2d9] sm:$0xff] %vm105, %v3513
    %3579 = vst.msk [vmem:[%s3520 + $0x2e9] sm:$0xff] %vm105, %v3514
    %3580 = vst.msk [vmem:[%s3520 + $0x2f1] sm:$0xff] %vm105, %v3515
    %3581 = vst.msk [vmem:[%s3520 + $0x301] sm:$0xff] %vm105, %v3516
    %3582 = vst.msk [vmem:[%s3520 + $0x309] sm:$0xff] %vm105, %v3517
    %3583 = vst.msk [vmem:[%s3520 + $0x319] sm:$0xff] %vm105, %v3518
    %3584 = vst.msk [vmem:[%s3520 + $0x321] sm:$0xff] %vm105, %v3519
    %v3585 = vld [vmem:[#allocation3] sm:$0xff]
    %v3586 = vld [vmem:[#allocation3 + $0x8] sm:$0xff]
    %v3587 = vld [vmem:[#allocation3 + $0x10] sm:$0xff]
    %v3588 = vld [vmem:[#allocation3 + $0x18] sm:$0xff]
    %v3589 = vld [vmem:[#allocation3 + $0x20] sm:$0xff]
    %v3590 = vld [vmem:[#allocation3 + $0x28] sm:$0xff]
    %v3591 = vld [vmem:[#allocation3 + $0x30] sm:$0xff]
    %v3592 = vld [vmem:[#allocation3 + $0x38] sm:$0xff]
    %v3593 = vld [vmem:[#allocation3 + $0x40] sm:$0xff]
    %v3594 = vld [vmem:[#allocation3 + $0x48] sm:$0xff]
    %v3595 = vld [vmem:[#allocation3 + $0x50] sm:$0xff]
    %v3596 = vld [vmem:[#allocation3 + $0x58] sm:$0xff]
    %v3597 = vld [vmem:[#allocation3 + $0x60] sm:$0xff]
    %v3598 = vld [vmem:[#allocation3 + $0x68] sm:$0xff]
    %v3599 = vld [vmem:[#allocation3 + $0x70] sm:$0xff]
    %v3600 = vld [vmem:[#allocation3 + $0x78] sm:$0xff]
    %v3601 = vld [vmem:[#allocation3 + $0x80] sm:$0xff]
    %v3602 = vld [vmem:[#allocation3 + $0x88] sm:$0xff]
    %v3603 = vld [vmem:[#allocation3 + $0x90] sm:$0xff]
    %v3604 = vld [vmem:[#allocation3 + $0x98] sm:$0xff]
    %v3605 = vld [vmem:[#allocation3 + $0xa0] sm:$0xff]
    %v3606 = vld [vmem:[#allocation3 + $0xa8] sm:$0xff]
    %v3607 = vld [vmem:[#allocation3 + $0xb0] sm:$0xff]
    %v3608 = vld [vmem:[#allocation3 + $0xb8] sm:$0xff]
    %v3609 = vld [vmem:[#allocation3 + $0xc0] sm:$0xff]
    %v3610 = vld [vmem:[#allocation3 + $0xc8] sm:$0xff]
    %v3611 = vld [vmem:[#allocation3 + $0xd0] sm:$0xff]
    %v3612 = vld [vmem:[#allocation3 + $0xd8] sm:$0xff]
    %v3613 = vld [vmem:[#allocation3 + $0xe0] sm:$0xff]
    %v3614 = vld [vmem:[#allocation3 + $0xe8] sm:$0xff]
    %v3615 = vld [vmem:[#allocation3 + $0xf0] sm:$0xff]
    %v3616 = vld [vmem:[#allocation3 + $0xf8] sm:$0xff]
    %v3617 = vld [vmem:[#allocation3 + $0x100] sm:$0xff]
    %v3618 = vld [vmem:[#allocation3 + $0x108] sm:$0xff]
    %v3619 = vld [vmem:[#allocation3 + $0x110] sm:$0xff]
    %v3620 = vld [vmem:[#allocation3 + $0x118] sm:$0xff]
    %v3621 = vld [vmem:[#allocation3 + $0x120] sm:$0xff]
    %v3622 = vld [vmem:[#allocation3 + $0x128] sm:$0xff]
    %v3623 = vld [vmem:[#allocation3 + $0x130] sm:$0xff]
    %v3624 = vld [vmem:[#allocation3 + $0x138] sm:$0xff]
    %v3625 = vld [vmem:[#allocation3 + $0x140] sm:$0xff]
    %v3626 = vld [vmem:[#allocation3 + $0x148] sm:$0xff]
    %v3627 = vld [vmem:[#allocation3 + $0x150] sm:$0xff]
    %v3628 = vld [vmem:[#allocation3 + $0x158] sm:$0xff]
    %v3629 = vld [vmem:[#allocation3 + $0x160] sm:$0xff]
    %v3630 = vld [vmem:[#allocation3 + $0x168] sm:$0xff]
    %v3631 = vld [vmem:[#allocation3 + $0x170] sm:$0xff]
    %v3632 = vld [vmem:[#allocation3 + $0x178] sm:$0xff]
    %v3633 = vld [vmem:[#allocation3 + $0x180] sm:$0xff]
    %v3634 = vld [vmem:[#allocation3 + $0x188] sm:$0xff]
    %v3635 = vld [vmem:[#allocation3 + $0x190] sm:$0xff]
    %v3636 = vld [vmem:[#allocation3 + $0x198] sm:$0xff]
    %v3637 = vld [vmem:[#allocation3 + $0x1a0] sm:$0xff]
    %v3638 = vld [vmem:[#allocation3 + $0x1a8] sm:$0xff]
    %v3639 = vld [vmem:[#allocation3 + $0x1b0] sm:$0xff]
    %v3640 = vld [vmem:[#allocation3 + $0x1b8] sm:$0xff]
    %v3641 = vld [vmem:[#allocation3 + $0x1c0] sm:$0xff]
    %v3642 = vld [vmem:[#allocation3 + $0x1c8] sm:$0xff]
    %v3643 = vld [vmem:[#allocation3 + $0x1d0] sm:$0xff]
    %v3644 = vld [vmem:[#allocation3 + $0x1d8] sm:$0xff]
    %v3645 = vld [vmem:[#allocation3 + $0x1e0] sm:$0xff]
    %v3646 = vld [vmem:[#allocation3 + $0x1e8] sm:$0xff]
    %v3647 = vld [vmem:[#allocation3 + $0x1f0] sm:$0xff]
    %v3648 = vld [vmem:[#allocation3 + $0x1f8] sm:$0xff]
    %v3649 = vld [vmem:[#allocation3 + $0x200] sm:$0xff]
    %v3650 = vld [vmem:[#allocation3 + $0x208] sm:$0xff]
    %v3651 = vld [vmem:[#allocation3 + $0x210] sm:$0xff]
    %v3652 = vld [vmem:[#allocation3 + $0x218] sm:$0xff]
    %v3653 = vld [vmem:[#allocation3 + $0x220] sm:$0xff]
    %v3654 = vld [vmem:[#allocation3 + $0x228] sm:$0xff]
    %v3655 = vld [vmem:[#allocation3 + $0x230] sm:$0xff]
    %v3656 = vld [vmem:[#allocation3 + $0x238] sm:$0xff]
    %v3657 = vld [vmem:[#allocation3 + $0x240] sm:$0xff]
    %v3658 = vld [vmem:[#allocation3 + $0x248] sm:$0xff]
    %v3659 = vld [vmem:[#allocation3 + $0x250] sm:$0xff]
    %v3660 = vld [vmem:[#allocation3 + $0x258] sm:$0xff]
    %v3661 = vld [vmem:[#allocation3 + $0x260] sm:$0xff]
    %v3662 = vld [vmem:[#allocation3 + $0x268] sm:$0xff]
    %v3663 = vld [vmem:[#allocation3 + $0x270] sm:$0xff]
    %v3664 = vld [vmem:[#allocation3 + $0x278] sm:$0xff]
    %v3665 = vld [vmem:[#allocation3 + $0x280] sm:$0xff]
    %v3666 = vld [vmem:[#allocation3 + $0x288] sm:$0xff]
    %v3667 = vld [vmem:[#allocation3 + $0x290] sm:$0xff]
    %v3668 = vld [vmem:[#allocation3 + $0x298] sm:$0xff]
    %v3669 = vld [vmem:[#allocation3 + $0x2a0] sm:$0xff]
    %v3670 = vld [vmem:[#allocation3 + $0x2a8] sm:$0xff]
    %v3671 = vld [vmem:[#allocation3 + $0x2b0] sm:$0xff]
    %v3672 = vld [vmem:[#allocation3 + $0x2b8] sm:$0xff]
    %v3673 = vld [vmem:[#allocation3 + $0x2c0] sm:$0xff]
    %v3674 = vld [vmem:[#allocation3 + $0x2c8] sm:$0xff]
    %v3675 = vld [vmem:[#allocation3 + $0x2d0] sm:$0xff]
    %v3676 = vld [vmem:[#allocation3 + $0x2d8] sm:$0xff]
    %v3677 = vld [vmem:[#allocation3 + $0x2e0] sm:$0xff]
    %v3678 = vld [vmem:[#allocation3 + $0x2e8] sm:$0xff]
    %v3679 = vld [vmem:[#allocation3 + $0x2f0] sm:$0xff]
    %v3680 = vld [vmem:[#allocation3 + $0x2f8] sm:$0xff]
    %v3681 = vld [vmem:[#allocation3 + $0x300] sm:$0xff]
    %v3682 = vld [vmem:[#allocation3 + $0x308] sm:$0xff]
    %v3683 = vld [vmem:[#allocation3 + $0x310] sm:$0xff]
    %v3684 = vld [vmem:[#allocation3 + $0x318] sm:$0xff]
    %v3685 = vld [vmem:[#allocation3 + $0x320] sm:$0xff]
    %v3686 = vld [vmem:[#allocation3 + $0x328] sm:$0xff]
    %v3687 = vld [vmem:[#allocation3 + $0x330] sm:$0xff]
    %v3688 = vld [vmem:[#allocation3 + $0x338] sm:$0xff]
    %v3689 = vld [vmem:[#allocation3 + $0x340] sm:$0xff]
    %v3690 = vld [vmem:[#allocation3 + $0x348] sm:$0xff]
    %v3691 = vld [vmem:[#allocation3 + $0x350] sm:$0xff]
    %v3692 = vld [vmem:[#allocation3 + $0x358] sm:$0xff]
    %v3789 = vrot.slane %v3585, 1
    %v3790 = vrot.slane %v3586, 1
    %v3791 = vsel %vm610, %v3789, %v3790
    %v3792 = vrot.slane %v3587, 1
    %v3793 = vsel %vm610, %v3790, %v3792
    %v3794 = vrot.slane %v3588, 1
    %v3795 = vrot.slane %v3589, 1
    %v3796 = vsel %vm610, %v3794, %v3795
    %v3797 = vrot.slane %v3590, 1
    %v3798 = vsel %vm610, %v3795, %v3797
    %v3799 = vrot.slane %v3591, 1
    %v3800 = vrot.slane %v3592, 1
    %v3801 = vsel %vm610, %v3799, %v3800
    %v3802 = vrot.slane %v3593, 1
    %v3803 = vsel %vm610, %v3800, %v3802
    %v3804 = vrot.slane %v3594, 1
    %v3805 = vrot.slane %v3595, 1
    %v3806 = vsel %vm610, %v3804, %v3805
    %v3807 = vrot.slane %v3596, 1
    %v3808 = vsel %vm610, %v3805, %v3807
    %v3809 = vrot.slane %v3597, 1
    %v3810 = vrot.slane %v3598, 1
    %v3811 = vsel %vm610, %v3809, %v3810
    %v3812 = vrot.slane %v3599, 1
    %v3813 = vsel %vm610, %v3810, %v3812
    %v3814 = vrot.slane %v3600, 1
    %v3815 = vrot.slane %v3601, 1
    %v3816 = vsel %vm610, %v3814, %v3815
    %v3817 = vrot.slane %v3602, 1
    %v3818 = vsel %vm610, %v3815, %v3817
    %v3819 = vrot.slane %v3603, 1
    %v3820 = vrot.slane %v3604, 1
    %v3821 = vsel %vm610, %v3819, %v3820
    %v3822 = vrot.slane %v3605, 1
    %v3823 = vsel %vm610, %v3820, %v3822
    %v3824 = vrot.slane %v3606, 1
    %v3825 = vrot.slane %v3607, 1
    %v3826 = vsel %vm610, %v3824, %v3825
    %v3827 = vrot.slane %v3608, 1
    %v3828 = vsel %vm610, %v3825, %v3827
    %v3829 = vrot.slane %v3609, 1
    %v3830 = vrot.slane %v3610, 1
    %v3831 = vsel %vm610, %v3829, %v3830
    %v3832 = vrot.slane %v3611, 1
    %v3833 = vsel %vm610, %v3830, %v3832
    %v3834 = vrot.slane %v3612, 1
    %v3835 = vrot.slane %v3613, 1
    %v3836 = vsel %vm610, %v3834, %v3835
    %v3837 = vrot.slane %v3614, 1
    %v3838 = vsel %vm610, %v3835, %v3837
    %v3839 = vrot.slane %v3615, 1
    %v3840 = vrot.slane %v3616, 1
    %v3841 = vsel %vm610, %v3839, %v3840
    %v3842 = vrot.slane %v3617, 1
    %v3843 = vsel %vm610, %v3840, %v3842
    %v3844 = vrot.slane %v3618, 1
    %v3845 = vrot.slane %v3619, 1
    %v3846 = vsel %vm610, %v3844, %v3845
    %v3847 = vrot.slane %v3620, 1
    %v3848 = vsel %vm610, %v3845, %v3847
    %v3849 = vrot.slane %v3621, 1
    %v3850 = vrot.slane %v3622, 1
    %v3851 = vsel %vm610, %v3849, %v3850
    %v3852 = vrot.slane %v3623, 1
    %v3853 = vsel %vm610, %v3850, %v3852
    %v3854 = vrot.slane %v3624, 1
    %v3855 = vrot.slane %v3625, 1
    %v3856 = vsel %vm610, %v3854, %v3855
    %v3857 = vrot.slane %v3626, 1
    %v3858 = vsel %vm610, %v3855, %v3857
    %v3859 = vrot.slane %v3627, 1
    %v3860 = vrot.slane %v3628, 1
    %v3861 = vsel %vm610, %v3859, %v3860
    %v3862 = vrot.slane %v3629, 1
    %v3863 = vsel %vm610, %v3860, %v3862
    %v3864 = vrot.slane %v3630, 1
    %v3865 = vrot.slane %v3631, 1
    %v3866 = vsel %vm610, %v3864, %v3865
    %v3867 = vrot.slane %v3632, 1
    %v3868 = vsel %vm610, %v3865, %v3867
    %v3869 = vrot.slane %v3639, 1
    %v3870 = vrot.slane %v3640, 1
    %v3871 = vsel %vm610, %v3869, %v3870
    %v3872 = vrot.slane %v3641, 1
    %v3873 = vsel %vm610, %v3870, %v3872
    %v3874 = vrot.slane %v3642, 1
    %v3875 = vrot.slane %v3643, 1
    %v3876 = vsel %vm610, %v3874, %v3875
    %v3877 = vrot.slane %v3644, 1
    %v3878 = vsel %vm610, %v3875, %v3877
    %v3879 = vrot.slane %v3645, 1
    %v3880 = vrot.slane %v3646, 1
    %v3881 = vsel %vm610, %v3879, %v3880
    %v3882 = vrot.slane %v3647, 1
    %v3883 = vsel %vm610, %v3880, %v3882
    %v3884 = vrot.slane %v3648, 1
    %v3885 = vrot.slane %v3649, 1
    %v3886 = vsel %vm610, %v3884, %v3885
    %v3887 = vrot.slane %v3650, 1
    %v3888 = vsel %vm610, %v3885, %v3887
    %v3889 = vrot.slane %v3651, 1
    %v3890 = vrot.slane %v3652, 1
    %v3891 = vsel %vm610, %v3889, %v3890
    %v3892 = vrot.slane %v3653, 1
    %v3893 = vsel %vm610, %v3890, %v3892
    %v3894 = vrot.slane %v3654, 1
    %v3895 = vrot.slane %v3655, 1
    %v3896 = vsel %vm610, %v3894, %v3895
    %v3897 = vrot.slane %v3656, 1
    %v3898 = vsel %vm610, %v3895, %v3897
    %v3899 = vrot.slane %v3657, 1
    %v3900 = vrot.slane %v3658, 1
    %v3901 = vsel %vm610, %v3899, %v3900
    %v3902 = vrot.slane %v3659, 1
    %v3903 = vsel %vm610, %v3900, %v3902
    %v3904 = vrot.slane %v3660, 1
    %v3905 = vrot.slane %v3661, 1
    %v3906 = vsel %vm610, %v3904, %v3905
    %v3907 = vrot.slane %v3662, 1
    %v3908 = vsel %vm610, %v3905, %v3907
    %v3909 = vrot.slane %v3663, 1
    %v3910 = vrot.slane %v3664, 1
    %v3911 = vsel %vm610, %v3909, %v3910
    %v3912 = vrot.slane %v3665, 1
    %v3913 = vsel %vm610, %v3910, %v3912
    %v3914 = vrot.slane %v3666, 1
    %v3915 = vrot.slane %v3667, 1
    %v3916 = vsel %vm610, %v3914, %v3915
    %v3917 = vrot.slane %v3668, 1
    %v3918 = vsel %vm610, %v3915, %v3917
    %v3919 = vrot.slane %v3669, 1
    %v3920 = vrot.slane %v3670, 1
    %v3921 = vsel %vm610, %v3919, %v3920
    %v3922 = vrot.slane %v3671, 1
    %v3923 = vsel %vm610, %v3920, %v3922
    %v3924 = vrot.slane %v3672, 1
    %v3925 = vrot.slane %v3673, 1
    %v3926 = vsel %vm610, %v3924, %v3925
    %v3927 = vrot.slane %v3674, 1
    %v3928 = vsel %vm610, %v3925, %v3927
    %v3929 = vrot.slane %v3675, 1
    %v3930 = vrot.slane %v3676, 1
    %v3931 = vsel %vm610, %v3929, %v3930
    %v3932 = vrot.slane %v3677, 1
    %v3933 = vsel %vm610, %v3930, %v3932
    %v3934 = vrot.slane %v3678, 1
    %v3935 = vrot.slane %v3679, 1
    %v3936 = vsel %vm610, %v3934, %v3935
    %v3937 = vrot.slane %v3680, 1
    %v3938 = vsel %vm610, %v3935, %v3937
    %v3939 = vrot.slane %v3681, 1
    %v3940 = vrot.slane %v3682, 1
    %v3941 = vsel %vm610, %v3939, %v3940
    %v3942 = vrot.slane %v3683, 1
    %v3943 = vsel %vm610, %v3940, %v3942
    %v3944 = vrot.slane %v3684, 1
    %v3945 = vrot.slane %v3685, 1
    %v3946 = vsel %vm610, %v3944, %v3945
    %v3947 = vrot.slane %v3686, 1
    %v3948 = vsel %vm610, %v3945, %v3947
    %v3949 = vrot.slane %v3585, 2
    %v3950 = vrot.slane %v3586, 2
    %v3951 = vsel %vm771, %v3949, %v3950
    %v3952 = vrot.slane %v3587, 2
    %v3953 = vsel %vm771, %v3950, %v3952
    %v3954 = vrot.slane %v3588, 2
    %v3955 = vrot.slane %v3589, 2
    %v3956 = vsel %vm771, %v3954, %v3955
    %v3957 = vrot.slane %v3590, 2
    %v3958 = vsel %vm771, %v3955, %v3957
    %v3959 = vrot.slane %v3591, 2
    %v3960 = vrot.slane %v3592, 2
    %v3961 = vsel %vm771, %v3959, %v3960
    %v3962 = vrot.slane %v3593, 2
    %v3963 = vsel %vm771, %v3960, %v3962
    %v3964 = vrot.slane %v3594, 2
    %v3965 = vrot.slane %v3595, 2
    %v3966 = vsel %vm771, %v3964, %v3965
    %v3967 = vrot.slane %v3596, 2
    %v3968 = vsel %vm771, %v3965, %v3967
    %v3969 = vrot.slane %v3597, 2
    %v3970 = vrot.slane %v3598, 2
    %v3971 = vsel %vm771, %v3969, %v3970
    %v3972 = vrot.slane %v3599, 2
    %v3973 = vsel %vm771, %v3970, %v3972
    %v3974 = vrot.slane %v3600, 2
    %v3975 = vrot.slane %v3601, 2
    %v3976 = vsel %vm771, %v3974, %v3975
    %v3977 = vrot.slane %v3602, 2
    %v3978 = vsel %vm771, %v3975, %v3977
    %v3979 = vrot.slane %v3603, 2
    %v3980 = vrot.slane %v3604, 2
    %v3981 = vsel %vm771, %v3979, %v3980
    %v3982 = vrot.slane %v3605, 2
    %v3983 = vsel %vm771, %v3980, %v3982
    %v3984 = vrot.slane %v3606, 2
    %v3985 = vrot.slane %v3607, 2
    %v3986 = vsel %vm771, %v3984, %v3985
    %v3987 = vrot.slane %v3608, 2
    %v3988 = vsel %vm771, %v3985, %v3987
    %v3989 = vrot.slane %v3609, 2
    %v3990 = vrot.slane %v3610, 2
    %v3991 = vsel %vm771, %v3989, %v3990
    %v3992 = vrot.slane %v3611, 2
    %v3993 = vsel %vm771, %v3990, %v3992
    %v3994 = vrot.slane %v3612, 2
    %v3995 = vrot.slane %v3613, 2
    %v3996 = vsel %vm771, %v3994, %v3995
    %v3997 = vrot.slane %v3614, 2
    %v3998 = vsel %vm771, %v3995, %v3997
    %v3999 = vrot.slane %v3615, 2
    %v4000 = vrot.slane %v3616, 2
    %v4001 = vsel %vm771, %v3999, %v4000
    %v4002 = vrot.slane %v3617, 2
    %v4003 = vsel %vm771, %v4000, %v4002
    %v4004 = vrot.slane %v3618, 2
    %v4005 = vrot.slane %v3619, 2
    %v4006 = vsel %vm771, %v4004, %v4005
    %v4007 = vrot.slane %v3620, 2
    %v4008 = vsel %vm771, %v4005, %v4007
    %v4009 = vrot.slane %v3621, 2
    %v4010 = vrot.slane %v3622, 2
    %v4011 = vsel %vm771, %v4009, %v4010
    %v4012 = vrot.slane %v3623, 2
    %v4013 = vsel %vm771, %v4010, %v4012
    %v4014 = vrot.slane %v3624, 2
    %v4015 = vrot.slane %v3625, 2
    %v4016 = vsel %vm771, %v4014, %v4015
    %v4017 = vrot.slane %v3626, 2
    %v4018 = vsel %vm771, %v4015, %v4017
    %v4019 = vrot.slane %v3627, 2
    %v4020 = vrot.slane %v3628, 2
    %v4021 = vsel %vm771, %v4019, %v4020
    %v4022 = vrot.slane %v3629, 2
    %v4023 = vsel %vm771, %v4020, %v4022
    %v4024 = vrot.slane %v3630, 2
    %v4025 = vrot.slane %v3631, 2
    %v4026 = vsel %vm771, %v4024, %v4025
    %v4027 = vrot.slane %v3632, 2
    %v4028 = vsel %vm771, %v4025, %v4027
    %v4029 = vrot.slane %v3639, 2
    %v4030 = vrot.slane %v3640, 2
    %v4031 = vsel %vm771, %v4029, %v4030
    %v4032 = vrot.slane %v3641, 2
    %v4033 = vsel %vm771, %v4030, %v4032
    %v4034 = vrot.slane %v3642, 2
    %v4035 = vrot.slane %v3643, 2
    %v4036 = vsel %vm771, %v4034, %v4035
    %v4037 = vrot.slane %v3644, 2
    %v4038 = vsel %vm771, %v4035, %v4037
    %v4039 = vrot.slane %v3645, 2
    %v4040 = vrot.slane %v3646, 2
    %v4041 = vsel %vm771, %v4039, %v4040
    %v4042 = vrot.slane %v3647, 2
    %v4043 = vsel %vm771, %v4040, %v4042
    %v4044 = vrot.slane %v3648, 2
    %v4045 = vrot.slane %v3649, 2
    %v4046 = vsel %vm771, %v4044, %v4045
    %v4047 = vrot.slane %v3650, 2
    %v4048 = vsel %vm771, %v4045, %v4047
    %v4049 = vrot.slane %v3651, 2
    %v4050 = vrot.slane %v3652, 2
    %v4051 = vsel %vm771, %v4049, %v4050
    %v4052 = vrot.slane %v3653, 2
    %v4053 = vsel %vm771, %v4050, %v4052
    %v4054 = vrot.slane %v3654, 2
    %v4055 = vrot.slane %v3655, 2
    %v4056 = vsel %vm771, %v4054, %v4055
    %v4057 = vrot.slane %v3656, 2
    %v4058 = vsel %vm771, %v4055, %v4057
    %v4059 = vrot.slane %v3657, 2
    %v4060 = vrot.slane %v3658, 2
    %v4061 = vsel %vm771, %v4059, %v4060
    %v4062 = vrot.slane %v3659, 2
    %v4063 = vsel %vm771, %v4060, %v4062
    %v4064 = vrot.slane %v3660, 2
    %v4065 = vrot.slane %v3661, 2
    %v4066 = vsel %vm771, %v4064, %v4065
    %v4067 = vrot.slane %v3662, 2
    %v4068 = vsel %vm771, %v4065, %v4067
    %v4069 = vrot.slane %v3663, 2
    %v4070 = vrot.slane %v3664, 2
    %v4071 = vsel %vm771, %v4069, %v4070
    %v4072 = vrot.slane %v3665, 2
    %v4073 = vsel %vm771, %v4070, %v4072
    %v4074 = vrot.slane %v3666, 2
    %v4075 = vrot.slane %v3667, 2
    %v4076 = vsel %vm771, %v4074, %v4075
    %v4077 = vrot.slane %v3668, 2
    %v4078 = vsel %vm771, %v4075, %v4077
    %v4079 = vrot.slane %v3669, 2
    %v4080 = vrot.slane %v3670, 2
    %v4081 = vsel %vm771, %v4079, %v4080
    %v4082 = vrot.slane %v3671, 2
    %v4083 = vsel %vm771, %v4080, %v4082
    %v4084 = vrot.slane %v3672, 2
    %v4085 = vrot.slane %v3673, 2
    %v4086 = vsel %vm771, %v4084, %v4085
    %v4087 = vrot.slane %v3674, 2
    %v4088 = vsel %vm771, %v4085, %v4087
    %v4089 = vrot.slane %v3675, 2
    %v4090 = vrot.slane %v3676, 2
    %v4091 = vsel %vm771, %v4089, %v4090
    %v4092 = vrot.slane %v3677, 2
    %v4093 = vsel %vm771, %v4090, %v4092
    %v4094 = vrot.slane %v3678, 2
    %v4095 = vrot.slane %v3679, 2
    %v4096 = vsel %vm771, %v4094, %v4095
    %v4097 = vrot.slane %v3680, 2
    %v4098 = vsel %vm771, %v4095, %v4097
    %v4099 = vrot.slane %v3681, 2
    %v4100 = vrot.slane %v3682, 2
    %v4101 = vsel %vm771, %v4099, %v4100
    %v4102 = vrot.slane %v3683, 2
    %v4103 = vsel %vm771, %v4100, %v4102
    %v4104 = vrot.slane %v3684, 2
    %v4105 = vrot.slane %v3685, 2
    %v4106 = vsel %vm771, %v4104, %v4105
    %v4107 = vrot.slane %v3686, 2
    %v4108 = vsel %vm771, %v4105, %v4107
    %v4115 = vrot.slane %v3633, 2
    %v4116 = vrot.slane %v3634, 2
    %v4117 = vsel %vm771, %v4115, %v4116
    %v4118 = vrot.slane %v3635, 2
    %v4119 = vsel %vm771, %v4116, %v4118
    %v4120 = vrot.slane %v3687, 2
    %v4121 = vrot.slane %v3688, 2
    %v4122 = vsel %vm771, %v4120, %v4121
    %v4123 = vrot.slane %v3689, 2
    %v4124 = vsel %vm771, %v4121, %v4123
    %v4131 = vrot.slane %v3633, 1
    %v4132 = vrot.slane %v3634, 1
    %v4133 = vsel %vm610, %v4131, %v4132
    %v4134 = vrot.slane %v3635, 1
    %v4135 = vsel %vm610, %v4132, %v4134
    %v4136 = vrot.slane %v3636, 1
    %v4137 = vrot.slane %v3637, 1
    %v4138 = vsel %vm610, %v4136, %v4137
    %v4139 = vrot.slane %v3638, 1
    %v4140 = vsel %vm610, %v4137, %v4139
    %v4141 = vrot.slane %v3687, 1
    %v4142 = vrot.slane %v3688, 1
    %v4143 = vsel %vm610, %v4141, %v4142
    %v4144 = vrot.slane %v3689, 1
    %v4145 = vsel %vm610, %v4142, %v4144
    %v4146 = vrot.slane %v3690, 1
    %v4147 = vrot.slane %v3691, 1
    %v4148 = vsel %vm610, %v4146, %v4147
    %v4149 = vrot.slane %v3692, 1
    %v4150 = vsel %vm610, %v4147, %v4149
    %v4151 = vrot.slane %v3636, 2
    %v4152 = vrot.slane %v3637, 2
    %v4153 = vsel %vm771, %v4151, %v4152
    %v4154 = vrot.slane %v3638, 2
    %v4155 = vsel %vm771, %v4152, %v4154
    %v4156 = vrot.slane %v3690, 2
    %v4157 = vrot.slane %v3691, 2
    %v4158 = vsel %vm771, %v4156, %v4157
    %v4159 = vrot.slane %v3692, 2
    %v4160 = vsel %vm771, %v4157, %v4159
    %4225 = vrot.lane.b32.xlu0 %v3791, 16
    %v4226 = vpop.permute.xlu0 %4225
    %4227 = vrot.lane.b32.xlu0 %v3793, 16
    %v4228 = vpop.permute.xlu0 %4227
    %4229 = vrot.lane.b32.xlu0 %v3796, 16
    %v4230 = vpop.permute.xlu0 %4229
    %4231 = vrot.lane.b32.xlu0 %v3798, 16
    %v4232 = vpop.permute.xlu0 %4231
    %4233 = vrot.lane.b32.xlu0 %v3801, 16
    %v4234 = vpop.permute.xlu0 %4233
    %4235 = vrot.lane.b32.xlu0 %v3803, 16
    %v4236 = vpop.permute.xlu0 %4235
    %4237 = vrot.lane.b32.xlu0 %v3806, 16
    %v4238 = vpop.permute.xlu0 %4237
    %4239 = vrot.lane.b32.xlu0 %v3808, 16
    %v4240 = vpop.permute.xlu0 %4239
    %4241 = vrot.lane.b32.xlu0 %v3811, 16
    %v4242 = vpop.permute.xlu0 %4241
    %4243 = vrot.lane.b32.xlu0 %v3813, 16
    %v4244 = vpop.permute.xlu0 %4243
    %4245 = vrot.lane.b32.xlu0 %v3816, 16
    %v4246 = vpop.permute.xlu0 %4245
    %4247 = vrot.lane.b32.xlu0 %v3818, 16
    %v4248 = vpop.permute.xlu0 %4247
    %4249 = vrot.lane.b32.xlu0 %v3821, 16
    %v4250 = vpop.permute.xlu0 %4249
    %4251 = vrot.lane.b32.xlu0 %v3823, 16
    %v4252 = vpop.permute.xlu0 %4251
    %4253 = vrot.lane.b32.xlu0 %v3826, 16
    %v4254 = vpop.permute.xlu0 %4253
    %4255 = vrot.lane.b32.xlu0 %v3828, 16
    %v4256 = vpop.permute.xlu0 %4255
    %4257 = vrot.lane.b32.xlu0 %v3831, 16
    %v4258 = vpop.permute.xlu0 %4257
    %4259 = vrot.lane.b32.xlu0 %v3833, 16
    %v4260 = vpop.permute.xlu0 %4259
    %4261 = vrot.lane.b32.xlu0 %v3836, 16
    %v4262 = vpop.permute.xlu0 %4261
    %4263 = vrot.lane.b32.xlu0 %v3838, 16
    %v4264 = vpop.permute.xlu0 %4263
    %4265 = vrot.lane.b32.xlu0 %v3841, 16
    %v4266 = vpop.permute.xlu0 %4265
    %4267 = vrot.lane.b32.xlu0 %v3843, 16
    %v4268 = vpop.permute.xlu0 %4267
    %4269 = vrot.lane.b32.xlu0 %v3846, 16
    %v4270 = vpop.permute.xlu0 %4269
    %4271 = vrot.lane.b32.xlu0 %v3848, 16
    %v4272 = vpop.permute.xlu0 %4271
    %4273 = vrot.lane.b32.xlu0 %v3851, 16
    %v4274 = vpop.permute.xlu0 %4273
    %4275 = vrot.lane.b32.xlu0 %v3853, 16
    %v4276 = vpop.permute.xlu0 %4275
    %4277 = vrot.lane.b32.xlu0 %v3856, 16
    %v4278 = vpop.permute.xlu0 %4277
    %4279 = vrot.lane.b32.xlu0 %v3858, 16
    %v4280 = vpop.permute.xlu0 %4279
    %4281 = vrot.lane.b32.xlu0 %v3861, 16
    %v4282 = vpop.permute.xlu0 %4281
    %4283 = vrot.lane.b32.xlu0 %v3863, 16
    %v4284 = vpop.permute.xlu0 %4283
    %4285 = vrot.lane.b32.xlu0 %v3866, 16
    %v4286 = vpop.permute.xlu0 %4285
    %4287 = vrot.lane.b32.xlu0 %v3868, 16
    %v4288 = vpop.permute.xlu0 %4287
    %4289 = vrot.lane.b32.xlu0 %v3871, 16
    %v4290 = vpop.permute.xlu0 %4289
    %4291 = vrot.lane.b32.xlu0 %v3873, 16
    %v4292 = vpop.permute.xlu0 %4291
    %4293 = vrot.lane.b32.xlu0 %v3876, 16
    %v4294 = vpop.permute.xlu0 %4293
    %4295 = vrot.lane.b32.xlu0 %v3878, 16
    %v4296 = vpop.permute.xlu0 %4295
    %4297 = vrot.lane.b32.xlu0 %v3881, 16
    %v4298 = vpop.permute.xlu0 %4297
    %4299 = vrot.lane.b32.xlu0 %v3883, 16
    %v4300 = vpop.permute.xlu0 %4299
    %4301 = vrot.lane.b32.xlu0 %v3886, 16
    %v4302 = vpop.permute.xlu0 %4301
    %4303 = vrot.lane.b32.xlu0 %v3888, 16
    %v4304 = vpop.permute.xlu0 %4303
    %4305 = vrot.lane.b32.xlu0 %v3891, 16
    %v4306 = vpop.permute.xlu0 %4305
    %4307 = vrot.lane.b32.xlu0 %v3893, 16
    %v4308 = vpop.permute.xlu0 %4307
    %4309 = vrot.lane.b32.xlu0 %v3896, 16
    %v4310 = vpop.permute.xlu0 %4309
    %4311 = vrot.lane.b32.xlu0 %v3898, 16
    %v4312 = vpop.permute.xlu0 %4311
    %4313 = vrot.lane.b32.xlu0 %v3901, 16
    %v4314 = vpop.permute.xlu0 %4313
    %4315 = vrot.lane.b32.xlu0 %v3903, 16
    %v4316 = vpop.permute.xlu0 %4315
    %4317 = vrot.lane.b32.xlu0 %v3906, 16
    %v4318 = vpop.permute.xlu0 %4317
    %4319 = vrot.lane.b32.xlu0 %v3908, 16
    %v4320 = vpop.permute.xlu0 %4319
    %4321 = vrot.lane.b32.xlu0 %v3911, 16
    %v4322 = vpop.permute.xlu0 %4321
    %4323 = vrot.lane.b32.xlu0 %v3913, 16
    %v4324 = vpop.permute.xlu0 %4323
    %4325 = vrot.lane.b32.xlu0 %v3916, 16
    %v4326 = vpop.permute.xlu0 %4325
    %4327 = vrot.lane.b32.xlu0 %v3918, 16
    %v4328 = vpop.permute.xlu0 %4327
    %4329 = vrot.lane.b32.xlu0 %v3921, 16
    %v4330 = vpop.permute.xlu0 %4329
    %4331 = vrot.lane.b32.xlu0 %v3923, 16
    %v4332 = vpop.permute.xlu0 %4331
    %4333 = vrot.lane.b32.xlu0 %v3926, 16
    %v4334 = vpop.permute.xlu0 %4333
    %4335 = vrot.lane.b32.xlu0 %v3928, 16
    %v4336 = vpop.permute.xlu0 %4335
    %4337 = vrot.lane.b32.xlu0 %v3931, 16
    %v4338 = vpop.permute.xlu0 %4337
    %4339 = vrot.lane.b32.xlu0 %v3933, 16
    %v4340 = vpop.permute.xlu0 %4339
    %4341 = vrot.lane.b32.xlu0 %v3936, 16
    %v4342 = vpop.permute.xlu0 %4341
    %4343 = vrot.lane.b32.xlu0 %v3938, 16
    %v4344 = vpop.permute.xlu0 %4343
    %4345 = vrot.lane.b32.xlu0 %v3941, 16
    %v4346 = vpop.permute.xlu0 %4345
    %4347 = vrot.lane.b32.xlu0 %v3943, 16
    %v4348 = vpop.permute.xlu0 %4347
    %4349 = vrot.lane.b32.xlu0 %v3946, 16
    %v4350 = vpop.permute.xlu0 %4349
    %4351 = vrot.lane.b32.xlu0 %v3948, 16
    %v4352 = vpop.permute.xlu0 %4351
    %4417 = vrot.lane.b32.xlu0 %v3951, 32
    %v4418 = vpop.permute.xlu0 %4417
    %4419 = vrot.lane.b32.xlu0 %v3953, 32
    %v4420 = vpop.permute.xlu0 %4419
    %4421 = vrot.lane.b32.xlu0 %v3956, 32
    %v4422 = vpop.permute.xlu0 %4421
    %4423 = vrot.lane.b32.xlu0 %v3958, 32
    %v4424 = vpop.permute.xlu0 %4423
    %4425 = vrot.lane.b32.xlu0 %v3961, 32
    %v4426 = vpop.permute.xlu0 %4425
    %4427 = vrot.lane.b32.xlu0 %v3963, 32
    %v4428 = vpop.permute.xlu0 %4427
    %4429 = vrot.lane.b32.xlu0 %v3966, 32
    %v4430 = vpop.permute.xlu0 %4429
    %4431 = vrot.lane.b32.xlu0 %v3968, 32
    %v4432 = vpop.permute.xlu0 %4431
    %4433 = vrot.lane.b32.xlu0 %v3971, 32
    %v4434 = vpop.permute.xlu0 %4433
    %4435 = vrot.lane.b32.xlu0 %v3973, 32
    %v4436 = vpop.permute.xlu0 %4435
    %4437 = vrot.lane.b32.xlu0 %v3976, 32
    %v4438 = vpop.permute.xlu0 %4437
    %4439 = vrot.lane.b32.xlu0 %v3978, 32
    %v4440 = vpop.permute.xlu0 %4439
    %4441 = vrot.lane.b32.xlu0 %v3981, 32
    %v4442 = vpop.permute.xlu0 %4441
    %4443 = vrot.lane.b32.xlu0 %v3983, 32
    %v4444 = vpop.permute.xlu0 %4443
    %4445 = vrot.lane.b32.xlu0 %v3986, 32
    %v4446 = vpop.permute.xlu0 %4445
    %4447 = vrot.lane.b32.xlu0 %v3988, 32
    %v4448 = vpop.permute.xlu0 %4447
    %4449 = vrot.lane.b32.xlu0 %v3991, 32
    %v4450 = vpop.permute.xlu0 %4449
    %4451 = vrot.lane.b32.xlu0 %v3993, 32
    %v4452 = vpop.permute.xlu0 %4451
    %4453 = vrot.lane.b32.xlu0 %v3996, 32
    %v4454 = vpop.permute.xlu0 %4453
    %4455 = vrot.lane.b32.xlu0 %v3998, 32
    %v4456 = vpop.permute.xlu0 %4455
    %4457 = vrot.lane.b32.xlu0 %v4001, 32
    %v4458 = vpop.permute.xlu0 %4457
    %4459 = vrot.lane.b32.xlu0 %v4003, 32
    %v4460 = vpop.permute.xlu0 %4459
    %4461 = vrot.lane.b32.xlu0 %v4006, 32
    %v4462 = vpop.permute.xlu0 %4461
    %4463 = vrot.lane.b32.xlu0 %v4008, 32
    %v4464 = vpop.permute.xlu0 %4463
    %4465 = vrot.lane.b32.xlu0 %v4011, 32
    %v4466 = vpop.permute.xlu0 %4465
    %4467 = vrot.lane.b32.xlu0 %v4013, 32
    %v4468 = vpop.permute.xlu0 %4467
    %4469 = vrot.lane.b32.xlu0 %v4016, 32
    %v4470 = vpop.permute.xlu0 %4469
    %4471 = vrot.lane.b32.xlu0 %v4018, 32
    %v4472 = vpop.permute.xlu0 %4471
    %4473 = vrot.lane.b32.xlu0 %v4021, 32
    %v4474 = vpop.permute.xlu0 %4473
    %4475 = vrot.lane.b32.xlu0 %v4023, 32
    %v4476 = vpop.permute.xlu0 %4475
    %4477 = vrot.lane.b32.xlu0 %v4026, 32
    %v4478 = vpop.permute.xlu0 %4477
    %4479 = vrot.lane.b32.xlu0 %v4028, 32
    %v4480 = vpop.permute.xlu0 %4479
    %4481 = vrot.lane.b32.xlu0 %v4031, 32
    %v4482 = vpop.permute.xlu0 %4481
    %4483 = vrot.lane.b32.xlu0 %v4033, 32
    %v4484 = vpop.permute.xlu0 %4483
    %4485 = vrot.lane.b32.xlu0 %v4036, 32
    %v4486 = vpop.permute.xlu0 %4485
    %4487 = vrot.lane.b32.xlu0 %v4038, 32
    %v4488 = vpop.permute.xlu0 %4487
    %4489 = vrot.lane.b32.xlu0 %v4041, 32
    %v4490 = vpop.permute.xlu0 %4489
    %4491 = vrot.lane.b32.xlu0 %v4043, 32
    %v4492 = vpop.permute.xlu0 %4491
    %4493 = vrot.lane.b32.xlu0 %v4046, 32
    %v4494 = vpop.permute.xlu0 %4493
    %4495 = vrot.lane.b32.xlu0 %v4048, 32
    %v4496 = vpop.permute.xlu0 %4495
    %4497 = vrot.lane.b32.xlu0 %v4051, 32
    %v4498 = vpop.permute.xlu0 %4497
    %4499 = vrot.lane.b32.xlu0 %v4053, 32
    %v4500 = vpop.permute.xlu0 %4499
    %4501 = vrot.lane.b32.xlu0 %v4056, 32
    %v4502 = vpop.permute.xlu0 %4501
    %4503 = vrot.lane.b32.xlu0 %v4058, 32
    %v4504 = vpop.permute.xlu0 %4503
    %4505 = vrot.lane.b32.xlu0 %v4061, 32
    %v4506 = vpop.permute.xlu0 %4505
    %4507 = vrot.lane.b32.xlu0 %v4063, 32
    %v4508 = vpop.permute.xlu0 %4507
    %4509 = vrot.lane.b32.xlu0 %v4066, 32
    %v4510 = vpop.permute.xlu0 %4509
    %4511 = vrot.lane.b32.xlu0 %v4068, 32
    %v4512 = vpop.permute.xlu0 %4511
    %4513 = vrot.lane.b32.xlu0 %v4071, 32
    %v4514 = vpop.permute.xlu0 %4513
    %4515 = vrot.lane.b32.xlu0 %v4073, 32
    %v4516 = vpop.permute.xlu0 %4515
    %4517 = vrot.lane.b32.xlu0 %v4076, 32
    %v4518 = vpop.permute.xlu0 %4517
    %4519 = vrot.lane.b32.xlu0 %v4078, 32
    %v4520 = vpop.permute.xlu0 %4519
    %4521 = vrot.lane.b32.xlu0 %v4081, 32
    %v4522 = vpop.permute.xlu0 %4521
    %4523 = vrot.lane.b32.xlu0 %v4083, 32
    %v4524 = vpop.permute.xlu0 %4523
    %4525 = vrot.lane.b32.xlu0 %v4086, 32
    %v4526 = vpop.permute.xlu0 %4525
    %4527 = vrot.lane.b32.xlu0 %v4088, 32
    %v4528 = vpop.permute.xlu0 %4527
    %4529 = vrot.lane.b32.xlu0 %v4091, 32
    %v4530 = vpop.permute.xlu0 %4529
    %4531 = vrot.lane.b32.xlu0 %v4093, 32
    %v4532 = vpop.permute.xlu0 %4531
    %4533 = vrot.lane.b32.xlu0 %v4096, 32
    %v4534 = vpop.permute.xlu0 %4533
    %4535 = vrot.lane.b32.xlu0 %v4098, 32
    %v4536 = vpop.permute.xlu0 %4535
    %4537 = vrot.lane.b32.xlu0 %v4101, 32
    %v4538 = vpop.permute.xlu0 %4537
    %4539 = vrot.lane.b32.xlu0 %v4103, 32
    %v4540 = vpop.permute.xlu0 %4539
    %4541 = vrot.lane.b32.xlu0 %v4106, 32
    %v4542 = vpop.permute.xlu0 %4541
    %4543 = vrot.lane.b32.xlu0 %v4108, 32
    %v4544 = vpop.permute.xlu0 %4543
    %4609 = vrot.lane.b32.xlu0 %v3588, 48
    %v4610 = vpop.permute.xlu0 %4609
    %4611 = vrot.lane.b32.xlu0 %v3589, 48
    %v4612 = vpop.permute.xlu0 %4611
    %4613 = vrot.lane.b32.xlu0 %v3591, 48
    %v4614 = vpop.permute.xlu0 %4613
    %4615 = vrot.lane.b32.xlu0 %v3592, 48
    %v4616 = vpop.permute.xlu0 %4615
    %4617 = vrot.lane.b32.xlu0 %v3594, 48
    %v4618 = vpop.permute.xlu0 %4617
    %4619 = vrot.lane.b32.xlu0 %v3595, 48
    %v4620 = vpop.permute.xlu0 %4619
    %4621 = vrot.lane.b32.xlu0 %v3597, 48
    %v4622 = vpop.permute.xlu0 %4621
    %4623 = vrot.lane.b32.xlu0 %v3598, 48
    %v4624 = vpop.permute.xlu0 %4623
    %4625 = vrot.lane.b32.xlu0 %v3600, 48
    %v4626 = vpop.permute.xlu0 %4625
    %4627 = vrot.lane.b32.xlu0 %v3601, 48
    %v4628 = vpop.permute.xlu0 %4627
    %4629 = vrot.lane.b32.xlu0 %v3603, 48
    %v4630 = vpop.permute.xlu0 %4629
    %4631 = vrot.lane.b32.xlu0 %v3604, 48
    %v4632 = vpop.permute.xlu0 %4631
    %4633 = vrot.lane.b32.xlu0 %v3606, 48
    %v4634 = vpop.permute.xlu0 %4633
    %4635 = vrot.lane.b32.xlu0 %v3607, 48
    %v4636 = vpop.permute.xlu0 %4635
    %4637 = vrot.lane.b32.xlu0 %v3609, 48
    %v4638 = vpop.permute.xlu0 %4637
    %4639 = vrot.lane.b32.xlu0 %v3610, 48
    %v4640 = vpop.permute.xlu0 %4639
    %4641 = vrot.lane.b32.xlu0 %v3612, 48
    %v4642 = vpop.permute.xlu0 %4641
    %4643 = vrot.lane.b32.xlu0 %v3613, 48
    %v4644 = vpop.permute.xlu0 %4643
    %4645 = vrot.lane.b32.xlu0 %v3615, 48
    %v4646 = vpop.permute.xlu0 %4645
    %4647 = vrot.lane.b32.xlu0 %v3616, 48
    %v4648 = vpop.permute.xlu0 %4647
    %4649 = vrot.lane.b32.xlu0 %v3618, 48
    %v4650 = vpop.permute.xlu0 %4649
    %4651 = vrot.lane.b32.xlu0 %v3619, 48
    %v4652 = vpop.permute.xlu0 %4651
    %4653 = vrot.lane.b32.xlu0 %v3621, 48
    %v4654 = vpop.permute.xlu0 %4653
    %4655 = vrot.lane.b32.xlu0 %v3622, 48
    %v4656 = vpop.permute.xlu0 %4655
    %4657 = vrot.lane.b32.xlu0 %v3624, 48
    %v4658 = vpop.permute.xlu0 %4657
    %4659 = vrot.lane.b32.xlu0 %v3625, 48
    %v4660 = vpop.permute.xlu0 %4659
    %4661 = vrot.lane.b32.xlu0 %v3627, 48
    %v4662 = vpop.permute.xlu0 %4661
    %4663 = vrot.lane.b32.xlu0 %v3628, 48
    %v4664 = vpop.permute.xlu0 %4663
    %4665 = vrot.lane.b32.xlu0 %v3630, 48
    %v4666 = vpop.permute.xlu0 %4665
    %4667 = vrot.lane.b32.xlu0 %v3631, 48
    %v4668 = vpop.permute.xlu0 %4667
    %4669 = vrot.lane.b32.xlu0 %v3633, 48
    %v4670 = vpop.permute.xlu0 %4669
    %4671 = vrot.lane.b32.xlu0 %v3634, 48
    %v4672 = vpop.permute.xlu0 %4671
    %4673 = vrot.lane.b32.xlu0 %v3642, 48
    %v4674 = vpop.permute.xlu0 %4673
    %4675 = vrot.lane.b32.xlu0 %v3643, 48
    %v4676 = vpop.permute.xlu0 %4675
    %4677 = vrot.lane.b32.xlu0 %v3645, 48
    %v4678 = vpop.permute.xlu0 %4677
    %4679 = vrot.lane.b32.xlu0 %v3646, 48
    %v4680 = vpop.permute.xlu0 %4679
    %4681 = vrot.lane.b32.xlu0 %v3648, 48
    %v4682 = vpop.permute.xlu0 %4681
    %4683 = vrot.lane.b32.xlu0 %v3649, 48
    %v4684 = vpop.permute.xlu0 %4683
    %4685 = vrot.lane.b32.xlu0 %v3651, 48
    %v4686 = vpop.permute.xlu0 %4685
    %4687 = vrot.lane.b32.xlu0 %v3652, 48
    %v4688 = vpop.permute.xlu0 %4687
    %4689 = vrot.lane.b32.xlu0 %v3654, 48
    %v4690 = vpop.permute.xlu0 %4689
    %4691 = vrot.lane.b32.xlu0 %v3655, 48
    %v4692 = vpop.permute.xlu0 %4691
    %4693 = vrot.lane.b32.xlu0 %v3657, 48
    %v4694 = vpop.permute.xlu0 %4693
    %4695 = vrot.lane.b32.xlu0 %v3658, 48
    %v4696 = vpop.permute.xlu0 %4695
    %4697 = vrot.lane.b32.xlu0 %v3660, 48
    %v4698 = vpop.permute.xlu0 %4697
    %4699 = vrot.lane.b32.xlu0 %v3661, 48
    %v4700 = vpop.permute.xlu0 %4699
    %4701 = vrot.lane.b32.xlu0 %v3663, 48
    %v4702 = vpop.permute.xlu0 %4701
    %4703 = vrot.lane.b32.xlu0 %v3664, 48
    %v4704 = vpop.permute.xlu0 %4703
    %4705 = vrot.lane.b32.xlu0 %v3666, 48
    %v4706 = vpop.permute.xlu0 %4705
    %4707 = vrot.lane.b32.xlu0 %v3667, 48
    %v4708 = vpop.permute.xlu0 %4707
    %4709 = vrot.lane.b32.xlu0 %v3669, 48
    %v4710 = vpop.permute.xlu0 %4709
    %4711 = vrot.lane.b32.xlu0 %v3670, 48
    %v4712 = vpop.permute.xlu0 %4711
    %4713 = vrot.lane.b32.xlu0 %v3672, 48
    %v4714 = vpop.permute.xlu0 %4713
    %4715 = vrot.lane.b32.xlu0 %v3673, 48
    %v4716 = vpop.permute.xlu0 %4715
    %4717 = vrot.lane.b32.xlu0 %v3675, 48
    %v4718 = vpop.permute.xlu0 %4717
    %4719 = vrot.lane.b32.xlu0 %v3676, 48
    %v4720 = vpop.permute.xlu0 %4719
    %4721 = vrot.lane.b32.xlu0 %v3678, 48
    %v4722 = vpop.permute.xlu0 %4721
    %4723 = vrot.lane.b32.xlu0 %v3679, 48
    %v4724 = vpop.permute.xlu0 %4723
    %4725 = vrot.lane.b32.xlu0 %v3681, 48
    %v4726 = vpop.permute.xlu0 %4725
    %4727 = vrot.lane.b32.xlu0 %v3682, 48
    %v4728 = vpop.permute.xlu0 %4727
    %4729 = vrot.lane.b32.xlu0 %v3684, 48
    %v4730 = vpop.permute.xlu0 %4729
    %4731 = vrot.lane.b32.xlu0 %v3685, 48
    %v4732 = vpop.permute.xlu0 %4731
    %4733 = vrot.lane.b32.xlu0 %v3687, 48
    %v4734 = vpop.permute.xlu0 %4733
    %4735 = vrot.lane.b32.xlu0 %v3688, 48
    %v4736 = vpop.permute.xlu0 %4735
    %4865 = vrot.lane.b32.xlu0 %v3456, 64
    %v4866 = vpop.permute.xlu0 %4865
    %4867 = vrot.lane.b32.xlu0 %v3457, 64
    %v4868 = vpop.permute.xlu0 %4867
    %4869 = vrot.lane.b32.xlu0 %v3458, 64
    %v4870 = vpop.permute.xlu0 %4869
    %4871 = vrot.lane.b32.xlu0 %v3459, 64
    %v4872 = vpop.permute.xlu0 %4871
    %4873 = vrot.lane.b32.xlu0 %v3460, 64
    %v4874 = vpop.permute.xlu0 %4873
    %4875 = vrot.lane.b32.xlu0 %v3461, 64
    %v4876 = vpop.permute.xlu0 %4875
    %4877 = vrot.lane.b32.xlu0 %v3462, 64
    %v4878 = vpop.permute.xlu0 %4877
    %4879 = vrot.lane.b32.xlu0 %v3463, 64
    %v4880 = vpop.permute.xlu0 %4879
    %4881 = vrot.lane.b32.xlu0 %v3464, 64
    %v4882 = vpop.permute.xlu0 %4881
    %4883 = vrot.lane.b32.xlu0 %v3465, 64
    %v4884 = vpop.permute.xlu0 %4883
    %4885 = vrot.lane.b32.xlu0 %v3466, 64
    %v4886 = vpop.permute.xlu0 %4885
    %4887 = vrot.lane.b32.xlu0 %v3467, 64
    %v4888 = vpop.permute.xlu0 %4887
    %4889 = vrot.lane.b32.xlu0 %v3468, 64
    %v4890 = vpop.permute.xlu0 %4889
    %4891 = vrot.lane.b32.xlu0 %v3469, 64
    %v4892 = vpop.permute.xlu0 %4891
    %4893 = vrot.lane.b32.xlu0 %v3470, 64
    %v4894 = vpop.permute.xlu0 %4893
    %4895 = vrot.lane.b32.xlu0 %v3471, 64
    %v4896 = vpop.permute.xlu0 %4895
    %4897 = vrot.lane.b32.xlu0 %v3472, 64
    %v4898 = vpop.permute.xlu0 %4897
    %4899 = vrot.lane.b32.xlu0 %v3473, 64
    %v4900 = vpop.permute.xlu0 %4899
    %4901 = vrot.lane.b32.xlu0 %v3474, 64
    %v4902 = vpop.permute.xlu0 %4901
    %4903 = vrot.lane.b32.xlu0 %v3475, 64
    %v4904 = vpop.permute.xlu0 %4903
    %4905 = vrot.lane.b32.xlu0 %v3476, 64
    %v4906 = vpop.permute.xlu0 %4905
    %4907 = vrot.lane.b32.xlu0 %v3477, 64
    %v4908 = vpop.permute.xlu0 %4907
    %4909 = vrot.lane.b32.xlu0 %v3478, 64
    %v4910 = vpop.permute.xlu0 %4909
    %4911 = vrot.lane.b32.xlu0 %v3479, 64
    %v4912 = vpop.permute.xlu0 %4911
    %4913 = vrot.lane.b32.xlu0 %v3480, 64
    %v4914 = vpop.permute.xlu0 %4913
    %4915 = vrot.lane.b32.xlu0 %v3481, 64
    %v4916 = vpop.permute.xlu0 %4915
    %4917 = vrot.lane.b32.xlu0 %v3482, 64
    %v4918 = vpop.permute.xlu0 %4917
    %4919 = vrot.lane.b32.xlu0 %v3483, 64
    %v4920 = vpop.permute.xlu0 %4919
    %4921 = vrot.lane.b32.xlu0 %v3484, 64
    %v4922 = vpop.permute.xlu0 %4921
    %4923 = vrot.lane.b32.xlu0 %v3485, 64
    %v4924 = vpop.permute.xlu0 %4923
    %4925 = vrot.lane.b32.xlu0 %v3486, 64
    %v4926 = vpop.permute.xlu0 %4925
    %4927 = vrot.lane.b32.xlu0 %v3487, 64
    %v4928 = vpop.permute.xlu0 %4927
    %4929 = vrot.lane.b32.xlu0 %v3488, 64
    %v4930 = vpop.permute.xlu0 %4929
    %4931 = vrot.lane.b32.xlu0 %v3489, 64
    %v4932 = vpop.permute.xlu0 %4931
    %4933 = vrot.lane.b32.xlu0 %v3490, 64
    %v4934 = vpop.permute.xlu0 %4933
    %4935 = vrot.lane.b32.xlu0 %v3491, 64
    %v4936 = vpop.permute.xlu0 %4935
    %4937 = vrot.lane.b32.xlu0 %v3492, 64
    %v4938 = vpop.permute.xlu0 %4937
    %4939 = vrot.lane.b32.xlu0 %v3493, 64
    %v4940 = vpop.permute.xlu0 %4939
    %4941 = vrot.lane.b32.xlu0 %v3494, 64
    %v4942 = vpop.permute.xlu0 %4941
    %4943 = vrot.lane.b32.xlu0 %v3495, 64
    %v4944 = vpop.permute.xlu0 %4943
    %4945 = vrot.lane.b32.xlu0 %v3496, 64
    %v4946 = vpop.permute.xlu0 %4945
    %4947 = vrot.lane.b32.xlu0 %v3497, 64
    %v4948 = vpop.permute.xlu0 %4947
    %4949 = vrot.lane.b32.xlu0 %v3498, 64
    %v4950 = vpop.permute.xlu0 %4949
    %4951 = vrot.lane.b32.xlu0 %v3499, 64
    %v4952 = vpop.permute.xlu0 %4951
    %4953 = vrot.lane.b32.xlu0 %v3500, 64
    %v4954 = vpop.permute.xlu0 %4953
    %4955 = vrot.lane.b32.xlu0 %v3501, 64
    %v4956 = vpop.permute.xlu0 %4955
    %4957 = vrot.lane.b32.xlu0 %v3502, 64
    %v4958 = vpop.permute.xlu0 %4957
    %4959 = vrot.lane.b32.xlu0 %v3503, 64
    %v4960 = vpop.permute.xlu0 %4959
    %4961 = vrot.lane.b32.xlu0 %v3504, 64
    %v4962 = vpop.permute.xlu0 %4961
    %4963 = vrot.lane.b32.xlu0 %v3505, 64
    %v4964 = vpop.permute.xlu0 %4963
    %4965 = vrot.lane.b32.xlu0 %v3506, 64
    %v4966 = vpop.permute.xlu0 %4965
    %4967 = vrot.lane.b32.xlu0 %v3507, 64
    %v4968 = vpop.permute.xlu0 %4967
    %4969 = vrot.lane.b32.xlu0 %v3508, 64
    %v4970 = vpop.permute.xlu0 %4969
    %4971 = vrot.lane.b32.xlu0 %v3509, 64
    %v4972 = vpop.permute.xlu0 %4971
    %4973 = vrot.lane.b32.xlu0 %v3510, 64
    %v4974 = vpop.permute.xlu0 %4973
    %4975 = vrot.lane.b32.xlu0 %v3511, 64
    %v4976 = vpop.permute.xlu0 %4975
    %4977 = vrot.lane.b32.xlu0 %v3512, 64
    %v4978 = vpop.permute.xlu0 %4977
    %4979 = vrot.lane.b32.xlu0 %v3513, 64
    %v4980 = vpop.permute.xlu0 %4979
    %4981 = vrot.lane.b32.xlu0 %v3514, 64
    %v4982 = vpop.permute.xlu0 %4981
    %4983 = vrot.lane.b32.xlu0 %v3515, 64
    %v4984 = vpop.permute.xlu0 %4983
    %4985 = vrot.lane.b32.xlu0 %v3516, 64
    %v4986 = vpop.permute.xlu0 %4985
    %4987 = vrot.lane.b32.xlu0 %v3517, 64
    %v4988 = vpop.permute.xlu0 %4987
    %4989 = vrot.lane.b32.xlu0 %v3518, 64
    %v4990 = vpop.permute.xlu0 %4989
    %4991 = vrot.lane.b32.xlu0 %v3519, 64
    %v4992 = vpop.permute.xlu0 %4991
    %5057 = vrot.lane.b32.xlu0 %v3956, 80
    %v5058 = vpop.permute.xlu0 %5057
    %5059 = vrot.lane.b32.xlu0 %v3958, 80
    %v5060 = vpop.permute.xlu0 %5059
    %5061 = vrot.lane.b32.xlu0 %v3961, 80
    %v5062 = vpop.permute.xlu0 %5061
    %5063 = vrot.lane.b32.xlu0 %v3963, 80
    %v5064 = vpop.permute.xlu0 %5063
    %5065 = vrot.lane.b32.xlu0 %v3966, 80
    %v5066 = vpop.permute.xlu0 %5065
    %5067 = vrot.lane.b32.xlu0 %v3968, 80
    %v5068 = vpop.permute.xlu0 %5067
    %5069 = vrot.lane.b32.xlu0 %v3971, 80
    %v5070 = vpop.permute.xlu0 %5069
    %5071 = vrot.lane.b32.xlu0 %v3973, 80
    %v5072 = vpop.permute.xlu0 %5071
    %5073 = vrot.lane.b32.xlu0 %v3976, 80
    %v5074 = vpop.permute.xlu0 %5073
    %5075 = vrot.lane.b32.xlu0 %v3978, 80
    %v5076 = vpop.permute.xlu0 %5075
    %5077 = vrot.lane.b32.xlu0 %v3981, 80
    %v5078 = vpop.permute.xlu0 %5077
    %5079 = vrot.lane.b32.xlu0 %v3983, 80
    %v5080 = vpop.permute.xlu0 %5079
    %5081 = vrot.lane.b32.xlu0 %v3986, 80
    %v5082 = vpop.permute.xlu0 %5081
    %5083 = vrot.lane.b32.xlu0 %v3988, 80
    %v5084 = vpop.permute.xlu0 %5083
    %5085 = vrot.lane.b32.xlu0 %v3991, 80
    %v5086 = vpop.permute.xlu0 %5085
    %5087 = vrot.lane.b32.xlu0 %v3993, 80
    %v5088 = vpop.permute.xlu0 %5087
    %5089 = vrot.lane.b32.xlu0 %v3996, 80
    %v5090 = vpop.permute.xlu0 %5089
    %5091 = vrot.lane.b32.xlu0 %v3998, 80
    %v5092 = vpop.permute.xlu0 %5091
    %5093 = vrot.lane.b32.xlu0 %v4001, 80
    %v5094 = vpop.permute.xlu0 %5093
    %5095 = vrot.lane.b32.xlu0 %v4003, 80
    %v5096 = vpop.permute.xlu0 %5095
    %5097 = vrot.lane.b32.xlu0 %v4006, 80
    %v5098 = vpop.permute.xlu0 %5097
    %5099 = vrot.lane.b32.xlu0 %v4008, 80
    %v5100 = vpop.permute.xlu0 %5099
    %5101 = vrot.lane.b32.xlu0 %v4011, 80
    %v5102 = vpop.permute.xlu0 %5101
    %5103 = vrot.lane.b32.xlu0 %v4013, 80
    %v5104 = vpop.permute.xlu0 %5103
    %5105 = vrot.lane.b32.xlu0 %v4016, 80
    %v5106 = vpop.permute.xlu0 %5105
    %5107 = vrot.lane.b32.xlu0 %v4018, 80
    %v5108 = vpop.permute.xlu0 %5107
    %5109 = vrot.lane.b32.xlu0 %v4021, 80
    %v5110 = vpop.permute.xlu0 %5109
    %5111 = vrot.lane.b32.xlu0 %v4023, 80
    %v5112 = vpop.permute.xlu0 %5111
    %5113 = vrot.lane.b32.xlu0 %v4026, 80
    %v5114 = vpop.permute.xlu0 %5113
    %5115 = vrot.lane.b32.xlu0 %v4028, 80
    %v5116 = vpop.permute.xlu0 %5115
    %5117 = vrot.lane.b32.xlu0 %v4117, 80
    %v5118 = vpop.permute.xlu0 %5117
    %5119 = vrot.lane.b32.xlu0 %v4119, 80
    %v5120 = vpop.permute.xlu0 %5119
    %5121 = vrot.lane.b32.xlu0 %v4036, 80
    %v5122 = vpop.permute.xlu0 %5121
    %5123 = vrot.lane.b32.xlu0 %v4038, 80
    %v5124 = vpop.permute.xlu0 %5123
    %5125 = vrot.lane.b32.xlu0 %v4041, 80
    %v5126 = vpop.permute.xlu0 %5125
    %5127 = vrot.lane.b32.xlu0 %v4043, 80
    %v5128 = vpop.permute.xlu0 %5127
    %5129 = vrot.lane.b32.xlu0 %v4046, 80
    %v5130 = vpop.permute.xlu0 %5129
    %5131 = vrot.lane.b32.xlu0 %v4048, 80
    %v5132 = vpop.permute.xlu0 %5131
    %5133 = vrot.lane.b32.xlu0 %v4051, 80
    %v5134 = vpop.permute.xlu0 %5133
    %5135 = vrot.lane.b32.xlu0 %v4053, 80
    %v5136 = vpop.permute.xlu0 %5135
    %5137 = vrot.lane.b32.xlu0 %v4056, 80
    %v5138 = vpop.permute.xlu0 %5137
    %5139 = vrot.lane.b32.xlu0 %v4058, 80
    %v5140 = vpop.permute.xlu0 %5139
    %5141 = vrot.lane.b32.xlu0 %v4061, 80
    %v5142 = vpop.permute.xlu0 %5141
    %5143 = vrot.lane.b32.xlu0 %v4063, 80
    %v5144 = vpop.permute.xlu0 %5143
    %5145 = vrot.lane.b32.xlu0 %v4066, 80
    %v5146 = vpop.permute.xlu0 %5145
    %5147 = vrot.lane.b32.xlu0 %v4068, 80
    %v5148 = vpop.permute.xlu0 %5147
    %5149 = vrot.lane.b32.xlu0 %v4071, 80
    %v5150 = vpop.permute.xlu0 %5149
    %5151 = vrot.lane.b32.xlu0 %v4073, 80
    %v5152 = vpop.permute.xlu0 %5151
    %5153 = vrot.lane.b32.xlu0 %v4076, 80
    %v5154 = vpop.permute.xlu0 %5153
    %5155 = vrot.lane.b32.xlu0 %v4078, 80
    %v5156 = vpop.permute.xlu0 %5155
    %5157 = vrot.lane.b32.xlu0 %v4081, 80
    %v5158 = vpop.permute.xlu0 %5157
    %5159 = vrot.lane.b32.xlu0 %v4083, 80
    %v5160 = vpop.permute.xlu0 %5159
    %5161 = vrot.lane.b32.xlu0 %v4086, 80
    %v5162 = vpop.permute.xlu0 %5161
    %5163 = vrot.lane.b32.xlu0 %v4088, 80
    %v5164 = vpop.permute.xlu0 %5163
    %5165 = vrot.lane.b32.xlu0 %v4091, 80
    %v5166 = vpop.permute.xlu0 %5165
    %5167 = vrot.lane.b32.xlu0 %v4093, 80
    %v5168 = vpop.permute.xlu0 %5167
    %5169 = vrot.lane.b32.xlu0 %v4096, 80
    %v5170 = vpop.permute.xlu0 %5169
    %5171 = vrot.lane.b32.xlu0 %v4098, 80
    %v5172 = vpop.permute.xlu0 %5171
    %5173 = vrot.lane.b32.xlu0 %v4101, 80
    %v5174 = vpop.permute.xlu0 %5173
    %5175 = vrot.lane.b32.xlu0 %v4103, 80
    %v5176 = vpop.permute.xlu0 %5175
    %5177 = vrot.lane.b32.xlu0 %v4106, 80
    %v5178 = vpop.permute.xlu0 %5177
    %5179 = vrot.lane.b32.xlu0 %v4108, 80
    %v5180 = vpop.permute.xlu0 %5179
    %5181 = vrot.lane.b32.xlu0 %v4122, 80
    %v5182 = vpop.permute.xlu0 %5181
    %5183 = vrot.lane.b32.xlu0 %v4124, 80
    %v5184 = vpop.permute.xlu0 %5183
    %5249 = vrot.lane.b32.xlu0 %v3591, 96
    %v5250 = vpop.permute.xlu0 %5249
    %5251 = vrot.lane.b32.xlu0 %v3592, 96
    %v5252 = vpop.permute.xlu0 %5251
    %5253 = vrot.lane.b32.xlu0 %v3594, 96
    %v5254 = vpop.permute.xlu0 %5253
    %5255 = vrot.lane.b32.xlu0 %v3595, 96
    %v5256 = vpop.permute.xlu0 %5255
    %5257 = vrot.lane.b32.xlu0 %v3597, 96
    %v5258 = vpop.permute.xlu0 %5257
    %5259 = vrot.lane.b32.xlu0 %v3598, 96
    %v5260 = vpop.permute.xlu0 %5259
    %5261 = vrot.lane.b32.xlu0 %v3600, 96
    %v5262 = vpop.permute.xlu0 %5261
    %5263 = vrot.lane.b32.xlu0 %v3601, 96
    %v5264 = vpop.permute.xlu0 %5263
    %5265 = vrot.lane.b32.xlu0 %v3603, 96
    %v5266 = vpop.permute.xlu0 %5265
    %5267 = vrot.lane.b32.xlu0 %v3604, 96
    %v5268 = vpop.permute.xlu0 %5267
    %5269 = vrot.lane.b32.xlu0 %v3606, 96
    %v5270 = vpop.permute.xlu0 %5269
    %5271 = vrot.lane.b32.xlu0 %v3607, 96
    %v5272 = vpop.permute.xlu0 %5271
    %5273 = vrot.lane.b32.xlu0 %v3609, 96
    %v5274 = vpop.permute.xlu0 %5273
    %5275 = vrot.lane.b32.xlu0 %v3610, 96
    %v5276 = vpop.permute.xlu0 %5275
    %5277 = vrot.lane.b32.xlu0 %v3612, 96
    %v5278 = vpop.permute.xlu0 %5277
    %5279 = vrot.lane.b32.xlu0 %v3613, 96
    %v5280 = vpop.permute.xlu0 %5279
    %5281 = vrot.lane.b32.xlu0 %v3615, 96
    %v5282 = vpop.permute.xlu0 %5281
    %5283 = vrot.lane.b32.xlu0 %v3616, 96
    %v5284 = vpop.permute.xlu0 %5283
    %5285 = vrot.lane.b32.xlu0 %v3618, 96
    %v5286 = vpop.permute.xlu0 %5285
    %5287 = vrot.lane.b32.xlu0 %v3619, 96
    %v5288 = vpop.permute.xlu0 %5287
    %5289 = vrot.lane.b32.xlu0 %v3621, 96
    %v5290 = vpop.permute.xlu0 %5289
    %5291 = vrot.lane.b32.xlu0 %v3622, 96
    %v5292 = vpop.permute.xlu0 %5291
    %5293 = vrot.lane.b32.xlu0 %v3624, 96
    %v5294 = vpop.permute.xlu0 %5293
    %5295 = vrot.lane.b32.xlu0 %v3625, 96
    %v5296 = vpop.permute.xlu0 %5295
    %5297 = vrot.lane.b32.xlu0 %v3627, 96
    %v5298 = vpop.permute.xlu0 %5297
    %5299 = vrot.lane.b32.xlu0 %v3628, 96
    %v5300 = vpop.permute.xlu0 %5299
    %5301 = vrot.lane.b32.xlu0 %v3630, 96
    %v5302 = vpop.permute.xlu0 %5301
    %5303 = vrot.lane.b32.xlu0 %v3631, 96
    %v5304 = vpop.permute.xlu0 %5303
    %5305 = vrot.lane.b32.xlu0 %v3633, 96
    %v5306 = vpop.permute.xlu0 %5305
    %5307 = vrot.lane.b32.xlu0 %v3634, 96
    %v5308 = vpop.permute.xlu0 %5307
    %5309 = vrot.lane.b32.xlu0 %v3636, 96
    %v5310 = vpop.permute.xlu0 %5309
    %5311 = vrot.lane.b32.xlu0 %v3637, 96
    %v5312 = vpop.permute.xlu0 %5311
    %5313 = vrot.lane.b32.xlu0 %v3645, 96
    %v5314 = vpop.permute.xlu0 %5313
    %5315 = vrot.lane.b32.xlu0 %v3646, 96
    %v5316 = vpop.permute.xlu0 %5315
    %5317 = vrot.lane.b32.xlu0 %v3648, 96
    %v5318 = vpop.permute.xlu0 %5317
    %5319 = vrot.lane.b32.xlu0 %v3649, 96
    %v5320 = vpop.permute.xlu0 %5319
    %5321 = vrot.lane.b32.xlu0 %v3651, 96
    %v5322 = vpop.permute.xlu0 %5321
    %5323 = vrot.lane.b32.xlu0 %v3652, 96
    %v5324 = vpop.permute.xlu0 %5323
    %5325 = vrot.lane.b32.xlu0 %v3654, 96
    %v5326 = vpop.permute.xlu0 %5325
    %5327 = vrot.lane.b32.xlu0 %v3655, 96
    %v5328 = vpop.permute.xlu0 %5327
    %5329 = vrot.lane.b32.xlu0 %v3657, 96
    %v5330 = vpop.permute.xlu0 %5329
    %5331 = vrot.lane.b32.xlu0 %v3658, 96
    %v5332 = vpop.permute.xlu0 %5331
    %5333 = vrot.lane.b32.xlu0 %v3660, 96
    %v5334 = vpop.permute.xlu0 %5333
    %5335 = vrot.lane.b32.xlu0 %v3661, 96
    %v5336 = vpop.permute.xlu0 %5335
    %5337 = vrot.lane.b32.xlu0 %v3663, 96
    %v5338 = vpop.permute.xlu0 %5337
    %5339 = vrot.lane.b32.xlu0 %v3664, 96
    %v5340 = vpop.permute.xlu0 %5339
    %5341 = vrot.lane.b32.xlu0 %v3666, 96
    %v5342 = vpop.permute.xlu0 %5341
    %5343 = vrot.lane.b32.xlu0 %v3667, 96
    %v5344 = vpop.permute.xlu0 %5343
    %5345 = vrot.lane.b32.xlu0 %v3669, 96
    %v5346 = vpop.permute.xlu0 %5345
    %5347 = vrot.lane.b32.xlu0 %v3670, 96
    %v5348 = vpop.permute.xlu0 %5347
    %5349 = vrot.lane.b32.xlu0 %v3672, 96
    %v5350 = vpop.permute.xlu0 %5349
    %5351 = vrot.lane.b32.xlu0 %v3673, 96
    %v5352 = vpop.permute.xlu0 %5351
    %5353 = vrot.lane.b32.xlu0 %v3675, 96
    %v5354 = vpop.permute.xlu0 %5353
    %5355 = vrot.lane.b32.xlu0 %v3676, 96
    %v5356 = vpop.permute.xlu0 %5355
    %5357 = vrot.lane.b32.xlu0 %v3678, 96
    %v5358 = vpop.permute.xlu0 %5357
    %5359 = vrot.lane.b32.xlu0 %v3679, 96
    %v5360 = vpop.permute.xlu0 %5359
    %5361 = vrot.lane.b32.xlu0 %v3681, 96
    %v5362 = vpop.permute.xlu0 %5361
    %5363 = vrot.lane.b32.xlu0 %v3682, 96
    %v5364 = vpop.permute.xlu0 %5363
    %5365 = vrot.lane.b32.xlu0 %v3684, 96
    %v5366 = vpop.permute.xlu0 %5365
    %5367 = vrot.lane.b32.xlu0 %v3685, 96
    %v5368 = vpop.permute.xlu0 %5367
    %5369 = vrot.lane.b32.xlu0 %v3687, 96
    %v5370 = vpop.permute.xlu0 %5369
    %5371 = vrot.lane.b32.xlu0 %v3688, 96
    %v5372 = vpop.permute.xlu0 %5371
    %5373 = vrot.lane.b32.xlu0 %v3690, 96
    %v5374 = vpop.permute.xlu0 %5373
    %5375 = vrot.lane.b32.xlu0 %v3691, 96
    %v5376 = vpop.permute.xlu0 %5375
    %5441 = vrot.lane.b32.xlu0 %v3801, 112
    %v5442 = vpop.permute.xlu0 %5441
    %5443 = vrot.lane.b32.xlu0 %v3803, 112
    %v5444 = vpop.permute.xlu0 %5443
    %5445 = vrot.lane.b32.xlu0 %v3806, 112
    %v5446 = vpop.permute.xlu0 %5445
    %5447 = vrot.lane.b32.xlu0 %v3808, 112
    %v5448 = vpop.permute.xlu0 %5447
    %5449 = vrot.lane.b32.xlu0 %v3811, 112
    %v5450 = vpop.permute.xlu0 %5449
    %5451 = vrot.lane.b32.xlu0 %v3813, 112
    %v5452 = vpop.permute.xlu0 %5451
    %5453 = vrot.lane.b32.xlu0 %v3816, 112
    %v5454 = vpop.permute.xlu0 %5453
    %5455 = vrot.lane.b32.xlu0 %v3818, 112
    %v5456 = vpop.permute.xlu0 %5455
    %5457 = vrot.lane.b32.xlu0 %v3821, 112
    %v5458 = vpop.permute.xlu0 %5457
    %5459 = vrot.lane.b32.xlu0 %v3823, 112
    %v5460 = vpop.permute.xlu0 %5459
    %5461 = vrot.lane.b32.xlu0 %v3826, 112
    %v5462 = vpop.permute.xlu0 %5461
    %5463 = vrot.lane.b32.xlu0 %v3828, 112
    %v5464 = vpop.permute.xlu0 %5463
    %5465 = vrot.lane.b32.xlu0 %v3831, 112
    %v5466 = vpop.permute.xlu0 %5465
    %5467 = vrot.lane.b32.xlu0 %v3833, 112
    %v5468 = vpop.permute.xlu0 %5467
    %5469 = vrot.lane.b32.xlu0 %v3836, 112
    %v5470 = vpop.permute.xlu0 %5469
    %5471 = vrot.lane.b32.xlu0 %v3838, 112
    %v5472 = vpop.permute.xlu0 %5471
    %5473 = vrot.lane.b32.xlu0 %v3841, 112
    %v5474 = vpop.permute.xlu0 %5473
    %5475 = vrot.lane.b32.xlu0 %v3843, 112
    %v5476 = vpop.permute.xlu0 %5475
    %5477 = vrot.lane.b32.xlu0 %v3846, 112
    %v5478 = vpop.permute.xlu0 %5477
    %5479 = vrot.lane.b32.xlu0 %v3848, 112
    %v5480 = vpop.permute.xlu0 %5479
    %5481 = vrot.lane.b32.xlu0 %v3851, 112
    %v5482 = vpop.permute.xlu0 %5481
    %5483 = vrot.lane.b32.xlu0 %v3853, 112
    %v5484 = vpop.permute.xlu0 %5483
    %5485 = vrot.lane.b32.xlu0 %v3856, 112
    %v5486 = vpop.permute.xlu0 %5485
    %5487 = vrot.lane.b32.xlu0 %v3858, 112
    %v5488 = vpop.permute.xlu0 %5487
    %5489 = vrot.lane.b32.xlu0 %v3861, 112
    %v5490 = vpop.permute.xlu0 %5489
    %5491 = vrot.lane.b32.xlu0 %v3863, 112
    %v5492 = vpop.permute.xlu0 %5491
    %5493 = vrot.lane.b32.xlu0 %v3866, 112
    %v5494 = vpop.permute.xlu0 %5493
    %5495 = vrot.lane.b32.xlu0 %v3868, 112
    %v5496 = vpop.permute.xlu0 %5495
    %5497 = vrot.lane.b32.xlu0 %v4133, 112
    %v5498 = vpop.permute.xlu0 %5497
    %5499 = vrot.lane.b32.xlu0 %v4135, 112
    %v5500 = vpop.permute.xlu0 %5499
    %5501 = vrot.lane.b32.xlu0 %v4138, 112
    %v5502 = vpop.permute.xlu0 %5501
    %5503 = vrot.lane.b32.xlu0 %v4140, 112
    %v5504 = vpop.permute.xlu0 %5503
    %5505 = vrot.lane.b32.xlu0 %v3881, 112
    %v5506 = vpop.permute.xlu0 %5505
    %5507 = vrot.lane.b32.xlu0 %v3883, 112
    %v5508 = vpop.permute.xlu0 %5507
    %5509 = vrot.lane.b32.xlu0 %v3886, 112
    %v5510 = vpop.permute.xlu0 %5509
    %5511 = vrot.lane.b32.xlu0 %v3888, 112
    %v5512 = vpop.permute.xlu0 %5511
    %5513 = vrot.lane.b32.xlu0 %v3891, 112
    %v5514 = vpop.permute.xlu0 %5513
    %5515 = vrot.lane.b32.xlu0 %v3893, 112
    %v5516 = vpop.permute.xlu0 %5515
    %5517 = vrot.lane.b32.xlu0 %v3896, 112
    %v5518 = vpop.permute.xlu0 %5517
    %5519 = vrot.lane.b32.xlu0 %v3898, 112
    %v5520 = vpop.permute.xlu0 %5519
    %5521 = vrot.lane.b32.xlu0 %v3901, 112
    %v5522 = vpop.permute.xlu0 %5521
    %5523 = vrot.lane.b32.xlu0 %v3903, 112
    %v5524 = vpop.permute.xlu0 %5523
    %5525 = vrot.lane.b32.xlu0 %v3906, 112
    %v5526 = vpop.permute.xlu0 %5525
    %5527 = vrot.lane.b32.xlu0 %v3908, 112
    %v5528 = vpop.permute.xlu0 %5527
    %5529 = vrot.lane.b32.xlu0 %v3911, 112
    %v5530 = vpop.permute.xlu0 %5529
    %5531 = vrot.lane.b32.xlu0 %v3913, 112
    %v5532 = vpop.permute.xlu0 %5531
    %5533 = vrot.lane.b32.xlu0 %v3916, 112
    %v5534 = vpop.permute.xlu0 %5533
    %5535 = vrot.lane.b32.xlu0 %v3918, 112
    %v5536 = vpop.permute.xlu0 %5535
    %5537 = vrot.lane.b32.xlu0 %v3921, 112
    %v5538 = vpop.permute.xlu0 %5537
    %5539 = vrot.lane.b32.xlu0 %v3923, 112
    %v5540 = vpop.permute.xlu0 %5539
    %5541 = vrot.lane.b32.xlu0 %v3926, 112
    %v5542 = vpop.permute.xlu0 %5541
    %5543 = vrot.lane.b32.xlu0 %v3928, 112
    %v5544 = vpop.permute.xlu0 %5543
    %5545 = vrot.lane.b32.xlu0 %v3931, 112
    %v5546 = vpop.permute.xlu0 %5545
    %5547 = vrot.lane.b32.xlu0 %v3933, 112
    %v5548 = vpop.permute.xlu0 %5547
    %5549 = vrot.lane.b32.xlu0 %v3936, 112
    %v5550 = vpop.permute.xlu0 %5549
    %5551 = vrot.lane.b32.xlu0 %v3938, 112
    %v5552 = vpop.permute.xlu0 %5551
    %5553 = vrot.lane.b32.xlu0 %v3941, 112
    %v5554 = vpop.permute.xlu0 %5553
    %5555 = vrot.lane.b32.xlu0 %v3943, 112
    %v5556 = vpop.permute.xlu0 %5555
    %5557 = vrot.lane.b32.xlu0 %v3946, 112
    %v5558 = vpop.permute.xlu0 %5557
    %5559 = vrot.lane.b32.xlu0 %v3948, 112
    %v5560 = vpop.permute.xlu0 %5559
    %5561 = vrot.lane.b32.xlu0 %v4143, 112
    %v5562 = vpop.permute.xlu0 %5561
    %5563 = vrot.lane.b32.xlu0 %v4145, 112
    %v5564 = vpop.permute.xlu0 %5563
    %5565 = vrot.lane.b32.xlu0 %v4148, 112
    %v5566 = vpop.permute.xlu0 %5565
    %5567 = vrot.lane.b32.xlu0 %v4150, 112
    %v5568 = vpop.permute.xlu0 %5567
    %v5633 = vsel %vm105, %v3585, %v4226
    %v5634 = vsel %vm105, %v3586, %v4228
    %v5635 = vsel %vm105, %v3588, %v4230
    %v5636 = vsel %vm105, %v3589, %v4232
    %v5637 = vsel %vm105, %v3591, %v4234
    %v5638 = vsel %vm105, %v3592, %v4236
    %v5639 = vsel %vm105, %v3594, %v4238
    %v5640 = vsel %vm105, %v3595, %v4240
    %v5641 = vsel %vm105, %v3597, %v4242
    %v5642 = vsel %vm105, %v3598, %v4244
    %v5643 = vsel %vm105, %v3600, %v4246
    %v5644 = vsel %vm105, %v3601, %v4248
    %v5645 = vsel %vm105, %v3603, %v4250
    %v5646 = vsel %vm105, %v3604, %v4252
    %v5647 = vsel %vm105, %v3606, %v4254
    %v5648 = vsel %vm105, %v3607, %v4256
    %v5649 = vsel %vm105, %v3609, %v4258
    %v5650 = vsel %vm105, %v3610, %v4260
    %v5651 = vsel %vm105, %v3612, %v4262
    %v5652 = vsel %vm105, %v3613, %v4264
    %v5653 = vsel %vm105, %v3615, %v4266
    %v5654 = vsel %vm105, %v3616, %v4268
    %v5655 = vsel %vm105, %v3618, %v4270
    %v5656 = vsel %vm105, %v3619, %v4272
    %v5657 = vsel %vm105, %v3621, %v4274
    %v5658 = vsel %vm105, %v3622, %v4276
    %v5659 = vsel %vm105, %v3624, %v4278
    %v5660 = vsel %vm105, %v3625, %v4280
    %v5661 = vsel %vm105, %v3627, %v4282
    %v5662 = vsel %vm105, %v3628, %v4284
    %v5663 = vsel %vm105, %v3630, %v4286
    %v5664 = vsel %vm105, %v3631, %v4288
    %v5665 = vsel %vm105, %v3639, %v4290
    %v5666 = vsel %vm105, %v3640, %v4292
    %v5667 = vsel %vm105, %v3642, %v4294
    %v5668 = vsel %vm105, %v3643, %v4296
    %v5669 = vsel %vm105, %v3645, %v4298
    %v5670 = vsel %vm105, %v3646, %v4300
    %v5671 = vsel %vm105, %v3648, %v4302
    %v5672 = vsel %vm105, %v3649, %v4304
    %v5673 = vsel %vm105, %v3651, %v4306
    %v5674 = vsel %vm105, %v3652, %v4308
    %v5675 = vsel %vm105, %v3654, %v4310
    %v5676 = vsel %vm105, %v3655, %v4312
    %v5677 = vsel %vm105, %v3657, %v4314
    %v5678 = vsel %vm105, %v3658, %v4316
    %v5679 = vsel %vm105, %v3660, %v4318
    %v5680 = vsel %vm105, %v3661, %v4320
    %v5681 = vsel %vm105, %v3663, %v4322
    %v5682 = vsel %vm105, %v3664, %v4324
    %v5683 = vsel %vm105, %v3666, %v4326
    %v5684 = vsel %vm105, %v3667, %v4328
    %v5685 = vsel %vm105, %v3669, %v4330
    %v5686 = vsel %vm105, %v3670, %v4332
    %v5687 = vsel %vm105, %v3672, %v4334
    %v5688 = vsel %vm105, %v3673, %v4336
    %v5689 = vsel %vm105, %v3675, %v4338
    %v5690 = vsel %vm105, %v3676, %v4340
    %v5691 = vsel %vm105, %v3678, %v4342
    %v5692 = vsel %vm105, %v3679, %v4344
    %v5693 = vsel %vm105, %v3681, %v4346
    %v5694 = vsel %vm105, %v3682, %v4348
    %v5695 = vsel %vm105, %v3684, %v4350
    %v5696 = vsel %vm105, %v3685, %v4352
    %v5697 = vsel %vm18, %v5633, %v4418
    %v5698 = vsel %vm18, %v5634, %v4420
    %v5699 = vsel %vm18, %v5635, %v4422
    %v5700 = vsel %vm18, %v5636, %v4424
    %v5701 = vsel %vm18, %v5637, %v4426
    %v5702 = vsel %vm18, %v5638, %v4428
    %v5703 = vsel %vm18, %v5639, %v4430
    %v5704 = vsel %vm18, %v5640, %v4432
    %v5705 = vsel %vm18, %v5641, %v4434
    %v5706 = vsel %vm18, %v5642, %v4436
    %v5707 = vsel %vm18, %v5643, %v4438
    %v5708 = vsel %vm18, %v5644, %v4440
    %v5709 = vsel %vm18, %v5645, %v4442
    %v5710 = vsel %vm18, %v5646, %v4444
    %v5711 = vsel %vm18, %v5647, %v4446
    %v5712 = vsel %vm18, %v5648, %v4448
    %v5713 = vsel %vm18, %v5649, %v4450
    %v5714 = vsel %vm18, %v5650, %v4452
    %v5715 = vsel %vm18, %v5651, %v4454
    %v5716 = vsel %vm18, %v5652, %v4456
    %v5717 = vsel %vm18, %v5653, %v4458
    %v5718 = vsel %vm18, %v5654, %v4460
    %v5719 = vsel %vm18, %v5655, %v4462
    %v5720 = vsel %vm18, %v5656, %v4464
    %v5721 = vsel %vm18, %v5657, %v4466
    %v5722 = vsel %vm18, %v5658, %v4468
    %v5723 = vsel %vm18, %v5659, %v4470
    %v5724 = vsel %vm18, %v5660, %v4472
    %v5725 = vsel %vm18, %v5661, %v4474
    %v5726 = vsel %vm18, %v5662, %v4476
    %v5727 = vsel %vm18, %v5663, %v4478
    %v5728 = vsel %vm18, %v5664, %v4480
    %v5729 = vsel %vm18, %v5665, %v4482
    %v5730 = vsel %vm18, %v5666, %v4484
    %v5731 = vsel %vm18, %v5667, %v4486
    %v5732 = vsel %vm18, %v5668, %v4488
    %v5733 = vsel %vm18, %v5669, %v4490
    %v5734 = vsel %vm18, %v5670, %v4492
    %v5735 = vsel %vm18, %v5671, %v4494
    %v5736 = vsel %vm18, %v5672, %v4496
    %v5737 = vsel %vm18, %v5673, %v4498
    %v5738 = vsel %vm18, %v5674, %v4500
    %v5739 = vsel %vm18, %v5675, %v4502
    %v5740 = vsel %vm18, %v5676, %v4504
    %v5741 = vsel %vm18, %v5677, %v4506
    %v5742 = vsel %vm18, %v5678, %v4508
    %v5743 = vsel %vm18, %v5679, %v4510
    %v5744 = vsel %vm18, %v5680, %v4512
    %v5745 = vsel %vm18, %v5681, %v4514
    %v5746 = vsel %vm18, %v5682, %v4516
    %v5747 = vsel %vm18, %v5683, %v4518
    %v5748 = vsel %vm18, %v5684, %v4520
    %v5749 = vsel %vm18, %v5685, %v4522
    %v5750 = vsel %vm18, %v5686, %v4524
    %v5751 = vsel %vm18, %v5687, %v4526
    %v5752 = vsel %vm18, %v5688, %v4528
    %v5753 = vsel %vm18, %v5689, %v4530
    %v5754 = vsel %vm18, %v5690, %v4532
    %v5755 = vsel %vm18, %v5691, %v4534
    %v5756 = vsel %vm18, %v5692, %v4536
    %v5757 = vsel %vm18, %v5693, %v4538
    %v5758 = vsel %vm18, %v5694, %v4540
    %v5759 = vsel %vm18, %v5695, %v4542
    %v5760 = vsel %vm18, %v5696, %v4544
    %vm5761 = vcmask 392192
    %v5762 = vsel %vm5761, %v5697, %v4610
    %v5763 = vsel %vm5761, %v5698, %v4612
    %v5764 = vsel %vm5761, %v5699, %v4614
    %v5765 = vsel %vm5761, %v5700, %v4616
    %v5766 = vsel %vm5761, %v5701, %v4618
    %v5767 = vsel %vm5761, %v5702, %v4620
    %v5768 = vsel %vm5761, %v5703, %v4622
    %v5769 = vsel %vm5761, %v5704, %v4624
    %v5770 = vsel %vm5761, %v5705, %v4626
    %v5771 = vsel %vm5761, %v5706, %v4628
    %v5772 = vsel %vm5761, %v5707, %v4630
    %v5773 = vsel %vm5761, %v5708, %v4632
    %v5774 = vsel %vm5761, %v5709, %v4634
    %v5775 = vsel %vm5761, %v5710, %v4636
    %v5776 = vsel %vm5761, %v5711, %v4638
    %v5777 = vsel %vm5761, %v5712, %v4640
    %v5778 = vsel %vm5761, %v5713, %v4642
    %v5779 = vsel %vm5761, %v5714, %v4644
    %v5780 = vsel %vm5761, %v5715, %v4646
    %v5781 = vsel %vm5761, %v5716, %v4648
    %v5782 = vsel %vm5761, %v5717, %v4650
    %v5783 = vsel %vm5761, %v5718, %v4652
    %v5784 = vsel %vm5761, %v5719, %v4654
    %v5785 = vsel %vm5761, %v5720, %v4656
    %v5786 = vsel %vm5761, %v5721, %v4658
    %v5787 = vsel %vm5761, %v5722, %v4660
    %v5788 = vsel %vm5761, %v5723, %v4662
    %v5789 = vsel %vm5761, %v5724, %v4664
    %v5790 = vsel %vm5761, %v5725, %v4666
    %v5791 = vsel %vm5761, %v5726, %v4668
    %v5792 = vsel %vm5761, %v5727, %v4670
    %v5793 = vsel %vm5761, %v5728, %v4672
    %v5794 = vsel %vm5761, %v5729, %v4674
    %v5795 = vsel %vm5761, %v5730, %v4676
    %v5796 = vsel %vm5761, %v5731, %v4678
    %v5797 = vsel %vm5761, %v5732, %v4680
    %v5798 = vsel %vm5761, %v5733, %v4682
    %v5799 = vsel %vm5761, %v5734, %v4684
    %v5800 = vsel %vm5761, %v5735, %v4686
    %v5801 = vsel %vm5761, %v5736, %v4688
    %v5802 = vsel %vm5761, %v5737, %v4690
    %v5803 = vsel %vm5761, %v5738, %v4692
    %v5804 = vsel %vm5761, %v5739, %v4694
    %v5805 = vsel %vm5761, %v5740, %v4696
    %v5806 = vsel %vm5761, %v5741, %v4698
    %v5807 = vsel %vm5761, %v5742, %v4700
    %v5808 = vsel %vm5761, %v5743, %v4702
    %v5809 = vsel %vm5761, %v5744, %v4704
    %v5810 = vsel %vm5761, %v5745, %v4706
    %v5811 = vsel %vm5761, %v5746, %v4708
    %v5812 = vsel %vm5761, %v5747, %v4710
    %v5813 = vsel %vm5761, %v5748, %v4712
    %v5814 = vsel %vm5761, %v5749, %v4714
    %v5815 = vsel %vm5761, %v5750, %v4716
    %v5816 = vsel %vm5761, %v5751, %v4718
    %v5817 = vsel %vm5761, %v5752, %v4720
    %v5818 = vsel %vm5761, %v5753, %v4722
    %v5819 = vsel %vm5761, %v5754, %v4724
    %v5820 = vsel %vm5761, %v5755, %v4726
    %v5821 = vsel %vm5761, %v5756, %v4728
    %v5822 = vsel %vm5761, %v5757, %v4730
    %v5823 = vsel %vm5761, %v5758, %v4732
    %v5824 = vsel %vm5761, %v5759, %v4734
    %v5825 = vsel %vm5761, %v5760, %v4736
    %v5826 = vsel %vm2200, %v5762, %v4866
    %v5827 = vsel %vm2200, %v5763, %v4868
    %v5828 = vsel %vm2200, %v5764, %v4870
    %v5829 = vsel %vm2200, %v5765, %v4872
    %v5830 = vsel %vm2200, %v5766, %v4874
    %v5831 = vsel %vm2200, %v5767, %v4876
    %v5832 = vsel %vm2200, %v5768, %v4878
    %v5833 = vsel %vm2200, %v5769, %v4880
    %v5834 = vsel %vm2200, %v5770, %v4882
    %v5835 = vsel %vm2200, %v5771, %v4884
    %v5836 = vsel %vm2200, %v5772, %v4886
    %v5837 = vsel %vm2200, %v5773, %v4888
    %v5838 = vsel %vm2200, %v5774, %v4890
    %v5839 = vsel %vm2200, %v5775, %v4892
    %v5840 = vsel %vm2200, %v5776, %v4894
    %v5841 = vsel %vm2200, %v5777, %v4896
    %v5842 = vsel %vm2200, %v5778, %v4898
    %v5843 = vsel %vm2200, %v5779, %v4900
    %v5844 = vsel %vm2200, %v5780, %v4902
    %v5845 = vsel %vm2200, %v5781, %v4904
    %v5846 = vsel %vm2200, %v5782, %v4906
    %v5847 = vsel %vm2200, %v5783, %v4908
    %v5848 = vsel %vm2200, %v5784, %v4910
    %v5849 = vsel %vm2200, %v5785, %v4912
    %v5850 = vsel %vm2200, %v5786, %v4914
    %v5851 = vsel %vm2200, %v5787, %v4916
    %v5852 = vsel %vm2200, %v5788, %v4918
    %v5853 = vsel %vm2200, %v5789, %v4920
    %v5854 = vsel %vm2200, %v5790, %v4922
    %v5855 = vsel %vm2200, %v5791, %v4924
    %v5856 = vsel %vm2200, %v5792, %v4926
    %v5857 = vsel %vm2200, %v5793, %v4928
    %v5858 = vsel %vm2200, %v5794, %v4930
    %v5859 = vsel %vm2200, %v5795, %v4932
    %v5860 = vsel %vm2200, %v5796, %v4934
    %v5861 = vsel %vm2200, %v5797, %v4936
    %v5862 = vsel %vm2200, %v5798, %v4938
    %v5863 = vsel %vm2200, %v5799, %v4940
    %v5864 = vsel %vm2200, %v5800, %v4942
    %v5865 = vsel %vm2200, %v5801, %v4944
    %v5866 = vsel %vm2200, %v5802, %v4946
    %v5867 = vsel %vm2200, %v5803, %v4948
    %v5868 = vsel %vm2200, %v5804, %v4950
    %v5869 = vsel %vm2200, %v5805, %v4952
    %v5870 = vsel %vm2200, %v5806, %v4954
    %v5871 = vsel %vm2200, %v5807, %v4956
    %v5872 = vsel %vm2200, %v5808, %v4958
    %v5873 = vsel %vm2200, %v5809, %v4960
    %v5874 = vsel %vm2200, %v5810, %v4962
    %v5875 = vsel %vm2200, %v5811, %v4964
    %v5876 = vsel %vm2200, %v5812, %v4966
    %v5877 = vsel %vm2200, %v5813, %v4968
    %v5878 = vsel %vm2200, %v5814, %v4970
    %v5879 = vsel %vm2200, %v5815, %v4972
    %v5880 = vsel %vm2200, %v5816, %v4974
    %v5881 = vsel %vm2200, %v5817, %v4976
    %v5882 = vsel %vm2200, %v5818, %v4978
    %v5883 = vsel %vm2200, %v5819, %v4980
    %v5884 = vsel %vm2200, %v5820, %v4982
    %v5885 = vsel %vm2200, %v5821, %v4984
    %v5886 = vsel %vm2200, %v5822, %v4986
    %v5887 = vsel %vm2200, %v5823, %v4988
    %v5888 = vsel %vm2200, %v5824, %v4990
    %v5889 = vsel %vm2200, %v5825, %v4992
    %vm5890 = vcmask 654336
    %v5891 = vsel %vm5890, %v5826, %v5058
    %v5892 = vsel %vm5890, %v5827, %v5060
    %v5893 = vsel %vm5890, %v5828, %v5062
    %v5894 = vsel %vm5890, %v5829, %v5064
    %v5895 = vsel %vm5890, %v5830, %v5066
    %v5896 = vsel %vm5890, %v5831, %v5068
    %v5897 = vsel %vm5890, %v5832, %v5070
    %v5898 = vsel %vm5890, %v5833, %v5072
    %v5899 = vsel %vm5890, %v5834, %v5074
    %v5900 = vsel %vm5890, %v5835, %v5076
    %v5901 = vsel %vm5890, %v5836, %v5078
    %v5902 = vsel %vm5890, %v5837, %v5080
    %v5903 = vsel %vm5890, %v5838, %v5082
    %v5904 = vsel %vm5890, %v5839, %v5084
    %v5905 = vsel %vm5890, %v5840, %v5086
    %v5906 = vsel %vm5890, %v5841, %v5088
    %v5907 = vsel %vm5890, %v5842, %v5090
    %v5908 = vsel %vm5890, %v5843, %v5092
    %v5909 = vsel %vm5890, %v5844, %v5094
    %v5910 = vsel %vm5890, %v5845, %v5096
    %v5911 = vsel %vm5890, %v5846, %v5098
    %v5912 = vsel %vm5890, %v5847, %v5100
    %v5913 = vsel %vm5890, %v5848, %v5102
    %v5914 = vsel %vm5890, %v5849, %v5104
    %v5915 = vsel %vm5890, %v5850, %v5106
    %v5916 = vsel %vm5890, %v5851, %v5108
    %v5917 = vsel %vm5890, %v5852, %v5110
    %v5918 = vsel %vm5890, %v5853, %v5112
    %v5919 = vsel %vm5890, %v5854, %v5114
    %v5920 = vsel %vm5890, %v5855, %v5116
    %v5921 = vsel %vm5890, %v5856, %v5118
    %v5922 = vsel %vm5890, %v5857, %v5120
    %v5923 = vsel %vm5890, %v5858, %v5122
    %v5924 = vsel %vm5890, %v5859, %v5124
    %v5925 = vsel %vm5890, %v5860, %v5126
    %v5926 = vsel %vm5890, %v5861, %v5128
    %v5927 = vsel %vm5890, %v5862, %v5130
    %v5928 = vsel %vm5890, %v5863, %v5132
    %v5929 = vsel %vm5890, %v5864, %v5134
    %v5930 = vsel %vm5890, %v5865, %v5136
    %v5931 = vsel %vm5890, %v5866, %v5138
    %v5932 = vsel %vm5890, %v5867, %v5140
    %v5933 = vsel %vm5890, %v5868, %v5142
    %v5934 = vsel %vm5890, %v5869, %v5144
    %v5935 = vsel %vm5890, %v5870, %v5146
    %v5936 = vsel %vm5890, %v5871, %v5148
    %v5937 = vsel %vm5890, %v5872, %v5150
    %v5938 = vsel %vm5890, %v5873, %v5152
    %v5939 = vsel %vm5890, %v5874, %v5154
    %v5940 = vsel %vm5890, %v5875, %v5156
    %v5941 = vsel %vm5890, %v5876, %v5158
    %v5942 = vsel %vm5890, %v5877, %v5160
    %v5943 = vsel %vm5890, %v5878, %v5162
    %v5944 = vsel %vm5890, %v5879, %v5164
    %v5945 = vsel %vm5890, %v5880, %v5166
    %v5946 = vsel %vm5890, %v5881, %v5168
    %v5947 = vsel %vm5890, %v5882, %v5170
    %v5948 = vsel %vm5890, %v5883, %v5172
    %v5949 = vsel %vm5890, %v5884, %v5174
    %v5950 = vsel %vm5890, %v5885, %v5176
    %v5951 = vsel %vm5890, %v5886, %v5178
    %v5952 = vsel %vm5890, %v5887, %v5180
    %v5953 = vsel %vm5890, %v5888, %v5182
    %v5954 = vsel %vm5890, %v5889, %v5184
    %v5955 = vsel %vm2265, %v5891, %v5250
    %v5956 = vsel %vm2265, %v5892, %v5252
    %v5957 = vsel %vm2265, %v5893, %v5254
    %v5958 = vsel %vm2265, %v5894, %v5256
    %v5959 = vsel %vm2265, %v5895, %v5258
    %v5960 = vsel %vm2265, %v5896, %v5260
    %v5961 = vsel %vm2265, %v5897, %v5262
    %v5962 = vsel %vm2265, %v5898, %v5264
    %v5963 = vsel %vm2265, %v5899, %v5266
    %v5964 = vsel %vm2265, %v5900, %v5268
    %v5965 = vsel %vm2265, %v5901, %v5270
    %v5966 = vsel %vm2265, %v5902, %v5272
    %v5967 = vsel %vm2265, %v5903, %v5274
    %v5968 = vsel %vm2265, %v5904, %v5276
    %v5969 = vsel %vm2265, %v5905, %v5278
    %v5970 = vsel %vm2265, %v5906, %v5280
    %v5971 = vsel %vm2265, %v5907, %v5282
    %v5972 = vsel %vm2265, %v5908, %v5284
    %v5973 = vsel %vm2265, %v5909, %v5286
    %v5974 = vsel %vm2265, %v5910, %v5288
    %v5975 = vsel %vm2265, %v5911, %v5290
    %v5976 = vsel %vm2265, %v5912, %v5292
    %v5977 = vsel %vm2265, %v5913, %v5294
    %v5978 = vsel %vm2265, %v5914, %v5296
    %v5979 = vsel %vm2265, %v5915, %v5298
    %v5980 = vsel %vm2265, %v5916, %v5300
    %v5981 = vsel %vm2265, %v5917, %v5302
    %v5982 = vsel %vm2265, %v5918, %v5304
    %v5983 = vsel %vm2265, %v5919, %v5306
    %v5984 = vsel %vm2265, %v5920, %v5308
    %v5985 = vsel %vm2265, %v5921, %v5310
    %v5986 = vsel %vm2265, %v5922, %v5312
    %v5987 = vsel %vm2265, %v5923, %v5314
    %v5988 = vsel %vm2265, %v5924, %v5316
    %v5989 = vsel %vm2265, %v5925, %v5318
    %v5990 = vsel %vm2265, %v5926, %v5320
    %v5991 = vsel %vm2265, %v5927, %v5322
    %v5992 = vsel %vm2265, %v5928, %v5324
    %v5993 = vsel %vm2265, %v5929, %v5326
    %v5994 = vsel %vm2265, %v5930, %v5328
    %v5995 = vsel %vm2265, %v5931, %v5330
    %v5996 = vsel %vm2265, %v5932, %v5332
    %v5997 = vsel %vm2265, %v5933, %v5334
    %v5998 = vsel %vm2265, %v5934, %v5336
    %v5999 = vsel %vm2265, %v5935, %v5338
    %v6000 = vsel %vm2265, %v5936, %v5340
    %v6001 = vsel %vm2265, %v5937, %v5342
    %v6002 = vsel %vm2265, %v5938, %v5344
    %v6003 = vsel %vm2265, %v5939, %v5346
    %v6004 = vsel %vm2265, %v5940, %v5348
    %v6005 = vsel %vm2265, %v5941, %v5350
    %v6006 = vsel %vm2265, %v5942, %v5352
    %v6007 = vsel %vm2265, %v5943, %v5354
    %v6008 = vsel %vm2265, %v5944, %v5356
    %v6009 = vsel %vm2265, %v5945, %v5358
    %v6010 = vsel %vm2265, %v5946, %v5360
    %v6011 = vsel %vm2265, %v5947, %v5362
    %v6012 = vsel %vm2265, %v5948, %v5364
    %v6013 = vsel %vm2265, %v5949, %v5366
    %v6014 = vsel %vm2265, %v5950, %v5368
    %v6015 = vsel %vm2265, %v5951, %v5370
    %v6016 = vsel %vm2265, %v5952, %v5372
    %v6017 = vsel %vm2265, %v5953, %v5374
    %v6018 = vsel %vm2265, %v5954, %v5376
    %vm6019 = vcmask 916480
    %v6020 = vsel %vm6019, %v5955, %v5442
    %v6021 = vsel %vm6019, %v5956, %v5444
    %v6022 = vsel %vm6019, %v5957, %v5446
    %v6023 = vsel %vm6019, %v5958, %v5448
    %v6024 = vsel %vm6019, %v5959, %v5450
    %v6025 = vsel %vm6019, %v5960, %v5452
    %v6026 = vsel %vm6019, %v5961, %v5454
    %v6027 = vsel %vm6019, %v5962, %v5456
    %v6028 = vsel %vm6019, %v5963, %v5458
    %v6029 = vsel %vm6019, %v5964, %v5460
    %v6030 = vsel %vm6019, %v5965, %v5462
    %v6031 = vsel %vm6019, %v5966, %v5464
    %v6032 = vsel %vm6019, %v5967, %v5466
    %v6033 = vsel %vm6019, %v5968, %v5468
    %v6034 = vsel %vm6019, %v5969, %v5470
    %v6035 = vsel %vm6019, %v5970, %v5472
    %v6036 = vsel %vm6019, %v5971, %v5474
    %v6037 = vsel %vm6019, %v5972, %v5476
    %v6038 = vsel %vm6019, %v5973, %v5478
    %v6039 = vsel %vm6019, %v5974, %v5480
    %v6040 = vsel %vm6019, %v5975, %v5482
    %v6041 = vsel %vm6019, %v5976, %v5484
    %v6042 = vsel %vm6019, %v5977, %v5486
    %v6043 = vsel %vm6019, %v5978, %v5488
    %v6044 = vsel %vm6019, %v5979, %v5490
    %v6045 = vsel %vm6019, %v5980, %v5492
    %v6046 = vsel %vm6019, %v5981, %v5494
    %v6047 = vsel %vm6019, %v5982, %v5496
    %v6048 = vsel %vm6019, %v5983, %v5498
    %v6049 = vsel %vm6019, %v5984, %v5500
    %v6050 = vsel %vm6019, %v5985, %v5502
    %v6051 = vsel %vm6019, %v5986, %v5504
    %v6052 = vsel %vm6019, %v5987, %v5506
    %v6053 = vsel %vm6019, %v5988, %v5508
    %v6054 = vsel %vm6019, %v5989, %v5510
    %v6055 = vsel %vm6019, %v5990, %v5512
    %v6056 = vsel %vm6019, %v5991, %v5514
    %v6057 = vsel %vm6019, %v5992, %v5516
    %v6058 = vsel %vm6019, %v5993, %v5518
    %v6059 = vsel %vm6019, %v5994, %v5520
    %v6060 = vsel %vm6019, %v5995, %v5522
    %v6061 = vsel %vm6019, %v5996, %v5524
    %v6062 = vsel %vm6019, %v5997, %v5526
    %v6063 = vsel %vm6019, %v5998, %v5528
    %v6064 = vsel %vm6019, %v5999, %v5530
    %v6065 = vsel %vm6019, %v6000, %v5532
    %v6066 = vsel %vm6019, %v6001, %v5534
    %v6067 = vsel %vm6019, %v6002, %v5536
    %v6068 = vsel %vm6019, %v6003, %v5538
    %v6069 = vsel %vm6019, %v6004, %v5540
    %v6070 = vsel %vm6019, %v6005, %v5542
    %v6071 = vsel %vm6019, %v6006, %v5544
    %v6072 = vsel %vm6019, %v6007, %v5546
    %v6073 = vsel %vm6019, %v6008, %v5548
    %v6074 = vsel %vm6019, %v6009, %v5550
    %v6075 = vsel %vm6019, %v6010, %v5552
    %v6076 = vsel %vm6019, %v6011, %v5554
    %v6077 = vsel %vm6019, %v6012, %v5556
    %v6078 = vsel %vm6019, %v6013, %v5558
    %v6079 = vsel %vm6019, %v6014, %v5560
    %v6080 = vsel %vm6019, %v6015, %v5562
    %v6081 = vsel %vm6019, %v6016, %v5564
    %v6082 = vsel %vm6019, %v6017, %v5566
    %v6083 = vsel %vm6019, %v6018, %v5568
    %v6084 = vld [vmem:[%s2] sm:$0xff]
    %v6085 = vld [vmem:[%s2 + $0x8] sm:$0xff]
    %v6086 = vld [vmem:[%s2 + $0x10] sm:$0xff]
    %v6087 = vld [vmem:[%s2 + $0x18] sm:$0xff]
    %v6088 = vld [vmem:[%s2 + $0x20] sm:$0xff]
    %v6089 = vld [vmem:[%s2 + $0x28] sm:$0xff]
    %v6090 = vld [vmem:[%s2 + $0x30] sm:$0xff]
    %v6091 = vld [vmem:[%s2 + $0x38] sm:$0xff]
    %v6092 = vld [vmem:[%s2 + $0x40] sm:$0xff]
    %v6093 = vld [vmem:[%s2 + $0x48] sm:$0xff]
    %v6094 = vld [vmem:[%s2 + $0x50] sm:$0xff]
    %v6095 = vld [vmem:[%s2 + $0x58] sm:$0xff]
    %v6096 = vld [vmem:[%s2 + $0x60] sm:$0xff]
    %v6097 = vld [vmem:[%s2 + $0x68] sm:$0xff]
    %v6098 = vld [vmem:[%s2 + $0x70] sm:$0xff]
    %v6099 = vld [vmem:[%s2 + $0x78] sm:$0xff]
    %v6100 = vld [vmem:[%s2 + $0x80] sm:$0xff]
    %v6101 = vld [vmem:[%s2 + $0x88] sm:$0xff]
    %v6102 = vsel %vm105, %v3961, 0
    %v6104 = vsel %vm105, %v3963, 0
    %v6106 = vsel %vm105, %v3966, 0
    %v6108 = vsel %vm105, %v3968, 0
    %v6110 = vsel %vm105, %v3971, 0
    %v6112 = vsel %vm105, %v3973, 0
    %v6114 = vsel %vm105, %v3976, 0
    %v6116 = vsel %vm105, %v3978, 0
    %v6118 = vsel %vm105, %v3981, 0
    %v6120 = vsel %vm105, %v3983, 0
    %v6122 = vsel %vm105, %v3986, 0
    %v6124 = vsel %vm105, %v3988, 0
    %v6126 = vsel %vm105, %v3991, 0
    %v6128 = vsel %vm105, %v3993, 0
    %v6130 = vsel %vm105, %v3996, 0
    %v6132 = vsel %vm105, %v3998, 0
    %v6134 = vsel %vm105, %v4001, 0
    %v6136 = vsel %vm105, %v4003, 0
    %v6138 = vsel %vm105, %v4006, 0
    %v6140 = vsel %vm105, %v4008, 0
    %v6142 = vsel %vm105, %v4011, 0
    %v6144 = vsel %vm105, %v4013, 0
    %v6146 = vsel %vm105, %v4016, 0
    %v6148 = vsel %vm105, %v4018, 0
    %v6150 = vsel %vm105, %v4021, 0
    %v6152 = vsel %vm105, %v4023, 0
    %v6154 = vsel %vm105, %v4026, 0
    %v6156 = vsel %vm105, %v4028, 0
    %v6158 = vsel %vm105, %v4117, 0
    %v6160 = vsel %vm105, %v4119, 0
    %v6162 = vsel %vm105, %v4153, 0
    %v6164 = vsel %vm105, %v4155, 0
    %v6166 = vsel %vm105, %v4041, 0
    %v6168 = vsel %vm105, %v4043, 0
    %v6170 = vsel %vm105, %v4046, 0
    %v6172 = vsel %vm105, %v4048, 0
    %v6174 = vsel %vm105, %v4051, 0
    %v6176 = vsel %vm105, %v4053, 0
    %v6178 = vsel %vm105, %v4056, 0
    %v6180 = vsel %vm105, %v4058, 0
    %v6182 = vsel %vm105, %v4061, 0
    %v6184 = vsel %vm105, %v4063, 0
    %v6186 = vsel %vm105, %v4066, 0
    %v6188 = vsel %vm105, %v4068, 0
    %v6190 = vsel %vm105, %v4071, 0
    %v6192 = vsel %vm105, %v4073, 0
    %v6194 = vsel %vm105, %v4076, 0
    %v6196 = vsel %vm105, %v4078, 0
    %v6198 = vsel %vm105, %v4081, 0
    %v6200 = vsel %vm105, %v4083, 0
    %v6202 = vsel %vm105, %v4086, 0
    %v6204 = vsel %vm105, %v4088, 0
    %v6206 = vsel %vm105, %v4091, 0
    %v6208 = vsel %vm105, %v4093, 0
    %v6210 = vsel %vm105, %v4096, 0
    %v6212 = vsel %vm105, %v4098, 0
    %v6214 = vsel %vm105, %v4101, 0
    %v6216 = vsel %vm105, %v4103, 0
    %v6218 = vsel %vm105, %v4106, 0
    %v6220 = vsel %vm105, %v4108, 0
    %v6222 = vsel %vm105, %v4122, 0
    %v6224 = vsel %vm105, %v4124, 0
    %v6226 = vsel %vm105, %v4158, 0
    %v6228 = vsel %vm105, %v4160, 0
    %6230 = vmatprep.subr.mxu0 0.0
    %6231 = vmatpush1.msra.mxu0 %v6099
    %6232 = vmatprep.subr.mxu0 0.0
    %6233 = vmatpush1.msra.mxu0 %v6098
    %6234 = vmatprep.subr.mxu0 0.0
    %6235 = vmatpush1.msra.mxu0 %v6097
    %6236 = vmatprep.subr.mxu0 0.0
    %6237 = vmatpush1.msra.mxu0 %v6096
    %6238 = vmatprep.subr.mxu0 0.0
    %6239 = vmatpush1.msra.mxu0 %v6095
    %6240 = vmatprep.subr.mxu0 0.0
    %6241 = vmatpush1.msra.mxu0 %v6094
    %6242 = vmatprep.subr.mxu0 0.0
    %6243 = vmatpush1.msra.mxu0 %v6093
    %6244 = vmatprep.subr.mxu0 0.0
    %6245 = vmatpush1.msra.mxu0 %v6092
    %6246 = vmatprep.subr.mxu0 0.0
    %6247 = vmatpush1.msra.mxu0 %v6091
    %6248 = vmatprep.subr.mxu0 0.0
    %6249 = vmatpush1.msra.mxu0 %v6090
    %6250 = vmatprep.subr.mxu0 0.0
    %6251 = vmatpush1.msra.mxu0 %v6089
    %6252 = vmatprep.subr.mxu0 0.0
    %6253 = vmatpush1.msra.mxu0 %v6088
    %6254 = vmatprep.subr.mxu0 0.0
    %6255 = vmatpush1.msra.mxu0 %v6087
    %6256 = vmatprep.subr.mxu0 0.0
    %6257 = vmatpush1.msra.mxu0 %v6086
    %6258 = vmatprep.subr.mxu0 0.0
    %6259 = vmatpush1.msra.mxu0 %v6085
    %6260 = vmatprep.subr.mxu0 0.0
    %6261 = vmatpush1.msra.mxu0 %v6084
    %6262 = vmatprep.subr.mxu0 0.0
    %6263 = vmatpush2.msra.mxu0 0.0
    %6264 = vmatprep.subr.mxu0 0.0
    %6265 = vmatpush2.msra.mxu0 0.0
    %6266 = vmatprep.subr.mxu0 0.0
    %6267 = vmatpush2.msra.mxu0 0.0
    %6268 = vmatprep.subr.mxu0 0.0
    %6269 = vmatpush2.msra.mxu0 0.0
    %6270 = vmatprep.subr.mxu0 0.0
    %6271 = vmatpush2.msra.mxu0 0.0
    %6272 = vmatprep.subr.mxu0 0.0
    %6273 = vmatpush2.msra.mxu0 0.0
    %6274 = vmatprep.subr.mxu0 0.0
    %6275 = vmatpush2.msra.mxu0 0.0
    %6276 = vmatprep.subr.mxu0 0.0
    %6277 = vmatpush2.msra.mxu0 0.0
    %6278 = vmatprep.subr.mxu0 0.0
    %6279 = vmatpush2.msra.mxu0 0.0
    %6280 = vmatprep.subr.mxu0 0.0
    %6281 = vmatpush2.msra.mxu0 0.0
    %6282 = vmatprep.subr.mxu0 0.0
    %6283 = vmatpush2.msra.mxu0 0.0
    %6284 = vmatprep.subr.mxu0 0.0
    %6285 = vmatpush2.msra.mxu0 0.0
    %6286 = vmatprep.subr.mxu0 0.0
    %6287 = vmatpush2.msra.mxu0 0.0
    %6288 = vmatprep.subr.mxu0 0.0
    %6289 = vmatpush2.msra.mxu0 0.0
    %6290 = vmatprep.subr.mxu0 0.0
    %6291 = vmatpush2.msra.mxu0 %v6101
    %6292 = vmatprep.subr.mxu0 0.0
    %6293 = vmatpush2.msra.mxu0 %v6100
    %6294 = vmatprep.mubr.f32.mxu0 %v6102
    %6295 = vmatmul.mubr.f32.gmra.mxu0 %v6020
    %v6296 = vpop.f32.mrf.mxu0
    %v6297 = vadd.f32 0.0, %v6296
    %v6298 = vpop.f32.mrf.mxu0
    %6299 = vmatprep.mubr.f32.mxu0 %v6104
    %6300 = vmatmul.mubr.f32.gmra.mxu0 %v6021
    %v6301 = vpop.f32.mrf.mxu0
    %v6302 = vadd.f32 0.0, %v6301
    %v6303 = vpop.f32.mrf.mxu0
    %6304 = vmatprep.mubr.f32.mxu0 %v6106
    %6305 = vmatmul.mubr.f32.gmra.mxu0 %v6022
    %v6306 = vpop.f32.mrf.mxu0
    %v6307 = vadd.f32 0.0, %v6306
    %v6308 = vpop.f32.mrf.mxu0
    %6309 = vmatprep.mubr.f32.mxu0 %v6108
    %6310 = vmatmul.mubr.f32.gmra.mxu0 %v6023
    %v6311 = vpop.f32.mrf.mxu0
    %v6312 = vadd.f32 0.0, %v6311
    %v6313 = vpop.f32.mrf.mxu0
    %6314 = vmatprep.mubr.f32.mxu0 %v6110
    %6315 = vmatmul.mubr.f32.gmra.mxu0 %v6024
    %v6316 = vpop.f32.mrf.mxu0
    %v6317 = vadd.f32 0.0, %v6316
    %v6318 = vpop.f32.mrf.mxu0
    %6319 = vmatprep.mubr.f32.mxu0 %v6112
    %6320 = vmatmul.mubr.f32.gmra.mxu0 %v6025
    %v6321 = vpop.f32.mrf.mxu0
    %v6322 = vadd.f32 0.0, %v6321
    %v6323 = vpop.f32.mrf.mxu0
    %6324 = vmatprep.mubr.f32.mxu0 %v6114
    %6325 = vmatmul.mubr.f32.gmra.mxu0 %v6026
    %v6326 = vpop.f32.mrf.mxu0
    %v6327 = vadd.f32 0.0, %v6326
    %v6328 = vpop.f32.mrf.mxu0
    %6329 = vmatprep.mubr.f32.mxu0 %v6116
    %6330 = vmatmul.mubr.f32.gmra.mxu0 %v6027
    %v6331 = vpop.f32.mrf.mxu0
    %v6332 = vadd.f32 0.0, %v6331
    %v6333 = vpop.f32.mrf.mxu0
    %6334 = vmatprep.mubr.f32.mxu0 %v6118
    %6335 = vmatmul.mubr.f32.gmra.mxu0 %v6028
    %v6336 = vpop.f32.mrf.mxu0
    %v6337 = vadd.f32 0.0, %v6336
    %v6338 = vpop.f32.mrf.mxu0
    %6339 = vmatprep.mubr.f32.mxu0 %v6120
    %6340 = vmatmul.mubr.f32.gmra.mxu0 %v6029
    %v6341 = vpop.f32.mrf.mxu0
    %v6342 = vadd.f32 0.0, %v6341
    %v6343 = vpop.f32.mrf.mxu0
    %6344 = vmatprep.mubr.f32.mxu0 %v6122
    %6345 = vmatmul.mubr.f32.gmra.mxu0 %v6030
    %v6346 = vpop.f32.mrf.mxu0
    %v6347 = vadd.f32 0.0, %v6346
    %v6348 = vpop.f32.mrf.mxu0
    %6349 = vmatprep.mubr.f32.mxu0 %v6124
    %6350 = vmatmul.mubr.f32.gmra.mxu0 %v6031
    %v6351 = vpop.f32.mrf.mxu0
    %v6352 = vadd.f32 0.0, %v6351
    %v6353 = vpop.f32.mrf.mxu0
    %6354 = vmatprep.mubr.f32.mxu0 %v6126
    %6355 = vmatmul.mubr.f32.gmra.mxu0 %v6032
    %v6356 = vpop.f32.mrf.mxu0
    %v6357 = vadd.f32 0.0, %v6356
    %v6358 = vpop.f32.mrf.mxu0
    %6359 = vmatprep.mubr.f32.mxu0 %v6128
    %6360 = vmatmul.mubr.f32.gmra.mxu0 %v6033
    %v6361 = vpop.f32.mrf.mxu0
    %v6362 = vadd.f32 0.0, %v6361
    %v6363 = vpop.f32.mrf.mxu0
    %6364 = vmatprep.mubr.f32.mxu0 %v6130
    %6365 = vmatmul.mubr.f32.gmra.mxu0 %v6034
    %v6366 = vpop.f32.mrf.mxu0
    %v6367 = vadd.f32 0.0, %v6366
    %v6368 = vpop.f32.mrf.mxu0
    %6369 = vmatprep.mubr.f32.mxu0 %v6132
    %6370 = vmatmul.mubr.f32.gmra.mxu0 %v6035
    %v6371 = vpop.f32.mrf.mxu0
    %v6372 = vadd.f32 0.0, %v6371
    %v6373 = vpop.f32.mrf.mxu0
    %6374 = vmatprep.mubr.f32.mxu0 %v6134
    %6375 = vmatmul.mubr.f32.gmra.mxu0 %v6036
    %v6376 = vpop.f32.mrf.mxu0
    %v6377 = vadd.f32 0.0, %v6376
    %v6378 = vpop.f32.mrf.mxu0
    %6379 = vmatprep.mubr.f32.mxu0 %v6136
    %6380 = vmatmul.mubr.f32.gmra.mxu0 %v6037
    %v6381 = vpop.f32.mrf.mxu0
    %v6382 = vadd.f32 0.0, %v6381
    %v6383 = vpop.f32.mrf.mxu0
    %6384 = vmatprep.mubr.f32.mxu0 %v6138
    %6385 = vmatmul.mubr.f32.gmra.mxu0 %v6038
    %v6386 = vpop.f32.mrf.mxu0
    %v6387 = vadd.f32 0.0, %v6386
    %v6388 = vpop.f32.mrf.mxu0
    %6389 = vmatprep.mubr.f32.mxu0 %v6140
    %6390 = vmatmul.mubr.f32.gmra.mxu0 %v6039
    %v6391 = vpop.f32.mrf.mxu0
    %v6392 = vadd.f32 0.0, %v6391
    %v6393 = vpop.f32.mrf.mxu0
    %6394 = vmatprep.mubr.f32.mxu0 %v6142
    %6395 = vmatmul.mubr.f32.gmra.mxu0 %v6040
    %v6396 = vpop.f32.mrf.mxu0
    %v6397 = vadd.f32 0.0, %v6396
    %v6398 = vpop.f32.mrf.mxu0
    %6399 = vmatprep.mubr.f32.mxu0 %v6144
    %6400 = vmatmul.mubr.f32.gmra.mxu0 %v6041
    %v6401 = vpop.f32.mrf.mxu0
    %v6402 = vadd.f32 0.0, %v6401
    %v6403 = vpop.f32.mrf.mxu0
    %6404 = vmatprep.mubr.f32.mxu0 %v6146
    %6405 = vmatmul.mubr.f32.gmra.mxu0 %v6042
    %v6406 = vpop.f32.mrf.mxu0
    %v6407 = vadd.f32 0.0, %v6406
    %v6408 = vpop.f32.mrf.mxu0
    %6409 = vmatprep.mubr.f32.mxu0 %v6148
    %6410 = vmatmul.mubr.f32.gmra.mxu0 %v6043
    %v6411 = vpop.f32.mrf.mxu0
    %v6412 = vadd.f32 0.0, %v6411
    %v6413 = vpop.f32.mrf.mxu0
    %6414 = vmatprep.mubr.f32.mxu0 %v6150
    %6415 = vmatmul.mubr.f32.gmra.mxu0 %v6044
    %v6416 = vpop.f32.mrf.mxu0
    %v6417 = vadd.f32 0.0, %v6416
    %v6418 = vpop.f32.mrf.mxu0
    %6419 = vmatprep.mubr.f32.mxu0 %v6152
    %6420 = vmatmul.mubr.f32.gmra.mxu0 %v6045
    %v6421 = vpop.f32.mrf.mxu0
    %v6422 = vadd.f32 0.0, %v6421
    %v6423 = vpop.f32.mrf.mxu0
    %6424 = vmatprep.mubr.f32.mxu0 %v6154
    %6425 = vmatmul.mubr.f32.gmra.mxu0 %v6046
    %v6426 = vpop.f32.mrf.mxu0
    %v6427 = vadd.f32 0.0, %v6426
    %v6428 = vpop.f32.mrf.mxu0
    %6429 = vmatprep.mubr.f32.mxu0 %v6156
    %6430 = vmatmul.mubr.f32.gmra.mxu0 %v6047
    %v6431 = vpop.f32.mrf.mxu0
    %v6432 = vadd.f32 0.0, %v6431
    %v6433 = vpop.f32.mrf.mxu0
    %6434 = vmatprep.mubr.f32.mxu0 %v6158
    %6435 = vmatmul.mubr.f32.gmra.mxu0 %v6048
    %v6436 = vpop.f32.mrf.mxu0
    %v6437 = vadd.f32 0.0, %v6436
    %v6438 = vpop.f32.mrf.mxu0
    %6439 = vmatprep.mubr.f32.mxu0 %v6160
    %6440 = vmatmul.mubr.f32.gmra.mxu0 %v6049
    %v6441 = vpop.f32.mrf.mxu0
    %v6442 = vadd.f32 0.0, %v6441
    %v6443 = vpop.f32.mrf.mxu0
    %6444 = vmatprep.mubr.f32.mxu0 %v6162
    %6445 = vmatmul.mubr.f32.gmra.mxu0 %v6050
    %v6446 = vpop.f32.mrf.mxu0
    %v6447 = vadd.f32 0.0, %v6446
    %v6448 = vpop.f32.mrf.mxu0
    %6449 = vmatprep.mubr.f32.mxu0 %v6164
    %6450 = vmatmul.mubr.f32.gmra.mxu0 %v6051
    %v6451 = vpop.f32.mrf.mxu0
    %v6452 = vadd.f32 0.0, %v6451
    %v6453 = vpop.f32.mrf.mxu0
    %6454 = vmatprep.mubr.f32.mxu0 %v6166
    %6455 = vmatmul.mubr.f32.gmra.mxu0 %v6052
    %v6456 = vpop.f32.mrf.mxu0
    %v6457 = vadd.f32 0.0, %v6456
    %v6458 = vpop.f32.mrf.mxu0
    %6459 = vmatprep.mubr.f32.mxu0 %v6168
    %6460 = vmatmul.mubr.f32.gmra.mxu0 %v6053
    %v6461 = vpop.f32.mrf.mxu0
    %v6462 = vadd.f32 0.0, %v6461
    %v6463 = vpop.f32.mrf.mxu0
    %6464 = vmatprep.mubr.f32.mxu0 %v6170
    %6465 = vmatmul.mubr.f32.gmra.mxu0 %v6054
    %v6466 = vpop.f32.mrf.mxu0
    %v6467 = vadd.f32 0.0, %v6466
    %v6468 = vpop.f32.mrf.mxu0
    %6469 = vmatprep.mubr.f32.mxu0 %v6172
    %6470 = vmatmul.mubr.f32.gmra.mxu0 %v6055
    %v6471 = vpop.f32.mrf.mxu0
    %v6472 = vadd.f32 0.0, %v6471
    %v6473 = vpop.f32.mrf.mxu0
    %6474 = vmatprep.mubr.f32.mxu0 %v6174
    %6475 = vmatmul.mubr.f32.gmra.mxu0 %v6056
    %v6476 = vpop.f32.mrf.mxu0
    %v6477 = vadd.f32 0.0, %v6476
    %v6478 = vpop.f32.mrf.mxu0
    %6479 = vmatprep.mubr.f32.mxu0 %v6176
    %6480 = vmatmul.mubr.f32.gmra.mxu0 %v6057
    %v6481 = vpop.f32.mrf.mxu0
    %v6482 = vadd.f32 0.0, %v6481
    %v6483 = vpop.f32.mrf.mxu0
    %6484 = vmatprep.mubr.f32.mxu0 %v6178
    %6485 = vmatmul.mubr.f32.gmra.mxu0 %v6058
    %v6486 = vpop.f32.mrf.mxu0
    %v6487 = vadd.f32 0.0, %v6486
    %v6488 = vpop.f32.mrf.mxu0
    %6489 = vmatprep.mubr.f32.mxu0 %v6180
    %6490 = vmatmul.mubr.f32.gmra.mxu0 %v6059
    %v6491 = vpop.f32.mrf.mxu0
    %v6492 = vadd.f32 0.0, %v6491
    %v6493 = vpop.f32.mrf.mxu0
    %6494 = vmatprep.mubr.f32.mxu0 %v6182
    %6495 = vmatmul.mubr.f32.gmra.mxu0 %v6060
    %v6496 = vpop.f32.mrf.mxu0
    %v6497 = vadd.f32 0.0, %v6496
    %v6498 = vpop.f32.mrf.mxu0
    %6499 = vmatprep.mubr.f32.mxu0 %v6184
    %6500 = vmatmul.mubr.f32.gmra.mxu0 %v6061
    %v6501 = vpop.f32.mrf.mxu0
    %v6502 = vadd.f32 0.0, %v6501
    %v6503 = vpop.f32.mrf.mxu0
    %6504 = vmatprep.mubr.f32.mxu0 %v6186
    %6505 = vmatmul.mubr.f32.gmra.mxu0 %v6062
    %v6506 = vpop.f32.mrf.mxu0
    %v6507 = vadd.f32 0.0, %v6506
    %v6508 = vpop.f32.mrf.mxu0
    %6509 = vmatprep.mubr.f32.mxu0 %v6188
    %6510 = vmatmul.mubr.f32.gmra.mxu0 %v6063
    %v6511 = vpop.f32.mrf.mxu0
    %v6512 = vadd.f32 0.0, %v6511
    %v6513 = vpop.f32.mrf.mxu0
    %6514 = vmatprep.mubr.f32.mxu0 %v6190
    %6515 = vmatmul.mubr.f32.gmra.mxu0 %v6064
    %v6516 = vpop.f32.mrf.mxu0
    %v6517 = vadd.f32 0.0, %v6516
    %v6518 = vpop.f32.mrf.mxu0
    %6519 = vmatprep.mubr.f32.mxu0 %v6192
    %6520 = vmatmul.mubr.f32.gmra.mxu0 %v6065
    %v6521 = vpop.f32.mrf.mxu0
    %v6522 = vadd.f32 0.0, %v6521
    %v6523 = vpop.f32.mrf.mxu0
    %6524 = vmatprep.mubr.f32.mxu0 %v6194
    %6525 = vmatmul.mubr.f32.gmra.mxu0 %v6066
    %v6526 = vpop.f32.mrf.mxu0
    %v6527 = vadd.f32 0.0, %v6526
    %v6528 = vpop.f32.mrf.mxu0
    %6529 = vmatprep.mubr.f32.mxu0 %v6196
    %6530 = vmatmul.mubr.f32.gmra.mxu0 %v6067
    %v6531 = vpop.f32.mrf.mxu0
    %v6532 = vadd.f32 0.0, %v6531
    %v6533 = vpop.f32.mrf.mxu0
    %6534 = vmatprep.mubr.f32.mxu0 %v6198
    %6535 = vmatmul.mubr.f32.gmra.mxu0 %v6068
    %v6536 = vpop.f32.mrf.mxu0
    %v6537 = vadd.f32 0.0, %v6536
    %v6538 = vpop.f32.mrf.mxu0
    %6539 = vmatprep.mubr.f32.mxu0 %v6200
    %6540 = vmatmul.mubr.f32.gmra.mxu0 %v6069
    %v6541 = vpop.f32.mrf.mxu0
    %v6542 = vadd.f32 0.0, %v6541
    %v6543 = vpop.f32.mrf.mxu0
    %6544 = vmatprep.mubr.f32.mxu0 %v6202
    %6545 = vmatmul.mubr.f32.gmra.mxu0 %v6070
    %v6546 = vpop.f32.mrf.mxu0
    %v6547 = vadd.f32 0.0, %v6546
    %v6548 = vpop.f32.mrf.mxu0
    %6549 = vmatprep.mubr.f32.mxu0 %v6204
    %6550 = vmatmul.mubr.f32.gmra.mxu0 %v6071
    %v6551 = vpop.f32.mrf.mxu0
    %v6552 = vadd.f32 0.0, %v6551
    %v6553 = vpop.f32.mrf.mxu0
    %6554 = vmatprep.mubr.f32.mxu0 %v6206
    %6555 = vmatmul.mubr.f32.gmra.mxu0 %v6072
    %v6556 = vpop.f32.mrf.mxu0
    %v6557 = vadd.f32 0.0, %v6556
    %v6558 = vpop.f32.mrf.mxu0
    %6559 = vmatprep.mubr.f32.mxu0 %v6208
    %6560 = vmatmul.mubr.f32.gmra.mxu0 %v6073
    %v6561 = vpop.f32.mrf.mxu0
    %v6562 = vadd.f32 0.0, %v6561
    %v6563 = vpop.f32.mrf.mxu0
    %6564 = vmatprep.mubr.f32.mxu0 %v6210
    %6565 = vmatmul.mubr.f32.gmra.mxu0 %v6074
    %v6566 = vpop.f32.mrf.mxu0
    %v6567 = vadd.f32 0.0, %v6566
    %v6568 = vpop.f32.mrf.mxu0
    %6569 = vmatprep.mubr.f32.mxu0 %v6212
    %6570 = vmatmul.mubr.f32.gmra.mxu0 %v6075
    %v6571 = vpop.f32.mrf.mxu0
    %v6572 = vadd.f32 0.0, %v6571
    %v6573 = vpop.f32.mrf.mxu0
    %6574 = vmatprep.mubr.f32.mxu0 %v6214
    %6575 = vmatmul.mubr.f32.gmra.mxu0 %v6076
    %v6576 = vpop.f32.mrf.mxu0
    %v6577 = vadd.f32 0.0, %v6576
    %v6578 = vpop.f32.mrf.mxu0
    %6579 = vmatprep.mubr.f32.mxu0 %v6216
    %6580 = vmatmul.mubr.f32.gmra.mxu0 %v6077
    %v6581 = vpop.f32.mrf.mxu0
    %v6582 = vadd.f32 0.0, %v6581
    %v6583 = vpop.f32.mrf.mxu0
    %6584 = vmatprep.mubr.f32.mxu0 %v6218
    %6585 = vmatmul.mubr.f32.gmra.mxu0 %v6078
    %v6586 = vpop.f32.mrf.mxu0
    %v6587 = vadd.f32 0.0, %v6586
    %v6588 = vpop.f32.mrf.mxu0
    %6589 = vmatprep.mubr.f32.mxu0 %v6220
    %6590 = vmatmul.mubr.f32.gmra.mxu0 %v6079
    %v6591 = vpop.f32.mrf.mxu0
    %v6592 = vadd.f32 0.0, %v6591
    %v6593 = vpop.f32.mrf.mxu0
    %6594 = vmatprep.mubr.f32.mxu0 %v6222
    %6595 = vmatmul.mubr.f32.gmra.mxu0 %v6080
    %v6596 = vpop.f32.mrf.mxu0
    %v6597 = vadd.f32 0.0, %v6596
    %v6598 = vpop.f32.mrf.mxu0
    %6599 = vmatprep.mubr.f32.mxu0 %v6224
    %6600 = vmatmul.mubr.f32.gmra.mxu0 %v6081
    %v6601 = vpop.f32.mrf.mxu0
    %v6602 = vadd.f32 0.0, %v6601
    %v6603 = vpop.f32.mrf.mxu0
    %6604 = vmatprep.mubr.f32.mxu0 %v6226
    %6605 = vmatmul.mubr.f32.gmra.mxu0 %v6082
    %v6606 = vpop.f32.mrf.mxu0
    %v6607 = vadd.f32 0.0, %v6606
    %v6608 = vpop.f32.mrf.mxu0
    %6609 = vmatprep.mubr.f32.mxu0 %v6228
    %6610 = vmatmul.mubr.f32.gmra.mxu0 %v6083
    %v6611 = vpop.f32.mrf.mxu0
    %v6612 = vadd.f32 0.0, %v6611
    %v6613 = vpop.f32.mrf.mxu0
    %6614 = vdwg.mxu0
    %v6615 = vmax.f32 %v6297, 0.0
    %v6616 = vmax.f32 %v6302, 0.0
    %v6617 = vmax.f32 %v6307, 0.0
    %v6618 = vmax.f32 %v6312, 0.0
    %v6619 = vmax.f32 %v6317, 0.0
    %v6620 = vmax.f32 %v6322, 0.0
    %v6621 = vmax.f32 %v6327, 0.0
    %v6622 = vmax.f32 %v6332, 0.0
    %v6623 = vmax.f32 %v6337, 0.0
    %v6624 = vmax.f32 %v6342, 0.0
    %v6625 = vmax.f32 %v6347, 0.0
    %v6626 = vmax.f32 %v6352, 0.0
    %v6627 = vmax.f32 %v6357, 0.0
    %v6628 = vmax.f32 %v6362, 0.0
    %v6629 = vmax.f32 %v6367, 0.0
    %v6630 = vmax.f32 %v6372, 0.0
    %v6631 = vmax.f32 %v6377, 0.0
    %v6632 = vmax.f32 %v6382, 0.0
    %v6633 = vmax.f32 %v6387, 0.0
    %v6634 = vmax.f32 %v6392, 0.0
    %v6635 = vmax.f32 %v6397, 0.0
    %v6636 = vmax.f32 %v6402, 0.0
    %v6637 = vmax.f32 %v6407, 0.0
    %v6638 = vmax.f32 %v6412, 0.0
    %v6639 = vmax.f32 %v6417, 0.0
    %v6640 = vmax.f32 %v6422, 0.0
    %v6641 = vmax.f32 %v6427, 0.0
    %v6642 = vmax.f32 %v6432, 0.0
    %v6643 = vmax.f32 %v6437, 0.0
    %v6644 = vmax.f32 %v6442, 0.0
    %v6645 = vmax.f32 %v6447, 0.0
    %v6646 = vmax.f32 %v6452, 0.0
    %v6647 = vmax.f32 %v6457, 0.0
    %v6648 = vmax.f32 %v6462, 0.0
    %v6649 = vmax.f32 %v6467, 0.0
    %v6650 = vmax.f32 %v6472, 0.0
    %v6651 = vmax.f32 %v6477, 0.0
    %v6652 = vmax.f32 %v6482, 0.0
    %v6653 = vmax.f32 %v6487, 0.0
    %v6654 = vmax.f32 %v6492, 0.0
    %v6655 = vmax.f32 %v6497, 0.0
    %v6656 = vmax.f32 %v6502, 0.0
    %v6657 = vmax.f32 %v6507, 0.0
    %v6658 = vmax.f32 %v6512, 0.0
    %v6659 = vmax.f32 %v6517, 0.0
    %v6660 = vmax.f32 %v6522, 0.0
    %v6661 = vmax.f32 %v6527, 0.0
    %v6662 = vmax.f32 %v6532, 0.0
    %v6663 = vmax.f32 %v6537, 0.0
    %v6664 = vmax.f32 %v6542, 0.0
    %v6665 = vmax.f32 %v6547, 0.0
    %v6666 = vmax.f32 %v6552, 0.0
    %v6667 = vmax.f32 %v6557, 0.0
    %v6668 = vmax.f32 %v6562, 0.0
    %v6669 = vmax.f32 %v6567, 0.0
    %v6670 = vmax.f32 %v6572, 0.0
    %v6671 = vmax.f32 %v6577, 0.0
    %v6672 = vmax.f32 %v6582, 0.0
    %v6673 = vmax.f32 %v6587, 0.0
    %v6674 = vmax.f32 %v6592, 0.0
    %v6675 = vmax.f32 %v6597, 0.0
    %v6676 = vmax.f32 %v6602, 0.0
    %v6677 = vmax.f32 %v6607, 0.0
    %v6678 = vmax.f32 %v6612, 0.0
    %s6679 = scalar_lea.vmem [#allocation4], 24
    %6680 = vst.msk [vmem:[%s6679 + $0x1] sm:$0xff] %vm18, %v6615
    %6681 = vst.msk [vmem:[%s6679 + $0x9] sm:$0xff] %vm18, %v6616
    %6682 = vst.msk [vmem:[%s6679 + $0x19] sm:$0xff] %vm18, %v6617
    %6683 = vst.msk [vmem:[%s6679 + $0x21] sm:$0xff] %vm18, %v6618
    %6684 = vst.msk [vmem:[%s6679 + $0x31] sm:$0xff] %vm18, %v6619
    %6685 = vst.msk [vmem:[%s6679 + $0x39] sm:$0xff] %vm18, %v6620
    %6686 = vst.msk [vmem:[%s6679 + $0x49] sm:$0xff] %vm18, %v6621
    %6687 = vst.msk [vmem:[%s6679 + $0x51] sm:$0xff] %vm18, %v6622
    %6688 = vst.msk [vmem:[%s6679 + $0x61] sm:$0xff] %vm18, %v6623
    %6689 = vst.msk [vmem:[%s6679 + $0x69] sm:$0xff] %vm18, %v6624
    %6690 = vst.msk [vmem:[%s6679 + $0x79] sm:$0xff] %vm18, %v6625
    %6691 = vst.msk [vmem:[%s6679 + $0x81] sm:$0xff] %vm18, %v6626
    %6692 = vst.msk [vmem:[%s6679 + $0x91] sm:$0xff] %vm18, %v6627
    %6693 = vst.msk [vmem:[%s6679 + $0x99] sm:$0xff] %vm18, %v6628
    %6694 = vst.msk [vmem:[%s6679 + $0xa9] sm:$0xff] %vm18, %v6629
    %6695 = vst.msk [vmem:[%s6679 + $0xb1] sm:$0xff] %vm18, %v6630
    %6696 = vst.msk [vmem:[%s6679 + $0xc1] sm:$0xff] %vm18, %v6631
    %6697 = vst.msk [vmem:[%s6679 + $0xc9] sm:$0xff] %vm18, %v6632
    %6698 = vst.msk [vmem:[%s6679 + $0xd9] sm:$0xff] %vm18, %v6633
    %6699 = vst.msk [vmem:[%s6679 + $0xe1] sm:$0xff] %vm18, %v6634
    %6700 = vst.msk [vmem:[%s6679 + $0xf1] sm:$0xff] %vm18, %v6635
    %6701 = vst.msk [vmem:[%s6679 + $0xf9] sm:$0xff] %vm18, %v6636
    %6702 = vst.msk [vmem:[%s6679 + $0x109] sm:$0xff] %vm18, %v6637
    %6703 = vst.msk [vmem:[%s6679 + $0x111] sm:$0xff] %vm18, %v6638
    %6704 = vst.msk [vmem:[%s6679 + $0x121] sm:$0xff] %vm18, %v6639
    %6705 = vst.msk [vmem:[%s6679 + $0x129] sm:$0xff] %vm18, %v6640
    %6706 = vst.msk [vmem:[%s6679 + $0x139] sm:$0xff] %vm18, %v6641
    %6707 = vst.msk [vmem:[%s6679 + $0x141] sm:$0xff] %vm18, %v6642
    %6708 = vst.msk [vmem:[%s6679 + $0x151] sm:$0xff] %vm18, %v6643
    %6709 = vst.msk [vmem:[%s6679 + $0x159] sm:$0xff] %vm18, %v6644
    %6710 = vst.msk [vmem:[%s6679 + $0x169] sm:$0xff] %vm18, %v6645
    %6711 = vst.msk [vmem:[%s6679 + $0x171] sm:$0xff] %vm18, %v6646
    %6712 = vst.msk [vmem:[%s6679 + $0x1b1] sm:$0xff] %vm18, %v6647
    %6713 = vst.msk [vmem:[%s6679 + $0x1b9] sm:$0xff] %vm18, %v6648
    %6714 = vst.msk [vmem:[%s6679 + $0x1c9] sm:$0xff] %vm18, %v6649
    %6715 = vst.msk [vmem:[%s6679 + $0x1d1] sm:$0xff] %vm18, %v6650
    %6716 = vst.msk [vmem:[%s6679 + $0x1e1] sm:$0xff] %vm18, %v6651
    %6717 = vst.msk [vmem:[%s6679 + $0x1e9] sm:$0xff] %vm18, %v6652
    %6718 = vst.msk [vmem:[%s6679 + $0x1f9] sm:$0xff] %vm18, %v6653
    %6719 = vst.msk [vmem:[%s6679 + $0x201] sm:$0xff] %vm18, %v6654
    %6720 = vst.msk [vmem:[%s6679 + $0x211] sm:$0xff] %vm18, %v6655
    %6721 = vst.msk [vmem:[%s6679 + $0x219] sm:$0xff] %vm18, %v6656
    %6722 = vst.msk [vmem:[%s6679 + $0x229] sm:$0xff] %vm18, %v6657
    %6723 = vst.msk [vmem:[%s6679 + $0x231] sm:$0xff] %vm18, %v6658
    %6724 = vst.msk [vmem:[%s6679 + $0x241] sm:$0xff] %vm18, %v6659
    %6725 = vst.msk [vmem:[%s6679 + $0x249] sm:$0xff] %vm18, %v6660
    %6726 = vst.msk [vmem:[%s6679 + $0x259] sm:$0xff] %vm18, %v6661
    %6727 = vst.msk [vmem:[%s6679 + $0x261] sm:$0xff] %vm18, %v6662
    %6728 = vst.msk [vmem:[%s6679 + $0x271] sm:$0xff] %vm18, %v6663
    %6729 = vst.msk [vmem:[%s6679 + $0x279] sm:$0xff] %vm18, %v6664
    %6730 = vst.msk [vmem:[%s6679 + $0x289] sm:$0xff] %vm18, %v6665
    %6731 = vst.msk [vmem:[%s6679 + $0x291] sm:$0xff] %vm18, %v6666
    %6732 = vst.msk [vmem:[%s6679 + $0x2a1] sm:$0xff] %vm18, %v6667
    %6733 = vst.msk [vmem:[%s6679 + $0x2a9] sm:$0xff] %vm18, %v6668
    %6734 = vst.msk [vmem:[%s6679 + $0x2b9] sm:$0xff] %vm18, %v6669
    %6735 = vst.msk [vmem:[%s6679 + $0x2c1] sm:$0xff] %vm18, %v6670
    %6736 = vst.msk [vmem:[%s6679 + $0x2d1] sm:$0xff] %vm18, %v6671
    %6737 = vst.msk [vmem:[%s6679 + $0x2d9] sm:$0xff] %vm18, %v6672
    %6738 = vst.msk [vmem:[%s6679 + $0x2e9] sm:$0xff] %vm18, %v6673
    %6739 = vst.msk [vmem:[%s6679 + $0x2f1] sm:$0xff] %vm18, %v6674
    %6740 = vst.msk [vmem:[%s6679 + $0x301] sm:$0xff] %vm18, %v6675
    %6741 = vst.msk [vmem:[%s6679 + $0x309] sm:$0xff] %vm18, %v6676
    %6742 = vst.msk [vmem:[%s6679 + $0x319] sm:$0xff] %vm18, %v6677
    %6743 = vst.msk [vmem:[%s6679 + $0x321] sm:$0xff] %vm18, %v6678
    %v6744 = vld [vmem:[#allocation4] sm:$0xff]
    %v6745 = vld [vmem:[#allocation4 + $0x8] sm:$0xff]
    %v6746 = vld [vmem:[#allocation4 + $0x10] sm:$0xff]
    %v6747 = vld [vmem:[#allocation4 + $0x18] sm:$0xff]
    %v6748 = vld [vmem:[#allocation4 + $0x20] sm:$0xff]
    %v6749 = vld [vmem:[#allocation4 + $0x28] sm:$0xff]
    %v6750 = vld [vmem:[#allocation4 + $0x30] sm:$0xff]
    %v6751 = vld [vmem:[#allocation4 + $0x38] sm:$0xff]
    %v6752 = vld [vmem:[#allocation4 + $0x40] sm:$0xff]
    %v6753 = vld [vmem:[#allocation4 + $0x48] sm:$0xff]
    %v6754 = vld [vmem:[#allocation4 + $0x50] sm:$0xff]
    %v6755 = vld [vmem:[#allocation4 + $0x58] sm:$0xff]
    %v6756 = vld [vmem:[#allocation4 + $0x60] sm:$0xff]
    %v6757 = vld [vmem:[#allocation4 + $0x68] sm:$0xff]
    %v6758 = vld [vmem:[#allocation4 + $0x70] sm:$0xff]
    %v6759 = vld [vmem:[#allocation4 + $0x78] sm:$0xff]
    %v6760 = vld [vmem:[#allocation4 + $0x80] sm:$0xff]
    %v6761 = vld [vmem:[#allocation4 + $0x88] sm:$0xff]
    %v6762 = vld [vmem:[#allocation4 + $0x90] sm:$0xff]
    %v6763 = vld [vmem:[#allocation4 + $0x98] sm:$0xff]
    %v6764 = vld [vmem:[#allocation4 + $0xa0] sm:$0xff]
    %v6765 = vld [vmem:[#allocation4 + $0xa8] sm:$0xff]
    %v6766 = vld [vmem:[#allocation4 + $0xb0] sm:$0xff]
    %v6767 = vld [vmem:[#allocation4 + $0xb8] sm:$0xff]
    %v6768 = vld [vmem:[#allocation4 + $0xc0] sm:$0xff]
    %v6769 = vld [vmem:[#allocation4 + $0xc8] sm:$0xff]
    %v6770 = vld [vmem:[#allocation4 + $0xd0] sm:$0xff]
    %v6771 = vld [vmem:[#allocation4 + $0xd8] sm:$0xff]
    %v6772 = vld [vmem:[#allocation4 + $0xe0] sm:$0xff]
    %v6773 = vld [vmem:[#allocation4 + $0xe8] sm:$0xff]
    %v6774 = vld [vmem:[#allocation4 + $0xf0] sm:$0xff]
    %v6775 = vld [vmem:[#allocation4 + $0xf8] sm:$0xff]
    %v6776 = vld [vmem:[#allocation4 + $0x100] sm:$0xff]
    %v6777 = vld [vmem:[#allocation4 + $0x108] sm:$0xff]
    %v6778 = vld [vmem:[#allocation4 + $0x110] sm:$0xff]
    %v6779 = vld [vmem:[#allocation4 + $0x118] sm:$0xff]
    %v6780 = vld [vmem:[#allocation4 + $0x120] sm:$0xff]
    %v6781 = vld [vmem:[#allocation4 + $0x128] sm:$0xff]
    %v6782 = vld [vmem:[#allocation4 + $0x130] sm:$0xff]
    %v6783 = vld [vmem:[#allocation4 + $0x138] sm:$0xff]
    %v6784 = vld [vmem:[#allocation4 + $0x140] sm:$0xff]
    %v6785 = vld [vmem:[#allocation4 + $0x148] sm:$0xff]
    %v6786 = vld [vmem:[#allocation4 + $0x150] sm:$0xff]
    %v6787 = vld [vmem:[#allocation4 + $0x158] sm:$0xff]
    %v6788 = vld [vmem:[#allocation4 + $0x160] sm:$0xff]
    %v6789 = vld [vmem:[#allocation4 + $0x168] sm:$0xff]
    %v6790 = vld [vmem:[#allocation4 + $0x170] sm:$0xff]
    %v6791 = vld [vmem:[#allocation4 + $0x178] sm:$0xff]
    %v6792 = vld [vmem:[#allocation4 + $0x180] sm:$0xff]
    %v6793 = vld [vmem:[#allocation4 + $0x188] sm:$0xff]
    %v6794 = vld [vmem:[#allocation4 + $0x190] sm:$0xff]
    %v6795 = vld [vmem:[#allocation4 + $0x198] sm:$0xff]
    %v6796 = vld [vmem:[#allocation4 + $0x1a0] sm:$0xff]
    %v6797 = vld [vmem:[#allocation4 + $0x1a8] sm:$0xff]
    %v6798 = vld [vmem:[#allocation4 + $0x1b0] sm:$0xff]
    %v6799 = vld [vmem:[#allocation4 + $0x1b8] sm:$0xff]
    %v6800 = vld [vmem:[#allocation4 + $0x1c0] sm:$0xff]
    %v6801 = vld [vmem:[#allocation4 + $0x1c8] sm:$0xff]
    %v6802 = vld [vmem:[#allocation4 + $0x1d0] sm:$0xff]
    %v6803 = vld [vmem:[#allocation4 + $0x1d8] sm:$0xff]
    %v6804 = vld [vmem:[#allocation4 + $0x1e0] sm:$0xff]
    %v6805 = vld [vmem:[#allocation4 + $0x1e8] sm:$0xff]
    %v6806 = vld [vmem:[#allocation4 + $0x1f0] sm:$0xff]
    %v6807 = vld [vmem:[#allocation4 + $0x1f8] sm:$0xff]
    %v6808 = vld [vmem:[#allocation4 + $0x200] sm:$0xff]
    %v6809 = vld [vmem:[#allocation4 + $0x208] sm:$0xff]
    %v6810 = vld [vmem:[#allocation4 + $0x210] sm:$0xff]
    %v6811 = vld [vmem:[#allocation4 + $0x218] sm:$0xff]
    %v6812 = vld [vmem:[#allocation4 + $0x220] sm:$0xff]
    %v6813 = vld [vmem:[#allocation4 + $0x228] sm:$0xff]
    %v6814 = vld [vmem:[#allocation4 + $0x230] sm:$0xff]
    %v6815 = vld [vmem:[#allocation4 + $0x238] sm:$0xff]
    %v6816 = vld [vmem:[#allocation4 + $0x240] sm:$0xff]
    %v6817 = vld [vmem:[#allocation4 + $0x248] sm:$0xff]
    %v6818 = vld [vmem:[#allocation4 + $0x250] sm:$0xff]
    %v6819 = vld [vmem:[#allocation4 + $0x258] sm:$0xff]
    %v6820 = vld [vmem:[#allocation4 + $0x260] sm:$0xff]
    %v6821 = vld [vmem:[#allocation4 + $0x268] sm:$0xff]
    %v6822 = vld [vmem:[#allocation4 + $0x270] sm:$0xff]
    %v6823 = vld [vmem:[#allocation4 + $0x278] sm:$0xff]
    %v6824 = vld [vmem:[#allocation4 + $0x280] sm:$0xff]
    %v6825 = vld [vmem:[#allocation4 + $0x288] sm:$0xff]
    %v6826 = vld [vmem:[#allocation4 + $0x290] sm:$0xff]
    %v6827 = vld [vmem:[#allocation4 + $0x298] sm:$0xff]
    %v6828 = vld [vmem:[#allocation4 + $0x2a0] sm:$0xff]
    %v6829 = vld [vmem:[#allocation4 + $0x2a8] sm:$0xff]
    %v6830 = vld [vmem:[#allocation4 + $0x2b0] sm:$0xff]
    %v6831 = vld [vmem:[#allocation4 + $0x2b8] sm:$0xff]
    %v6832 = vld [vmem:[#allocation4 + $0x2c0] sm:$0xff]
    %v6833 = vld [vmem:[#allocation4 + $0x2c8] sm:$0xff]
    %v6834 = vld [vmem:[#allocation4 + $0x2d0] sm:$0xff]
    %v6835 = vld [vmem:[#allocation4 + $0x2d8] sm:$0xff]
    %v6836 = vld [vmem:[#allocation4 + $0x2e0] sm:$0xff]
    %v6837 = vld [vmem:[#allocation4 + $0x2e8] sm:$0xff]
    %v6838 = vld [vmem:[#allocation4 + $0x2f0] sm:$0xff]
    %v6839 = vld [vmem:[#allocation4 + $0x2f8] sm:$0xff]
    %v6840 = vld [vmem:[#allocation4 + $0x300] sm:$0xff]
    %v6841 = vld [vmem:[#allocation4 + $0x308] sm:$0xff]
    %v6842 = vld [vmem:[#allocation4 + $0x310] sm:$0xff]
    %v6843 = vld [vmem:[#allocation4 + $0x318] sm:$0xff]
    %v6844 = vld [vmem:[#allocation4 + $0x320] sm:$0xff]
    %v6845 = vld [vmem:[#allocation4 + $0x328] sm:$0xff]
    %v6846 = vld [vmem:[#allocation4 + $0x330] sm:$0xff]
    %v6847 = vld [vmem:[#allocation4 + $0x338] sm:$0xff]
    %v6848 = vld [vmem:[#allocation4 + $0x340] sm:$0xff]
    %v6849 = vld [vmem:[#allocation4 + $0x348] sm:$0xff]
    %v6850 = vld [vmem:[#allocation4 + $0x350] sm:$0xff]
    %v6851 = vld [vmem:[#allocation4 + $0x358] sm:$0xff]
    %v6948 = vrot.slane %v6744, 1
    %v6949 = vrot.slane %v6745, 1
    %v6950 = vsel %vm610, %v6948, %v6949
    %v6951 = vrot.slane %v6746, 1
    %v6952 = vsel %vm610, %v6949, %v6951
    %v6953 = vrot.slane %v6747, 1
    %v6954 = vrot.slane %v6748, 1
    %v6955 = vsel %vm610, %v6953, %v6954
    %v6956 = vrot.slane %v6749, 1
    %v6957 = vsel %vm610, %v6954, %v6956
    %v6958 = vrot.slane %v6750, 1
    %v6959 = vrot.slane %v6751, 1
    %v6960 = vsel %vm610, %v6958, %v6959
    %v6961 = vrot.slane %v6752, 1
    %v6962 = vsel %vm610, %v6959, %v6961
    %v6963 = vrot.slane %v6753, 1
    %v6964 = vrot.slane %v6754, 1
    %v6965 = vsel %vm610, %v6963, %v6964
    %v6966 = vrot.slane %v6755, 1
    %v6967 = vsel %vm610, %v6964, %v6966
    %v6968 = vrot.slane %v6756, 1
    %v6969 = vrot.slane %v6757, 1
    %v6970 = vsel %vm610, %v6968, %v6969
    %v6971 = vrot.slane %v6758, 1
    %v6972 = vsel %vm610, %v6969, %v6971
    %v6973 = vrot.slane %v6759, 1
    %v6974 = vrot.slane %v6760, 1
    %v6975 = vsel %vm610, %v6973, %v6974
    %v6976 = vrot.slane %v6761, 1
    %v6977 = vsel %vm610, %v6974, %v6976
    %v6978 = vrot.slane %v6762, 1
    %v6979 = vrot.slane %v6763, 1
    %v6980 = vsel %vm610, %v6978, %v6979
    %v6981 = vrot.slane %v6764, 1
    %v6982 = vsel %vm610, %v6979, %v6981
    %v6983 = vrot.slane %v6765, 1
    %v6984 = vrot.slane %v6766, 1
    %v6985 = vsel %vm610, %v6983, %v6984
    %v6986 = vrot.slane %v6767, 1
    %v6987 = vsel %vm610, %v6984, %v6986
    %v6988 = vrot.slane %v6768, 1
    %v6989 = vrot.slane %v6769, 1
    %v6990 = vsel %vm610, %v6988, %v6989
    %v6991 = vrot.slane %v6770, 1
    %v6992 = vsel %vm610, %v6989, %v6991
    %v6993 = vrot.slane %v6771, 1
    %v6994 = vrot.slane %v6772, 1
    %v6995 = vsel %vm610, %v6993, %v6994
    %v6996 = vrot.slane %v6773, 1
    %v6997 = vsel %vm610, %v6994, %v6996
    %v6998 = vrot.slane %v6774, 1
    %v6999 = vrot.slane %v6775, 1
    %v7000 = vsel %vm610, %v6998, %v6999
    %v7001 = vrot.slane %v6776, 1
    %v7002 = vsel %vm610, %v6999, %v7001
    %v7003 = vrot.slane %v6777, 1
    %v7004 = vrot.slane %v6778, 1
    %v7005 = vsel %vm610, %v7003, %v7004
    %v7006 = vrot.slane %v6779, 1
    %v7007 = vsel %vm610, %v7004, %v7006
    %v7008 = vrot.slane %v6780, 1
    %v7009 = vrot.slane %v6781, 1
    %v7010 = vsel %vm610, %v7008, %v7009
    %v7011 = vrot.slane %v6782, 1
    %v7012 = vsel %vm610, %v7009, %v7011
    %v7013 = vrot.slane %v6783, 1
    %v7014 = vrot.slane %v6784, 1
    %v7015 = vsel %vm610, %v7013, %v7014
    %v7016 = vrot.slane %v6785, 1
    %v7017 = vsel %vm610, %v7014, %v7016
    %v7018 = vrot.slane %v6786, 1
    %v7019 = vrot.slane %v6787, 1
    %v7020 = vsel %vm610, %v7018, %v7019
    %v7021 = vrot.slane %v6788, 1
    %v7022 = vsel %vm610, %v7019, %v7021
    %v7023 = vrot.slane %v6789, 1
    %v7024 = vrot.slane %v6790, 1
    %v7025 = vsel %vm610, %v7023, %v7024
    %v7026 = vrot.slane %v6791, 1
    %v7027 = vsel %vm610, %v7024, %v7026
    %v7028 = vrot.slane %v6798, 1
    %v7029 = vrot.slane %v6799, 1
    %v7030 = vsel %vm610, %v7028, %v7029
    %v7031 = vrot.slane %v6800, 1
    %v7032 = vsel %vm610, %v7029, %v7031
    %v7033 = vrot.slane %v6801, 1
    %v7034 = vrot.slane %v6802, 1
    %v7035 = vsel %vm610, %v7033, %v7034
    %v7036 = vrot.slane %v6803, 1
    %v7037 = vsel %vm610, %v7034, %v7036
    %v7038 = vrot.slane %v6804, 1
    %v7039 = vrot.slane %v6805, 1
    %v7040 = vsel %vm610, %v7038, %v7039
    %v7041 = vrot.slane %v6806, 1
    %v7042 = vsel %vm610, %v7039, %v7041
    %v7043 = vrot.slane %v6807, 1
    %v7044 = vrot.slane %v6808, 1
    %v7045 = vsel %vm610, %v7043, %v7044
    %v7046 = vrot.slane %v6809, 1
    %v7047 = vsel %vm610, %v7044, %v7046
    %v7048 = vrot.slane %v6810, 1
    %v7049 = vrot.slane %v6811, 1
    %v7050 = vsel %vm610, %v7048, %v7049
    %v7051 = vrot.slane %v6812, 1
    %v7052 = vsel %vm610, %v7049, %v7051
    %v7053 = vrot.slane %v6813, 1
    %v7054 = vrot.slane %v6814, 1
    %v7055 = vsel %vm610, %v7053, %v7054
    %v7056 = vrot.slane %v6815, 1
    %v7057 = vsel %vm610, %v7054, %v7056
    %v7058 = vrot.slane %v6816, 1
    %v7059 = vrot.slane %v6817, 1
    %v7060 = vsel %vm610, %v7058, %v7059
    %v7061 = vrot.slane %v6818, 1
    %v7062 = vsel %vm610, %v7059, %v7061
    %v7063 = vrot.slane %v6819, 1
    %v7064 = vrot.slane %v6820, 1
    %v7065 = vsel %vm610, %v7063, %v7064
    %v7066 = vrot.slane %v6821, 1
    %v7067 = vsel %vm610, %v7064, %v7066
    %v7068 = vrot.slane %v6822, 1
    %v7069 = vrot.slane %v6823, 1
    %v7070 = vsel %vm610, %v7068, %v7069
    %v7071 = vrot.slane %v6824, 1
    %v7072 = vsel %vm610, %v7069, %v7071
    %v7073 = vrot.slane %v6825, 1
    %v7074 = vrot.slane %v6826, 1
    %v7075 = vsel %vm610, %v7073, %v7074
    %v7076 = vrot.slane %v6827, 1
    %v7077 = vsel %vm610, %v7074, %v7076
    %v7078 = vrot.slane %v6828, 1
    %v7079 = vrot.slane %v6829, 1
    %v7080 = vsel %vm610, %v7078, %v7079
    %v7081 = vrot.slane %v6830, 1
    %v7082 = vsel %vm610, %v7079, %v7081
    %v7083 = vrot.slane %v6831, 1
    %v7084 = vrot.slane %v6832, 1
    %v7085 = vsel %vm610, %v7083, %v7084
    %v7086 = vrot.slane %v6833, 1
    %v7087 = vsel %vm610, %v7084, %v7086
    %v7088 = vrot.slane %v6834, 1
    %v7089 = vrot.slane %v6835, 1
    %v7090 = vsel %vm610, %v7088, %v7089
    %v7091 = vrot.slane %v6836, 1
    %v7092 = vsel %vm610, %v7089, %v7091
    %v7093 = vrot.slane %v6837, 1
    %v7094 = vrot.slane %v6838, 1
    %v7095 = vsel %vm610, %v7093, %v7094
    %v7096 = vrot.slane %v6839, 1
    %v7097 = vsel %vm610, %v7094, %v7096
    %v7098 = vrot.slane %v6840, 1
    %v7099 = vrot.slane %v6841, 1
    %v7100 = vsel %vm610, %v7098, %v7099
    %v7101 = vrot.slane %v6842, 1
    %v7102 = vsel %vm610, %v7099, %v7101
    %v7103 = vrot.slane %v6843, 1
    %v7104 = vrot.slane %v6844, 1
    %v7105 = vsel %vm610, %v7103, %v7104
    %v7106 = vrot.slane %v6845, 1
    %v7107 = vsel %vm610, %v7104, %v7106
    %v7108 = vrot.slane %v6744, 2
    %v7109 = vrot.slane %v6745, 2
    %v7110 = vsel %vm771, %v7108, %v7109
    %v7111 = vrot.slane %v6746, 2
    %v7112 = vsel %vm771, %v7109, %v7111
    %v7113 = vrot.slane %v6747, 2
    %v7114 = vrot.slane %v6748, 2
    %v7115 = vsel %vm771, %v7113, %v7114
    %v7116 = vrot.slane %v6749, 2
    %v7117 = vsel %vm771, %v7114, %v7116
    %v7118 = vrot.slane %v6750, 2
    %v7119 = vrot.slane %v6751, 2
    %v7120 = vsel %vm771, %v7118, %v7119
    %v7121 = vrot.slane %v6752, 2
    %v7122 = vsel %vm771, %v7119, %v7121
    %v7123 = vrot.slane %v6753, 2
    %v7124 = vrot.slane %v6754, 2
    %v7125 = vsel %vm771, %v7123, %v7124
    %v7126 = vrot.slane %v6755, 2
    %v7127 = vsel %vm771, %v7124, %v7126
    %v7128 = vrot.slane %v6756, 2
    %v7129 = vrot.slane %v6757, 2
    %v7130 = vsel %vm771, %v7128, %v7129
    %v7131 = vrot.slane %v6758, 2
    %v7132 = vsel %vm771, %v7129, %v7131
    %v7133 = vrot.slane %v6759, 2
    %v7134 = vrot.slane %v6760, 2
    %v7135 = vsel %vm771, %v7133, %v7134
    %v7136 = vrot.slane %v6761, 2
    %v7137 = vsel %vm771, %v7134, %v7136
    %v7138 = vrot.slane %v6762, 2
    %v7139 = vrot.slane %v6763, 2
    %v7140 = vsel %vm771, %v7138, %v7139
    %v7141 = vrot.slane %v6764, 2
    %v7142 = vsel %vm771, %v7139, %v7141
    %v7143 = vrot.slane %v6765, 2
    %v7144 = vrot.slane %v6766, 2
    %v7145 = vsel %vm771, %v7143, %v7144
    %v7146 = vrot.slane %v6767, 2
    %v7147 = vsel %vm771, %v7144, %v7146
    %v7148 = vrot.slane %v6768, 2
    %v7149 = vrot.slane %v6769, 2
    %v7150 = vsel %vm771, %v7148, %v7149
    %v7151 = vrot.slane %v6770, 2
    %v7152 = vsel %vm771, %v7149, %v7151
    %v7153 = vrot.slane %v6771, 2
    %v7154 = vrot.slane %v6772, 2
    %v7155 = vsel %vm771, %v7153, %v7154
    %v7156 = vrot.slane %v6773, 2
    %v7157 = vsel %vm771, %v7154, %v7156
    %v7158 = vrot.slane %v6774, 2
    %v7159 = vrot.slane %v6775, 2
    %v7160 = vsel %vm771, %v7158, %v7159
    %v7161 = vrot.slane %v6776, 2
    %v7162 = vsel %vm771, %v7159, %v7161
    %v7163 = vrot.slane %v6777, 2
    %v7164 = vrot.slane %v6778, 2
    %v7165 = vsel %vm771, %v7163, %v7164
    %v7166 = vrot.slane %v6779, 2
    %v7167 = vsel %vm771, %v7164, %v7166
    %v7168 = vrot.slane %v6780, 2
    %v7169 = vrot.slane %v6781, 2
    %v7170 = vsel %vm771, %v7168, %v7169
    %v7171 = vrot.slane %v6782, 2
    %v7172 = vsel %vm771, %v7169, %v7171
    %v7173 = vrot.slane %v6783, 2
    %v7174 = vrot.slane %v6784, 2
    %v7175 = vsel %vm771, %v7173, %v7174
    %v7176 = vrot.slane %v6785, 2
    %v7177 = vsel %vm771, %v7174, %v7176
    %v7178 = vrot.slane %v6786, 2
    %v7179 = vrot.slane %v6787, 2
    %v7180 = vsel %vm771, %v7178, %v7179
    %v7181 = vrot.slane %v6788, 2
    %v7182 = vsel %vm771, %v7179, %v7181
    %v7183 = vrot.slane %v6789, 2
    %v7184 = vrot.slane %v6790, 2
    %v7185 = vsel %vm771, %v7183, %v7184
    %v7186 = vrot.slane %v6791, 2
    %v7187 = vsel %vm771, %v7184, %v7186
    %v7188 = vrot.slane %v6798, 2
    %v7189 = vrot.slane %v6799, 2
    %v7190 = vsel %vm771, %v7188, %v7189
    %v7191 = vrot.slane %v6800, 2
    %v7192 = vsel %vm771, %v7189, %v7191
    %v7193 = vrot.slane %v6801, 2
    %v7194 = vrot.slane %v6802, 2
    %v7195 = vsel %vm771, %v7193, %v7194
    %v7196 = vrot.slane %v6803, 2
    %v7197 = vsel %vm771, %v7194, %v7196
    %v7198 = vrot.slane %v6804, 2
    %v7199 = vrot.slane %v6805, 2
    %v7200 = vsel %vm771, %v7198, %v7199
    %v7201 = vrot.slane %v6806, 2
    %v7202 = vsel %vm771, %v7199, %v7201
    %v7203 = vrot.slane %v6807, 2
    %v7204 = vrot.slane %v6808, 2
    %v7205 = vsel %vm771, %v7203, %v7204
    %v7206 = vrot.slane %v6809, 2
    %v7207 = vsel %vm771, %v7204, %v7206
    %v7208 = vrot.slane %v6810, 2
    %v7209 = vrot.slane %v6811, 2
    %v7210 = vsel %vm771, %v7208, %v7209
    %v7211 = vrot.slane %v6812, 2
    %v7212 = vsel %vm771, %v7209, %v7211
    %v7213 = vrot.slane %v6813, 2
    %v7214 = vrot.slane %v6814, 2
    %v7215 = vsel %vm771, %v7213, %v7214
    %v7216 = vrot.slane %v6815, 2
    %v7217 = vsel %vm771, %v7214, %v7216
    %v7218 = vrot.slane %v6816, 2
    %v7219 = vrot.slane %v6817, 2
    %v7220 = vsel %vm771, %v7218, %v7219
    %v7221 = vrot.slane %v6818, 2
    %v7222 = vsel %vm771, %v7219, %v7221
    %v7223 = vrot.slane %v6819, 2
    %v7224 = vrot.slane %v6820, 2
    %v7225 = vsel %vm771, %v7223, %v7224
    %v7226 = vrot.slane %v6821, 2
    %v7227 = vsel %vm771, %v7224, %v7226
    %v7228 = vrot.slane %v6822, 2
    %v7229 = vrot.slane %v6823, 2
    %v7230 = vsel %vm771, %v7228, %v7229
    %v7231 = vrot.slane %v6824, 2
    %v7232 = vsel %vm771, %v7229, %v7231
    %v7233 = vrot.slane %v6825, 2
    %v7234 = vrot.slane %v6826, 2
    %v7235 = vsel %vm771, %v7233, %v7234
    %v7236 = vrot.slane %v6827, 2
    %v7237 = vsel %vm771, %v7234, %v7236
    %v7238 = vrot.slane %v6828, 2
    %v7239 = vrot.slane %v6829, 2
    %v7240 = vsel %vm771, %v7238, %v7239
    %v7241 = vrot.slane %v6830, 2
    %v7242 = vsel %vm771, %v7239, %v7241
    %v7243 = vrot.slane %v6831, 2
    %v7244 = vrot.slane %v6832, 2
    %v7245 = vsel %vm771, %v7243, %v7244
    %v7246 = vrot.slane %v6833, 2
    %v7247 = vsel %vm771, %v7244, %v7246
    %v7248 = vrot.slane %v6834, 2
    %v7249 = vrot.slane %v6835, 2
    %v7250 = vsel %vm771, %v7248, %v7249
    %v7251 = vrot.slane %v6836, 2
    %v7252 = vsel %vm771, %v7249, %v7251
    %v7253 = vrot.slane %v6837, 2
    %v7254 = vrot.slane %v6838, 2
    %v7255 = vsel %vm771, %v7253, %v7254
    %v7256 = vrot.slane %v6839, 2
    %v7257 = vsel %vm771, %v7254, %v7256
    %v7258 = vrot.slane %v6840, 2
    %v7259 = vrot.slane %v6841, 2
    %v7260 = vsel %vm771, %v7258, %v7259
    %v7261 = vrot.slane %v6842, 2
    %v7262 = vsel %vm771, %v7259, %v7261
    %v7263 = vrot.slane %v6843, 2
    %v7264 = vrot.slane %v6844, 2
    %v7265 = vsel %vm771, %v7263, %v7264
    %v7266 = vrot.slane %v6845, 2
    %v7267 = vsel %vm771, %v7264, %v7266
    %v7274 = vrot.slane %v6792, 2
    %v7275 = vrot.slane %v6793, 2
    %v7276 = vsel %vm771, %v7274, %v7275
    %v7277 = vrot.slane %v6794, 2
    %v7278 = vsel %vm771, %v7275, %v7277
    %v7279 = vrot.slane %v6846, 2
    %v7280 = vrot.slane %v6847, 2
    %v7281 = vsel %vm771, %v7279, %v7280
    %v7282 = vrot.slane %v6848, 2
    %v7283 = vsel %vm771, %v7280, %v7282
    %v7290 = vrot.slane %v6792, 1
    %v7291 = vrot.slane %v6793, 1
    %v7292 = vsel %vm610, %v7290, %v7291
    %v7293 = vrot.slane %v6794, 1
    %v7294 = vsel %vm610, %v7291, %v7293
    %v7295 = vrot.slane %v6795, 1
    %v7296 = vrot.slane %v6796, 1
    %v7297 = vsel %vm610, %v7295, %v7296
    %v7298 = vrot.slane %v6797, 1
    %v7299 = vsel %vm610, %v7296, %v7298
    %v7300 = vrot.slane %v6846, 1
    %v7301 = vrot.slane %v6847, 1
    %v7302 = vsel %vm610, %v7300, %v7301
    %v7303 = vrot.slane %v6848, 1
    %v7304 = vsel %vm610, %v7301, %v7303
    %v7305 = vrot.slane %v6849, 1
    %v7306 = vrot.slane %v6850, 1
    %v7307 = vsel %vm610, %v7305, %v7306
    %v7308 = vrot.slane %v6851, 1
    %v7309 = vsel %vm610, %v7306, %v7308
    %v7310 = vrot.slane %v6795, 2
    %v7311 = vrot.slane %v6796, 2
    %v7312 = vsel %vm771, %v7310, %v7311
    %v7313 = vrot.slane %v6797, 2
    %v7314 = vsel %vm771, %v7311, %v7313
    %v7315 = vrot.slane %v6849, 2
    %v7316 = vrot.slane %v6850, 2
    %v7317 = vsel %vm771, %v7315, %v7316
    %v7318 = vrot.slane %v6851, 2
    %v7319 = vsel %vm771, %v7316, %v7318
    %7320 = vrot.lane.b32.xlu0 %v6950, 32
    %v7321 = vpop.permute.xlu0 %7320
    %7322 = vrot.lane.b32.xlu0 %v6952, 32
    %v7323 = vpop.permute.xlu0 %7322
    %7324 = vrot.lane.b32.xlu0 %v6955, 32
    %v7325 = vpop.permute.xlu0 %7324
    %7326 = vrot.lane.b32.xlu0 %v6957, 32
    %v7327 = vpop.permute.xlu0 %7326
    %7328 = vrot.lane.b32.xlu0 %v6960, 32
    %v7329 = vpop.permute.xlu0 %7328
    %7330 = vrot.lane.b32.xlu0 %v6962, 32
    %v7331 = vpop.permute.xlu0 %7330
    %7332 = vrot.lane.b32.xlu0 %v6965, 32
    %v7333 = vpop.permute.xlu0 %7332
    %7334 = vrot.lane.b32.xlu0 %v6967, 32
    %v7335 = vpop.permute.xlu0 %7334
    %7336 = vrot.lane.b32.xlu0 %v6970, 32
    %v7337 = vpop.permute.xlu0 %7336
    %7338 = vrot.lane.b32.xlu0 %v6972, 32
    %v7339 = vpop.permute.xlu0 %7338
    %7340 = vrot.lane.b32.xlu0 %v6975, 32
    %v7341 = vpop.permute.xlu0 %7340
    %7342 = vrot.lane.b32.xlu0 %v6977, 32
    %v7343 = vpop.permute.xlu0 %7342
    %7344 = vrot.lane.b32.xlu0 %v6980, 32
    %v7345 = vpop.permute.xlu0 %7344
    %7346 = vrot.lane.b32.xlu0 %v6982, 32
    %v7347 = vpop.permute.xlu0 %7346
    %7348 = vrot.lane.b32.xlu0 %v6985, 32
    %v7349 = vpop.permute.xlu0 %7348
    %7350 = vrot.lane.b32.xlu0 %v6987, 32
    %v7351 = vpop.permute.xlu0 %7350
    %7352 = vrot.lane.b32.xlu0 %v6990, 32
    %v7353 = vpop.permute.xlu0 %7352
    %7354 = vrot.lane.b32.xlu0 %v6992, 32
    %v7355 = vpop.permute.xlu0 %7354
    %7356 = vrot.lane.b32.xlu0 %v6995, 32
    %v7357 = vpop.permute.xlu0 %7356
    %7358 = vrot.lane.b32.xlu0 %v6997, 32
    %v7359 = vpop.permute.xlu0 %7358
    %7360 = vrot.lane.b32.xlu0 %v7000, 32
    %v7361 = vpop.permute.xlu0 %7360
    %7362 = vrot.lane.b32.xlu0 %v7002, 32
    %v7363 = vpop.permute.xlu0 %7362
    %7364 = vrot.lane.b32.xlu0 %v7005, 32
    %v7365 = vpop.permute.xlu0 %7364
    %7366 = vrot.lane.b32.xlu0 %v7007, 32
    %v7367 = vpop.permute.xlu0 %7366
    %7368 = vrot.lane.b32.xlu0 %v7010, 32
    %v7369 = vpop.permute.xlu0 %7368
    %7370 = vrot.lane.b32.xlu0 %v7012, 32
    %v7371 = vpop.permute.xlu0 %7370
    %7372 = vrot.lane.b32.xlu0 %v7015, 32
    %v7373 = vpop.permute.xlu0 %7372
    %7374 = vrot.lane.b32.xlu0 %v7017, 32
    %v7375 = vpop.permute.xlu0 %7374
    %7376 = vrot.lane.b32.xlu0 %v7020, 32
    %v7377 = vpop.permute.xlu0 %7376
    %7378 = vrot.lane.b32.xlu0 %v7022, 32
    %v7379 = vpop.permute.xlu0 %7378
    %7380 = vrot.lane.b32.xlu0 %v7025, 32
    %v7381 = vpop.permute.xlu0 %7380
    %7382 = vrot.lane.b32.xlu0 %v7027, 32
    %v7383 = vpop.permute.xlu0 %7382
    %7384 = vrot.lane.b32.xlu0 %v7030, 32
    %v7385 = vpop.permute.xlu0 %7384
    %7386 = vrot.lane.b32.xlu0 %v7032, 32
    %v7387 = vpop.permute.xlu0 %7386
    %7388 = vrot.lane.b32.xlu0 %v7035, 32
    %v7389 = vpop.permute.xlu0 %7388
    %7390 = vrot.lane.b32.xlu0 %v7037, 32
    %v7391 = vpop.permute.xlu0 %7390
    %7392 = vrot.lane.b32.xlu0 %v7040, 32
    %v7393 = vpop.permute.xlu0 %7392
    %7394 = vrot.lane.b32.xlu0 %v7042, 32
    %v7395 = vpop.permute.xlu0 %7394
    %7396 = vrot.lane.b32.xlu0 %v7045, 32
    %v7397 = vpop.permute.xlu0 %7396
    %7398 = vrot.lane.b32.xlu0 %v7047, 32
    %v7399 = vpop.permute.xlu0 %7398
    %7400 = vrot.lane.b32.xlu0 %v7050, 32
    %v7401 = vpop.permute.xlu0 %7400
    %7402 = vrot.lane.b32.xlu0 %v7052, 32
    %v7403 = vpop.permute.xlu0 %7402
    %7404 = vrot.lane.b32.xlu0 %v7055, 32
    %v7405 = vpop.permute.xlu0 %7404
    %7406 = vrot.lane.b32.xlu0 %v7057, 32
    %v7407 = vpop.permute.xlu0 %7406
    %7408 = vrot.lane.b32.xlu0 %v7060, 32
    %v7409 = vpop.permute.xlu0 %7408
    %7410 = vrot.lane.b32.xlu0 %v7062, 32
    %v7411 = vpop.permute.xlu0 %7410
    %7412 = vrot.lane.b32.xlu0 %v7065, 32
    %v7413 = vpop.permute.xlu0 %7412
    %7414 = vrot.lane.b32.xlu0 %v7067, 32
    %v7415 = vpop.permute.xlu0 %7414
    %7416 = vrot.lane.b32.xlu0 %v7070, 32
    %v7417 = vpop.permute.xlu0 %7416
    %7418 = vrot.lane.b32.xlu0 %v7072, 32
    %v7419 = vpop.permute.xlu0 %7418
    %7420 = vrot.lane.b32.xlu0 %v7075, 32
    %v7421 = vpop.permute.xlu0 %7420
    %7422 = vrot.lane.b32.xlu0 %v7077, 32
    %v7423 = vpop.permute.xlu0 %7422
    %7424 = vrot.lane.b32.xlu0 %v7080, 32
    %v7425 = vpop.permute.xlu0 %7424
    %7426 = vrot.lane.b32.xlu0 %v7082, 32
    %v7427 = vpop.permute.xlu0 %7426
    %7428 = vrot.lane.b32.xlu0 %v7085, 32
    %v7429 = vpop.permute.xlu0 %7428
    %7430 = vrot.lane.b32.xlu0 %v7087, 32
    %v7431 = vpop.permute.xlu0 %7430
    %7432 = vrot.lane.b32.xlu0 %v7090, 32
    %v7433 = vpop.permute.xlu0 %7432
    %7434 = vrot.lane.b32.xlu0 %v7092, 32
    %v7435 = vpop.permute.xlu0 %7434
    %7436 = vrot.lane.b32.xlu0 %v7095, 32
    %v7437 = vpop.permute.xlu0 %7436
    %7438 = vrot.lane.b32.xlu0 %v7097, 32
    %v7439 = vpop.permute.xlu0 %7438
    %7440 = vrot.lane.b32.xlu0 %v7100, 32
    %v7441 = vpop.permute.xlu0 %7440
    %7442 = vrot.lane.b32.xlu0 %v7102, 32
    %v7443 = vpop.permute.xlu0 %7442
    %7444 = vrot.lane.b32.xlu0 %v7105, 32
    %v7445 = vpop.permute.xlu0 %7444
    %7446 = vrot.lane.b32.xlu0 %v7107, 32
    %v7447 = vpop.permute.xlu0 %7446
    %7512 = vrot.lane.b32.xlu0 %v7110, 64
    %v7513 = vpop.permute.xlu0 %7512
    %7514 = vrot.lane.b32.xlu0 %v7112, 64
    %v7515 = vpop.permute.xlu0 %7514
    %7516 = vrot.lane.b32.xlu0 %v7115, 64
    %v7517 = vpop.permute.xlu0 %7516
    %7518 = vrot.lane.b32.xlu0 %v7117, 64
    %v7519 = vpop.permute.xlu0 %7518
    %7520 = vrot.lane.b32.xlu0 %v7120, 64
    %v7521 = vpop.permute.xlu0 %7520
    %7522 = vrot.lane.b32.xlu0 %v7122, 64
    %v7523 = vpop.permute.xlu0 %7522
    %7524 = vrot.lane.b32.xlu0 %v7125, 64
    %v7525 = vpop.permute.xlu0 %7524
    %7526 = vrot.lane.b32.xlu0 %v7127, 64
    %v7527 = vpop.permute.xlu0 %7526
    %7528 = vrot.lane.b32.xlu0 %v7130, 64
    %v7529 = vpop.permute.xlu0 %7528
    %7530 = vrot.lane.b32.xlu0 %v7132, 64
    %v7531 = vpop.permute.xlu0 %7530
    %7532 = vrot.lane.b32.xlu0 %v7135, 64
    %v7533 = vpop.permute.xlu0 %7532
    %7534 = vrot.lane.b32.xlu0 %v7137, 64
    %v7535 = vpop.permute.xlu0 %7534
    %7536 = vrot.lane.b32.xlu0 %v7140, 64
    %v7537 = vpop.permute.xlu0 %7536
    %7538 = vrot.lane.b32.xlu0 %v7142, 64
    %v7539 = vpop.permute.xlu0 %7538
    %7540 = vrot.lane.b32.xlu0 %v7145, 64
    %v7541 = vpop.permute.xlu0 %7540
    %7542 = vrot.lane.b32.xlu0 %v7147, 64
    %v7543 = vpop.permute.xlu0 %7542
    %7544 = vrot.lane.b32.xlu0 %v7150, 64
    %v7545 = vpop.permute.xlu0 %7544
    %7546 = vrot.lane.b32.xlu0 %v7152, 64
    %v7547 = vpop.permute.xlu0 %7546
    %7548 = vrot.lane.b32.xlu0 %v7155, 64
    %v7549 = vpop.permute.xlu0 %7548
    %7550 = vrot.lane.b32.xlu0 %v7157, 64
    %v7551 = vpop.permute.xlu0 %7550
    %7552 = vrot.lane.b32.xlu0 %v7160, 64
    %v7553 = vpop.permute.xlu0 %7552
    %7554 = vrot.lane.b32.xlu0 %v7162, 64
    %v7555 = vpop.permute.xlu0 %7554
    %7556 = vrot.lane.b32.xlu0 %v7165, 64
    %v7557 = vpop.permute.xlu0 %7556
    %7558 = vrot.lane.b32.xlu0 %v7167, 64
    %v7559 = vpop.permute.xlu0 %7558
    %7560 = vrot.lane.b32.xlu0 %v7170, 64
    %v7561 = vpop.permute.xlu0 %7560
    %7562 = vrot.lane.b32.xlu0 %v7172, 64
    %v7563 = vpop.permute.xlu0 %7562
    %7564 = vrot.lane.b32.xlu0 %v7175, 64
    %v7565 = vpop.permute.xlu0 %7564
    %7566 = vrot.lane.b32.xlu0 %v7177, 64
    %v7567 = vpop.permute.xlu0 %7566
    %7568 = vrot.lane.b32.xlu0 %v7180, 64
    %v7569 = vpop.permute.xlu0 %7568
    %7570 = vrot.lane.b32.xlu0 %v7182, 64
    %v7571 = vpop.permute.xlu0 %7570
    %7572 = vrot.lane.b32.xlu0 %v7185, 64
    %v7573 = vpop.permute.xlu0 %7572
    %7574 = vrot.lane.b32.xlu0 %v7187, 64
    %v7575 = vpop.permute.xlu0 %7574
    %7576 = vrot.lane.b32.xlu0 %v7190, 64
    %v7577 = vpop.permute.xlu0 %7576
    %7578 = vrot.lane.b32.xlu0 %v7192, 64
    %v7579 = vpop.permute.xlu0 %7578
    %7580 = vrot.lane.b32.xlu0 %v7195, 64
    %v7581 = vpop.permute.xlu0 %7580
    %7582 = vrot.lane.b32.xlu0 %v7197, 64
    %v7583 = vpop.permute.xlu0 %7582
    %7584 = vrot.lane.b32.xlu0 %v7200, 64
    %v7585 = vpop.permute.xlu0 %7584
    %7586 = vrot.lane.b32.xlu0 %v7202, 64
    %v7587 = vpop.permute.xlu0 %7586
    %7588 = vrot.lane.b32.xlu0 %v7205, 64
    %v7589 = vpop.permute.xlu0 %7588
    %7590 = vrot.lane.b32.xlu0 %v7207, 64
    %v7591 = vpop.permute.xlu0 %7590
    %7592 = vrot.lane.b32.xlu0 %v7210, 64
    %v7593 = vpop.permute.xlu0 %7592
    %7594 = vrot.lane.b32.xlu0 %v7212, 64
    %v7595 = vpop.permute.xlu0 %7594
    %7596 = vrot.lane.b32.xlu0 %v7215, 64
    %v7597 = vpop.permute.xlu0 %7596
    %7598 = vrot.lane.b32.xlu0 %v7217, 64
    %v7599 = vpop.permute.xlu0 %7598
    %7600 = vrot.lane.b32.xlu0 %v7220, 64
    %v7601 = vpop.permute.xlu0 %7600
    %7602 = vrot.lane.b32.xlu0 %v7222, 64
    %v7603 = vpop.permute.xlu0 %7602
    %7604 = vrot.lane.b32.xlu0 %v7225, 64
    %v7605 = vpop.permute.xlu0 %7604
    %7606 = vrot.lane.b32.xlu0 %v7227, 64
    %v7607 = vpop.permute.xlu0 %7606
    %7608 = vrot.lane.b32.xlu0 %v7230, 64
    %v7609 = vpop.permute.xlu0 %7608
    %7610 = vrot.lane.b32.xlu0 %v7232, 64
    %v7611 = vpop.permute.xlu0 %7610
    %7612 = vrot.lane.b32.xlu0 %v7235, 64
    %v7613 = vpop.permute.xlu0 %7612
    %7614 = vrot.lane.b32.xlu0 %v7237, 64
    %v7615 = vpop.permute.xlu0 %7614
    %7616 = vrot.lane.b32.xlu0 %v7240, 64
    %v7617 = vpop.permute.xlu0 %7616
    %7618 = vrot.lane.b32.xlu0 %v7242, 64
    %v7619 = vpop.permute.xlu0 %7618
    %7620 = vrot.lane.b32.xlu0 %v7245, 64
    %v7621 = vpop.permute.xlu0 %7620
    %7622 = vrot.lane.b32.xlu0 %v7247, 64
    %v7623 = vpop.permute.xlu0 %7622
    %7624 = vrot.lane.b32.xlu0 %v7250, 64
    %v7625 = vpop.permute.xlu0 %7624
    %7626 = vrot.lane.b32.xlu0 %v7252, 64
    %v7627 = vpop.permute.xlu0 %7626
    %7628 = vrot.lane.b32.xlu0 %v7255, 64
    %v7629 = vpop.permute.xlu0 %7628
    %7630 = vrot.lane.b32.xlu0 %v7257, 64
    %v7631 = vpop.permute.xlu0 %7630
    %7632 = vrot.lane.b32.xlu0 %v7260, 64
    %v7633 = vpop.permute.xlu0 %7632
    %7634 = vrot.lane.b32.xlu0 %v7262, 64
    %v7635 = vpop.permute.xlu0 %7634
    %7636 = vrot.lane.b32.xlu0 %v7265, 64
    %v7637 = vpop.permute.xlu0 %7636
    %7638 = vrot.lane.b32.xlu0 %v7267, 64
    %v7639 = vpop.permute.xlu0 %7638
    %7704 = vrot.lane.b32.xlu0 %v6747, 96
    %v7705 = vpop.permute.xlu0 %7704
    %7706 = vrot.lane.b32.xlu0 %v6748, 96
    %v7707 = vpop.permute.xlu0 %7706
    %7708 = vrot.lane.b32.xlu0 %v6750, 96
    %v7709 = vpop.permute.xlu0 %7708
    %7710 = vrot.lane.b32.xlu0 %v6751, 96
    %v7711 = vpop.permute.xlu0 %7710
    %7712 = vrot.lane.b32.xlu0 %v6753, 96
    %v7713 = vpop.permute.xlu0 %7712
    %7714 = vrot.lane.b32.xlu0 %v6754, 96
    %v7715 = vpop.permute.xlu0 %7714
    %7716 = vrot.lane.b32.xlu0 %v6756, 96
    %v7717 = vpop.permute.xlu0 %7716
    %7718 = vrot.lane.b32.xlu0 %v6757, 96
    %v7719 = vpop.permute.xlu0 %7718
    %7720 = vrot.lane.b32.xlu0 %v6759, 96
    %v7721 = vpop.permute.xlu0 %7720
    %7722 = vrot.lane.b32.xlu0 %v6760, 96
    %v7723 = vpop.permute.xlu0 %7722
    %7724 = vrot.lane.b32.xlu0 %v6762, 96
    %v7725 = vpop.permute.xlu0 %7724
    %7726 = vrot.lane.b32.xlu0 %v6763, 96
    %v7727 = vpop.permute.xlu0 %7726
    %7728 = vrot.lane.b32.xlu0 %v6765, 96
    %v7729 = vpop.permute.xlu0 %7728
    %7730 = vrot.lane.b32.xlu0 %v6766, 96
    %v7731 = vpop.permute.xlu0 %7730
    %7732 = vrot.lane.b32.xlu0 %v6768, 96
    %v7733 = vpop.permute.xlu0 %7732
    %7734 = vrot.lane.b32.xlu0 %v6769, 96
    %v7735 = vpop.permute.xlu0 %7734
    %7736 = vrot.lane.b32.xlu0 %v6771, 96
    %v7737 = vpop.permute.xlu0 %7736
    %7738 = vrot.lane.b32.xlu0 %v6772, 96
    %v7739 = vpop.permute.xlu0 %7738
    %7740 = vrot.lane.b32.xlu0 %v6774, 96
    %v7741 = vpop.permute.xlu0 %7740
    %7742 = vrot.lane.b32.xlu0 %v6775, 96
    %v7743 = vpop.permute.xlu0 %7742
    %7744 = vrot.lane.b32.xlu0 %v6777, 96
    %v7745 = vpop.permute.xlu0 %7744
    %7746 = vrot.lane.b32.xlu0 %v6778, 96
    %v7747 = vpop.permute.xlu0 %7746
    %7748 = vrot.lane.b32.xlu0 %v6780, 96
    %v7749 = vpop.permute.xlu0 %7748
    %7750 = vrot.lane.b32.xlu0 %v6781, 96
    %v7751 = vpop.permute.xlu0 %7750
    %7752 = vrot.lane.b32.xlu0 %v6783, 96
    %v7753 = vpop.permute.xlu0 %7752
    %7754 = vrot.lane.b32.xlu0 %v6784, 96
    %v7755 = vpop.permute.xlu0 %7754
    %7756 = vrot.lane.b32.xlu0 %v6786, 96
    %v7757 = vpop.permute.xlu0 %7756
    %7758 = vrot.lane.b32.xlu0 %v6787, 96
    %v7759 = vpop.permute.xlu0 %7758
    %7760 = vrot.lane.b32.xlu0 %v6789, 96
    %v7761 = vpop.permute.xlu0 %7760
    %7762 = vrot.lane.b32.xlu0 %v6790, 96
    %v7763 = vpop.permute.xlu0 %7762
    %7764 = vrot.lane.b32.xlu0 %v6792, 96
    %v7765 = vpop.permute.xlu0 %7764
    %7766 = vrot.lane.b32.xlu0 %v6793, 96
    %v7767 = vpop.permute.xlu0 %7766
    %7768 = vrot.lane.b32.xlu0 %v6801, 96
    %v7769 = vpop.permute.xlu0 %7768
    %7770 = vrot.lane.b32.xlu0 %v6802, 96
    %v7771 = vpop.permute.xlu0 %7770
    %7772 = vrot.lane.b32.xlu0 %v6804, 96
    %v7773 = vpop.permute.xlu0 %7772
    %7774 = vrot.lane.b32.xlu0 %v6805, 96
    %v7775 = vpop.permute.xlu0 %7774
    %7776 = vrot.lane.b32.xlu0 %v6807, 96
    %v7777 = vpop.permute.xlu0 %7776
    %7778 = vrot.lane.b32.xlu0 %v6808, 96
    %v7779 = vpop.permute.xlu0 %7778
    %7780 = vrot.lane.b32.xlu0 %v6810, 96
    %v7781 = vpop.permute.xlu0 %7780
    %7782 = vrot.lane.b32.xlu0 %v6811, 96
    %v7783 = vpop.permute.xlu0 %7782
    %7784 = vrot.lane.b32.xlu0 %v6813, 96
    %v7785 = vpop.permute.xlu0 %7784
    %7786 = vrot.lane.b32.xlu0 %v6814, 96
    %v7787 = vpop.permute.xlu0 %7786
    %7788 = vrot.lane.b32.xlu0 %v6816, 96
    %v7789 = vpop.permute.xlu0 %7788
    %7790 = vrot.lane.b32.xlu0 %v6817, 96
    %v7791 = vpop.permute.xlu0 %7790
    %7792 = vrot.lane.b32.xlu0 %v6819, 96
    %v7793 = vpop.permute.xlu0 %7792
    %7794 = vrot.lane.b32.xlu0 %v6820, 96
    %v7795 = vpop.permute.xlu0 %7794
    %7796 = vrot.lane.b32.xlu0 %v6822, 96
    %v7797 = vpop.permute.xlu0 %7796
    %7798 = vrot.lane.b32.xlu0 %v6823, 96
    %v7799 = vpop.permute.xlu0 %7798
    %7800 = vrot.lane.b32.xlu0 %v6825, 96
    %v7801 = vpop.permute.xlu0 %7800
    %7802 = vrot.lane.b32.xlu0 %v6826, 96
    %v7803 = vpop.permute.xlu0 %7802
    %7804 = vrot.lane.b32.xlu0 %v6828, 96
    %v7805 = vpop.permute.xlu0 %7804
    %7806 = vrot.lane.b32.xlu0 %v6829, 96
    %v7807 = vpop.permute.xlu0 %7806
    %7808 = vrot.lane.b32.xlu0 %v6831, 96
    %v7809 = vpop.permute.xlu0 %7808
    %7810 = vrot.lane.b32.xlu0 %v6832, 96
    %v7811 = vpop.permute.xlu0 %7810
    %7812 = vrot.lane.b32.xlu0 %v6834, 96
    %v7813 = vpop.permute.xlu0 %7812
    %7814 = vrot.lane.b32.xlu0 %v6835, 96
    %v7815 = vpop.permute.xlu0 %7814
    %7816 = vrot.lane.b32.xlu0 %v6837, 96
    %v7817 = vpop.permute.xlu0 %7816
    %7818 = vrot.lane.b32.xlu0 %v6838, 96
    %v7819 = vpop.permute.xlu0 %7818
    %7820 = vrot.lane.b32.xlu0 %v6840, 96
    %v7821 = vpop.permute.xlu0 %7820
    %7822 = vrot.lane.b32.xlu0 %v6841, 96
    %v7823 = vpop.permute.xlu0 %7822
    %7824 = vrot.lane.b32.xlu0 %v6843, 96
    %v7825 = vpop.permute.xlu0 %7824
    %7826 = vrot.lane.b32.xlu0 %v6844, 96
    %v7827 = vpop.permute.xlu0 %7826
    %7828 = vrot.lane.b32.xlu0 %v6846, 96
    %v7829 = vpop.permute.xlu0 %7828
    %7830 = vrot.lane.b32.xlu0 %v6847, 96
    %v7831 = vpop.permute.xlu0 %7830
    %7896 = vrot.lane.b32.xlu0 %v7115, 32
    %v7897 = vpop.permute.xlu0 %7896
    %7898 = vrot.lane.b32.xlu0 %v7117, 32
    %v7899 = vpop.permute.xlu0 %7898
    %7900 = vrot.lane.b32.xlu0 %v7120, 32
    %v7901 = vpop.permute.xlu0 %7900
    %7902 = vrot.lane.b32.xlu0 %v7122, 32
    %v7903 = vpop.permute.xlu0 %7902
    %7904 = vrot.lane.b32.xlu0 %v7125, 32
    %v7905 = vpop.permute.xlu0 %7904
    %7906 = vrot.lane.b32.xlu0 %v7127, 32
    %v7907 = vpop.permute.xlu0 %7906
    %7908 = vrot.lane.b32.xlu0 %v7130, 32
    %v7909 = vpop.permute.xlu0 %7908
    %7910 = vrot.lane.b32.xlu0 %v7132, 32
    %v7911 = vpop.permute.xlu0 %7910
    %7912 = vrot.lane.b32.xlu0 %v7135, 32
    %v7913 = vpop.permute.xlu0 %7912
    %7914 = vrot.lane.b32.xlu0 %v7137, 32
    %v7915 = vpop.permute.xlu0 %7914
    %7916 = vrot.lane.b32.xlu0 %v7140, 32
    %v7917 = vpop.permute.xlu0 %7916
    %7918 = vrot.lane.b32.xlu0 %v7142, 32
    %v7919 = vpop.permute.xlu0 %7918
    %7920 = vrot.lane.b32.xlu0 %v7145, 32
    %v7921 = vpop.permute.xlu0 %7920
    %7922 = vrot.lane.b32.xlu0 %v7147, 32
    %v7923 = vpop.permute.xlu0 %7922
    %7924 = vrot.lane.b32.xlu0 %v7150, 32
    %v7925 = vpop.permute.xlu0 %7924
    %7926 = vrot.lane.b32.xlu0 %v7152, 32
    %v7927 = vpop.permute.xlu0 %7926
    %7928 = vrot.lane.b32.xlu0 %v7155, 32
    %v7929 = vpop.permute.xlu0 %7928
    %7930 = vrot.lane.b32.xlu0 %v7157, 32
    %v7931 = vpop.permute.xlu0 %7930
    %7932 = vrot.lane.b32.xlu0 %v7160, 32
    %v7933 = vpop.permute.xlu0 %7932
    %7934 = vrot.lane.b32.xlu0 %v7162, 32
    %v7935 = vpop.permute.xlu0 %7934
    %7936 = vrot.lane.b32.xlu0 %v7165, 32
    %v7937 = vpop.permute.xlu0 %7936
    %7938 = vrot.lane.b32.xlu0 %v7167, 32
    %v7939 = vpop.permute.xlu0 %7938
    %7940 = vrot.lane.b32.xlu0 %v7170, 32
    %v7941 = vpop.permute.xlu0 %7940
    %7942 = vrot.lane.b32.xlu0 %v7172, 32
    %v7943 = vpop.permute.xlu0 %7942
    %7944 = vrot.lane.b32.xlu0 %v7175, 32
    %v7945 = vpop.permute.xlu0 %7944
    %7946 = vrot.lane.b32.xlu0 %v7177, 32
    %v7947 = vpop.permute.xlu0 %7946
    %7948 = vrot.lane.b32.xlu0 %v7180, 32
    %v7949 = vpop.permute.xlu0 %7948
    %7950 = vrot.lane.b32.xlu0 %v7182, 32
    %v7951 = vpop.permute.xlu0 %7950
    %7952 = vrot.lane.b32.xlu0 %v7185, 32
    %v7953 = vpop.permute.xlu0 %7952
    %7954 = vrot.lane.b32.xlu0 %v7187, 32
    %v7955 = vpop.permute.xlu0 %7954
    %7956 = vrot.lane.b32.xlu0 %v7276, 32
    %v7957 = vpop.permute.xlu0 %7956
    %7958 = vrot.lane.b32.xlu0 %v7278, 32
    %v7959 = vpop.permute.xlu0 %7958
    %7960 = vrot.lane.b32.xlu0 %v7195, 32
    %v7961 = vpop.permute.xlu0 %7960
    %7962 = vrot.lane.b32.xlu0 %v7197, 32
    %v7963 = vpop.permute.xlu0 %7962
    %7964 = vrot.lane.b32.xlu0 %v7200, 32
    %v7965 = vpop.permute.xlu0 %7964
    %7966 = vrot.lane.b32.xlu0 %v7202, 32
    %v7967 = vpop.permute.xlu0 %7966
    %7968 = vrot.lane.b32.xlu0 %v7205, 32
    %v7969 = vpop.permute.xlu0 %7968
    %7970 = vrot.lane.b32.xlu0 %v7207, 32
    %v7971 = vpop.permute.xlu0 %7970
    %7972 = vrot.lane.b32.xlu0 %v7210, 32
    %v7973 = vpop.permute.xlu0 %7972
    %7974 = vrot.lane.b32.xlu0 %v7212, 32
    %v7975 = vpop.permute.xlu0 %7974
    %7976 = vrot.lane.b32.xlu0 %v7215, 32
    %v7977 = vpop.permute.xlu0 %7976
    %7978 = vrot.lane.b32.xlu0 %v7217, 32
    %v7979 = vpop.permute.xlu0 %7978
    %7980 = vrot.lane.b32.xlu0 %v7220, 32
    %v7981 = vpop.permute.xlu0 %7980
    %7982 = vrot.lane.b32.xlu0 %v7222, 32
    %v7983 = vpop.permute.xlu0 %7982
    %7984 = vrot.lane.b32.xlu0 %v7225, 32
    %v7985 = vpop.permute.xlu0 %7984
    %7986 = vrot.lane.b32.xlu0 %v7227, 32
    %v7987 = vpop.permute.xlu0 %7986
    %7988 = vrot.lane.b32.xlu0 %v7230, 32
    %v7989 = vpop.permute.xlu0 %7988
    %7990 = vrot.lane.b32.xlu0 %v7232, 32
    %v7991 = vpop.permute.xlu0 %7990
    %7992 = vrot.lane.b32.xlu0 %v7235, 32
    %v7993 = vpop.permute.xlu0 %7992
    %7994 = vrot.lane.b32.xlu0 %v7237, 32
    %v7995 = vpop.permute.xlu0 %7994
    %7996 = vrot.lane.b32.xlu0 %v7240, 32
    %v7997 = vpop.permute.xlu0 %7996
    %7998 = vrot.lane.b32.xlu0 %v7242, 32
    %v7999 = vpop.permute.xlu0 %7998
    %8000 = vrot.lane.b32.xlu0 %v7245, 32
    %v8001 = vpop.permute.xlu0 %8000
    %8002 = vrot.lane.b32.xlu0 %v7247, 32
    %v8003 = vpop.permute.xlu0 %8002
    %8004 = vrot.lane.b32.xlu0 %v7250, 32
    %v8005 = vpop.permute.xlu0 %8004
    %8006 = vrot.lane.b32.xlu0 %v7252, 32
    %v8007 = vpop.permute.xlu0 %8006
    %8008 = vrot.lane.b32.xlu0 %v7255, 32
    %v8009 = vpop.permute.xlu0 %8008
    %8010 = vrot.lane.b32.xlu0 %v7257, 32
    %v8011 = vpop.permute.xlu0 %8010
    %8012 = vrot.lane.b32.xlu0 %v7260, 32
    %v8013 = vpop.permute.xlu0 %8012
    %8014 = vrot.lane.b32.xlu0 %v7262, 32
    %v8015 = vpop.permute.xlu0 %8014
    %8016 = vrot.lane.b32.xlu0 %v7265, 32
    %v8017 = vpop.permute.xlu0 %8016
    %8018 = vrot.lane.b32.xlu0 %v7267, 32
    %v8019 = vpop.permute.xlu0 %8018
    %8020 = vrot.lane.b32.xlu0 %v7281, 32
    %v8021 = vpop.permute.xlu0 %8020
    %8022 = vrot.lane.b32.xlu0 %v7283, 32
    %v8023 = vpop.permute.xlu0 %8022
    %8088 = vrot.lane.b32.xlu0 %v6750, 64
    %v8089 = vpop.permute.xlu0 %8088
    %8090 = vrot.lane.b32.xlu0 %v6751, 64
    %v8091 = vpop.permute.xlu0 %8090
    %8092 = vrot.lane.b32.xlu0 %v6753, 64
    %v8093 = vpop.permute.xlu0 %8092
    %8094 = vrot.lane.b32.xlu0 %v6754, 64
    %v8095 = vpop.permute.xlu0 %8094
    %8096 = vrot.lane.b32.xlu0 %v6756, 64
    %v8097 = vpop.permute.xlu0 %8096
    %8098 = vrot.lane.b32.xlu0 %v6757, 64
    %v8099 = vpop.permute.xlu0 %8098
    %8100 = vrot.lane.b32.xlu0 %v6759, 64
    %v8101 = vpop.permute.xlu0 %8100
    %8102 = vrot.lane.b32.xlu0 %v6760, 64
    %v8103 = vpop.permute.xlu0 %8102
    %8104 = vrot.lane.b32.xlu0 %v6762, 64
    %v8105 = vpop.permute.xlu0 %8104
    %8106 = vrot.lane.b32.xlu0 %v6763, 64
    %v8107 = vpop.permute.xlu0 %8106
    %8108 = vrot.lane.b32.xlu0 %v6765, 64
    %v8109 = vpop.permute.xlu0 %8108
    %8110 = vrot.lane.b32.xlu0 %v6766, 64
    %v8111 = vpop.permute.xlu0 %8110
    %8112 = vrot.lane.b32.xlu0 %v6768, 64
    %v8113 = vpop.permute.xlu0 %8112
    %8114 = vrot.lane.b32.xlu0 %v6769, 64
    %v8115 = vpop.permute.xlu0 %8114
    %8116 = vrot.lane.b32.xlu0 %v6771, 64
    %v8117 = vpop.permute.xlu0 %8116
    %8118 = vrot.lane.b32.xlu0 %v6772, 64
    %v8119 = vpop.permute.xlu0 %8118
    %8120 = vrot.lane.b32.xlu0 %v6774, 64
    %v8121 = vpop.permute.xlu0 %8120
    %8122 = vrot.lane.b32.xlu0 %v6775, 64
    %v8123 = vpop.permute.xlu0 %8122
    %8124 = vrot.lane.b32.xlu0 %v6777, 64
    %v8125 = vpop.permute.xlu0 %8124
    %8126 = vrot.lane.b32.xlu0 %v6778, 64
    %v8127 = vpop.permute.xlu0 %8126
    %8128 = vrot.lane.b32.xlu0 %v6780, 64
    %v8129 = vpop.permute.xlu0 %8128
    %8130 = vrot.lane.b32.xlu0 %v6781, 64
    %v8131 = vpop.permute.xlu0 %8130
    %8132 = vrot.lane.b32.xlu0 %v6783, 64
    %v8133 = vpop.permute.xlu0 %8132
    %8134 = vrot.lane.b32.xlu0 %v6784, 64
    %v8135 = vpop.permute.xlu0 %8134
    %8136 = vrot.lane.b32.xlu0 %v6786, 64
    %v8137 = vpop.permute.xlu0 %8136
    %8138 = vrot.lane.b32.xlu0 %v6787, 64
    %v8139 = vpop.permute.xlu0 %8138
    %8140 = vrot.lane.b32.xlu0 %v6789, 64
    %v8141 = vpop.permute.xlu0 %8140
    %8142 = vrot.lane.b32.xlu0 %v6790, 64
    %v8143 = vpop.permute.xlu0 %8142
    %8144 = vrot.lane.b32.xlu0 %v6792, 64
    %v8145 = vpop.permute.xlu0 %8144
    %8146 = vrot.lane.b32.xlu0 %v6793, 64
    %v8147 = vpop.permute.xlu0 %8146
    %8148 = vrot.lane.b32.xlu0 %v6795, 64
    %v8149 = vpop.permute.xlu0 %8148
    %8150 = vrot.lane.b32.xlu0 %v6796, 64
    %v8151 = vpop.permute.xlu0 %8150
    %8152 = vrot.lane.b32.xlu0 %v6804, 64
    %v8153 = vpop.permute.xlu0 %8152
    %8154 = vrot.lane.b32.xlu0 %v6805, 64
    %v8155 = vpop.permute.xlu0 %8154
    %8156 = vrot.lane.b32.xlu0 %v6807, 64
    %v8157 = vpop.permute.xlu0 %8156
    %8158 = vrot.lane.b32.xlu0 %v6808, 64
    %v8159 = vpop.permute.xlu0 %8158
    %8160 = vrot.lane.b32.xlu0 %v6810, 64
    %v8161 = vpop.permute.xlu0 %8160
    %8162 = vrot.lane.b32.xlu0 %v6811, 64
    %v8163 = vpop.permute.xlu0 %8162
    %8164 = vrot.lane.b32.xlu0 %v6813, 64
    %v8165 = vpop.permute.xlu0 %8164
    %8166 = vrot.lane.b32.xlu0 %v6814, 64
    %v8167 = vpop.permute.xlu0 %8166
    %8168 = vrot.lane.b32.xlu0 %v6816, 64
    %v8169 = vpop.permute.xlu0 %8168
    %8170 = vrot.lane.b32.xlu0 %v6817, 64
    %v8171 = vpop.permute.xlu0 %8170
    %8172 = vrot.lane.b32.xlu0 %v6819, 64
    %v8173 = vpop.permute.xlu0 %8172
    %8174 = vrot.lane.b32.xlu0 %v6820, 64
    %v8175 = vpop.permute.xlu0 %8174
    %8176 = vrot.lane.b32.xlu0 %v6822, 64
    %v8177 = vpop.permute.xlu0 %8176
    %8178 = vrot.lane.b32.xlu0 %v6823, 64
    %v8179 = vpop.permute.xlu0 %8178
    %8180 = vrot.lane.b32.xlu0 %v6825, 64
    %v8181 = vpop.permute.xlu0 %8180
    %8182 = vrot.lane.b32.xlu0 %v6826, 64
    %v8183 = vpop.permute.xlu0 %8182
    %8184 = vrot.lane.b32.xlu0 %v6828, 64
    %v8185 = vpop.permute.xlu0 %8184
    %8186 = vrot.lane.b32.xlu0 %v6829, 64
    %v8187 = vpop.permute.xlu0 %8186
    %8188 = vrot.lane.b32.xlu0 %v6831, 64
    %v8189 = vpop.permute.xlu0 %8188
    %8190 = vrot.lane.b32.xlu0 %v6832, 64
    %v8191 = vpop.permute.xlu0 %8190
    %8192 = vrot.lane.b32.xlu0 %v6834, 64
    %v8193 = vpop.permute.xlu0 %8192
    %8194 = vrot.lane.b32.xlu0 %v6835, 64
    %v8195 = vpop.permute.xlu0 %8194
    %8196 = vrot.lane.b32.xlu0 %v6837, 64
    %v8197 = vpop.permute.xlu0 %8196
    %8198 = vrot.lane.b32.xlu0 %v6838, 64
    %v8199 = vpop.permute.xlu0 %8198
    %8200 = vrot.lane.b32.xlu0 %v6840, 64
    %v8201 = vpop.permute.xlu0 %8200
    %8202 = vrot.lane.b32.xlu0 %v6841, 64
    %v8203 = vpop.permute.xlu0 %8202
    %8204 = vrot.lane.b32.xlu0 %v6843, 64
    %v8205 = vpop.permute.xlu0 %8204
    %8206 = vrot.lane.b32.xlu0 %v6844, 64
    %v8207 = vpop.permute.xlu0 %8206
    %8208 = vrot.lane.b32.xlu0 %v6846, 64
    %v8209 = vpop.permute.xlu0 %8208
    %8210 = vrot.lane.b32.xlu0 %v6847, 64
    %v8211 = vpop.permute.xlu0 %8210
    %8212 = vrot.lane.b32.xlu0 %v6849, 64
    %v8213 = vpop.permute.xlu0 %8212
    %8214 = vrot.lane.b32.xlu0 %v6850, 64
    %v8215 = vpop.permute.xlu0 %8214
    %8280 = vrot.lane.b32.xlu0 %v6960, 96
    %v8281 = vpop.permute.xlu0 %8280
    %8282 = vrot.lane.b32.xlu0 %v6962, 96
    %v8283 = vpop.permute.xlu0 %8282
    %8284 = vrot.lane.b32.xlu0 %v6965, 96
    %v8285 = vpop.permute.xlu0 %8284
    %8286 = vrot.lane.b32.xlu0 %v6967, 96
    %v8287 = vpop.permute.xlu0 %8286
    %8288 = vrot.lane.b32.xlu0 %v6970, 96
    %v8289 = vpop.permute.xlu0 %8288
    %8290 = vrot.lane.b32.xlu0 %v6972, 96
    %v8291 = vpop.permute.xlu0 %8290
    %8292 = vrot.lane.b32.xlu0 %v6975, 96
    %v8293 = vpop.permute.xlu0 %8292
    %8294 = vrot.lane.b32.xlu0 %v6977, 96
    %v8295 = vpop.permute.xlu0 %8294
    %8296 = vrot.lane.b32.xlu0 %v6980, 96
    %v8297 = vpop.permute.xlu0 %8296
    %8298 = vrot.lane.b32.xlu0 %v6982, 96
    %v8299 = vpop.permute.xlu0 %8298
    %8300 = vrot.lane.b32.xlu0 %v6985, 96
    %v8301 = vpop.permute.xlu0 %8300
    %8302 = vrot.lane.b32.xlu0 %v6987, 96
    %v8303 = vpop.permute.xlu0 %8302
    %8304 = vrot.lane.b32.xlu0 %v6990, 96
    %v8305 = vpop.permute.xlu0 %8304
    %8306 = vrot.lane.b32.xlu0 %v6992, 96
    %v8307 = vpop.permute.xlu0 %8306
    %8308 = vrot.lane.b32.xlu0 %v6995, 96
    %v8309 = vpop.permute.xlu0 %8308
    %8310 = vrot.lane.b32.xlu0 %v6997, 96
    %v8311 = vpop.permute.xlu0 %8310
    %8312 = vrot.lane.b32.xlu0 %v7000, 96
    %v8313 = vpop.permute.xlu0 %8312
    %8314 = vrot.lane.b32.xlu0 %v7002, 96
    %v8315 = vpop.permute.xlu0 %8314
    %8316 = vrot.lane.b32.xlu0 %v7005, 96
    %v8317 = vpop.permute.xlu0 %8316
    %8318 = vrot.lane.b32.xlu0 %v7007, 96
    %v8319 = vpop.permute.xlu0 %8318
    %8320 = vrot.lane.b32.xlu0 %v7010, 96
    %v8321 = vpop.permute.xlu0 %8320
    %8322 = vrot.lane.b32.xlu0 %v7012, 96
    %v8323 = vpop.permute.xlu0 %8322
    %8324 = vrot.lane.b32.xlu0 %v7015, 96
    %v8325 = vpop.permute.xlu0 %8324
    %8326 = vrot.lane.b32.xlu0 %v7017, 96
    %v8327 = vpop.permute.xlu0 %8326
    %8328 = vrot.lane.b32.xlu0 %v7020, 96
    %v8329 = vpop.permute.xlu0 %8328
    %8330 = vrot.lane.b32.xlu0 %v7022, 96
    %v8331 = vpop.permute.xlu0 %8330
    %8332 = vrot.lane.b32.xlu0 %v7025, 96
    %v8333 = vpop.permute.xlu0 %8332
    %8334 = vrot.lane.b32.xlu0 %v7027, 96
    %v8335 = vpop.permute.xlu0 %8334
    %8336 = vrot.lane.b32.xlu0 %v7292, 96
    %v8337 = vpop.permute.xlu0 %8336
    %8338 = vrot.lane.b32.xlu0 %v7294, 96
    %v8339 = vpop.permute.xlu0 %8338
    %8340 = vrot.lane.b32.xlu0 %v7297, 96
    %v8341 = vpop.permute.xlu0 %8340
    %8342 = vrot.lane.b32.xlu0 %v7299, 96
    %v8343 = vpop.permute.xlu0 %8342
    %8344 = vrot.lane.b32.xlu0 %v7040, 96
    %v8345 = vpop.permute.xlu0 %8344
    %8346 = vrot.lane.b32.xlu0 %v7042, 96
    %v8347 = vpop.permute.xlu0 %8346
    %8348 = vrot.lane.b32.xlu0 %v7045, 96
    %v8349 = vpop.permute.xlu0 %8348
    %8350 = vrot.lane.b32.xlu0 %v7047, 96
    %v8351 = vpop.permute.xlu0 %8350
    %8352 = vrot.lane.b32.xlu0 %v7050, 96
    %v8353 = vpop.permute.xlu0 %8352
    %8354 = vrot.lane.b32.xlu0 %v7052, 96
    %v8355 = vpop.permute.xlu0 %8354
    %8356 = vrot.lane.b32.xlu0 %v7055, 96
    %v8357 = vpop.permute.xlu0 %8356
    %8358 = vrot.lane.b32.xlu0 %v7057, 96
    %v8359 = vpop.permute.xlu0 %8358
    %8360 = vrot.lane.b32.xlu0 %v7060, 96
    %v8361 = vpop.permute.xlu0 %8360
    %8362 = vrot.lane.b32.xlu0 %v7062, 96
    %v8363 = vpop.permute.xlu0 %8362
    %8364 = vrot.lane.b32.xlu0 %v7065, 96
    %v8365 = vpop.permute.xlu0 %8364
    %8366 = vrot.lane.b32.xlu0 %v7067, 96
    %v8367 = vpop.permute.xlu0 %8366
    %8368 = vrot.lane.b32.xlu0 %v7070, 96
    %v8369 = vpop.permute.xlu0 %8368
    %8370 = vrot.lane.b32.xlu0 %v7072, 96
    %v8371 = vpop.permute.xlu0 %8370
    %8372 = vrot.lane.b32.xlu0 %v7075, 96
    %v8373 = vpop.permute.xlu0 %8372
    %8374 = vrot.lane.b32.xlu0 %v7077, 96
    %v8375 = vpop.permute.xlu0 %8374
    %8376 = vrot.lane.b32.xlu0 %v7080, 96
    %v8377 = vpop.permute.xlu0 %8376
    %8378 = vrot.lane.b32.xlu0 %v7082, 96
    %v8379 = vpop.permute.xlu0 %8378
    %8380 = vrot.lane.b32.xlu0 %v7085, 96
    %v8381 = vpop.permute.xlu0 %8380
    %8382 = vrot.lane.b32.xlu0 %v7087, 96
    %v8383 = vpop.permute.xlu0 %8382
    %8384 = vrot.lane.b32.xlu0 %v7090, 96
    %v8385 = vpop.permute.xlu0 %8384
    %8386 = vrot.lane.b32.xlu0 %v7092, 96
    %v8387 = vpop.permute.xlu0 %8386
    %8388 = vrot.lane.b32.xlu0 %v7095, 96
    %v8389 = vpop.permute.xlu0 %8388
    %8390 = vrot.lane.b32.xlu0 %v7097, 96
    %v8391 = vpop.permute.xlu0 %8390
    %8392 = vrot.lane.b32.xlu0 %v7100, 96
    %v8393 = vpop.permute.xlu0 %8392
    %8394 = vrot.lane.b32.xlu0 %v7102, 96
    %v8395 = vpop.permute.xlu0 %8394
    %8396 = vrot.lane.b32.xlu0 %v7105, 96
    %v8397 = vpop.permute.xlu0 %8396
    %8398 = vrot.lane.b32.xlu0 %v7107, 96
    %v8399 = vpop.permute.xlu0 %8398
    %8400 = vrot.lane.b32.xlu0 %v7302, 96
    %v8401 = vpop.permute.xlu0 %8400
    %8402 = vrot.lane.b32.xlu0 %v7304, 96
    %v8403 = vpop.permute.xlu0 %8402
    %8404 = vrot.lane.b32.xlu0 %v7307, 96
    %v8405 = vpop.permute.xlu0 %8404
    %8406 = vrot.lane.b32.xlu0 %v7309, 96
    %v8407 = vpop.permute.xlu0 %8406
    %v8472 = vsel %vm18, %v6744, %v7321
    %v8473 = vsel %vm18, %v6745, %v7323
    %v8474 = vsel %vm18, %v6747, %v7325
    %v8475 = vsel %vm18, %v6748, %v7327
    %v8476 = vsel %vm18, %v6750, %v7329
    %v8477 = vsel %vm18, %v6751, %v7331
    %v8478 = vsel %vm18, %v6753, %v7333
    %v8479 = vsel %vm18, %v6754, %v7335
    %v8480 = vsel %vm18, %v6756, %v7337
    %v8481 = vsel %vm18, %v6757, %v7339
    %v8482 = vsel %vm18, %v6759, %v7341
    %v8483 = vsel %vm18, %v6760, %v7343
    %v8484 = vsel %vm18, %v6762, %v7345
    %v8485 = vsel %vm18, %v6763, %v7347
    %v8486 = vsel %vm18, %v6765, %v7349
    %v8487 = vsel %vm18, %v6766, %v7351
    %v8488 = vsel %vm18, %v6768, %v7353
    %v8489 = vsel %vm18, %v6769, %v7355
    %v8490 = vsel %vm18, %v6771, %v7357
    %v8491 = vsel %vm18, %v6772, %v7359
    %v8492 = vsel %vm18, %v6774, %v7361
    %v8493 = vsel %vm18, %v6775, %v7363
    %v8494 = vsel %vm18, %v6777, %v7365
    %v8495 = vsel %vm18, %v6778, %v7367
    %v8496 = vsel %vm18, %v6780, %v7369
    %v8497 = vsel %vm18, %v6781, %v7371
    %v8498 = vsel %vm18, %v6783, %v7373
    %v8499 = vsel %vm18, %v6784, %v7375
    %v8500 = vsel %vm18, %v6786, %v7377
    %v8501 = vsel %vm18, %v6787, %v7379
    %v8502 = vsel %vm18, %v6789, %v7381
    %v8503 = vsel %vm18, %v6790, %v7383
    %v8504 = vsel %vm18, %v6798, %v7385
    %v8505 = vsel %vm18, %v6799, %v7387
    %v8506 = vsel %vm18, %v6801, %v7389
    %v8507 = vsel %vm18, %v6802, %v7391
    %v8508 = vsel %vm18, %v6804, %v7393
    %v8509 = vsel %vm18, %v6805, %v7395
    %v8510 = vsel %vm18, %v6807, %v7397
    %v8511 = vsel %vm18, %v6808, %v7399
    %v8512 = vsel %vm18, %v6810, %v7401
    %v8513 = vsel %vm18, %v6811, %v7403
    %v8514 = vsel %vm18, %v6813, %v7405
    %v8515 = vsel %vm18, %v6814, %v7407
    %v8516 = vsel %vm18, %v6816, %v7409
    %v8517 = vsel %vm18, %v6817, %v7411
    %v8518 = vsel %vm18, %v6819, %v7413
    %v8519 = vsel %vm18, %v6820, %v7415
    %v8520 = vsel %vm18, %v6822, %v7417
    %v8521 = vsel %vm18, %v6823, %v7419
    %v8522 = vsel %vm18, %v6825, %v7421
    %v8523 = vsel %vm18, %v6826, %v7423
    %v8524 = vsel %vm18, %v6828, %v7425
    %v8525 = vsel %vm18, %v6829, %v7427
    %v8526 = vsel %vm18, %v6831, %v7429
    %v8527 = vsel %vm18, %v6832, %v7431
    %v8528 = vsel %vm18, %v6834, %v7433
    %v8529 = vsel %vm18, %v6835, %v7435
    %v8530 = vsel %vm18, %v6837, %v7437
    %v8531 = vsel %vm18, %v6838, %v7439
    %v8532 = vsel %vm18, %v6840, %v7441
    %v8533 = vsel %vm18, %v6841, %v7443
    %v8534 = vsel %vm18, %v6843, %v7445
    %v8535 = vsel %vm18, %v6844, %v7447
    %v8536 = vsel %vm2200, %v8472, %v7513
    %v8537 = vsel %vm2200, %v8473, %v7515
    %v8538 = vsel %vm2200, %v8474, %v7517
    %v8539 = vsel %vm2200, %v8475, %v7519
    %v8540 = vsel %vm2200, %v8476, %v7521
    %v8541 = vsel %vm2200, %v8477, %v7523
    %v8542 = vsel %vm2200, %v8478, %v7525
    %v8543 = vsel %vm2200, %v8479, %v7527
    %v8544 = vsel %vm2200, %v8480, %v7529
    %v8545 = vsel %vm2200, %v8481, %v7531
    %v8546 = vsel %vm2200, %v8482, %v7533
    %v8547 = vsel %vm2200, %v8483, %v7535
    %v8548 = vsel %vm2200, %v8484, %v7537
    %v8549 = vsel %vm2200, %v8485, %v7539
    %v8550 = vsel %vm2200, %v8486, %v7541
    %v8551 = vsel %vm2200, %v8487, %v7543
    %v8552 = vsel %vm2200, %v8488, %v7545
    %v8553 = vsel %vm2200, %v8489, %v7547
    %v8554 = vsel %vm2200, %v8490, %v7549
    %v8555 = vsel %vm2200, %v8491, %v7551
    %v8556 = vsel %vm2200, %v8492, %v7553
    %v8557 = vsel %vm2200, %v8493, %v7555
    %v8558 = vsel %vm2200, %v8494, %v7557
    %v8559 = vsel %vm2200, %v8495, %v7559
    %v8560 = vsel %vm2200, %v8496, %v7561
    %v8561 = vsel %vm2200, %v8497, %v7563
    %v8562 = vsel %vm2200, %v8498, %v7565
    %v8563 = vsel %vm2200, %v8499, %v7567
    %v8564 = vsel %vm2200, %v8500, %v7569
    %v8565 = vsel %vm2200, %v8501, %v7571
    %v8566 = vsel %vm2200, %v8502, %v7573
    %v8567 = vsel %vm2200, %v8503, %v7575
    %v8568 = vsel %vm2200, %v8504, %v7577
    %v8569 = vsel %vm2200, %v8505, %v7579
    %v8570 = vsel %vm2200, %v8506, %v7581
    %v8571 = vsel %vm2200, %v8507, %v7583
    %v8572 = vsel %vm2200, %v8508, %v7585
    %v8573 = vsel %vm2200, %v8509, %v7587
    %v8574 = vsel %vm2200, %v8510, %v7589
    %v8575 = vsel %vm2200, %v8511, %v7591
    %v8576 = vsel %vm2200, %v8512, %v7593
    %v8577 = vsel %vm2200, %v8513, %v7595
    %v8578 = vsel %vm2200, %v8514, %v7597
    %v8579 = vsel %vm2200, %v8515, %v7599
    %v8580 = vsel %vm2200, %v8516, %v7601
    %v8581 = vsel %vm2200, %v8517, %v7603
    %v8582 = vsel %vm2200, %v8518, %v7605
    %v8583 = vsel %vm2200, %v8519, %v7607
    %v8584 = vsel %vm2200, %v8520, %v7609
    %v8585 = vsel %vm2200, %v8521, %v7611
    %v8586 = vsel %vm2200, %v8522, %v7613
    %v8587 = vsel %vm2200, %v8523, %v7615
    %v8588 = vsel %vm2200, %v8524, %v7617
    %v8589 = vsel %vm2200, %v8525, %v7619
    %v8590 = vsel %vm2200, %v8526, %v7621
    %v8591 = vsel %vm2200, %v8527, %v7623
    %v8592 = vsel %vm2200, %v8528, %v7625
    %v8593 = vsel %vm2200, %v8529, %v7627
    %v8594 = vsel %vm2200, %v8530, %v7629
    %v8595 = vsel %vm2200, %v8531, %v7631
    %v8596 = vsel %vm2200, %v8532, %v7633
    %v8597 = vsel %vm2200, %v8533, %v7635
    %v8598 = vsel %vm2200, %v8534, %v7637
    %v8599 = vsel %vm2200, %v8535, %v7639
    %v8600 = vsel %vm2265, %v8536, %v7705
    %v8601 = vsel %vm2265, %v8537, %v7707
    %v8602 = vsel %vm2265, %v8538, %v7709
    %v8603 = vsel %vm2265, %v8539, %v7711
    %v8604 = vsel %vm2265, %v8540, %v7713
    %v8605 = vsel %vm2265, %v8541, %v7715
    %v8606 = vsel %vm2265, %v8542, %v7717
    %v8607 = vsel %vm2265, %v8543, %v7719
    %v8608 = vsel %vm2265, %v8544, %v7721
    %v8609 = vsel %vm2265, %v8545, %v7723
    %v8610 = vsel %vm2265, %v8546, %v7725
    %v8611 = vsel %vm2265, %v8547, %v7727
    %v8612 = vsel %vm2265, %v8548, %v7729
    %v8613 = vsel %vm2265, %v8549, %v7731
    %v8614 = vsel %vm2265, %v8550, %v7733
    %v8615 = vsel %vm2265, %v8551, %v7735
    %v8616 = vsel %vm2265, %v8552, %v7737
    %v8617 = vsel %vm2265, %v8553, %v7739
    %v8618 = vsel %vm2265, %v8554, %v7741
    %v8619 = vsel %vm2265, %v8555, %v7743
    %v8620 = vsel %vm2265, %v8556, %v7745
    %v8621 = vsel %vm2265, %v8557, %v7747
    %v8622 = vsel %vm2265, %v8558, %v7749
    %v8623 = vsel %vm2265, %v8559, %v7751
    %v8624 = vsel %vm2265, %v8560, %v7753
    %v8625 = vsel %vm2265, %v8561, %v7755
    %v8626 = vsel %vm2265, %v8562, %v7757
    %v8627 = vsel %vm2265, %v8563, %v7759
    %v8628 = vsel %vm2265, %v8564, %v7761
    %v8629 = vsel %vm2265, %v8565, %v7763
    %v8630 = vsel %vm2265, %v8566, %v7765
    %v8631 = vsel %vm2265, %v8567, %v7767
    %v8632 = vsel %vm2265, %v8568, %v7769
    %v8633 = vsel %vm2265, %v8569, %v7771
    %v8634 = vsel %vm2265, %v8570, %v7773
    %v8635 = vsel %vm2265, %v8571, %v7775
    %v8636 = vsel %vm2265, %v8572, %v7777
    %v8637 = vsel %vm2265, %v8573, %v7779
    %v8638 = vsel %vm2265, %v8574, %v7781
    %v8639 = vsel %vm2265, %v8575, %v7783
    %v8640 = vsel %vm2265, %v8576, %v7785
    %v8641 = vsel %vm2265, %v8577, %v7787
    %v8642 = vsel %vm2265, %v8578, %v7789
    %v8643 = vsel %vm2265, %v8579, %v7791
    %v8644 = vsel %vm2265, %v8580, %v7793
    %v8645 = vsel %vm2265, %v8581, %v7795
    %v8646 = vsel %vm2265, %v8582, %v7797
    %v8647 = vsel %vm2265, %v8583, %v7799
    %v8648 = vsel %vm2265, %v8584, %v7801
    %v8649 = vsel %vm2265, %v8585, %v7803
    %v8650 = vsel %vm2265, %v8586, %v7805
    %v8651 = vsel %vm2265, %v8587, %v7807
    %v8652 = vsel %vm2265, %v8588, %v7809
    %v8653 = vsel %vm2265, %v8589, %v7811
    %v8654 = vsel %vm2265, %v8590, %v7813
    %v8655 = vsel %vm2265, %v8591, %v7815
    %v8656 = vsel %vm2265, %v8592, %v7817
    %v8657 = vsel %vm2265, %v8593, %v7819
    %v8658 = vsel %vm2265, %v8594, %v7821
    %v8659 = vsel %vm2265, %v8595, %v7823
    %v8660 = vsel %vm2265, %v8596, %v7825
    %v8661 = vsel %vm2265, %v8597, %v7827
    %v8662 = vsel %vm2265, %v8598, %v7829
    %v8663 = vsel %vm2265, %v8599, %v7831
    %v8664 = vsel %vm18, %v6615, %v7897
    %v8665 = vsel %vm18, %v6616, %v7899
    %v8666 = vsel %vm18, %v6617, %v7901
    %v8667 = vsel %vm18, %v6618, %v7903
    %v8668 = vsel %vm18, %v6619, %v7905
    %v8669 = vsel %vm18, %v6620, %v7907
    %v8670 = vsel %vm18, %v6621, %v7909
    %v8671 = vsel %vm18, %v6622, %v7911
    %v8672 = vsel %vm18, %v6623, %v7913
    %v8673 = vsel %vm18, %v6624, %v7915
    %v8674 = vsel %vm18, %v6625, %v7917
    %v8675 = vsel %vm18, %v6626, %v7919
    %v8676 = vsel %vm18, %v6627, %v7921
    %v8677 = vsel %vm18, %v6628, %v7923
    %v8678 = vsel %vm18, %v6629, %v7925
    %v8679 = vsel %vm18, %v6630, %v7927
    %v8680 = vsel %vm18, %v6631, %v7929
    %v8681 = vsel %vm18, %v6632, %v7931
    %v8682 = vsel %vm18, %v6633, %v7933
    %v8683 = vsel %vm18, %v6634, %v7935
    %v8684 = vsel %vm18, %v6635, %v7937
    %v8685 = vsel %vm18, %v6636, %v7939
    %v8686 = vsel %vm18, %v6637, %v7941
    %v8687 = vsel %vm18, %v6638, %v7943
    %v8688 = vsel %vm18, %v6639, %v7945
    %v8689 = vsel %vm18, %v6640, %v7947
    %v8690 = vsel %vm18, %v6641, %v7949
    %v8691 = vsel %vm18, %v6642, %v7951
    %v8692 = vsel %vm18, %v6643, %v7953
    %v8693 = vsel %vm18, %v6644, %v7955
    %v8694 = vsel %vm18, %v6645, %v7957
    %v8695 = vsel %vm18, %v6646, %v7959
    %v8696 = vsel %vm18, %v6647, %v7961
    %v8697 = vsel %vm18, %v6648, %v7963
    %v8698 = vsel %vm18, %v6649, %v7965
    %v8699 = vsel %vm18, %v6650, %v7967
    %v8700 = vsel %vm18, %v6651, %v7969
    %v8701 = vsel %vm18, %v6652, %v7971
    %v8702 = vsel %vm18, %v6653, %v7973
    %v8703 = vsel %vm18, %v6654, %v7975
    %v8704 = vsel %vm18, %v6655, %v7977
    %v8705 = vsel %vm18, %v6656, %v7979
    %v8706 = vsel %vm18, %v6657, %v7981
    %v8707 = vsel %vm18, %v6658, %v7983
    %v8708 = vsel %vm18, %v6659, %v7985
    %v8709 = vsel %vm18, %v6660, %v7987
    %v8710 = vsel %vm18, %v6661, %v7989
    %v8711 = vsel %vm18, %v6662, %v7991
    %v8712 = vsel %vm18, %v6663, %v7993
    %v8713 = vsel %vm18, %v6664, %v7995
    %v8714 = vsel %vm18, %v6665, %v7997
    %v8715 = vsel %vm18, %v6666, %v7999
    %v8716 = vsel %vm18, %v6667, %v8001
    %v8717 = vsel %vm18, %v6668, %v8003
    %v8718 = vsel %vm18, %v6669, %v8005
    %v8719 = vsel %vm18, %v6670, %v8007
    %v8720 = vsel %vm18, %v6671, %v8009
    %v8721 = vsel %vm18, %v6672, %v8011
    %v8722 = vsel %vm18, %v6673, %v8013
    %v8723 = vsel %vm18, %v6674, %v8015
    %v8724 = vsel %vm18, %v6675, %v8017
    %v8725 = vsel %vm18, %v6676, %v8019
    %v8726 = vsel %vm18, %v6677, %v8021
    %v8727 = vsel %vm18, %v6678, %v8023
    %v8728 = vsel %vm2200, %v8664, %v8089
    %v8729 = vsel %vm2200, %v8665, %v8091
    %v8730 = vsel %vm2200, %v8666, %v8093
    %v8731 = vsel %vm2200, %v8667, %v8095
    %v8732 = vsel %vm2200, %v8668, %v8097
    %v8733 = vsel %vm2200, %v8669, %v8099
    %v8734 = vsel %vm2200, %v8670, %v8101
    %v8735 = vsel %vm2200, %v8671, %v8103
    %v8736 = vsel %vm2200, %v8672, %v8105
    %v8737 = vsel %vm2200, %v8673, %v8107
    %v8738 = vsel %vm2200, %v8674, %v8109
    %v8739 = vsel %vm2200, %v8675, %v8111
    %v8740 = vsel %vm2200, %v8676, %v8113
    %v8741 = vsel %vm2200, %v8677, %v8115
    %v8742 = vsel %vm2200, %v8678, %v8117
    %v8743 = vsel %vm2200, %v8679, %v8119
    %v8744 = vsel %vm2200, %v8680, %v8121
    %v8745 = vsel %vm2200, %v8681, %v8123
    %v8746 = vsel %vm2200, %v8682, %v8125
    %v8747 = vsel %vm2200, %v8683, %v8127
    %v8748 = vsel %vm2200, %v8684, %v8129
    %v8749 = vsel %vm2200, %v8685, %v8131
    %v8750 = vsel %vm2200, %v8686, %v8133
    %v8751 = vsel %vm2200, %v8687, %v8135
    %v8752 = vsel %vm2200, %v8688, %v8137
    %v8753 = vsel %vm2200, %v8689, %v8139
    %v8754 = vsel %vm2200, %v8690, %v8141
    %v8755 = vsel %vm2200, %v8691, %v8143
    %v8756 = vsel %vm2200, %v8692, %v8145
    %v8757 = vsel %vm2200, %v8693, %v8147
    %v8758 = vsel %vm2200, %v8694, %v8149
    %v8759 = vsel %vm2200, %v8695, %v8151
    %v8760 = vsel %vm2200, %v8696, %v8153
    %v8761 = vsel %vm2200, %v8697, %v8155
    %v8762 = vsel %vm2200, %v8698, %v8157
    %v8763 = vsel %vm2200, %v8699, %v8159
    %v8764 = vsel %vm2200, %v8700, %v8161
    %v8765 = vsel %vm2200, %v8701, %v8163
    %v8766 = vsel %vm2200, %v8702, %v8165
    %v8767 = vsel %vm2200, %v8703, %v8167
    %v8768 = vsel %vm2200, %v8704, %v8169
    %v8769 = vsel %vm2200, %v8705, %v8171
    %v8770 = vsel %vm2200, %v8706, %v8173
    %v8771 = vsel %vm2200, %v8707, %v8175
    %v8772 = vsel %vm2200, %v8708, %v8177
    %v8773 = vsel %vm2200, %v8709, %v8179
    %v8774 = vsel %vm2200, %v8710, %v8181
    %v8775 = vsel %vm2200, %v8711, %v8183
    %v8776 = vsel %vm2200, %v8712, %v8185
    %v8777 = vsel %vm2200, %v8713, %v8187
    %v8778 = vsel %vm2200, %v8714, %v8189
    %v8779 = vsel %vm2200, %v8715, %v8191
    %v8780 = vsel %vm2200, %v8716, %v8193
    %v8781 = vsel %vm2200, %v8717, %v8195
    %v8782 = vsel %vm2200, %v8718, %v8197
    %v8783 = vsel %vm2200, %v8719, %v8199
    %v8784 = vsel %vm2200, %v8720, %v8201
    %v8785 = vsel %vm2200, %v8721, %v8203
    %v8786 = vsel %vm2200, %v8722, %v8205
    %v8787 = vsel %vm2200, %v8723, %v8207
    %v8788 = vsel %vm2200, %v8724, %v8209
    %v8789 = vsel %vm2200, %v8725, %v8211
    %v8790 = vsel %vm2200, %v8726, %v8213
    %v8791 = vsel %vm2200, %v8727, %v8215
    %v8792 = vsel %vm2265, %v8728, %v8281
    %v8793 = vsel %vm2265, %v8729, %v8283
    %v8794 = vsel %vm2265, %v8730, %v8285
    %v8795 = vsel %vm2265, %v8731, %v8287
    %v8796 = vsel %vm2265, %v8732, %v8289
    %v8797 = vsel %vm2265, %v8733, %v8291
    %v8798 = vsel %vm2265, %v8734, %v8293
    %v8799 = vsel %vm2265, %v8735, %v8295
    %v8800 = vsel %vm2265, %v8736, %v8297
    %v8801 = vsel %vm2265, %v8737, %v8299
    %v8802 = vsel %vm2265, %v8738, %v8301
    %v8803 = vsel %vm2265, %v8739, %v8303
    %v8804 = vsel %vm2265, %v8740, %v8305
    %v8805 = vsel %vm2265, %v8741, %v8307
    %v8806 = vsel %vm2265, %v8742, %v8309
    %v8807 = vsel %vm2265, %v8743, %v8311
    %v8808 = vsel %vm2265, %v8744, %v8313
    %v8809 = vsel %vm2265, %v8745, %v8315
    %v8810 = vsel %vm2265, %v8746, %v8317
    %v8811 = vsel %vm2265, %v8747, %v8319
    %v8812 = vsel %vm2265, %v8748, %v8321
    %v8813 = vsel %vm2265, %v8749, %v8323
    %v8814 = vsel %vm2265, %v8750, %v8325
    %v8815 = vsel %vm2265, %v8751, %v8327
    %v8816 = vsel %vm2265, %v8752, %v8329
    %v8817 = vsel %vm2265, %v8753, %v8331
    %v8818 = vsel %vm2265, %v8754, %v8333
    %v8819 = vsel %vm2265, %v8755, %v8335
    %v8820 = vsel %vm2265, %v8756, %v8337
    %v8821 = vsel %vm2265, %v8757, %v8339
    %v8822 = vsel %vm2265, %v8758, %v8341
    %v8823 = vsel %vm2265, %v8759, %v8343
    %v8824 = vsel %vm2265, %v8760, %v8345
    %v8825 = vsel %vm2265, %v8761, %v8347
    %v8826 = vsel %vm2265, %v8762, %v8349
    %v8827 = vsel %vm2265, %v8763, %v8351
    %v8828 = vsel %vm2265, %v8764, %v8353
    %v8829 = vsel %vm2265, %v8765, %v8355
    %v8830 = vsel %vm2265, %v8766, %v8357
    %v8831 = vsel %vm2265, %v8767, %v8359
    %v8832 = vsel %vm2265, %v8768, %v8361
    %v8833 = vsel %vm2265, %v8769, %v8363
    %v8834 = vsel %vm2265, %v8770, %v8365
    %v8835 = vsel %vm2265, %v8771, %v8367
    %v8836 = vsel %vm2265, %v8772, %v8369
    %v8837 = vsel %vm2265, %v8773, %v8371
    %v8838 = vsel %vm2265, %v8774, %v8373
    %v8839 = vsel %vm2265, %v8775, %v8375
    %v8840 = vsel %vm2265, %v8776, %v8377
    %v8841 = vsel %vm2265, %v8777, %v8379
    %v8842 = vsel %vm2265, %v8778, %v8381
    %v8843 = vsel %vm2265, %v8779, %v8383
    %v8844 = vsel %vm2265, %v8780, %v8385
    %v8845 = vsel %vm2265, %v8781, %v8387
    %v8846 = vsel %vm2265, %v8782, %v8389
    %v8847 = vsel %vm2265, %v8783, %v8391
    %v8848 = vsel %vm2265, %v8784, %v8393
    %v8849 = vsel %vm2265, %v8785, %v8395
    %v8850 = vsel %vm2265, %v8786, %v8397
    %v8851 = vsel %vm2265, %v8787, %v8399
    %v8852 = vsel %vm2265, %v8788, %v8401
    %v8853 = vsel %vm2265, %v8789, %v8403
    %v8854 = vsel %vm2265, %v8790, %v8405
    %v8855 = vsel %vm2265, %v8791, %v8407
    %8984 = vrot.lane.b32.xlu0 %v8600, 16
    %v8985 = vpop.permute.xlu0 %8984
    %8986 = vrot.lane.b32.xlu0 %v8792, 16
    %v8987 = vpop.permute.xlu0 %8986
    %8988 = vrot.lane.b32.xlu0 %v7120, 16
    %v8989 = vpop.permute.xlu0 %8988
    %8990 = vrot.lane.b32.xlu0 %v8601, 16
    %v8991 = vpop.permute.xlu0 %8990
    %8992 = vrot.lane.b32.xlu0 %v8793, 16
    %v8993 = vpop.permute.xlu0 %8992
    %8994 = vrot.lane.b32.xlu0 %v7122, 16
    %v8995 = vpop.permute.xlu0 %8994
    %8996 = vrot.lane.b32.xlu0 %v8602, 16
    %v8997 = vpop.permute.xlu0 %8996
    %8998 = vrot.lane.b32.xlu0 %v8794, 16
    %v8999 = vpop.permute.xlu0 %8998
    %9000 = vrot.lane.b32.xlu0 %v7125, 16
    %v9001 = vpop.permute.xlu0 %9000
    %9002 = vrot.lane.b32.xlu0 %v8603, 16
    %v9003 = vpop.permute.xlu0 %9002
    %9004 = vrot.lane.b32.xlu0 %v8795, 16
    %v9005 = vpop.permute.xlu0 %9004
    %9006 = vrot.lane.b32.xlu0 %v7127, 16
    %v9007 = vpop.permute.xlu0 %9006
    %9008 = vrot.lane.b32.xlu0 %v8604, 16
    %v9009 = vpop.permute.xlu0 %9008
    %9010 = vrot.lane.b32.xlu0 %v8796, 16
    %v9011 = vpop.permute.xlu0 %9010
    %9012 = vrot.lane.b32.xlu0 %v7130, 16
    %v9013 = vpop.permute.xlu0 %9012
    %9014 = vrot.lane.b32.xlu0 %v8605, 16
    %v9015 = vpop.permute.xlu0 %9014
    %9016 = vrot.lane.b32.xlu0 %v8797, 16
    %v9017 = vpop.permute.xlu0 %9016
    %9018 = vrot.lane.b32.xlu0 %v7132, 16
    %v9019 = vpop.permute.xlu0 %9018
    %9020 = vrot.lane.b32.xlu0 %v8606, 16
    %v9021 = vpop.permute.xlu0 %9020
    %9022 = vrot.lane.b32.xlu0 %v8798, 16
    %v9023 = vpop.permute.xlu0 %9022
    %9024 = vrot.lane.b32.xlu0 %v7135, 16
    %v9025 = vpop.permute.xlu0 %9024
    %9026 = vrot.lane.b32.xlu0 %v8607, 16
    %v9027 = vpop.permute.xlu0 %9026
    %9028 = vrot.lane.b32.xlu0 %v8799, 16
    %v9029 = vpop.permute.xlu0 %9028
    %9030 = vrot.lane.b32.xlu0 %v7137, 16
    %v9031 = vpop.permute.xlu0 %9030
    %9032 = vrot.lane.b32.xlu0 %v8608, 16
    %v9033 = vpop.permute.xlu0 %9032
    %9034 = vrot.lane.b32.xlu0 %v8800, 16
    %v9035 = vpop.permute.xlu0 %9034
    %9036 = vrot.lane.b32.xlu0 %v7140, 16
    %v9037 = vpop.permute.xlu0 %9036
    %9038 = vrot.lane.b32.xlu0 %v8609, 16
    %v9039 = vpop.permute.xlu0 %9038
    %9040 = vrot.lane.b32.xlu0 %v8801, 16
    %v9041 = vpop.permute.xlu0 %9040
    %9042 = vrot.lane.b32.xlu0 %v7142, 16
    %v9043 = vpop.permute.xlu0 %9042
    %9044 = vrot.lane.b32.xlu0 %v8610, 16
    %v9045 = vpop.permute.xlu0 %9044
    %9046 = vrot.lane.b32.xlu0 %v8802, 16
    %v9047 = vpop.permute.xlu0 %9046
    %9048 = vrot.lane.b32.xlu0 %v7145, 16
    %v9049 = vpop.permute.xlu0 %9048
    %9050 = vrot.lane.b32.xlu0 %v8611, 16
    %v9051 = vpop.permute.xlu0 %9050
    %9052 = vrot.lane.b32.xlu0 %v8803, 16
    %v9053 = vpop.permute.xlu0 %9052
    %9054 = vrot.lane.b32.xlu0 %v7147, 16
    %v9055 = vpop.permute.xlu0 %9054
    %9056 = vrot.lane.b32.xlu0 %v8612, 16
    %v9057 = vpop.permute.xlu0 %9056
    %9058 = vrot.lane.b32.xlu0 %v8804, 16
    %v9059 = vpop.permute.xlu0 %9058
    %9060 = vrot.lane.b32.xlu0 %v7150, 16
    %v9061 = vpop.permute.xlu0 %9060
    %9062 = vrot.lane.b32.xlu0 %v8613, 16
    %v9063 = vpop.permute.xlu0 %9062
    %9064 = vrot.lane.b32.xlu0 %v8805, 16
    %v9065 = vpop.permute.xlu0 %9064
    %9066 = vrot.lane.b32.xlu0 %v7152, 16
    %v9067 = vpop.permute.xlu0 %9066
    %9068 = vrot.lane.b32.xlu0 %v8614, 16
    %v9069 = vpop.permute.xlu0 %9068
    %9070 = vrot.lane.b32.xlu0 %v8806, 16
    %v9071 = vpop.permute.xlu0 %9070
    %9072 = vrot.lane.b32.xlu0 %v7155, 16
    %v9073 = vpop.permute.xlu0 %9072
    %9074 = vrot.lane.b32.xlu0 %v8615, 16
    %v9075 = vpop.permute.xlu0 %9074
    %9076 = vrot.lane.b32.xlu0 %v8807, 16
    %v9077 = vpop.permute.xlu0 %9076
    %9078 = vrot.lane.b32.xlu0 %v7157, 16
    %v9079 = vpop.permute.xlu0 %9078
    %9080 = vrot.lane.b32.xlu0 %v8616, 16
    %v9081 = vpop.permute.xlu0 %9080
    %9082 = vrot.lane.b32.xlu0 %v8808, 16
    %v9083 = vpop.permute.xlu0 %9082
    %9084 = vrot.lane.b32.xlu0 %v7160, 16
    %v9085 = vpop.permute.xlu0 %9084
    %9086 = vrot.lane.b32.xlu0 %v8617, 16
    %v9087 = vpop.permute.xlu0 %9086
    %9088 = vrot.lane.b32.xlu0 %v8809, 16
    %v9089 = vpop.permute.xlu0 %9088
    %9090 = vrot.lane.b32.xlu0 %v7162, 16
    %v9091 = vpop.permute.xlu0 %9090
    %9092 = vrot.lane.b32.xlu0 %v8618, 16
    %v9093 = vpop.permute.xlu0 %9092
    %9094 = vrot.lane.b32.xlu0 %v8810, 16
    %v9095 = vpop.permute.xlu0 %9094
    %9096 = vrot.lane.b32.xlu0 %v7165, 16
    %v9097 = vpop.permute.xlu0 %9096
    %9098 = vrot.lane.b32.xlu0 %v8619, 16
    %v9099 = vpop.permute.xlu0 %9098
    %9100 = vrot.lane.b32.xlu0 %v8811, 16
    %v9101 = vpop.permute.xlu0 %9100
    %9102 = vrot.lane.b32.xlu0 %v7167, 16
    %v9103 = vpop.permute.xlu0 %9102
    %9104 = vrot.lane.b32.xlu0 %v8620, 16
    %v9105 = vpop.permute.xlu0 %9104
    %9106 = vrot.lane.b32.xlu0 %v8812, 16
    %v9107 = vpop.permute.xlu0 %9106
    %9108 = vrot.lane.b32.xlu0 %v7170, 16
    %v9109 = vpop.permute.xlu0 %9108
    %9110 = vrot.lane.b32.xlu0 %v8621, 16
    %v9111 = vpop.permute.xlu0 %9110
    %9112 = vrot.lane.b32.xlu0 %v8813, 16
    %v9113 = vpop.permute.xlu0 %9112
    %9114 = vrot.lane.b32.xlu0 %v7172, 16
    %v9115 = vpop.permute.xlu0 %9114
    %9116 = vrot.lane.b32.xlu0 %v8622, 16
    %v9117 = vpop.permute.xlu0 %9116
    %9118 = vrot.lane.b32.xlu0 %v8814, 16
    %v9119 = vpop.permute.xlu0 %9118
    %9120 = vrot.lane.b32.xlu0 %v7175, 16
    %v9121 = vpop.permute.xlu0 %9120
    %9122 = vrot.lane.b32.xlu0 %v8623, 16
    %v9123 = vpop.permute.xlu0 %9122
    %9124 = vrot.lane.b32.xlu0 %v8815, 16
    %v9125 = vpop.permute.xlu0 %9124
    %9126 = vrot.lane.b32.xlu0 %v7177, 16
    %v9127 = vpop.permute.xlu0 %9126
    %9128 = vrot.lane.b32.xlu0 %v8624, 16
    %v9129 = vpop.permute.xlu0 %9128
    %9130 = vrot.lane.b32.xlu0 %v8816, 16
    %v9131 = vpop.permute.xlu0 %9130
    %9132 = vrot.lane.b32.xlu0 %v7180, 16
    %v9133 = vpop.permute.xlu0 %9132
    %9134 = vrot.lane.b32.xlu0 %v8625, 16
    %v9135 = vpop.permute.xlu0 %9134
    %9136 = vrot.lane.b32.xlu0 %v8817, 16
    %v9137 = vpop.permute.xlu0 %9136
    %9138 = vrot.lane.b32.xlu0 %v7182, 16
    %v9139 = vpop.permute.xlu0 %9138
    %9140 = vrot.lane.b32.xlu0 %v8626, 16
    %v9141 = vpop.permute.xlu0 %9140
    %9142 = vrot.lane.b32.xlu0 %v8818, 16
    %v9143 = vpop.permute.xlu0 %9142
    %9144 = vrot.lane.b32.xlu0 %v7185, 16
    %v9145 = vpop.permute.xlu0 %9144
    %9146 = vrot.lane.b32.xlu0 %v8627, 16
    %v9147 = vpop.permute.xlu0 %9146
    %9148 = vrot.lane.b32.xlu0 %v8819, 16
    %v9149 = vpop.permute.xlu0 %9148
    %9150 = vrot.lane.b32.xlu0 %v7187, 16
    %v9151 = vpop.permute.xlu0 %9150
    %9152 = vrot.lane.b32.xlu0 %v8628, 16
    %v9153 = vpop.permute.xlu0 %9152
    %9154 = vrot.lane.b32.xlu0 %v8820, 16
    %v9155 = vpop.permute.xlu0 %9154
    %9156 = vrot.lane.b32.xlu0 %v7276, 16
    %v9157 = vpop.permute.xlu0 %9156
    %9158 = vrot.lane.b32.xlu0 %v8629, 16
    %v9159 = vpop.permute.xlu0 %9158
    %9160 = vrot.lane.b32.xlu0 %v8821, 16
    %v9161 = vpop.permute.xlu0 %9160
    %9162 = vrot.lane.b32.xlu0 %v7278, 16
    %v9163 = vpop.permute.xlu0 %9162
    %9164 = vrot.lane.b32.xlu0 %v8630, 16
    %v9165 = vpop.permute.xlu0 %9164
    %9166 = vrot.lane.b32.xlu0 %v8822, 16
    %v9167 = vpop.permute.xlu0 %9166
    %9168 = vrot.lane.b32.xlu0 %v7312, 16
    %v9169 = vpop.permute.xlu0 %9168
    %9170 = vrot.lane.b32.xlu0 %v8631, 16
    %v9171 = vpop.permute.xlu0 %9170
    %9172 = vrot.lane.b32.xlu0 %v8823, 16
    %v9173 = vpop.permute.xlu0 %9172
    %9174 = vrot.lane.b32.xlu0 %v7314, 16
    %v9175 = vpop.permute.xlu0 %9174
    %9176 = vrot.lane.b32.xlu0 %v8632, 16
    %v9177 = vpop.permute.xlu0 %9176
    %9178 = vrot.lane.b32.xlu0 %v8824, 16
    %v9179 = vpop.permute.xlu0 %9178
    %9180 = vrot.lane.b32.xlu0 %v7200, 16
    %v9181 = vpop.permute.xlu0 %9180
    %9182 = vrot.lane.b32.xlu0 %v8633, 16
    %v9183 = vpop.permute.xlu0 %9182
    %9184 = vrot.lane.b32.xlu0 %v8825, 16
    %v9185 = vpop.permute.xlu0 %9184
    %9186 = vrot.lane.b32.xlu0 %v7202, 16
    %v9187 = vpop.permute.xlu0 %9186
    %9188 = vrot.lane.b32.xlu0 %v8634, 16
    %v9189 = vpop.permute.xlu0 %9188
    %9190 = vrot.lane.b32.xlu0 %v8826, 16
    %v9191 = vpop.permute.xlu0 %9190
    %9192 = vrot.lane.b32.xlu0 %v7205, 16
    %v9193 = vpop.permute.xlu0 %9192
    %9194 = vrot.lane.b32.xlu0 %v8635, 16
    %v9195 = vpop.permute.xlu0 %9194
    %9196 = vrot.lane.b32.xlu0 %v8827, 16
    %v9197 = vpop.permute.xlu0 %9196
    %9198 = vrot.lane.b32.xlu0 %v7207, 16
    %v9199 = vpop.permute.xlu0 %9198
    %9200 = vrot.lane.b32.xlu0 %v8636, 16
    %v9201 = vpop.permute.xlu0 %9200
    %9202 = vrot.lane.b32.xlu0 %v8828, 16
    %v9203 = vpop.permute.xlu0 %9202
    %9204 = vrot.lane.b32.xlu0 %v7210, 16
    %v9205 = vpop.permute.xlu0 %9204
    %9206 = vrot.lane.b32.xlu0 %v8637, 16
    %v9207 = vpop.permute.xlu0 %9206
    %9208 = vrot.lane.b32.xlu0 %v8829, 16
    %v9209 = vpop.permute.xlu0 %9208
    %9210 = vrot.lane.b32.xlu0 %v7212, 16
    %v9211 = vpop.permute.xlu0 %9210
    %9212 = vrot.lane.b32.xlu0 %v8638, 16
    %v9213 = vpop.permute.xlu0 %9212
    %9214 = vrot.lane.b32.xlu0 %v8830, 16
    %v9215 = vpop.permute.xlu0 %9214
    %9216 = vrot.lane.b32.xlu0 %v7215, 16
    %v9217 = vpop.permute.xlu0 %9216
    %9218 = vrot.lane.b32.xlu0 %v8639, 16
    %v9219 = vpop.permute.xlu0 %9218
    %9220 = vrot.lane.b32.xlu0 %v8831, 16
    %v9221 = vpop.permute.xlu0 %9220
    %9222 = vrot.lane.b32.xlu0 %v7217, 16
    %v9223 = vpop.permute.xlu0 %9222
    %9224 = vrot.lane.b32.xlu0 %v8640, 16
    %v9225 = vpop.permute.xlu0 %9224
    %9226 = vrot.lane.b32.xlu0 %v8832, 16
    %v9227 = vpop.permute.xlu0 %9226
    %9228 = vrot.lane.b32.xlu0 %v7220, 16
    %v9229 = vpop.permute.xlu0 %9228
    %9230 = vrot.lane.b32.xlu0 %v8641, 16
    %v9231 = vpop.permute.xlu0 %9230
    %9232 = vrot.lane.b32.xlu0 %v8833, 16
    %v9233 = vpop.permute.xlu0 %9232
    %9234 = vrot.lane.b32.xlu0 %v7222, 16
    %v9235 = vpop.permute.xlu0 %9234
    %9236 = vrot.lane.b32.xlu0 %v8642, 16
    %v9237 = vpop.permute.xlu0 %9236
    %9238 = vrot.lane.b32.xlu0 %v8834, 16
    %v9239 = vpop.permute.xlu0 %9238
    %9240 = vrot.lane.b32.xlu0 %v7225, 16
    %v9241 = vpop.permute.xlu0 %9240
    %9242 = vrot.lane.b32.xlu0 %v8643, 16
    %v9243 = vpop.permute.xlu0 %9242
    %9244 = vrot.lane.b32.xlu0 %v8835, 16
    %v9245 = vpop.permute.xlu0 %9244
    %9246 = vrot.lane.b32.xlu0 %v7227, 16
    %v9247 = vpop.permute.xlu0 %9246
    %9248 = vrot.lane.b32.xlu0 %v8644, 16
    %v9249 = vpop.permute.xlu0 %9248
    %9250 = vrot.lane.b32.xlu0 %v8836, 16
    %v9251 = vpop.permute.xlu0 %9250
    %9252 = vrot.lane.b32.xlu0 %v7230, 16
    %v9253 = vpop.permute.xlu0 %9252
    %9254 = vrot.lane.b32.xlu0 %v8645, 16
    %v9255 = vpop.permute.xlu0 %9254
    %9256 = vrot.lane.b32.xlu0 %v8837, 16
    %v9257 = vpop.permute.xlu0 %9256
    %9258 = vrot.lane.b32.xlu0 %v7232, 16
    %v9259 = vpop.permute.xlu0 %9258
    %9260 = vrot.lane.b32.xlu0 %v8646, 16
    %v9261 = vpop.permute.xlu0 %9260
    %9262 = vrot.lane.b32.xlu0 %v8838, 16
    %v9263 = vpop.permute.xlu0 %9262
    %9264 = vrot.lane.b32.xlu0 %v7235, 16
    %v9265 = vpop.permute.xlu0 %9264
    %9266 = vrot.lane.b32.xlu0 %v8647, 16
    %v9267 = vpop.permute.xlu0 %9266
    %9268 = vrot.lane.b32.xlu0 %v8839, 16
    %v9269 = vpop.permute.xlu0 %9268
    %9270 = vrot.lane.b32.xlu0 %v7237, 16
    %v9271 = vpop.permute.xlu0 %9270
    %9272 = vrot.lane.b32.xlu0 %v8648, 16
    %v9273 = vpop.permute.xlu0 %9272
    %9274 = vrot.lane.b32.xlu0 %v8840, 16
    %v9275 = vpop.permute.xlu0 %9274
    %9276 = vrot.lane.b32.xlu0 %v7240, 16
    %v9277 = vpop.permute.xlu0 %9276
    %9278 = vrot.lane.b32.xlu0 %v8649, 16
    %v9279 = vpop.permute.xlu0 %9278
    %9280 = vrot.lane.b32.xlu0 %v8841, 16
    %v9281 = vpop.permute.xlu0 %9280
    %9282 = vrot.lane.b32.xlu0 %v7242, 16
    %v9283 = vpop.permute.xlu0 %9282
    %9284 = vrot.lane.b32.xlu0 %v8650, 16
    %v9285 = vpop.permute.xlu0 %9284
    %9286 = vrot.lane.b32.xlu0 %v8842, 16
    %v9287 = vpop.permute.xlu0 %9286
    %9288 = vrot.lane.b32.xlu0 %v7245, 16
    %v9289 = vpop.permute.xlu0 %9288
    %9290 = vrot.lane.b32.xlu0 %v8651, 16
    %v9291 = vpop.permute.xlu0 %9290
    %9292 = vrot.lane.b32.xlu0 %v8843, 16
    %v9293 = vpop.permute.xlu0 %9292
    %9294 = vrot.lane.b32.xlu0 %v7247, 16
    %v9295 = vpop.permute.xlu0 %9294
    %9296 = vrot.lane.b32.xlu0 %v8652, 16
    %v9297 = vpop.permute.xlu0 %9296
    %9298 = vrot.lane.b32.xlu0 %v8844, 16
    %v9299 = vpop.permute.xlu0 %9298
    %9300 = vrot.lane.b32.xlu0 %v7250, 16
    %v9301 = vpop.permute.xlu0 %9300
    %9302 = vrot.lane.b32.xlu0 %v8653, 16
    %v9303 = vpop.permute.xlu0 %9302
    %9304 = vrot.lane.b32.xlu0 %v8845, 16
    %v9305 = vpop.permute.xlu0 %9304
    %9306 = vrot.lane.b32.xlu0 %v7252, 16
    %v9307 = vpop.permute.xlu0 %9306
    %9308 = vrot.lane.b32.xlu0 %v8654, 16
    %v9309 = vpop.permute.xlu0 %9308
    %9310 = vrot.lane.b32.xlu0 %v8846, 16
    %v9311 = vpop.permute.xlu0 %9310
    %9312 = vrot.lane.b32.xlu0 %v7255, 16
    %v9313 = vpop.permute.xlu0 %9312
    %9314 = vrot.lane.b32.xlu0 %v8655, 16
    %v9315 = vpop.permute.xlu0 %9314
    %9316 = vrot.lane.b32.xlu0 %v8847, 16
    %v9317 = vpop.permute.xlu0 %9316
    %9318 = vrot.lane.b32.xlu0 %v7257, 16
    %v9319 = vpop.permute.xlu0 %9318
    %9320 = vrot.lane.b32.xlu0 %v8656, 16
    %v9321 = vpop.permute.xlu0 %9320
    %9322 = vrot.lane.b32.xlu0 %v8848, 16
    %v9323 = vpop.permute.xlu0 %9322
    %9324 = vrot.lane.b32.xlu0 %v7260, 16
    %v9325 = vpop.permute.xlu0 %9324
    %9326 = vrot.lane.b32.xlu0 %v8657, 16
    %v9327 = vpop.permute.xlu0 %9326
    %9328 = vrot.lane.b32.xlu0 %v8849, 16
    %v9329 = vpop.permute.xlu0 %9328
    %9330 = vrot.lane.b32.xlu0 %v7262, 16
    %v9331 = vpop.permute.xlu0 %9330
    %9332 = vrot.lane.b32.xlu0 %v8658, 16
    %v9333 = vpop.permute.xlu0 %9332
    %9334 = vrot.lane.b32.xlu0 %v8850, 16
    %v9335 = vpop.permute.xlu0 %9334
    %9336 = vrot.lane.b32.xlu0 %v7265, 16
    %v9337 = vpop.permute.xlu0 %9336
    %9338 = vrot.lane.b32.xlu0 %v8659, 16
    %v9339 = vpop.permute.xlu0 %9338
    %9340 = vrot.lane.b32.xlu0 %v8851, 16
    %v9341 = vpop.permute.xlu0 %9340
    %9342 = vrot.lane.b32.xlu0 %v7267, 16
    %v9343 = vpop.permute.xlu0 %9342
    %9344 = vrot.lane.b32.xlu0 %v8660, 16
    %v9345 = vpop.permute.xlu0 %9344
    %9346 = vrot.lane.b32.xlu0 %v8852, 16
    %v9347 = vpop.permute.xlu0 %9346
    %9348 = vrot.lane.b32.xlu0 %v7281, 16
    %v9349 = vpop.permute.xlu0 %9348
    %9350 = vrot.lane.b32.xlu0 %v8661, 16
    %v9351 = vpop.permute.xlu0 %9350
    %9352 = vrot.lane.b32.xlu0 %v8853, 16
    %v9353 = vpop.permute.xlu0 %9352
    %9354 = vrot.lane.b32.xlu0 %v7283, 16
    %v9355 = vpop.permute.xlu0 %9354
    %9356 = vrot.lane.b32.xlu0 %v8662, 16
    %v9357 = vpop.permute.xlu0 %9356
    %9358 = vrot.lane.b32.xlu0 %v8854, 16
    %v9359 = vpop.permute.xlu0 %9358
    %9360 = vrot.lane.b32.xlu0 %v7317, 16
    %v9361 = vpop.permute.xlu0 %9360
    %9362 = vrot.lane.b32.xlu0 %v8663, 16
    %v9363 = vpop.permute.xlu0 %9362
    %9364 = vrot.lane.b32.xlu0 %v8855, 16
    %v9365 = vpop.permute.xlu0 %9364
    %9366 = vrot.lane.b32.xlu0 %v7319, 16
    %v9367 = vpop.permute.xlu0 %9366
    %v9368 = vsel %vm105, %v8985, %v8987
    %v9369 = vsel %vm105, %v8987, %v8989
    %v9370 = vsel %vm105, %v8991, %v8993
    %v9371 = vsel %vm105, %v8993, %v8995
    %v9372 = vsel %vm105, %v8997, %v8999
    %v9373 = vsel %vm105, %v8999, %v9001
    %v9374 = vsel %vm105, %v9003, %v9005
    %v9375 = vsel %vm105, %v9005, %v9007
    %v9376 = vsel %vm105, %v9009, %v9011
    %v9377 = vsel %vm105, %v9011, %v9013
    %v9378 = vsel %vm105, %v9015, %v9017
    %v9379 = vsel %vm105, %v9017, %v9019
    %v9380 = vsel %vm105, %v9021, %v9023
    %v9381 = vsel %vm105, %v9023, %v9025
    %v9382 = vsel %vm105, %v9027, %v9029
    %v9383 = vsel %vm105, %v9029, %v9031
    %v9384 = vsel %vm105, %v9033, %v9035
    %v9385 = vsel %vm105, %v9035, %v9037
    %v9386 = vsel %vm105, %v9039, %v9041
    %v9387 = vsel %vm105, %v9041, %v9043
    %v9388 = vsel %vm105, %v9045, %v9047
    %v9389 = vsel %vm105, %v9047, %v9049
    %v9390 = vsel %vm105, %v9051, %v9053
    %v9391 = vsel %vm105, %v9053, %v9055
    %v9392 = vsel %vm105, %v9057, %v9059
    %v9393 = vsel %vm105, %v9059, %v9061
    %v9394 = vsel %vm105, %v9063, %v9065
    %v9395 = vsel %vm105, %v9065, %v9067
    %v9396 = vsel %vm105, %v9069, %v9071
    %v9397 = vsel %vm105, %v9071, %v9073
    %v9398 = vsel %vm105, %v9075, %v9077
    %v9399 = vsel %vm105, %v9077, %v9079
    %v9400 = vsel %vm105, %v9081, %v9083
    %v9401 = vsel %vm105, %v9083, %v9085
    %v9402 = vsel %vm105, %v9087, %v9089
    %v9403 = vsel %vm105, %v9089, %v9091
    %v9404 = vsel %vm105, %v9093, %v9095
    %v9405 = vsel %vm105, %v9095, %v9097
    %v9406 = vsel %vm105, %v9099, %v9101
    %v9407 = vsel %vm105, %v9101, %v9103
    %v9408 = vsel %vm105, %v9105, %v9107
    %v9409 = vsel %vm105, %v9107, %v9109
    %v9410 = vsel %vm105, %v9111, %v9113
    %v9411 = vsel %vm105, %v9113, %v9115
    %v9412 = vsel %vm105, %v9117, %v9119
    %v9413 = vsel %vm105, %v9119, %v9121
    %v9414 = vsel %vm105, %v9123, %v9125
    %v9415 = vsel %vm105, %v9125, %v9127
    %v9416 = vsel %vm105, %v9129, %v9131
    %v9417 = vsel %vm105, %v9131, %v9133
    %v9418 = vsel %vm105, %v9135, %v9137
    %v9419 = vsel %vm105, %v9137, %v9139
    %v9420 = vsel %vm105, %v9141, %v9143
    %v9421 = vsel %vm105, %v9143, %v9145
    %v9422 = vsel %vm105, %v9147, %v9149
    %v9423 = vsel %vm105, %v9149, %v9151
    %v9424 = vsel %vm105, %v9153, %v9155
    %v9425 = vsel %vm105, %v9155, %v9157
    %v9426 = vsel %vm105, %v9159, %v9161
    %v9427 = vsel %vm105, %v9161, %v9163
    %v9428 = vsel %vm105, %v9165, %v9167
    %v9429 = vsel %vm105, %v9167, %v9169
    %v9430 = vsel %vm105, %v9171, %v9173
    %v9431 = vsel %vm105, %v9173, %v9175
    %v9432 = vsel %vm105, %v9177, %v9179
    %v9433 = vsel %vm105, %v9179, %v9181
    %v9434 = vsel %vm105, %v9183, %v9185
    %v9435 = vsel %vm105, %v9185, %v9187
    %v9436 = vsel %vm105, %v9189, %v9191
    %v9437 = vsel %vm105, %v9191, %v9193
    %v9438 = vsel %vm105, %v9195, %v9197
    %v9439 = vsel %vm105, %v9197, %v9199
    %v9440 = vsel %vm105, %v9201, %v9203
    %v9441 = vsel %vm105, %v9203, %v9205
    %v9442 = vsel %vm105, %v9207, %v9209
    %v9443 = vsel %vm105, %v9209, %v9211
    %v9444 = vsel %vm105, %v9213, %v9215
    %v9445 = vsel %vm105, %v9215, %v9217
    %v9446 = vsel %vm105, %v9219, %v9221
    %v9447 = vsel %vm105, %v9221, %v9223
    %v9448 = vsel %vm105, %v9225, %v9227
    %v9449 = vsel %vm105, %v9227, %v9229
    %v9450 = vsel %vm105, %v9231, %v9233
    %v9451 = vsel %vm105, %v9233, %v9235
    %v9452 = vsel %vm105, %v9237, %v9239
    %v9453 = vsel %vm105, %v9239, %v9241
    %v9454 = vsel %vm105, %v9243, %v9245
    %v9455 = vsel %vm105, %v9245, %v9247
    %v9456 = vsel %vm105, %v9249, %v9251
    %v9457 = vsel %vm105, %v9251, %v9253
    %v9458 = vsel %vm105, %v9255, %v9257
    %v9459 = vsel %vm105, %v9257, %v9259
    %v9460 = vsel %vm105, %v9261, %v9263
    %v9461 = vsel %vm105, %v9263, %v9265
    %v9462 = vsel %vm105, %v9267, %v9269
    %v9463 = vsel %vm105, %v9269, %v9271
    %v9464 = vsel %vm105, %v9273, %v9275
    %v9465 = vsel %vm105, %v9275, %v9277
    %v9466 = vsel %vm105, %v9279, %v9281
    %v9467 = vsel %vm105, %v9281, %v9283
    %v9468 = vsel %vm105, %v9285, %v9287
    %v9469 = vsel %vm105, %v9287, %v9289
    %v9470 = vsel %vm105, %v9291, %v9293
    %v9471 = vsel %vm105, %v9293, %v9295
    %v9472 = vsel %vm105, %v9297, %v9299
    %v9473 = vsel %vm105, %v9299, %v9301
    %v9474 = vsel %vm105, %v9303, %v9305
    %v9475 = vsel %vm105, %v9305, %v9307
    %v9476 = vsel %vm105, %v9309, %v9311
    %v9477 = vsel %vm105, %v9311, %v9313
    %v9478 = vsel %vm105, %v9315, %v9317
    %v9479 = vsel %vm105, %v9317, %v9319
    %v9480 = vsel %vm105, %v9321, %v9323
    %v9481 = vsel %vm105, %v9323, %v9325
    %v9482 = vsel %vm105, %v9327, %v9329
    %v9483 = vsel %vm105, %v9329, %v9331
    %v9484 = vsel %vm105, %v9333, %v9335
    %v9485 = vsel %vm105, %v9335, %v9337
    %v9486 = vsel %vm105, %v9339, %v9341
    %v9487 = vsel %vm105, %v9341, %v9343
    %v9488 = vsel %vm105, %v9345, %v9347
    %v9489 = vsel %vm105, %v9347, %v9349
    %v9490 = vsel %vm105, %v9351, %v9353
    %v9491 = vsel %vm105, %v9353, %v9355
    %v9492 = vsel %vm105, %v9357, %v9359
    %v9493 = vsel %vm105, %v9359, %v9361
    %v9494 = vsel %vm105, %v9363, %v9365
    %v9495 = vsel %vm105, %v9365, %v9367
    %v9624 = vsel %vm105, %v3961, %v8985
    %v9625 = vsel %vm105, %v3963, %v8991
    %v9626 = vsel %vm105, %v3966, %v8997
    %v9627 = vsel %vm105, %v3968, %v9003
    %v9628 = vsel %vm105, %v3971, %v9009
    %v9629 = vsel %vm105, %v3973, %v9015
    %v9630 = vsel %vm105, %v3976, %v9021
    %v9631 = vsel %vm105, %v3978, %v9027
    %v9632 = vsel %vm105, %v3981, %v9033
    %v9633 = vsel %vm105, %v3983, %v9039
    %v9634 = vsel %vm105, %v3986, %v9045
    %v9635 = vsel %vm105, %v3988, %v9051
    %v9636 = vsel %vm105, %v3991, %v9057
    %v9637 = vsel %vm105, %v3993, %v9063
    %v9638 = vsel %vm105, %v3996, %v9069
    %v9639 = vsel %vm105, %v3998, %v9075
    %v9640 = vsel %vm105, %v4001, %v9081
    %v9641 = vsel %vm105, %v4003, %v9087
    %v9642 = vsel %vm105, %v4006, %v9093
    %v9643 = vsel %vm105, %v4008, %v9099
    %v9644 = vsel %vm105, %v4011, %v9105
    %v9645 = vsel %vm105, %v4013, %v9111
    %v9646 = vsel %vm105, %v4016, %v9117
    %v9647 = vsel %vm105, %v4018, %v9123
    %v9648 = vsel %vm105, %v4021, %v9129
    %v9649 = vsel %vm105, %v4023, %v9135
    %v9650 = vsel %vm105, %v4026, %v9141
    %v9651 = vsel %vm105, %v4028, %v9147
    %v9652 = vsel %vm105, %v4117, %v9153
    %v9653 = vsel %vm105, %v4119, %v9159
    %v9654 = vsel %vm105, %v4153, %v9165
    %v9655 = vsel %vm105, %v4155, %v9171
    %v9656 = vsel %vm105, %v4041, %v9177
    %v9657 = vsel %vm105, %v4043, %v9183
    %v9658 = vsel %vm105, %v4046, %v9189
    %v9659 = vsel %vm105, %v4048, %v9195
    %v9660 = vsel %vm105, %v4051, %v9201
    %v9661 = vsel %vm105, %v4053, %v9207
    %v9662 = vsel %vm105, %v4056, %v9213
    %v9663 = vsel %vm105, %v4058, %v9219
    %v9664 = vsel %vm105, %v4061, %v9225
    %v9665 = vsel %vm105, %v4063, %v9231
    %v9666 = vsel %vm105, %v4066, %v9237
    %v9667 = vsel %vm105, %v4068, %v9243
    %v9668 = vsel %vm105, %v4071, %v9249
    %v9669 = vsel %vm105, %v4073, %v9255
    %v9670 = vsel %vm105, %v4076, %v9261
    %v9671 = vsel %vm105, %v4078, %v9267
    %v9672 = vsel %vm105, %v4081, %v9273
    %v9673 = vsel %vm105, %v4083, %v9279
    %v9674 = vsel %vm105, %v4086, %v9285
    %v9675 = vsel %vm105, %v4088, %v9291
    %v9676 = vsel %vm105, %v4091, %v9297
    %v9677 = vsel %vm105, %v4093, %v9303
    %v9678 = vsel %vm105, %v4096, %v9309
    %v9679 = vsel %vm105, %v4098, %v9315
    %v9680 = vsel %vm105, %v4101, %v9321
    %v9681 = vsel %vm105, %v4103, %v9327
    %v9682 = vsel %vm105, %v4106, %v9333
    %v9683 = vsel %vm105, %v4108, %v9339
    %v9684 = vsel %vm105, %v4122, %v9345
    %v9685 = vsel %vm105, %v4124, %v9351
    %v9686 = vsel %vm105, %v4158, %v9357
    %v9687 = vsel %vm105, %v4160, %v9363
    %v9688 = vld [vmem:[%s3] sm:$0xff]
    %v9689 = vld [vmem:[%s3 + $0x8] sm:$0xff]
    %v9690 = vld [vmem:[%s3 + $0x10] sm:$0xff]
    %v9691 = vld [vmem:[%s3 + $0x18] sm:$0xff]
    %v9692 = vld [vmem:[%s3 + $0x20] sm:$0xff]
    %v9693 = vld [vmem:[%s3 + $0x28] sm:$0xff]
    %v9694 = vld [vmem:[%s3 + $0x30] sm:$0xff]
    %v9695 = vld [vmem:[%s3 + $0x38] sm:$0xff]
    %v9696 = vld [vmem:[%s3 + $0x40] sm:$0xff]
    %v9697 = vld [vmem:[%s3 + $0x48] sm:$0xff]
    %v9698 = vld [vmem:[%s3 + $0x50] sm:$0xff]
    %v9699 = vld [vmem:[%s3 + $0x58] sm:$0xff]
    %v9700 = vld [vmem:[%s3 + $0x60] sm:$0xff]
    %v9701 = vld [vmem:[%s3 + $0x68] sm:$0xff]
    %v9702 = vld [vmem:[%s3 + $0x70] sm:$0xff]
    %v9703 = vld [vmem:[%s3 + $0x78] sm:$0xff]
    %v9704 = vld [vmem:[%s3 + $0x80] sm:$0xff]
    %v9705 = vld [vmem:[%s3 + $0x88] sm:$0xff]
    %v9706 = vld [vmem:[%s3 + $0x90] sm:$0xff]
    %v9707 = vld [vmem:[%s3 + $0x98] sm:$0xff]
    %v9708 = vld [vmem:[%s3 + $0xa0] sm:$0xff]
    %v9709 = vld [vmem:[%s3 + $0xa8] sm:$0xff]
    %v9710 = vld [vmem:[%s3 + $0xb0] sm:$0xff]
    %v9711 = vld [vmem:[%s3 + $0xb8] sm:$0xff]
    %v9712 = vld [vmem:[%s3 + $0xc0] sm:$0xff]
    %v9713 = vld [vmem:[%s3 + $0xc8] sm:$0xff]
    %v9714 = vld [vmem:[%s3 + $0xd0] sm:$0xff]
    %v9715 = vld [vmem:[%s3 + $0xd8] sm:$0xff]
    %v9716 = vld [vmem:[%s3 + $0xe0] sm:$0xff]
    %v9717 = vld [vmem:[%s3 + $0xe8] sm:$0xff]
    %v9718 = vld [vmem:[%s3 + $0xf0] sm:$0xff]
    %v9719 = vld [vmem:[%s3 + $0xf8] sm:$0xff]
    %v9720 = vld [vmem:[%s3 + $0x100] sm:$0xff]
    %v9721 = vld [vmem:[%s3 + $0x108] sm:$0xff]
    %v9722 = vld [vmem:[%s3 + $0x110] sm:$0xff]
    %v9723 = vld [vmem:[%s3 + $0x118] sm:$0xff]
    %v9724 = vld [vmem:[%s3 + $0x120] sm:$0xff]
    %v9725 = vld [vmem:[%s3 + $0x128] sm:$0xff]
    %v9726 = vld [vmem:[%s3 + $0x130] sm:$0xff]
    %v9727 = vld [vmem:[%s3 + $0x138] sm:$0xff]
    %v9728 = vld [vmem:[%s3 + $0x140] sm:$0xff]
    %v9729 = vld [vmem:[%s3 + $0x148] sm:$0xff]
    %v9730 = vld [vmem:[%s3 + $0x150] sm:$0xff]
    %v9731 = vld [vmem:[%s3 + $0x158] sm:$0xff]
    %v9732 = vld [vmem:[%s3 + $0x160] sm:$0xff]
    %v9733 = vld [vmem:[%s3 + $0x168] sm:$0xff]
    %v9734 = vld [vmem:[%s3 + $0x170] sm:$0xff]
    %v9735 = vld [vmem:[%s3 + $0x178] sm:$0xff]
    %v9736 = vld [vmem:[%s3 + $0x180] sm:$0xff]
    %v9737 = vld [vmem:[%s3 + $0x188] sm:$0xff]
    %v9738 = vld [vmem:[%s3 + $0x190] sm:$0xff]
    %v9739 = vld [vmem:[%s3 + $0x198] sm:$0xff]
    %v9740 = vld [vmem:[%s3 + $0x1a0] sm:$0xff]
    %v9741 = vld [vmem:[%s3 + $0x1a8] sm:$0xff]
    %v9742 = vsel %vm5761, %v9369, 0
    %v9744 = vsel %vm5761, %v9371, 0
    %v9746 = vsel %vm5761, %v9373, 0
    %v9748 = vsel %vm5761, %v9375, 0
    %v9750 = vsel %vm5761, %v9377, 0
    %v9752 = vsel %vm5761, %v9379, 0
    %v9754 = vsel %vm5761, %v9381, 0
    %v9756 = vsel %vm5761, %v9383, 0
    %v9758 = vsel %vm5761, %v9385, 0
    %v9760 = vsel %vm5761, %v9387, 0
    %v9762 = vsel %vm5761, %v9389, 0
    %v9764 = vsel %vm5761, %v9391, 0
    %v9766 = vsel %vm5761, %v9393, 0
    %v9768 = vsel %vm5761, %v9395, 0
    %v9770 = vsel %vm5761, %v9397, 0
    %v9772 = vsel %vm5761, %v9399, 0
    %v9774 = vsel %vm5761, %v9401, 0
    %v9776 = vsel %vm5761, %v9403, 0
    %v9778 = vsel %vm5761, %v9405, 0
    %v9780 = vsel %vm5761, %v9407, 0
    %v9782 = vsel %vm5761, %v9409, 0
    %v9784 = vsel %vm5761, %v9411, 0
    %v9786 = vsel %vm5761, %v9413, 0
    %v9788 = vsel %vm5761, %v9415, 0
    %v9790 = vsel %vm5761, %v9417, 0
    %v9792 = vsel %vm5761, %v9419, 0
    %v9794 = vsel %vm5761, %v9421, 0
    %v9796 = vsel %vm5761, %v9423, 0
    %v9798 = vsel %vm5761, %v9425, 0
    %v9800 = vsel %vm5761, %v9427, 0
    %v9802 = vsel %vm5761, %v9429, 0
    %v9804 = vsel %vm5761, %v9431, 0
    %v9806 = vsel %vm5761, %v9433, 0
    %v9808 = vsel %vm5761, %v9435, 0
    %v9810 = vsel %vm5761, %v9437, 0
    %v9812 = vsel %vm5761, %v9439, 0
    %v9814 = vsel %vm5761, %v9441, 0
    %v9816 = vsel %vm5761, %v9443, 0
    %v9818 = vsel %vm5761, %v9445, 0
    %v9820 = vsel %vm5761, %v9447, 0
    %v9822 = vsel %vm5761, %v9449, 0
    %v9824 = vsel %vm5761, %v9451, 0
    %v9826 = vsel %vm5761, %v9453, 0
    %v9828 = vsel %vm5761, %v9455, 0
    %v9830 = vsel %vm5761, %v9457, 0
    %v9832 = vsel %vm5761, %v9459, 0
    %v9834 = vsel %vm5761, %v9461, 0
    %v9836 = vsel %vm5761, %v9463, 0
    %v9838 = vsel %vm5761, %v9465, 0
    %v9840 = vsel %vm5761, %v9467, 0
    %v9842 = vsel %vm5761, %v9469, 0
    %v9844 = vsel %vm5761, %v9471, 0
    %v9846 = vsel %vm5761, %v9473, 0
    %v9848 = vsel %vm5761, %v9475, 0
    %v9850 = vsel %vm5761, %v9477, 0
    %v9852 = vsel %vm5761, %v9479, 0
    %v9854 = vsel %vm5761, %v9481, 0
    %v9856 = vsel %vm5761, %v9483, 0
    %v9858 = vsel %vm5761, %v9485, 0
    %v9860 = vsel %vm5761, %v9487, 0
    %v9862 = vsel %vm5761, %v9489, 0
    %v9864 = vsel %vm5761, %v9491, 0
    %v9866 = vsel %vm5761, %v9493, 0
    %v9868 = vsel %vm5761, %v9495, 0
    %9870 = vmatprep.subr.mxu0 0.0
    %9871 = vmatpush1.msra.mxu0 %v9703
    %9872 = vmatprep.subr.mxu0 0.0
    %9873 = vmatpush1.msra.mxu0 %v9702
    %9874 = vmatprep.subr.mxu0 0.0
    %9875 = vmatpush1.msra.mxu0 %v9701
    %9876 = vmatprep.subr.mxu0 0.0
    %9877 = vmatpush1.msra.mxu0 %v9700
    %9878 = vmatprep.subr.mxu0 0.0
    %9879 = vmatpush1.msra.mxu0 %v9699
    %9880 = vmatprep.subr.mxu0 0.0
    %9881 = vmatpush1.msra.mxu0 %v9698
    %9882 = vmatprep.subr.mxu0 0.0
    %9883 = vmatpush1.msra.mxu0 %v9697
    %9884 = vmatprep.subr.mxu0 0.0
    %9885 = vmatpush1.msra.mxu0 %v9696
    %9886 = vmatprep.subr.mxu0 0.0
    %9887 = vmatpush1.msra.mxu0 %v9695
    %9888 = vmatprep.subr.mxu0 0.0
    %9889 = vmatpush1.msra.mxu0 %v9694
    %9890 = vmatprep.subr.mxu0 0.0
    %9891 = vmatpush1.msra.mxu0 %v9693
    %9892 = vmatprep.subr.mxu0 0.0
    %9893 = vmatpush1.msra.mxu0 %v9692
    %9894 = vmatprep.subr.mxu0 0.0
    %9895 = vmatpush1.msra.mxu0 %v9691
    %9896 = vmatprep.subr.mxu0 0.0
    %9897 = vmatpush1.msra.mxu0 %v9690
    %9898 = vmatprep.subr.mxu0 0.0
    %9899 = vmatpush1.msra.mxu0 %v9689
    %9900 = vmatprep.subr.mxu0 0.0
    %9901 = vmatpush1.msra.mxu0 %v9688
    %9902 = vmatprep.subr.mxu0 0.0
    %9903 = vmatpush2.msra.mxu0 %v9719
    %9904 = vmatprep.subr.mxu0 0.0
    %9905 = vmatpush2.msra.mxu0 %v9718
    %9906 = vmatprep.subr.mxu0 0.0
    %9907 = vmatpush2.msra.mxu0 %v9717
    %9908 = vmatprep.subr.mxu0 0.0
    %9909 = vmatpush2.msra.mxu0 %v9716
    %9910 = vmatprep.subr.mxu0 0.0
    %9911 = vmatpush2.msra.mxu0 %v9715
    %9912 = vmatprep.subr.mxu0 0.0
    %9913 = vmatpush2.msra.mxu0 %v9714
    %9914 = vmatprep.subr.mxu0 0.0
    %9915 = vmatpush2.msra.mxu0 %v9713
    %9916 = vmatprep.subr.mxu0 0.0
    %9917 = vmatpush2.msra.mxu0 %v9712
    %9918 = vmatprep.subr.mxu0 0.0
    %9919 = vmatpush2.msra.mxu0 %v9711
    %9920 = vmatprep.subr.mxu0 0.0
    %9921 = vmatpush2.msra.mxu0 %v9710
    %9922 = vmatprep.subr.mxu0 0.0
    %9923 = vmatpush2.msra.mxu0 %v9709
    %9924 = vmatprep.subr.mxu0 0.0
    %9925 = vmatpush2.msra.mxu0 %v9708
    %9926 = vmatprep.subr.mxu0 0.0
    %9927 = vmatpush2.msra.mxu0 %v9707
    %9928 = vmatprep.subr.mxu0 0.0
    %9929 = vmatpush2.msra.mxu0 %v9706
    %9930 = vmatprep.subr.mxu0 0.0
    %9931 = vmatpush2.msra.mxu0 %v9705
    %9932 = vmatprep.subr.mxu0 0.0
    %9933 = vmatpush2.msra.mxu0 %v9704
    %9934 = vmatprep.mubr.f32.mxu0 %v9624
    %9935 = vmatmul.mubr.f32.gmra.mxu0 %v6020
    %v9936 = vpop.f32.mrf.mxu0
    %v9937 = vadd.f32 0.0, %v9936
    %v9938 = vpop.f32.mrf.mxu0
    %9939 = vmatprep.mubr.f32.mxu0 %v9625
    %9940 = vmatmul.mubr.f32.gmra.mxu0 %v6021
    %v9941 = vpop.f32.mrf.mxu0
    %v9942 = vadd.f32 0.0, %v9941
    %v9943 = vpop.f32.mrf.mxu0
    %9944 = vmatprep.mubr.f32.mxu0 %v9626
    %9945 = vmatmul.mubr.f32.gmra.mxu0 %v6022
    %v9946 = vpop.f32.mrf.mxu0
    %v9947 = vadd.f32 0.0, %v9946
    %v9948 = vpop.f32.mrf.mxu0
    %9949 = vmatprep.mubr.f32.mxu0 %v9627
    %9950 = vmatmul.mubr.f32.gmra.mxu0 %v6023
    %v9951 = vpop.f32.mrf.mxu0
    %v9952 = vadd.f32 0.0, %v9951
    %v9953 = vpop.f32.mrf.mxu0
    %9954 = vmatprep.mubr.f32.mxu0 %v9628
    %9955 = vmatmul.mubr.f32.gmra.mxu0 %v6024
    %v9956 = vpop.f32.mrf.mxu0
    %v9957 = vadd.f32 0.0, %v9956
    %v9958 = vpop.f32.mrf.mxu0
    %9959 = vmatprep.mubr.f32.mxu0 %v9629
    %9960 = vmatmul.mubr.f32.gmra.mxu0 %v6025
    %v9961 = vpop.f32.mrf.mxu0
    %v9962 = vadd.f32 0.0, %v9961
    %v9963 = vpop.f32.mrf.mxu0
    %9964 = vmatprep.mubr.f32.mxu0 %v9630
    %9965 = vmatmul.mubr.f32.gmra.mxu0 %v6026
    %v9966 = vpop.f32.mrf.mxu0
    %v9967 = vadd.f32 0.0, %v9966
    %v9968 = vpop.f32.mrf.mxu0
    %9969 = vmatprep.mubr.f32.mxu0 %v9631
    %9970 = vmatmul.mubr.f32.gmra.mxu0 %v6027
    %v9971 = vpop.f32.mrf.mxu0
    %v9972 = vadd.f32 0.0, %v9971
    %v9973 = vpop.f32.mrf.mxu0
    %9974 = vmatprep.mubr.f32.mxu0 %v9632
    %9975 = vmatmul.mubr.f32.gmra.mxu0 %v6028
    %v9976 = vpop.f32.mrf.mxu0
    %v9977 = vadd.f32 0.0, %v9976
    %v9978 = vpop.f32.mrf.mxu0
    %9979 = vmatprep.mubr.f32.mxu0 %v9633
    %9980 = vmatmul.mubr.f32.gmra.mxu0 %v6029
    %v9981 = vpop.f32.mrf.mxu0
    %v9982 = vadd.f32 0.0, %v9981
    %v9983 = vpop.f32.mrf.mxu0
    %9984 = vmatprep.mubr.f32.mxu0 %v9634
    %9985 = vmatmul.mubr.f32.gmra.mxu0 %v6030
    %v9986 = vpop.f32.mrf.mxu0
    %v9987 = vadd.f32 0.0, %v9986
    %v9988 = vpop.f32.mrf.mxu0
    %9989 = vmatprep.mubr.f32.mxu0 %v9635
    %9990 = vmatmul.mubr.f32.gmra.mxu0 %v6031
    %v9991 = vpop.f32.mrf.mxu0
    %v9992 = vadd.f32 0.0, %v9991
    %v9993 = vpop.f32.mrf.mxu0
    %9994 = vmatprep.mubr.f32.mxu0 %v9636
    %9995 = vmatmul.mubr.f32.gmra.mxu0 %v6032
    %v9996 = vpop.f32.mrf.mxu0
    %v9997 = vadd.f32 0.0, %v9996
    %v9998 = vpop.f32.mrf.mxu0
    %9999 = vmatprep.mubr.f32.mxu0 %v9637
    %10000 = vmatmul.mubr.f32.gmra.mxu0 %v6033
    %v10001 = vpop.f32.mrf.mxu0
    %v10002 = vadd.f32 0.0, %v10001
    %v10003 = vpop.f32.mrf.mxu0
    %10004 = vmatprep.mubr.f32.mxu0 %v9638
    %10005 = vmatmul.mubr.f32.gmra.mxu0 %v6034
    %v10006 = vpop.f32.mrf.mxu0
    %v10007 = vadd.f32 0.0, %v10006
    %v10008 = vpop.f32.mrf.mxu0
    %10009 = vmatprep.mubr.f32.mxu0 %v9639
    %10010 = vmatmul.mubr.f32.gmra.mxu0 %v6035
    %v10011 = vpop.f32.mrf.mxu0
    %v10012 = vadd.f32 0.0, %v10011
    %v10013 = vpop.f32.mrf.mxu0
    %10014 = vmatprep.mubr.f32.mxu0 %v9640
    %10015 = vmatmul.mubr.f32.gmra.mxu0 %v6036
    %v10016 = vpop.f32.mrf.mxu0
    %v10017 = vadd.f32 0.0, %v10016
    %v10018 = vpop.f32.mrf.mxu0
    %10019 = vmatprep.mubr.f32.mxu0 %v9641
    %10020 = vmatmul.mubr.f32.gmra.mxu0 %v6037
    %v10021 = vpop.f32.mrf.mxu0
    %v10022 = vadd.f32 0.0, %v10021
    %v10023 = vpop.f32.mrf.mxu0
    %10024 = vmatprep.mubr.f32.mxu0 %v9642
    %10025 = vmatmul.mubr.f32.gmra.mxu0 %v6038
    %v10026 = vpop.f32.mrf.mxu0
    %v10027 = vadd.f32 0.0, %v10026
    %v10028 = vpop.f32.mrf.mxu0
    %10029 = vmatprep.mubr.f32.mxu0 %v9643
    %10030 = vmatmul.mubr.f32.gmra.mxu0 %v6039
    %v10031 = vpop.f32.mrf.mxu0
    %v10032 = vadd.f32 0.0, %v10031
    %v10033 = vpop.f32.mrf.mxu0
    %10034 = vmatprep.mubr.f32.mxu0 %v9644
    %10035 = vmatmul.mubr.f32.gmra.mxu0 %v6040
    %v10036 = vpop.f32.mrf.mxu0
    %v10037 = vadd.f32 0.0, %v10036
    %v10038 = vpop.f32.mrf.mxu0
    %10039 = vmatprep.mubr.f32.mxu0 %v9645
    %10040 = vmatmul.mubr.f32.gmra.mxu0 %v6041
    %v10041 = vpop.f32.mrf.mxu0
    %v10042 = vadd.f32 0.0, %v10041
    %v10043 = vpop.f32.mrf.mxu0
    %10044 = vmatprep.mubr.f32.mxu0 %v9646
    %10045 = vmatmul.mubr.f32.gmra.mxu0 %v6042
    %v10046 = vpop.f32.mrf.mxu0
    %v10047 = vadd.f32 0.0, %v10046
    %v10048 = vpop.f32.mrf.mxu0
    %10049 = vmatprep.mubr.f32.mxu0 %v9647
    %10050 = vmatmul.mubr.f32.gmra.mxu0 %v6043
    %v10051 = vpop.f32.mrf.mxu0
    %v10052 = vadd.f32 0.0, %v10051
    %v10053 = vpop.f32.mrf.mxu0
    %10054 = vmatprep.mubr.f32.mxu0 %v9648
    %10055 = vmatmul.mubr.f32.gmra.mxu0 %v6044
    %v10056 = vpop.f32.mrf.mxu0
    %v10057 = vadd.f32 0.0, %v10056
    %v10058 = vpop.f32.mrf.mxu0
    %10059 = vmatprep.mubr.f32.mxu0 %v9649
    %10060 = vmatmul.mubr.f32.gmra.mxu0 %v6045
    %v10061 = vpop.f32.mrf.mxu0
    %v10062 = vadd.f32 0.0, %v10061
    %v10063 = vpop.f32.mrf.mxu0
    %10064 = vmatprep.mubr.f32.mxu0 %v9650
    %10065 = vmatmul.mubr.f32.gmra.mxu0 %v6046
    %v10066 = vpop.f32.mrf.mxu0
    %v10067 = vadd.f32 0.0, %v10066
    %v10068 = vpop.f32.mrf.mxu0
    %10069 = vmatprep.mubr.f32.mxu0 %v9651
    %10070 = vmatmul.mubr.f32.gmra.mxu0 %v6047
    %v10071 = vpop.f32.mrf.mxu0
    %v10072 = vadd.f32 0.0, %v10071
    %v10073 = vpop.f32.mrf.mxu0
    %10074 = vmatprep.mubr.f32.mxu0 %v9652
    %10075 = vmatmul.mubr.f32.gmra.mxu0 %v6048
    %v10076 = vpop.f32.mrf.mxu0
    %v10077 = vadd.f32 0.0, %v10076
    %v10078 = vpop.f32.mrf.mxu0
    %10079 = vmatprep.mubr.f32.mxu0 %v9653
    %10080 = vmatmul.mubr.f32.gmra.mxu0 %v6049
    %v10081 = vpop.f32.mrf.mxu0
    %v10082 = vadd.f32 0.0, %v10081
    %v10083 = vpop.f32.mrf.mxu0
    %10084 = vmatprep.mubr.f32.mxu0 %v9654
    %10085 = vmatmul.mubr.f32.gmra.mxu0 %v6050
    %v10086 = vpop.f32.mrf.mxu0
    %v10087 = vadd.f32 0.0, %v10086
    %v10088 = vpop.f32.mrf.mxu0
    %10089 = vmatprep.mubr.f32.mxu0 %v9655
    %10090 = vmatmul.mubr.f32.gmra.mxu0 %v6051
    %v10091 = vpop.f32.mrf.mxu0
    %v10092 = vadd.f32 0.0, %v10091
    %v10093 = vpop.f32.mrf.mxu0
    %10094 = vmatprep.mubr.f32.mxu0 %v9656
    %10095 = vmatmul.mubr.f32.gmra.mxu0 %v6052
    %v10096 = vpop.f32.mrf.mxu0
    %v10097 = vadd.f32 0.0, %v10096
    %v10098 = vpop.f32.mrf.mxu0
    %10099 = vmatprep.mubr.f32.mxu0 %v9657
    %10100 = vmatmul.mubr.f32.gmra.mxu0 %v6053
    %v10101 = vpop.f32.mrf.mxu0
    %v10102 = vadd.f32 0.0, %v10101
    %v10103 = vpop.f32.mrf.mxu0
    %10104 = vmatprep.mubr.f32.mxu0 %v9658
    %10105 = vmatmul.mubr.f32.gmra.mxu0 %v6054
    %v10106 = vpop.f32.mrf.mxu0
    %v10107 = vadd.f32 0.0, %v10106
    %v10108 = vpop.f32.mrf.mxu0
    %10109 = vmatprep.mubr.f32.mxu0 %v9659
    %10110 = vmatmul.mubr.f32.gmra.mxu0 %v6055
    %v10111 = vpop.f32.mrf.mxu0
    %v10112 = vadd.f32 0.0, %v10111
    %v10113 = vpop.f32.mrf.mxu0
    %10114 = vmatprep.mubr.f32.mxu0 %v9660
    %10115 = vmatmul.mubr.f32.gmra.mxu0 %v6056
    %v10116 = vpop.f32.mrf.mxu0
    %v10117 = vadd.f32 0.0, %v10116
    %v10118 = vpop.f32.mrf.mxu0
    %10119 = vmatprep.mubr.f32.mxu0 %v9661
    %10120 = vmatmul.mubr.f32.gmra.mxu0 %v6057
    %v10121 = vpop.f32.mrf.mxu0
    %v10122 = vadd.f32 0.0, %v10121
    %v10123 = vpop.f32.mrf.mxu0
    %10124 = vmatprep.mubr.f32.mxu0 %v9662
    %10125 = vmatmul.mubr.f32.gmra.mxu0 %v6058
    %v10126 = vpop.f32.mrf.mxu0
    %v10127 = vadd.f32 0.0, %v10126
    %v10128 = vpop.f32.mrf.mxu0
    %10129 = vmatprep.mubr.f32.mxu0 %v9663
    %10130 = vmatmul.mubr.f32.gmra.mxu0 %v6059
    %v10131 = vpop.f32.mrf.mxu0
    %v10132 = vadd.f32 0.0, %v10131
    %v10133 = vpop.f32.mrf.mxu0
    %10134 = vmatprep.mubr.f32.mxu0 %v9664
    %10135 = vmatmul.mubr.f32.gmra.mxu0 %v6060
    %v10136 = vpop.f32.mrf.mxu0
    %v10137 = vadd.f32 0.0, %v10136
    %v10138 = vpop.f32.mrf.mxu0
    %10139 = vmatprep.mubr.f32.mxu0 %v9665
    %10140 = vmatmul.mubr.f32.gmra.mxu0 %v6061
    %v10141 = vpop.f32.mrf.mxu0
    %v10142 = vadd.f32 0.0, %v10141
    %v10143 = vpop.f32.mrf.mxu0
    %10144 = vmatprep.mubr.f32.mxu0 %v9666
    %10145 = vmatmul.mubr.f32.gmra.mxu0 %v6062
    %v10146 = vpop.f32.mrf.mxu0
    %v10147 = vadd.f32 0.0, %v10146
    %v10148 = vpop.f32.mrf.mxu0
    %10149 = vmatprep.mubr.f32.mxu0 %v9667
    %10150 = vmatmul.mubr.f32.gmra.mxu0 %v6063
    %v10151 = vpop.f32.mrf.mxu0
    %v10152 = vadd.f32 0.0, %v10151
    %v10153 = vpop.f32.mrf.mxu0
    %10154 = vmatprep.mubr.f32.mxu0 %v9668
    %10155 = vmatmul.mubr.f32.gmra.mxu0 %v6064
    %v10156 = vpop.f32.mrf.mxu0
    %v10157 = vadd.f32 0.0, %v10156
    %v10158 = vpop.f32.mrf.mxu0
    %10159 = vmatprep.mubr.f32.mxu0 %v9669
    %10160 = vmatmul.mubr.f32.gmra.mxu0 %v6065
    %v10161 = vpop.f32.mrf.mxu0
    %v10162 = vadd.f32 0.0, %v10161
    %v10163 = vpop.f32.mrf.mxu0
    %10164 = vmatprep.mubr.f32.mxu0 %v9670
    %10165 = vmatmul.mubr.f32.gmra.mxu0 %v6066
    %v10166 = vpop.f32.mrf.mxu0
    %v10167 = vadd.f32 0.0, %v10166
    %v10168 = vpop.f32.mrf.mxu0
    %10169 = vmatprep.mubr.f32.mxu0 %v9671
    %10170 = vmatmul.mubr.f32.gmra.mxu0 %v6067
    %v10171 = vpop.f32.mrf.mxu0
    %v10172 = vadd.f32 0.0, %v10171
    %v10173 = vpop.f32.mrf.mxu0
    %10174 = vmatprep.mubr.f32.mxu0 %v9672
    %10175 = vmatmul.mubr.f32.gmra.mxu0 %v6068
    %v10176 = vpop.f32.mrf.mxu0
    %v10177 = vadd.f32 0.0, %v10176
    %v10178 = vpop.f32.mrf.mxu0
    %10179 = vmatprep.mubr.f32.mxu0 %v9673
    %10180 = vmatmul.mubr.f32.gmra.mxu0 %v6069
    %v10181 = vpop.f32.mrf.mxu0
    %v10182 = vadd.f32 0.0, %v10181
    %v10183 = vpop.f32.mrf.mxu0
    %10184 = vmatprep.mubr.f32.mxu0 %v9674
    %10185 = vmatmul.mubr.f32.gmra.mxu0 %v6070
    %v10186 = vpop.f32.mrf.mxu0
    %v10187 = vadd.f32 0.0, %v10186
    %v10188 = vpop.f32.mrf.mxu0
    %10189 = vmatprep.mubr.f32.mxu0 %v9675
    %10190 = vmatmul.mubr.f32.gmra.mxu0 %v6071
    %v10191 = vpop.f32.mrf.mxu0
    %v10192 = vadd.f32 0.0, %v10191
    %v10193 = vpop.f32.mrf.mxu0
    %10194 = vmatprep.mubr.f32.mxu0 %v9676
    %10195 = vmatmul.mubr.f32.gmra.mxu0 %v6072
    %v10196 = vpop.f32.mrf.mxu0
    %v10197 = vadd.f32 0.0, %v10196
    %v10198 = vpop.f32.mrf.mxu0
    %10199 = vmatprep.mubr.f32.mxu0 %v9677
    %10200 = vmatmul.mubr.f32.gmra.mxu0 %v6073
    %v10201 = vpop.f32.mrf.mxu0
    %v10202 = vadd.f32 0.0, %v10201
    %v10203 = vpop.f32.mrf.mxu0
    %10204 = vmatprep.mubr.f32.mxu0 %v9678
    %10205 = vmatmul.mubr.f32.gmra.mxu0 %v6074
    %v10206 = vpop.f32.mrf.mxu0
    %v10207 = vadd.f32 0.0, %v10206
    %v10208 = vpop.f32.mrf.mxu0
    %10209 = vmatprep.mubr.f32.mxu0 %v9679
    %10210 = vmatmul.mubr.f32.gmra.mxu0 %v6075
    %v10211 = vpop.f32.mrf.mxu0
    %v10212 = vadd.f32 0.0, %v10211
    %v10213 = vpop.f32.mrf.mxu0
    %10214 = vmatprep.mubr.f32.mxu0 %v9680
    %10215 = vmatmul.mubr.f32.gmra.mxu0 %v6076
    %v10216 = vpop.f32.mrf.mxu0
    %v10217 = vadd.f32 0.0, %v10216
    %v10218 = vpop.f32.mrf.mxu0
    %10219 = vmatprep.mubr.f32.mxu0 %v9681
    %10220 = vmatmul.mubr.f32.gmra.mxu0 %v6077
    %v10221 = vpop.f32.mrf.mxu0
    %v10222 = vadd.f32 0.0, %v10221
    %v10223 = vpop.f32.mrf.mxu0
    %10224 = vmatprep.mubr.f32.mxu0 %v9682
    %10225 = vmatmul.mubr.f32.gmra.mxu0 %v6078
    %v10226 = vpop.f32.mrf.mxu0
    %v10227 = vadd.f32 0.0, %v10226
    %v10228 = vpop.f32.mrf.mxu0
    %10229 = vmatprep.mubr.f32.mxu0 %v9683
    %10230 = vmatmul.mubr.f32.gmra.mxu0 %v6079
    %v10231 = vpop.f32.mrf.mxu0
    %v10232 = vadd.f32 0.0, %v10231
    %v10233 = vpop.f32.mrf.mxu0
    %10234 = vmatprep.mubr.f32.mxu0 %v9684
    %10235 = vmatmul.mubr.f32.gmra.mxu0 %v6080
    %v10236 = vpop.f32.mrf.mxu0
    %v10237 = vadd.f32 0.0, %v10236
    %v10238 = vpop.f32.mrf.mxu0
    %10239 = vmatprep.mubr.f32.mxu0 %v9685
    %10240 = vmatmul.mubr.f32.gmra.mxu0 %v6081
    %v10241 = vpop.f32.mrf.mxu0
    %v10242 = vadd.f32 0.0, %v10241
    %v10243 = vpop.f32.mrf.mxu0
    %10244 = vmatprep.mubr.f32.mxu0 %v9686
    %10245 = vmatmul.mubr.f32.gmra.mxu0 %v6082
    %v10246 = vpop.f32.mrf.mxu0
    %v10247 = vadd.f32 0.0, %v10246
    %v10248 = vpop.f32.mrf.mxu0
    %10249 = vmatprep.mubr.f32.mxu0 %v9687
    %10250 = vmatmul.mubr.f32.gmra.mxu0 %v6083
    %v10251 = vpop.f32.mrf.mxu0
    %v10252 = vadd.f32 0.0, %v10251
    %v10253 = vpop.f32.mrf.mxu0
    %10254 = vdwg.mxu0
    %10255 = vmatprep.subr.mxu0 0.0
    %10256 = vmatpush1.msra.mxu0 %v9735
    %10257 = vmatprep.subr.mxu0 0.0
    %10258 = vmatpush1.msra.mxu0 %v9734
    %10259 = vmatprep.subr.mxu0 0.0
    %10260 = vmatpush1.msra.mxu0 %v9733
    %10261 = vmatprep.subr.mxu0 0.0
    %10262 = vmatpush1.msra.mxu0 %v9732
    %10263 = vmatprep.subr.mxu0 0.0
    %10264 = vmatpush1.msra.mxu0 %v9731
    %10265 = vmatprep.subr.mxu0 0.0
    %10266 = vmatpush1.msra.mxu0 %v9730
    %10267 = vmatprep.subr.mxu0 0.0
    %10268 = vmatpush1.msra.mxu0 %v9729
    %10269 = vmatprep.subr.mxu0 0.0
    %10270 = vmatpush1.msra.mxu0 %v9728
    %10271 = vmatprep.subr.mxu0 0.0
    %10272 = vmatpush1.msra.mxu0 %v9727
    %10273 = vmatprep.subr.mxu0 0.0
    %10274 = vmatpush1.msra.mxu0 %v9726
    %10275 = vmatprep.subr.mxu0 0.0
    %10276 = vmatpush1.msra.mxu0 %v9725
    %10277 = vmatprep.subr.mxu0 0.0
    %10278 = vmatpush1.msra.mxu0 %v9724
    %10279 = vmatprep.subr.mxu0 0.0
    %10280 = vmatpush1.msra.mxu0 %v9723
    %10281 = vmatprep.subr.mxu0 0.0
    %10282 = vmatpush1.msra.mxu0 %v9722
    %10283 = vmatprep.subr.mxu0 0.0
    %10284 = vmatpush1.msra.mxu0 %v9721
    %10285 = vmatprep.subr.mxu0 0.0
    %10286 = vmatpush1.msra.mxu0 %v9720
    %10287 = vmatprep.subr.mxu0 0.0
    %10288 = vmatpush2.msra.mxu0 0.0
    %10289 = vmatprep.subr.mxu0 0.0
    %10290 = vmatpush2.msra.mxu0 0.0
    %10291 = vmatprep.subr.mxu0 0.0
    %10292 = vmatpush2.msra.mxu0 0.0
    %10293 = vmatprep.subr.mxu0 0.0
    %10294 = vmatpush2.msra.mxu0 0.0
    %10295 = vmatprep.subr.mxu0 0.0
    %10296 = vmatpush2.msra.mxu0 0.0
    %10297 = vmatprep.subr.mxu0 0.0
    %10298 = vmatpush2.msra.mxu0 0.0
    %10299 = vmatprep.subr.mxu0 0.0
    %10300 = vmatpush2.msra.mxu0 0.0
    %10301 = vmatprep.subr.mxu0 0.0
    %10302 = vmatpush2.msra.mxu0 0.0
    %10303 = vmatprep.subr.mxu0 0.0
    %10304 = vmatpush2.msra.mxu0 0.0
    %10305 = vmatprep.subr.mxu0 0.0
    %10306 = vmatpush2.msra.mxu0 0.0
    %10307 = vmatprep.subr.mxu0 0.0
    %10308 = vmatpush2.msra.mxu0 %v9741
    %10309 = vmatprep.subr.mxu0 0.0
    %10310 = vmatpush2.msra.mxu0 %v9740
    %10311 = vmatprep.subr.mxu0 0.0
    %10312 = vmatpush2.msra.mxu0 %v9739
    %10313 = vmatprep.subr.mxu0 0.0
    %10314 = vmatpush2.msra.mxu0 %v9738
    %10315 = vmatprep.subr.mxu0 0.0
    %10316 = vmatpush2.msra.mxu0 %v9737
    %10317 = vmatprep.subr.mxu0 0.0
    %10318 = vmatpush2.msra.mxu0 %v9736
    %10319 = vmatprep.mubr.f32.mxu0 %v9742
    %10320 = vmatmul.mubr.f32.gmra.mxu0 %v9368
    %v10321 = vpop.f32.mrf.mxu0
    %v10322 = vadd.f32 %v9937, %v10321
    %v10323 = vpop.f32.mrf.mxu0
    %10324 = vmatprep.mubr.f32.mxu0 %v9744
    %10325 = vmatmul.mubr.f32.gmra.mxu0 %v9370
    %v10326 = vpop.f32.mrf.mxu0
    %v10327 = vadd.f32 %v9942, %v10326
    %v10328 = vpop.f32.mrf.mxu0
    %10329 = vmatprep.mubr.f32.mxu0 %v9746
    %10330 = vmatmul.mubr.f32.gmra.mxu0 %v9372
    %v10331 = vpop.f32.mrf.mxu0
    %v10332 = vadd.f32 %v9947, %v10331
    %v10333 = vpop.f32.mrf.mxu0
    %10334 = vmatprep.mubr.f32.mxu0 %v9748
    %10335 = vmatmul.mubr.f32.gmra.mxu0 %v9374
    %v10336 = vpop.f32.mrf.mxu0
    %v10337 = vadd.f32 %v9952, %v10336
    %v10338 = vpop.f32.mrf.mxu0
    %10339 = vmatprep.mubr.f32.mxu0 %v9750
    %10340 = vmatmul.mubr.f32.gmra.mxu0 %v9376
    %v10341 = vpop.f32.mrf.mxu0
    %v10342 = vadd.f32 %v9957, %v10341
    %v10343 = vpop.f32.mrf.mxu0
    %10344 = vmatprep.mubr.f32.mxu0 %v9752
    %10345 = vmatmul.mubr.f32.gmra.mxu0 %v9378
    %v10346 = vpop.f32.mrf.mxu0
    %v10347 = vadd.f32 %v9962, %v10346
    %v10348 = vpop.f32.mrf.mxu0
    %10349 = vmatprep.mubr.f32.mxu0 %v9754
    %10350 = vmatmul.mubr.f32.gmra.mxu0 %v9380
    %v10351 = vpop.f32.mrf.mxu0
    %v10352 = vadd.f32 %v9967, %v10351
    %v10353 = vpop.f32.mrf.mxu0
    %10354 = vmatprep.mubr.f32.mxu0 %v9756
    %10355 = vmatmul.mubr.f32.gmra.mxu0 %v9382
    %v10356 = vpop.f32.mrf.mxu0
    %v10357 = vadd.f32 %v9972, %v10356
    %v10358 = vpop.f32.mrf.mxu0
    %10359 = vmatprep.mubr.f32.mxu0 %v9758
    %10360 = vmatmul.mubr.f32.gmra.mxu0 %v9384
    %v10361 = vpop.f32.mrf.mxu0
    %v10362 = vadd.f32 %v9977, %v10361
    %v10363 = vpop.f32.mrf.mxu0
    %10364 = vmatprep.mubr.f32.mxu0 %v9760
    %10365 = vmatmul.mubr.f32.gmra.mxu0 %v9386
    %v10366 = vpop.f32.mrf.mxu0
    %v10367 = vadd.f32 %v9982, %v10366
    %v10368 = vpop.f32.mrf.mxu0
    %10369 = vmatprep.mubr.f32.mxu0 %v9762
    %10370 = vmatmul.mubr.f32.gmra.mxu0 %v9388
    %v10371 = vpop.f32.mrf.mxu0
    %v10372 = vadd.f32 %v9987, %v10371
    %v10373 = vpop.f32.mrf.mxu0
    %10374 = vmatprep.mubr.f32.mxu0 %v9764
    %10375 = vmatmul.mubr.f32.gmra.mxu0 %v9390
    %v10376 = vpop.f32.mrf.mxu0
    %v10377 = vadd.f32 %v9992, %v10376
    %v10378 = vpop.f32.mrf.mxu0
    %10379 = vmatprep.mubr.f32.mxu0 %v9766
    %10380 = vmatmul.mubr.f32.gmra.mxu0 %v9392
    %v10381 = vpop.f32.mrf.mxu0
    %v10382 = vadd.f32 %v9997, %v10381
    %v10383 = vpop.f32.mrf.mxu0
    %10384 = vmatprep.mubr.f32.mxu0 %v9768
    %10385 = vmatmul.mubr.f32.gmra.mxu0 %v9394
    %v10386 = vpop.f32.mrf.mxu0
    %v10387 = vadd.f32 %v10002, %v10386
    %v10388 = vpop.f32.mrf.mxu0
    %10389 = vmatprep.mubr.f32.mxu0 %v9770
    %10390 = vmatmul.mubr.f32.gmra.mxu0 %v9396
    %v10391 = vpop.f32.mrf.mxu0
    %v10392 = vadd.f32 %v10007, %v10391
    %v10393 = vpop.f32.mrf.mxu0
    %10394 = vmatprep.mubr.f32.mxu0 %v9772
    %10395 = vmatmul.mubr.f32.gmra.mxu0 %v9398
    %v10396 = vpop.f32.mrf.mxu0
    %v10397 = vadd.f32 %v10012, %v10396
    %v10398 = vpop.f32.mrf.mxu0
    %10399 = vmatprep.mubr.f32.mxu0 %v9774
    %10400 = vmatmul.mubr.f32.gmra.mxu0 %v9400
    %v10401 = vpop.f32.mrf.mxu0
    %v10402 = vadd.f32 %v10017, %v10401
    %v10403 = vpop.f32.mrf.mxu0
    %10404 = vmatprep.mubr.f32.mxu0 %v9776
    %10405 = vmatmul.mubr.f32.gmra.mxu0 %v9402
    %v10406 = vpop.f32.mrf.mxu0
    %v10407 = vadd.f32 %v10022, %v10406
    %v10408 = vpop.f32.mrf.mxu0
    %10409 = vmatprep.mubr.f32.mxu0 %v9778
    %10410 = vmatmul.mubr.f32.gmra.mxu0 %v9404
    %v10411 = vpop.f32.mrf.mxu0
    %v10412 = vadd.f32 %v10027, %v10411
    %v10413 = vpop.f32.mrf.mxu0
    %10414 = vmatprep.mubr.f32.mxu0 %v9780
    %10415 = vmatmul.mubr.f32.gmra.mxu0 %v9406
    %v10416 = vpop.f32.mrf.mxu0
    %v10417 = vadd.f32 %v10032, %v10416
    %v10418 = vpop.f32.mrf.mxu0
    %10419 = vmatprep.mubr.f32.mxu0 %v9782
    %10420 = vmatmul.mubr.f32.gmra.mxu0 %v9408
    %v10421 = vpop.f32.mrf.mxu0
    %v10422 = vadd.f32 %v10037, %v10421
    %v10423 = vpop.f32.mrf.mxu0
    %10424 = vmatprep.mubr.f32.mxu0 %v9784
    %10425 = vmatmul.mubr.f32.gmra.mxu0 %v9410
    %v10426 = vpop.f32.mrf.mxu0
    %v10427 = vadd.f32 %v10042, %v10426
    %v10428 = vpop.f32.mrf.mxu0
    %10429 = vmatprep.mubr.f32.mxu0 %v9786
    %10430 = vmatmul.mubr.f32.gmra.mxu0 %v9412
    %v10431 = vpop.f32.mrf.mxu0
    %v10432 = vadd.f32 %v10047, %v10431
    %v10433 = vpop.f32.mrf.mxu0
    %10434 = vmatprep.mubr.f32.mxu0 %v9788
    %10435 = vmatmul.mubr.f32.gmra.mxu0 %v9414
    %v10436 = vpop.f32.mrf.mxu0
    %v10437 = vadd.f32 %v10052, %v10436
    %v10438 = vpop.f32.mrf.mxu0
    %10439 = vmatprep.mubr.f32.mxu0 %v9790
    %10440 = vmatmul.mubr.f32.gmra.mxu0 %v9416
    %v10441 = vpop.f32.mrf.mxu0
    %v10442 = vadd.f32 %v10057, %v10441
    %v10443 = vpop.f32.mrf.mxu0
    %10444 = vmatprep.mubr.f32.mxu0 %v9792
    %10445 = vmatmul.mubr.f32.gmra.mxu0 %v9418
    %v10446 = vpop.f32.mrf.mxu0
    %v10447 = vadd.f32 %v10062, %v10446
    %v10448 = vpop.f32.mrf.mxu0
    %10449 = vmatprep.mubr.f32.mxu0 %v9794
    %10450 = vmatmul.mubr.f32.gmra.mxu0 %v9420
    %v10451 = vpop.f32.mrf.mxu0
    %v10452 = vadd.f32 %v10067, %v10451
    %v10453 = vpop.f32.mrf.mxu0
    %10454 = vmatprep.mubr.f32.mxu0 %v9796
    %10455 = vmatmul.mubr.f32.gmra.mxu0 %v9422
    %v10456 = vpop.f32.mrf.mxu0
    %v10457 = vadd.f32 %v10072, %v10456
    %v10458 = vpop.f32.mrf.mxu0
    %10459 = vmatprep.mubr.f32.mxu0 %v9798
    %10460 = vmatmul.mubr.f32.gmra.mxu0 %v9424
    %v10461 = vpop.f32.mrf.mxu0
    %v10462 = vadd.f32 %v10077, %v10461
    %v10463 = vpop.f32.mrf.mxu0
    %10464 = vmatprep.mubr.f32.mxu0 %v9800
    %10465 = vmatmul.mubr.f32.gmra.mxu0 %v9426
    %v10466 = vpop.f32.mrf.mxu0
    %v10467 = vadd.f32 %v10082, %v10466
    %v10468 = vpop.f32.mrf.mxu0
    %10469 = vmatprep.mubr.f32.mxu0 %v9802
    %10470 = vmatmul.mubr.f32.gmra.mxu0 %v9428
    %v10471 = vpop.f32.mrf.mxu0
    %v10472 = vadd.f32 %v10087, %v10471
    %v10473 = vpop.f32.mrf.mxu0
    %10474 = vmatprep.mubr.f32.mxu0 %v9804
    %10475 = vmatmul.mubr.f32.gmra.mxu0 %v9430
    %v10476 = vpop.f32.mrf.mxu0
    %v10477 = vadd.f32 %v10092, %v10476
    %v10478 = vpop.f32.mrf.mxu0
    %10479 = vmatprep.mubr.f32.mxu0 %v9806
    %10480 = vmatmul.mubr.f32.gmra.mxu0 %v9432
    %v10481 = vpop.f32.mrf.mxu0
    %v10482 = vadd.f32 %v10097, %v10481
    %v10483 = vpop.f32.mrf.mxu0
    %10484 = vmatprep.mubr.f32.mxu0 %v9808
    %10485 = vmatmul.mubr.f32.gmra.mxu0 %v9434
    %v10486 = vpop.f32.mrf.mxu0
    %v10487 = vadd.f32 %v10102, %v10486
    %v10488 = vpop.f32.mrf.mxu0
    %10489 = vmatprep.mubr.f32.mxu0 %v9810
    %10490 = vmatmul.mubr.f32.gmra.mxu0 %v9436
    %v10491 = vpop.f32.mrf.mxu0
    %v10492 = vadd.f32 %v10107, %v10491
    %v10493 = vpop.f32.mrf.mxu0
    %10494 = vmatprep.mubr.f32.mxu0 %v9812
    %10495 = vmatmul.mubr.f32.gmra.mxu0 %v9438
    %v10496 = vpop.f32.mrf.mxu0
    %v10497 = vadd.f32 %v10112, %v10496
    %v10498 = vpop.f32.mrf.mxu0
    %10499 = vmatprep.mubr.f32.mxu0 %v9814
    %10500 = vmatmul.mubr.f32.gmra.mxu0 %v9440
    %v10501 = vpop.f32.mrf.mxu0
    %v10502 = vadd.f32 %v10117, %v10501
    %v10503 = vpop.f32.mrf.mxu0
    %10504 = vmatprep.mubr.f32.mxu0 %v9816
    %10505 = vmatmul.mubr.f32.gmra.mxu0 %v9442
    %v10506 = vpop.f32.mrf.mxu0
    %v10507 = vadd.f32 %v10122, %v10506
    %v10508 = vpop.f32.mrf.mxu0
    %10509 = vmatprep.mubr.f32.mxu0 %v9818
    %10510 = vmatmul.mubr.f32.gmra.mxu0 %v9444
    %v10511 = vpop.f32.mrf.mxu0
    %v10512 = vadd.f32 %v10127, %v10511
    %v10513 = vpop.f32.mrf.mxu0
    %10514 = vmatprep.mubr.f32.mxu0 %v9820
    %10515 = vmatmul.mubr.f32.gmra.mxu0 %v9446
    %v10516 = vpop.f32.mrf.mxu0
    %v10517 = vadd.f32 %v10132, %v10516
    %v10518 = vpop.f32.mrf.mxu0
    %10519 = vmatprep.mubr.f32.mxu0 %v9822
    %10520 = vmatmul.mubr.f32.gmra.mxu0 %v9448
    %v10521 = vpop.f32.mrf.mxu0
    %v10522 = vadd.f32 %v10137, %v10521
    %v10523 = vpop.f32.mrf.mxu0
    %10524 = vmatprep.mubr.f32.mxu0 %v9824
    %10525 = vmatmul.mubr.f32.gmra.mxu0 %v9450
    %v10526 = vpop.f32.mrf.mxu0
    %v10527 = vadd.f32 %v10142, %v10526
    %v10528 = vpop.f32.mrf.mxu0
    %10529 = vmatprep.mubr.f32.mxu0 %v9826
    %10530 = vmatmul.mubr.f32.gmra.mxu0 %v9452
    %v10531 = vpop.f32.mrf.mxu0
    %v10532 = vadd.f32 %v10147, %v10531
    %v10533 = vpop.f32.mrf.mxu0
    %10534 = vmatprep.mubr.f32.mxu0 %v9828
    %10535 = vmatmul.mubr.f32.gmra.mxu0 %v9454
    %v10536 = vpop.f32.mrf.mxu0
    %v10537 = vadd.f32 %v10152, %v10536
    %v10538 = vpop.f32.mrf.mxu0
    %10539 = vmatprep.mubr.f32.mxu0 %v9830
    %10540 = vmatmul.mubr.f32.gmra.mxu0 %v9456
    %v10541 = vpop.f32.mrf.mxu0
    %v10542 = vadd.f32 %v10157, %v10541
    %v10543 = vpop.f32.mrf.mxu0
    %10544 = vmatprep.mubr.f32.mxu0 %v9832
    %10545 = vmatmul.mubr.f32.gmra.mxu0 %v9458
    %v10546 = vpop.f32.mrf.mxu0
    %v10547 = vadd.f32 %v10162, %v10546
    %v10548 = vpop.f32.mrf.mxu0
    %10549 = vmatprep.mubr.f32.mxu0 %v9834
    %10550 = vmatmul.mubr.f32.gmra.mxu0 %v9460
    %v10551 = vpop.f32.mrf.mxu0
    %v10552 = vadd.f32 %v10167, %v10551
    %v10553 = vpop.f32.mrf.mxu0
    %10554 = vmatprep.mubr.f32.mxu0 %v9836
    %10555 = vmatmul.mubr.f32.gmra.mxu0 %v9462
    %v10556 = vpop.f32.mrf.mxu0
    %v10557 = vadd.f32 %v10172, %v10556
    %v10558 = vpop.f32.mrf.mxu0
    %10559 = vmatprep.mubr.f32.mxu0 %v9838
    %10560 = vmatmul.mubr.f32.gmra.mxu0 %v9464
    %v10561 = vpop.f32.mrf.mxu0
    %v10562 = vadd.f32 %v10177, %v10561
    %v10563 = vpop.f32.mrf.mxu0
    %10564 = vmatprep.mubr.f32.mxu0 %v9840
    %10565 = vmatmul.mubr.f32.gmra.mxu0 %v9466
    %v10566 = vpop.f32.mrf.mxu0
    %v10567 = vadd.f32 %v10182, %v10566
    %v10568 = vpop.f32.mrf.mxu0
    %10569 = vmatprep.mubr.f32.mxu0 %v9842
    %10570 = vmatmul.mubr.f32.gmra.mxu0 %v9468
    %v10571 = vpop.f32.mrf.mxu0
    %v10572 = vadd.f32 %v10187, %v10571
    %v10573 = vpop.f32.mrf.mxu0
    %10574 = vmatprep.mubr.f32.mxu0 %v9844
    %10575 = vmatmul.mubr.f32.gmra.mxu0 %v9470
    %v10576 = vpop.f32.mrf.mxu0
    %v10577 = vadd.f32 %v10192, %v10576
    %v10578 = vpop.f32.mrf.mxu0
    %10579 = vmatprep.mubr.f32.mxu0 %v9846
    %10580 = vmatmul.mubr.f32.gmra.mxu0 %v9472
    %v10581 = vpop.f32.mrf.mxu0
    %v10582 = vadd.f32 %v10197, %v10581
    %v10583 = vpop.f32.mrf.mxu0
    %10584 = vmatprep.mubr.f32.mxu0 %v9848
    %10585 = vmatmul.mubr.f32.gmra.mxu0 %v9474
    %v10586 = vpop.f32.mrf.mxu0
    %v10587 = vadd.f32 %v10202, %v10586
    %v10588 = vpop.f32.mrf.mxu0
    %10589 = vmatprep.mubr.f32.mxu0 %v9850
    %10590 = vmatmul.mubr.f32.gmra.mxu0 %v9476
    %v10591 = vpop.f32.mrf.mxu0
    %v10592 = vadd.f32 %v10207, %v10591
    %v10593 = vpop.f32.mrf.mxu0
    %10594 = vmatprep.mubr.f32.mxu0 %v9852
    %10595 = vmatmul.mubr.f32.gmra.mxu0 %v9478
    %v10596 = vpop.f32.mrf.mxu0
    %v10597 = vadd.f32 %v10212, %v10596
    %v10598 = vpop.f32.mrf.mxu0
    %10599 = vmatprep.mubr.f32.mxu0 %v9854
    %10600 = vmatmul.mubr.f32.gmra.mxu0 %v9480
    %v10601 = vpop.f32.mrf.mxu0
    %v10602 = vadd.f32 %v10217, %v10601
    %v10603 = vpop.f32.mrf.mxu0
    %10604 = vmatprep.mubr.f32.mxu0 %v9856
    %10605 = vmatmul.mubr.f32.gmra.mxu0 %v9482
    %v10606 = vpop.f32.mrf.mxu0
    %v10607 = vadd.f32 %v10222, %v10606
    %v10608 = vpop.f32.mrf.mxu0
    %10609 = vmatprep.mubr.f32.mxu0 %v9858
    %10610 = vmatmul.mubr.f32.gmra.mxu0 %v9484
    %v10611 = vpop.f32.mrf.mxu0
    %v10612 = vadd.f32 %v10227, %v10611
    %v10613 = vpop.f32.mrf.mxu0
    %10614 = vmatprep.mubr.f32.mxu0 %v9860
    %10615 = vmatmul.mubr.f32.gmra.mxu0 %v9486
    %v10616 = vpop.f32.mrf.mxu0
    %v10617 = vadd.f32 %v10232, %v10616
    %v10618 = vpop.f32.mrf.mxu0
    %10619 = vmatprep.mubr.f32.mxu0 %v9862
    %10620 = vmatmul.mubr.f32.gmra.mxu0 %v9488
    %v10621 = vpop.f32.mrf.mxu0
    %v10622 = vadd.f32 %v10237, %v10621
    %v10623 = vpop.f32.mrf.mxu0
    %10624 = vmatprep.mubr.f32.mxu0 %v9864
    %10625 = vmatmul.mubr.f32.gmra.mxu0 %v9490
    %v10626 = vpop.f32.mrf.mxu0
    %v10627 = vadd.f32 %v10242, %v10626
    %v10628 = vpop.f32.mrf.mxu0
    %10629 = vmatprep.mubr.f32.mxu0 %v9866
    %10630 = vmatmul.mubr.f32.gmra.mxu0 %v9492
    %v10631 = vpop.f32.mrf.mxu0
    %v10632 = vadd.f32 %v10247, %v10631
    %v10633 = vpop.f32.mrf.mxu0
    %10634 = vmatprep.mubr.f32.mxu0 %v9868
    %10635 = vmatmul.mubr.f32.gmra.mxu0 %v9494
    %v10636 = vpop.f32.mrf.mxu0
    %v10637 = vadd.f32 %v10252, %v10636
    %v10638 = vpop.f32.mrf.mxu0
    %10639 = vdwg.mxu0
    %v10640 = vmax.f32 %v10322, 0.0
    %v10641 = vmax.f32 %v10327, 0.0
    %v10642 = vmax.f32 %v10332, 0.0
    %v10643 = vmax.f32 %v10337, 0.0
    %v10644 = vmax.f32 %v10342, 0.0
    %v10645 = vmax.f32 %v10347, 0.0
    %v10646 = vmax.f32 %v10352, 0.0
    %v10647 = vmax.f32 %v10357, 0.0
    %v10648 = vmax.f32 %v10362, 0.0
    %v10649 = vmax.f32 %v10367, 0.0
    %v10650 = vmax.f32 %v10372, 0.0
    %v10651 = vmax.f32 %v10377, 0.0
    %v10652 = vmax.f32 %v10382, 0.0
    %v10653 = vmax.f32 %v10387, 0.0
    %v10654 = vmax.f32 %v10392, 0.0
    %v10655 = vmax.f32 %v10397, 0.0
    %v10656 = vmax.f32 %v10402, 0.0
    %v10657 = vmax.f32 %v10407, 0.0
    %v10658 = vmax.f32 %v10412, 0.0
    %v10659 = vmax.f32 %v10417, 0.0
    %v10660 = vmax.f32 %v10422, 0.0
    %v10661 = vmax.f32 %v10427, 0.0
    %v10662 = vmax.f32 %v10432, 0.0
    %v10663 = vmax.f32 %v10437, 0.0
    %v10664 = vmax.f32 %v10442, 0.0
    %v10665 = vmax.f32 %v10447, 0.0
    %v10666 = vmax.f32 %v10452, 0.0
    %v10667 = vmax.f32 %v10457, 0.0
    %v10668 = vmax.f32 %v10462, 0.0
    %v10669 = vmax.f32 %v10467, 0.0
    %v10670 = vmax.f32 %v10472, 0.0
    %v10671 = vmax.f32 %v10477, 0.0
    %v10672 = vmax.f32 %v10482, 0.0
    %v10673 = vmax.f32 %v10487, 0.0
    %v10674 = vmax.f32 %v10492, 0.0
    %v10675 = vmax.f32 %v10497, 0.0
    %v10676 = vmax.f32 %v10502, 0.0
    %v10677 = vmax.f32 %v10507, 0.0
    %v10678 = vmax.f32 %v10512, 0.0
    %v10679 = vmax.f32 %v10517, 0.0
    %v10680 = vmax.f32 %v10522, 0.0
    %v10681 = vmax.f32 %v10527, 0.0
    %v10682 = vmax.f32 %v10532, 0.0
    %v10683 = vmax.f32 %v10537, 0.0
    %v10684 = vmax.f32 %v10542, 0.0
    %v10685 = vmax.f32 %v10547, 0.0
    %v10686 = vmax.f32 %v10552, 0.0
    %v10687 = vmax.f32 %v10557, 0.0
    %v10688 = vmax.f32 %v10562, 0.0
    %v10689 = vmax.f32 %v10567, 0.0
    %v10690 = vmax.f32 %v10572, 0.0
    %v10691 = vmax.f32 %v10577, 0.0
    %v10692 = vmax.f32 %v10582, 0.0
    %v10693 = vmax.f32 %v10587, 0.0
    %v10694 = vmax.f32 %v10592, 0.0
    %v10695 = vmax.f32 %v10597, 0.0
    %v10696 = vmax.f32 %v10602, 0.0
    %v10697 = vmax.f32 %v10607, 0.0
    %v10698 = vmax.f32 %v10612, 0.0
    %v10699 = vmax.f32 %v10617, 0.0
    %v10700 = vmax.f32 %v10622, 0.0
    %v10701 = vmax.f32 %v10627, 0.0
    %v10702 = vmax.f32 %v10632, 0.0
    %v10703 = vmax.f32 %v10637, 0.0
    %v10704 = vadd.f32 %v10640, %v277
    %v10705 = vadd.f32 %v10641, %v278
    %v10706 = vadd.f32 %v10642, %v279
    %v10707 = vadd.f32 %v10643, %v280
    %v10708 = vadd.f32 %v10644, %v281
    %v10709 = vadd.f32 %v10645, %v282
    %v10710 = vadd.f32 %v10646, %v283
    %v10711 = vadd.f32 %v10647, %v284
    %v10712 = vadd.f32 %v10648, %v285
    %v10713 = vadd.f32 %v10649, %v286
    %v10714 = vadd.f32 %v10650, %v287
    %v10715 = vadd.f32 %v10651, %v288
    %v10716 = vadd.f32 %v10652, %v289
    %v10717 = vadd.f32 %v10653, %v290
    %v10718 = vadd.f32 %v10654, %v291
    %v10719 = vadd.f32 %v10655, %v292
    %v10720 = vadd.f32 %v10656, %v293
    %v10721 = vadd.f32 %v10657, %v294
    %v10722 = vadd.f32 %v10658, %v295
    %v10723 = vadd.f32 %v10659, %v296
    %v10724 = vadd.f32 %v10660, %v297
    %v10725 = vadd.f32 %v10661, %v298
    %v10726 = vadd.f32 %v10662, %v299
    %v10727 = vadd.f32 %v10663, %v300
    %v10728 = vadd.f32 %v10664, %v301
    %v10729 = vadd.f32 %v10665, %v302
    %v10730 = vadd.f32 %v10666, %v303
    %v10731 = vadd.f32 %v10667, %v304
    %v10732 = vadd.f32 %v10668, %v305
    %v10733 = vadd.f32 %v10669, %v306
    %v10734 = vadd.f32 %v10670, %v307
    %v10735 = vadd.f32 %v10671, %v308
    %v10736 = vadd.f32 %v10672, %v309
    %v10737 = vadd.f32 %v10673, %v310
    %v10738 = vadd.f32 %v10674, %v311
    %v10739 = vadd.f32 %v10675, %v312
    %v10740 = vadd.f32 %v10676, %v313
    %v10741 = vadd.f32 %v10677, %v314
    %v10742 = vadd.f32 %v10678, %v315
    %v10743 = vadd.f32 %v10679, %v316
    %v10744 = vadd.f32 %v10680, %v317
    %v10745 = vadd.f32 %v10681, %v318
    %v10746 = vadd.f32 %v10682, %v319
    %v10747 = vadd.f32 %v10683, %v320
    %v10748 = vadd.f32 %v10684, %v321
    %v10749 = vadd.f32 %v10685, %v322
    %v10750 = vadd.f32 %v10686, %v323
    %v10751 = vadd.f32 %v10687, %v324
    %v10752 = vadd.f32 %v10688, %v325
    %v10753 = vadd.f32 %v10689, %v326
    %v10754 = vadd.f32 %v10690, %v327
    %v10755 = vadd.f32 %v10691, %v328
    %v10756 = vadd.f32 %v10692, %v329
    %v10757 = vadd.f32 %v10693, %v330
    %v10758 = vadd.f32 %v10694, %v331
    %v10759 = vadd.f32 %v10695, %v332
    %v10760 = vadd.f32 %v10696, %v333
    %v10761 = vadd.f32 %v10697, %v334
    %v10762 = vadd.f32 %v10698, %v335
    %v10763 = vadd.f32 %v10699, %v336
    %v10764 = vadd.f32 %v10700, %v337
    %v10765 = vadd.f32 %v10701, %v338
    %v10766 = vadd.f32 %v10702, %v339
    %v10767 = vadd.f32 %v10703, %v340
    %10768 = vst.msk [vmem:[#allocation5] sm:$0xff] %vm18, %v10704
    %10769 = vst.msk [vmem:[#allocation5 + $0x8] sm:$0xff] %vm18, %v10705
    %10770 = vst.msk [vmem:[#allocation5 + $0x10] sm:$0xff] %vm18, %v10706
    %10771 = vst.msk [vmem:[#allocation5 + $0x18] sm:$0xff] %vm18, %v10707
    %10772 = vst.msk [vmem:[#allocation5 + $0x20] sm:$0xff] %vm18, %v10708
    %10773 = vst.msk [vmem:[#allocation5 + $0x28] sm:$0xff] %vm18, %v10709
    %10774 = vst.msk [vmem:[#allocation5 + $0x30] sm:$0xff] %vm18, %v10710
    %10775 = vst.msk [vmem:[#allocation5 + $0x38] sm:$0xff] %vm18, %v10711
    %10776 = vst.msk [vmem:[#allocation5 + $0x40] sm:$0xff] %vm18, %v10712
    %10777 = vst.msk [vmem:[#allocation5 + $0x48] sm:$0xff] %vm18, %v10713
    %10778 = vst.msk [vmem:[#allocation5 + $0x50] sm:$0xff] %vm18, %v10714
    %10779 = vst.msk [vmem:[#allocation5 + $0x58] sm:$0xff] %vm18, %v10715
    %10780 = vst.msk [vmem:[#allocation5 + $0x60] sm:$0xff] %vm18, %v10716
    %10781 = vst.msk [vmem:[#allocation5 + $0x68] sm:$0xff] %vm18, %v10717
    %10782 = vst.msk [vmem:[#allocation5 + $0x70] sm:$0xff] %vm18, %v10718
    %10783 = vst.msk [vmem:[#allocation5 + $0x78] sm:$0xff] %vm18, %v10719
    %10784 = vst.msk [vmem:[#allocation5 + $0x80] sm:$0xff] %vm18, %v10720
    %10785 = vst.msk [vmem:[#allocation5 + $0x88] sm:$0xff] %vm18, %v10721
    %10786 = vst.msk [vmem:[#allocation5 + $0x90] sm:$0xff] %vm18, %v10722
    %10787 = vst.msk [vmem:[#allocation5 + $0x98] sm:$0xff] %vm18, %v10723
    %10788 = vst.msk [vmem:[#allocation5 + $0xa0] sm:$0xff] %vm18, %v10724
    %10789 = vst.msk [vmem:[#allocation5 + $0xa8] sm:$0xff] %vm18, %v10725
    %10790 = vst.msk [vmem:[#allocation5 + $0xb0] sm:$0xff] %vm18, %v10726
    %10791 = vst.msk [vmem:[#allocation5 + $0xb8] sm:$0xff] %vm18, %v10727
    %10792 = vst.msk [vmem:[#allocation5 + $0xc0] sm:$0xff] %vm18, %v10728
    %10793 = vst.msk [vmem:[#allocation5 + $0xc8] sm:$0xff] %vm18, %v10729
    %10794 = vst.msk [vmem:[#allocation5 + $0xd0] sm:$0xff] %vm18, %v10730
    %10795 = vst.msk [vmem:[#allocation5 + $0xd8] sm:$0xff] %vm18, %v10731
    %10796 = vst.msk [vmem:[#allocation5 + $0xe0] sm:$0xff] %vm18, %v10732
    %10797 = vst.msk [vmem:[#allocation5 + $0xe8] sm:$0xff] %vm18, %v10733
    %10798 = vst.msk [vmem:[#allocation5 + $0xf0] sm:$0xff] %vm18, %v10734
    %10799 = vst.msk [vmem:[#allocation5 + $0xf8] sm:$0xff] %vm18, %v10735
    %10800 = vst.msk [vmem:[#allocation5 + $0x100] sm:$0xff] %vm18, %v10736
    %10801 = vst.msk [vmem:[#allocation5 + $0x108] sm:$0xff] %vm18, %v10737
    %10802 = vst.msk [vmem:[#allocation5 + $0x110] sm:$0xff] %vm18, %v10738
    %10803 = vst.msk [vmem:[#allocation5 + $0x118] sm:$0xff] %vm18, %v10739
    %10804 = vst.msk [vmem:[#allocation5 + $0x120] sm:$0xff] %vm18, %v10740
    %10805 = vst.msk [vmem:[#allocation5 + $0x128] sm:$0xff] %vm18, %v10741
    %10806 = vst.msk [vmem:[#allocation5 + $0x130] sm:$0xff] %vm18, %v10742
    %10807 = vst.msk [vmem:[#allocation5 + $0x138] sm:$0xff] %vm18, %v10743
    %10808 = vst.msk [vmem:[#allocation5 + $0x140] sm:$0xff] %vm18, %v10744
    %10809 = vst.msk [vmem:[#allocation5 + $0x148] sm:$0xff] %vm18, %v10745
    %10810 = vst.msk [vmem:[#allocation5 + $0x150] sm:$0xff] %vm18, %v10746
    %10811 = vst.msk [vmem:[#allocation5 + $0x158] sm:$0xff] %vm18, %v10747
    %10812 = vst.msk [vmem:[#allocation5 + $0x160] sm:$0xff] %vm18, %v10748
    %10813 = vst.msk [vmem:[#allocation5 + $0x168] sm:$0xff] %vm18, %v10749
    %10814 = vst.msk [vmem:[#allocation5 + $0x170] sm:$0xff] %vm18, %v10750
    %10815 = vst.msk [vmem:[#allocation5 + $0x178] sm:$0xff] %vm18, %v10751
    %10816 = vst.msk [vmem:[#allocation5 + $0x180] sm:$0xff] %vm18, %v10752
    %10817 = vst.msk [vmem:[#allocation5 + $0x188] sm:$0xff] %vm18, %v10753
    %10818 = vst.msk [vmem:[#allocation5 + $0x190] sm:$0xff] %vm18, %v10754
    %10819 = vst.msk [vmem:[#allocation5 + $0x198] sm:$0xff] %vm18, %v10755
    %10820 = vst.msk [vmem:[#allocation5 + $0x1a0] sm:$0xff] %vm18, %v10756
    %10821 = vst.msk [vmem:[#allocation5 + $0x1a8] sm:$0xff] %vm18, %v10757
    %10822 = vst.msk [vmem:[#allocation5 + $0x1b0] sm:$0xff] %vm18, %v10758
    %10823 = vst.msk [vmem:[#allocation5 + $0x1b8] sm:$0xff] %vm18, %v10759
    %10824 = vst.msk [vmem:[#allocation5 + $0x1c0] sm:$0xff] %vm18, %v10760
    %10825 = vst.msk [vmem:[#allocation5 + $0x1c8] sm:$0xff] %vm18, %v10761
    %10826 = vst.msk [vmem:[#allocation5 + $0x1d0] sm:$0xff] %vm18, %v10762
    %10827 = vst.msk [vmem:[#allocation5 + $0x1d8] sm:$0xff] %vm18, %v10763
    %10828 = vst.msk [vmem:[#allocation5 + $0x1e0] sm:$0xff] %vm18, %v10764
    %10829 = vst.msk [vmem:[#allocation5 + $0x1e8] sm:$0xff] %vm18, %v10765
    %10830 = vst.msk [vmem:[#allocation5 + $0x1f0] sm:$0xff] %vm18, %v10766
    %10831 = vst.msk [vmem:[#allocation5 + $0x1f8] sm:$0xff] %vm18, %v10767
    // Predicated region
    $region18: #{rdb_forward.1} parent=1 // pred_check
      _
    $region19: #{rdb_forward.1} parent=1 // pred_check_branch
      %10833 = sbr.rel (0) target = $region21
    $region20: #{rdb_forward.1} parent=1 // pred_region
      %s10835 = ssub.s32 8192, 8192
      %10836 = vsyncadd [#allocation6], %s10835
      %s10837 = sshll.u32 [#allocation5], 4
      %s10838 = int_to_ptr.vmem [resolvable:$true] %s10837
      %10843 = dma.vmem_to_hbm [thread:$0]  %s10838, 8192, %s4, [#allocation6], 128, 128, 8
    $region21: #{rdb_forward.1} parent=1 // pred_fallthru
      _
    // Predicated region
    $region22: #{rdb_forward.1} parent=1 // pred_check
      _
    $region23: #{rdb_forward.1} parent=1 // pred_check_branch
      %10845 = sbr.rel (0) target = $region25
    $region24: #{rdb_forward.1} parent=1 // pred_region
      %10846 = dma.done [#allocation6], 8192
    $region25: #{rdb_forward.1} parent=1 // pred_fallthru
      _
    %10847 = vsyncpa [#allocation6], 1

</llo_original>
